<compile_context>
chip_gen: v5e
topology: v5e:2x2
jax: 0.10.0
libtpu: 0.0.40
codegen_flags: <defaults>
</compile_context>

<pallas_src>
import functools

import jax
import jax.numpy as jnp
from jax import lax
from jax.experimental import pallas as pl
from jax.experimental.pallas import tpu as pltpu


def _round_up(x, m):
    return ((x + m - 1) // m) * m


def _roll_up(x, k):
    """Row-rotate so that row i of the result holds x[i + k] (cyclic)."""
    n = x.shape[0]
    return pltpu.roll(x, shift=(n - k) % n, axis=0)


def imdb_cnn_kernel(ids_ref, wa_ref, wm_ref, bf_ref, out_ref, *,
                    kernel_width, pool_size, vocab_size):
    """Embedding -> Conv1d(valid) -> ReLU -> MaxPool1d -> Linear -> sigmoid."""
    _, L_pad, B_tile = ids_ref.shape        # ids block: (1, L_pad, B_tile)
    KV1, C = wa_ref.shape                   # fused weight: (K*V + 1, C)
    O, G, _ = wm_ref.shape                  # fc weight:   (O, G, C)
    V = vocab_size
    KV = kernel_width * V

    ids_t = ids_ref[0]                      # (L_pad, B_tile), positions on sublanes
    # ids at position t+k for every t (cyclic per tile; wrapped / padded rows
    # are never used because the fc mask zeroes groups >= P).
    shifted = [ids_t if k == 0 else _roll_up(ids_t, k)
               for k in range(kernel_width)]

    # ---- fused embedding + conv: window one-hot (R, K*V+1) @ wA (K*V+1, C) --
    lane = lax.broadcasted_iota(jnp.int32, (L_pad, KV1), 1)
    bias_lane = lane == KV                  # constant all-ones bias column
    pieces = []
    for b in range(B_tile):                 # static, B_tile <= 64 by design
        m = bias_lane
        for k in range(kernel_width):
            col = shifted[k][:, b:b + 1]                     # (L_pad, 1)
            m = jnp.logical_or(m, lane == col + k * V)
        pieces.append(m.astype(jnp.float32))                 # (L_pad, KV1)
    win = jnp.concatenate(pieces, axis=0)                    # (R, KV1)
    conv = jnp.dot(win, wa_ref[...],
                   preferred_element_type=jnp.float32)       # (R, C), bias folded

    # ---- ReLU (VPU) --------------------------------------------------------
    act = jnp.maximum(conv, 0.0)

    # ---- MaxPool1d(pool_size, stride=pool_size): pool windows coincide with
    #      8-sublane groups (pool_size % 8 == 0, L_pad % pool_size == 0), so a
    #      free reshape + one sublane-group max replaces the roll tree. -------
    pooled = jnp.max(act.reshape(B_tile, G, pool_size, C), axis=2)   # (B, G, C)

    # ---- Linear (tiny out_features) as masked multiply + reduce, sigmoid ----
    cols = []
    for o in range(O):                      # O is static and tiny (default 1)
        w = pooled * wm_ref[o][None, :, :]                   # (B, G, C)
        s = jnp.sum(w, axis=1)                               # (B, C)
        cols.append(jnp.sum(s, axis=1, keepdims=True) + bf_ref[o])   # (B, 1)
    logits = cols[0] if O == 1 else jnp.concatenate(cols, axis=-1)
    out_ref[...] = jax.nn.sigmoid(logits).astype(out_ref.dtype)


def imdb_cnn_forward(token_ids, emb_table, w_conv, b_conv, w_fc, b_fc, *,
                     kernel_width=3, pool_size=8, b_tile=32):
    """token_ids: (B, L) int.  Returns (B, dense_out_features) f32."""
    B, L = token_ids.shape
    V, E = emb_table.shape
    C = w_conv.shape[0]
    O, dense_in = w_fc.shape
    L_out = L - kernel_width + 1
    P = L_out // pool_size

    # ---- static applicability / shape guards (review correctness notes) ----
    assert P >= 1, "sequence too short for conv + pool"
    assert P * C == dense_in, "dense_in_features must equal conv_out * P"
    assert P * pool_size + kernel_width - 1 <= L, \
        "pooled conv taps would read past the sequence end"
    if pool_size % 8 != 0:
        # TODO(synk): generic pool sizes need the sublane roll+max tree path.
        raise NotImplementedError("kernel assumes pool_size % 8 == 0")
    if kernel_width * V + 1 > 2048:
        # TODO(synk): realistic IMDb vocabularies need a DMA / scalar-prefetch
        # row gather instead of the one-hot fused matmul.
        raise NotImplementedError("one-hot fused gather only for tiny vocab")

    L_pad = _round_up(L, pool_size)          # multiple of 8 as well
    G = L_pad // pool_size                   # pooled groups per sample (>= P)

    # ---- batch tiling: >= 2 grid steps (v7x megacore), tiles multiple of 8,
    #      tile capped at 64 (per-sample one-hot assembly is unrolled and the
    #      per-step VMEM stays well inside the 32 MiB scoped limit).  On
    #      v5e/v6e, b_tile / vmem_limit_bytes can be swept higher. ------------
    b_tile = max(8, min(_round_up(b_tile, 8), 64))
    if B <= 2 * b_tile:
        B_tile = max(8, _round_up((B + 1) // 2, 8))
        n_tiles = 2
    else:
        B_tile = b_tile
        n_tiles = (B + B_tile - 1) // B_tile
        n_tiles += n_tiles % 2               # even #tiles shards across cores
    B_pad = B_tile * n_tiles

    # Token ids: pad with token 0 (harmless: padded rows / groups / samples are
    # masked or dropped), pre-split per tile and transposed so every block is
    # one dense contiguous (L_pad, B_tile) DMA with positions on sublanes.
    ids = jnp.pad(token_ids.astype(jnp.int32),
                  ((0, B_pad - B), (0, L_pad - L)))
    ids3 = ids.reshape(n_tiles, B_tile, L_pad).transpose(0, 2, 1)

    # Fused gather+conv weight: row k*V + v multiplies the one-hot of token v
    # at tap k; the last row carries the conv bias (selected by the all-ones
    # bias lane of the window one-hot).
    KV1 = kernel_width * V + 1
    wa = jnp.einsum('ve,cek->kvc', emb_table.astype(jnp.float32),
                    w_conv.astype(jnp.float32)).reshape(kernel_width * V, C)
    wa = jnp.concatenate([wa, b_conv.reshape(1, C).astype(jnp.float32)], axis=0)

    # FC weight laid out on (group, channel).  PyTorch flattens pooled
    # (B, C, P) with index c*P + p; padded groups p >= P get zero weight.
    wm = jnp.transpose(w_fc.astype(jnp.float32).reshape(O, C, P), (0, 2, 1))
    wm = jnp.pad(wm, ((0, 0), (0, G - P), (0, 0)))           # (O, G, C)
    bf = b_fc.astype(jnp.float32).reshape(O)                 # SMEM scalar(s)

    kernel = functools.partial(imdb_cnn_kernel, kernel_width=kernel_width,
                               pool_size=pool_size, vocab_size=V)

    flops = 2 * B_pad * L_pad * KV1 * C + 4 * B_pad * G * C * O
    bytes_accessed = 4 * int(ids3.size + wa.size + wm.size + bf.size
                             + B_pad * O)
    cost = pl.CostEstimate(flops=int(flops), transcendentals=int(B_pad * O),
                           bytes_accessed=bytes_accessed)

    out = pl.pallas_call(
        kernel,
        out_shape=jax.ShapeDtypeStruct((B_pad, O), jnp.float32),
        grid=(n_tiles,),
        in_specs=[
            pl.BlockSpec((1, L_pad, B_tile), lambda i: (i, 0, 0)),  # token ids
            pl.BlockSpec((KV1, C), lambda i: (0, 0)),               # fused emb*conv weight
            pl.BlockSpec((O, G, C), lambda i: (0, 0, 0)),           # fc weight on (g, c)
            pl.BlockSpec(memory_space=pltpu.MemorySpace.SMEM),      # fc bias
        ],
        out_specs=pl.BlockSpec((B_tile, O), lambda i: (i, 0)),
        compiler_params=pltpu.CompilerParams(
            dimension_semantics=("parallel",),
            vmem_limit_bytes=32 * 1024 * 1024),
        cost_estimate=cost,
    )(ids3, wa, wm, bf)
    return out[:B]


if __name__ == "__main__":
    # Module hyper-parameters (PyTorch defaults):
    vocab_size = 50
    embedding_dim = 16
    kernel_width = 3
    conv_out_channels = 8
    pool_size = 8
    dense_in_features = 128      # = conv_out_channels * ((L - 2) // 8) -> L = 130
    dense_out_features = 1

    batch = 2
    seq_len = 130

    key = jax.random.PRNGKey(0)
    k_tok, k_emb, k_wc, k_bc, k_wf, k_bf = jax.random.split(key, 6)

    emb_table = jax.random.normal(k_emb, (vocab_size, embedding_dim),
                                  dtype=jnp.float32)
    w_conv = 0.1 * jax.random.normal(
        k_wc, (conv_out_channels, embedding_dim, kernel_width),
        dtype=jnp.float32)
    b_conv = 0.1 * jax.random.normal(k_bc, (conv_out_channels,),
                                     dtype=jnp.float32)
    w_fc = 0.1 * jax.random.normal(
        k_wf, (dense_out_features, dense_in_features), dtype=jnp.float32)
    b_fc = 0.1 * jax.random.normal(k_bf, (dense_out_features,),
                                   dtype=jnp.float32)

    token_ids = jax.random.randint(k_tok, (batch, seq_len), 0, vocab_size,
                                   dtype=jnp.int32)

    out = imdb_cnn_forward(token_ids, emb_table, w_conv, b_conv, w_fc, b_fc,
                           kernel_width=kernel_width, pool_size=pool_size)
    out = jax.block_until_ready(out)

    # Pure-JAX reference mirroring the PyTorch module semantics.
    emb = emb_table[token_ids]                                   # (B, L, E)
    x = jnp.transpose(emb, (0, 2, 1))                            # (B, E, L)
    conv = lax.conv_general_dilated(
        x, w_conv, window_strides=(1,), padding='VALID',
        dimension_numbers=('NCH', 'OIH', 'NCH')) + b_conv[None, :, None]
    act = jnp.maximum(conv, 0.0)                                 # (B, C, L_out)
    P = (seq_len - kernel_width + 1) // pool_size
    pooled = act[:, :, :P * pool_size].reshape(
        batch, conv_out_channels, P, pool_size).max(axis=-1)     # (B, C, P)
    flat = pooled.reshape(batch, -1)                             # c*P + p order
    ref = jax.nn.sigmoid(flat @ w_fc.T + b_fc)

    assert out.shape == (batch, dense_out_features)
    assert jnp.allclose(out, ref, atol=2e-5, rtol=2e-5), (out, ref)
    print("KERNEL_OK")
</pallas_src>

<mosaic_0001>
module attributes {stable_mosaic.version = 11 : i64} {
  func.func @imdb_cnn_kernel(%arg0: i32, %arg1: memref<1x136x8xi32, #tpu.memory_space<vmem>>, %arg2: memref<151x8xf32, #tpu.memory_space<vmem>>, %arg3: memref<1x17x8xf32, #tpu.memory_space<vmem>>, %arg4: memref<1xf32, #tpu.memory_space<smem>>, %arg5: memref<8x1xf32, #tpu.memory_space<vmem>>) attributes {dimension_semantics = [#tpu.dimension_semantics<parallel>], iteration_bounds = array<i64: 2>, scalar_prefetch = 0 : i64, scratch_operands = 0 : i64, tpu.core_type = #tpu.core_type<tc>, window_params = [{transform_indices = @transform_0, window_bounds = array<i64: 1, 136, 8>}, {pipeline_mode = #tpu.pipeline_mode<synchronous>, transform_indices = @transform_1, window_bounds = array<i64: 151, 8>}, {pipeline_mode = #tpu.pipeline_mode<synchronous>, transform_indices = @transform_2, window_bounds = array<i64: 1, 17, 8>}, {transform_indices = @transform_3, window_bounds = array<i64: 1>}, {transform_indices = @transform_4, window_bounds = array<i64: 8, 1>}]} {
    %c0 = arith.constant 0 : index
    %c0_0 = arith.constant 0 : index
    %c0_1 = arith.constant 0 : index
    %0 = vector.load %arg1[%c0, %c0_0, %c0_1] : memref<1x136x8xi32, #tpu.memory_space<vmem>>, vector<1x136x8xi32>
    %1 = vector.shape_cast %0 : vector<1x136x8xi32> to vector<136x8xi32>
    %c135_i32 = arith.constant 135 : i32
    %2 = tpu.dynamic_rotate %1 by %c135_i32 dim 0 : vector<136x8xi32>, i32 -> vector<136x8xi32>
    %c134_i32 = arith.constant 134 : i32
    %3 = tpu.dynamic_rotate %1 by %c134_i32 dim 0 : vector<136x8xi32>, i32 -> vector<136x8xi32>
    %4 = tpu.iota {dimensions = array<i32: 1>} : vector<136x151xi32>
    %c150_i32 = arith.constant 150 : i32
    %5 = vector.broadcast %c150_i32 : i32 to vector<136x151xi32>
    %6 = arith.cmpi eq, %4, %5 : vector<136x151xi32>
    %7 = vector.extract_strided_slice %1 {offsets = [0, 0], sizes = [136, 1], strides = [1, 1]} : vector<136x8xi32> to vector<136x1xi32>
    %c0_i32 = arith.constant 0 : i32
    %8 = vector.broadcast %c0_i32 : i32 to vector<136x1xi32>
    %9 = arith.addi %7, %8 : vector<136x1xi32>
    %10 = vector.broadcast %9 : vector<136x1xi32> to vector<136x151xi32>
    %11 = arith.cmpi eq, %4, %10 : vector<136x151xi32>
    %12 = arith.ori %6, %11 : vector<136x151xi1>
    %13 = vector.extract_strided_slice %2 {offsets = [0, 0], sizes = [136, 1], strides = [1, 1]} : vector<136x8xi32> to vector<136x1xi32>
    %c50_i32 = arith.constant 50 : i32
    %14 = vector.broadcast %c50_i32 : i32 to vector<136x1xi32>
    %15 = arith.addi %13, %14 : vector<136x1xi32>
    %16 = vector.broadcast %15 : vector<136x1xi32> to vector<136x151xi32>
    %17 = arith.cmpi eq, %4, %16 : vector<136x151xi32>
    %18 = arith.ori %12, %17 : vector<136x151xi1>
    %19 = vector.extract_strided_slice %3 {offsets = [0, 0], sizes = [136, 1], strides = [1, 1]} : vector<136x8xi32> to vector<136x1xi32>
    %c100_i32 = arith.constant 100 : i32
    %20 = vector.broadcast %c100_i32 : i32 to vector<136x1xi32>
    %21 = arith.addi %19, %20 : vector<136x1xi32>
    %22 = vector.broadcast %21 : vector<136x1xi32> to vector<136x151xi32>
    %23 = arith.cmpi eq, %4, %22 : vector<136x151xi32>
    %24 = arith.ori %18, %23 : vector<136x151xi1>
    %25 = arith.extui %24 : vector<136x151xi1> to vector<136x151xi32>
    %26 = arith.sitofp %25 : vector<136x151xi32> to vector<136x151xf32>
    %27 = vector.extract_strided_slice %1 {offsets = [0, 1], sizes = [136, 1], strides = [1, 1]} : vector<136x8xi32> to vector<136x1xi32>
    %c0_i32_2 = arith.constant 0 : i32
    %28 = vector.broadcast %c0_i32_2 : i32 to vector<136x1xi32>
    %29 = arith.addi %27, %28 : vector<136x1xi32>
    %30 = vector.broadcast %29 : vector<136x1xi32> to vector<136x151xi32>
    %31 = arith.cmpi eq, %4, %30 : vector<136x151xi32>
    %32 = arith.ori %6, %31 : vector<136x151xi1>
    %33 = vector.extract_strided_slice %2 {offsets = [0, 1], sizes = [136, 1], strides = [1, 1]} : vector<136x8xi32> to vector<136x1xi32>
    %c50_i32_3 = arith.constant 50 : i32
    %34 = vector.broadcast %c50_i32_3 : i32 to vector<136x1xi32>
    %35 = arith.addi %33, %34 : vector<136x1xi32>
    %36 = vector.broadcast %35 : vector<136x1xi32> to vector<136x151xi32>
    %37 = arith.cmpi eq, %4, %36 : vector<136x151xi32>
    %38 = arith.ori %32, %37 : vector<136x151xi1>
    %39 = vector.extract_strided_slice %3 {offsets = [0, 1], sizes = [136, 1], strides = [1, 1]} : vector<136x8xi32> to vector<136x1xi32>
    %c100_i32_4 = arith.constant 100 : i32
    %40 = vector.broadcast %c100_i32_4 : i32 to vector<136x1xi32>
    %41 = arith.addi %39, %40 : vector<136x1xi32>
    %42 = vector.broadcast %41 : vector<136x1xi32> to vector<136x151xi32>
    %43 = arith.cmpi eq, %4, %42 : vector<136x151xi32>
    %44 = arith.ori %38, %43 : vector<136x151xi1>
    %45 = arith.extui %44 : vector<136x151xi1> to vector<136x151xi32>
    %46 = arith.sitofp %45 : vector<136x151xi32> to vector<136x151xf32>
    %47 = vector.extract_strided_slice %1 {offsets = [0, 2], sizes = [136, 1], strides = [1, 1]} : vector<136x8xi32> to vector<136x1xi32>
    %c0_i32_5 = arith.constant 0 : i32
    %48 = vector.broadcast %c0_i32_5 : i32 to vector<136x1xi32>
    %49 = arith.addi %47, %48 : vector<136x1xi32>
    %50 = vector.broadcast %49 : vector<136x1xi32> to vector<136x151xi32>
    %51 = arith.cmpi eq, %4, %50 : vector<136x151xi32>
    %52 = arith.ori %6, %51 : vector<136x151xi1>
    %53 = vector.extract_strided_slice %2 {offsets = [0, 2], sizes = [136, 1], strides = [1, 1]} : vector<136x8xi32> to vector<136x1xi32>
    %c50_i32_6 = arith.constant 50 : i32
    %54 = vector.broadcast %c50_i32_6 : i32 to vector<136x1xi32>
    %55 = arith.addi %53, %54 : vector<136x1xi32>
    %56 = vector.broadcast %55 : vector<136x1xi32> to vector<136x151xi32>
    %57 = arith.cmpi eq, %4, %56 : vector<136x151xi32>
    %58 = arith.ori %52, %57 : vector<136x151xi1>
    %59 = vector.extract_strided_slice %3 {offsets = [0, 2], sizes = [136, 1], strides = [1, 1]} : vector<136x8xi32> to vector<136x1xi32>
    %c100_i32_7 = arith.constant 100 : i32
    %60 = vector.broadcast %c100_i32_7 : i32 to vector<136x1xi32>
    %61 = arith.addi %59, %60 : vector<136x1xi32>
    %62 = vector.broadcast %61 : vector<136x1xi32> to vector<136x151xi32>
    %63 = arith.cmpi eq, %4, %62 : vector<136x151xi32>
    %64 = arith.ori %58, %63 : vector<136x151xi1>
    %65 = arith.extui %64 : vector<136x151xi1> to vector<136x151xi32>
    %66 = arith.sitofp %65 : vector<136x151xi32> to vector<136x151xf32>
    %67 = vector.extract_strided_slice %1 {offsets = [0, 3], sizes = [136, 1], strides = [1, 1]} : vector<136x8xi32> to vector<136x1xi32>
    %c0_i32_8 = arith.constant 0 : i32
    %68 = vector.broadcast %c0_i32_8 : i32 to vector<136x1xi32>
    %69 = arith.addi %67, %68 : vector<136x1xi32>
    %70 = vector.broadcast %69 : vector<136x1xi32> to vector<136x151xi32>
    %71 = arith.cmpi eq, %4, %70 : vector<136x151xi32>
    %72 = arith.ori %6, %71 : vector<136x151xi1>
    %73 = vector.extract_strided_slice %2 {offsets = [0, 3], sizes = [136, 1], strides = [1, 1]} : vector<136x8xi32> to vector<136x1xi32>
    %c50_i32_9 = arith.constant 50 : i32
    %74 = vector.broadcast %c50_i32_9 : i32 to vector<136x1xi32>
    %75 = arith.addi %73, %74 : vector<136x1xi32>
    %76 = vector.broadcast %75 : vector<136x1xi32> to vector<136x151xi32>
    %77 = arith.cmpi eq, %4, %76 : vector<136x151xi32>
    %78 = arith.ori %72, %77 : vector<136x151xi1>
    %79 = vector.extract_strided_slice %3 {offsets = [0, 3], sizes = [136, 1], strides = [1, 1]} : vector<136x8xi32> to vector<136x1xi32>
    %c100_i32_10 = arith.constant 100 : i32
    %80 = vector.broadcast %c100_i32_10 : i32 to vector<136x1xi32>
    %81 = arith.addi %79, %80 : vector<136x1xi32>
    %82 = vector.broadcast %81 : vector<136x1xi32> to vector<136x151xi32>
    %83 = arith.cmpi eq, %4, %82 : vector<136x151xi32>
    %84 = arith.ori %78, %83 : vector<136x151xi1>
    %85 = arith.extui %84 : vector<136x151xi1> to vector<136x151xi32>
    %86 = arith.sitofp %85 : vector<136x151xi32> to vector<136x151xf32>
    %87 = vector.extract_strided_slice %1 {offsets = [0, 4], sizes = [136, 1], strides = [1, 1]} : vector<136x8xi32> to vector<136x1xi32>
    %c0_i32_11 = arith.constant 0 : i32
    %88 = vector.broadcast %c0_i32_11 : i32 to vector<136x1xi32>
    %89 = arith.addi %87, %88 : vector<136x1xi32>
    %90 = vector.broadcast %89 : vector<136x1xi32> to vector<136x151xi32>
    %91 = arith.cmpi eq, %4, %90 : vector<136x151xi32>
    %92 = arith.ori %6, %91 : vector<136x151xi1>
    %93 = vector.extract_strided_slice %2 {offsets = [0, 4], sizes = [136, 1], strides = [1, 1]} : vector<136x8xi32> to vector<136x1xi32>
    %c50_i32_12 = arith.constant 50 : i32
    %94 = vector.broadcast %c50_i32_12 : i32 to vector<136x1xi32>
    %95 = arith.addi %93, %94 : vector<136x1xi32>
    %96 = vector.broadcast %95 : vector<136x1xi32> to vector<136x151xi32>
    %97 = arith.cmpi eq, %4, %96 : vector<136x151xi32>
    %98 = arith.ori %92, %97 : vector<136x151xi1>
    %99 = vector.extract_strided_slice %3 {offsets = [0, 4], sizes = [136, 1], strides = [1, 1]} : vector<136x8xi32> to vector<136x1xi32>
    %c100_i32_13 = arith.constant 100 : i32
    %100 = vector.broadcast %c100_i32_13 : i32 to vector<136x1xi32>
    %101 = arith.addi %99, %100 : vector<136x1xi32>
    %102 = vector.broadcast %101 : vector<136x1xi32> to vector<136x151xi32>
    %103 = arith.cmpi eq, %4, %102 : vector<136x151xi32>
    %104 = arith.ori %98, %103 : vector<136x151xi1>
    %105 = arith.extui %104 : vector<136x151xi1> to vector<136x151xi32>
    %106 = arith.sitofp %105 : vector<136x151xi32> to vector<136x151xf32>
    %107 = vector.extract_strided_slice %1 {offsets = [0, 5], sizes = [136, 1], strides = [1, 1]} : vector<136x8xi32> to vector<136x1xi32>
    %c0_i32_14 = arith.constant 0 : i32
    %108 = vector.broadcast %c0_i32_14 : i32 to vector<136x1xi32>
    %109 = arith.addi %107, %108 : vector<136x1xi32>
    %110 = vector.broadcast %109 : vector<136x1xi32> to vector<136x151xi32>
    %111 = arith.cmpi eq, %4, %110 : vector<136x151xi32>
    %112 = arith.ori %6, %111 : vector<136x151xi1>
    %113 = vector.extract_strided_slice %2 {offsets = [0, 5], sizes = [136, 1], strides = [1, 1]} : vector<136x8xi32> to vector<136x1xi32>
    %c50_i32_15 = arith.constant 50 : i32
    %114 = vector.broadcast %c50_i32_15 : i32 to vector<136x1xi32>
    %115 = arith.addi %113, %114 : vector<136x1xi32>
    %116 = vector.broadcast %115 : vector<136x1xi32> to vector<136x151xi32>
    %117 = arith.cmpi eq, %4, %116 : vector<136x151xi32>
    %118 = arith.ori %112, %117 : vector<136x151xi1>
    %119 = vector.extract_strided_slice %3 {offsets = [0, 5], sizes = [136, 1], strides = [1, 1]} : vector<136x8xi32> to vector<136x1xi32>
    %c100_i32_16 = arith.constant 100 : i32
    %120 = vector.broadcast %c100_i32_16 : i32 to vector<136x1xi32>
    %121 = arith.addi %119, %120 : vector<136x1xi32>
    %122 = vector.broadcast %121 : vector<136x1xi32> to vector<136x151xi32>
    %123 = arith.cmpi eq, %4, %122 : vector<136x151xi32>
    %124 = arith.ori %118, %123 : vector<136x151xi1>
    %125 = arith.extui %124 : vector<136x151xi1> to vector<136x151xi32>
    %126 = arith.sitofp %125 : vector<136x151xi32> to vector<136x151xf32>
    %127 = vector.extract_strided_slice %1 {offsets = [0, 6], sizes = [136, 1], strides = [1, 1]} : vector<136x8xi32> to vector<136x1xi32>
    %c0_i32_17 = arith.constant 0 : i32
    %128 = vector.broadcast %c0_i32_17 : i32 to vector<136x1xi32>
    %129 = arith.addi %127, %128 : vector<136x1xi32>
    %130 = vector.broadcast %129 : vector<136x1xi32> to vector<136x151xi32>
    %131 = arith.cmpi eq, %4, %130 : vector<136x151xi32>
    %132 = arith.ori %6, %131 : vector<136x151xi1>
    %133 = vector.extract_strided_slice %2 {offsets = [0, 6], sizes = [136, 1], strides = [1, 1]} : vector<136x8xi32> to vector<136x1xi32>
    %c50_i32_18 = arith.constant 50 : i32
    %134 = vector.broadcast %c50_i32_18 : i32 to vector<136x1xi32>
    %135 = arith.addi %133, %134 : vector<136x1xi32>
    %136 = vector.broadcast %135 : vector<136x1xi32> to vector<136x151xi32>
    %137 = arith.cmpi eq, %4, %136 : vector<136x151xi32>
    %138 = arith.ori %132, %137 : vector<136x151xi1>
    %139 = vector.extract_strided_slice %3 {offsets = [0, 6], sizes = [136, 1], strides = [1, 1]} : vector<136x8xi32> to vector<136x1xi32>
    %c100_i32_19 = arith.constant 100 : i32
    %140 = vector.broadcast %c100_i32_19 : i32 to vector<136x1xi32>
    %141 = arith.addi %139, %140 : vector<136x1xi32>
    %142 = vector.broadcast %141 : vector<136x1xi32> to vector<136x151xi32>
    %143 = arith.cmpi eq, %4, %142 : vector<136x151xi32>
    %144 = arith.ori %138, %143 : vector<136x151xi1>
    %145 = arith.extui %144 : vector<136x151xi1> to vector<136x151xi32>
    %146 = arith.sitofp %145 : vector<136x151xi32> to vector<136x151xf32>
    %147 = vector.extract_strided_slice %1 {offsets = [0, 7], sizes = [136, 1], strides = [1, 1]} : vector<136x8xi32> to vector<136x1xi32>
    %c0_i32_20 = arith.constant 0 : i32
    %148 = vector.broadcast %c0_i32_20 : i32 to vector<136x1xi32>
    %149 = arith.addi %147, %148 : vector<136x1xi32>
    %150 = vector.broadcast %149 : vector<136x1xi32> to vector<136x151xi32>
    %151 = arith.cmpi eq, %4, %150 : vector<136x151xi32>
    %152 = arith.ori %6, %151 : vector<136x151xi1>
    %153 = vector.extract_strided_slice %2 {offsets = [0, 7], sizes = [136, 1], strides = [1, 1]} : vector<136x8xi32> to vector<136x1xi32>
    %c50_i32_21 = arith.constant 50 : i32
    %154 = vector.broadcast %c50_i32_21 : i32 to vector<136x1xi32>
    %155 = arith.addi %153, %154 : vector<136x1xi32>
    %156 = vector.broadcast %155 : vector<136x1xi32> to vector<136x151xi32>
    %157 = arith.cmpi eq, %4, %156 : vector<136x151xi32>
    %158 = arith.ori %152, %157 : vector<136x151xi1>
    %159 = vector.extract_strided_slice %3 {offsets = [0, 7], sizes = [136, 1], strides = [1, 1]} : vector<136x8xi32> to vector<136x1xi32>
    %c100_i32_22 = arith.constant 100 : i32
    %160 = vector.broadcast %c100_i32_22 : i32 to vector<136x1xi32>
    %161 = arith.addi %159, %160 : vector<136x1xi32>
    %162 = vector.broadcast %161 : vector<136x1xi32> to vector<136x151xi32>
    %163 = arith.cmpi eq, %4, %162 : vector<136x151xi32>
    %164 = arith.ori %158, %163 : vector<136x151xi1>
    %165 = arith.extui %164 : vector<136x151xi1> to vector<136x151xi32>
    %166 = arith.sitofp %165 : vector<136x151xi32> to vector<136x151xf32>
    %167 = tpu.concatenate %26, %46, %66, %86, %106, %126, %146, %166 in 0 : vector<136x151xf32>, vector<136x151xf32>, vector<136x151xf32>, vector<136x151xf32>, vector<136x151xf32>, vector<136x151xf32>, vector<136x151xf32>, vector<136x151xf32> -> vector<1088x151xf32>
    %c0_23 = arith.constant 0 : index
    %c0_24 = arith.constant 0 : index
    %168 = vector.load %arg2[%c0_23, %c0_24] : memref<151x8xf32, #tpu.memory_space<vmem>>, vector<151x8xf32>
    %cst = arith.constant dense<0.000000e+00> : vector<1088x8xf32>
    %169 = tpu.matmul %167, %168, %cst {dimension_numbers = #tpu.dot_dimension_numbers<[1], [0], [0], [1], [0, 0, 1, 1], [], []>} : vector<1088x151xf32>, vector<151x8xf32>, vector<1088x8xf32> -> vector<1088x8xf32>
    %cst_25 = arith.constant 0.000000e+00 : f32
    %170 = vector.broadcast %cst_25 : f32 to vector<1088x8xf32>
    %171 = arith.maximumf %169, %170 : vector<1088x8xf32>
    %172 = vector.shape_cast %171 : vector<1088x8xf32> to vector<8x17x8x8xf32>
    %cst_26 = arith.constant dense<0xFF800000> : vector<8x17x8xf32>
    %173 = vector.multi_reduction <maximumf>, %172, %cst_26 [2] : vector<8x17x8x8xf32> to vector<8x17x8xf32>
    %c0_27 = arith.constant 0 : index
    %c0_28 = arith.constant 0 : index
    %c0_29 = arith.constant 0 : index
    %174 = vector.load %arg3[%c0_27, %c0_28, %c0_29] : memref<1x17x8xf32, #tpu.memory_space<vmem>>, vector<1x17x8xf32>
    %175 = vector.shape_cast %174 : vector<1x17x8xf32> to vector<17x8xf32>
    %176 = vector.shape_cast %175 : vector<17x8xf32> to vector<1x17x8xf32>
    %177 = vector.broadcast %176 : vector<1x17x8xf32> to vector<8x17x8xf32>
    %178 = arith.mulf %173, %177 : vector<8x17x8xf32>
    %cst_30 = arith.constant dense<0.000000e+00> : vector<8x8xf32>
    %179 = vector.multi_reduction <add>, %178, %cst_30 [1] : vector<8x17x8xf32> to vector<8x8xf32>
    %cst_31 = arith.constant dense<0.000000e+00> : vector<8xf32>
    %180 = vector.multi_reduction <add>, %179, %cst_31 [1] : vector<8x8xf32> to vector<8xf32>
    %181 = vector.shape_cast %180 : vector<8xf32> to vector<8x1xf32>
    %c0_32 = arith.constant 0 : index
    %182 = memref.load %arg4[%c0_32] : memref<1xf32, #tpu.memory_space<smem>>
    %183 = vector.broadcast %182 : f32 to vector<8x1xf32>
    %184 = arith.addf %181, %183 : vector<8x1xf32>
    %185 = arith.negf %184 : vector<8x1xf32>
    %186 = math.exp %185 : vector<8x1xf32>
    %cst_33 = arith.constant 1.000000e+00 : f32
    %187 = vector.broadcast %cst_33 : f32 to vector<8x1xf32>
    %188 = arith.addf %187, %186 : vector<8x1xf32>
    %189 = arith.divf %187, %188 : vector<8x1xf32>
    %c0_34 = arith.constant 0 : index
    %c0_35 = arith.constant 0 : index
    %190 = vector.load %arg5[%c0_34, %c0_35] : memref<8x1xf32, #tpu.memory_space<vmem>>, vector<8x1xf32>
    tpu.vector_store %arg5[%c0_34, %c0_35], %189 {strides = array<i32>} : memref<8x1xf32, #tpu.memory_space<vmem>>, vector<8x1xf32>,
    return
  }
  func.func @transform_0(%arg0: i32) -> (i32, i32, i32) {
    %c0_i32 = arith.constant 0 : i32
    %c0_i32_0 = arith.constant 0 : i32
    %c0_i32_1 = arith.constant 0 : i32
    return %arg0, %c0_i32, %c0_i32_0 : i32, i32, i32
  }
  func.func @transform_1(%arg0: i32) -> (i32, i32) {
    %c0_i32 = arith.constant 0 : i32
    %c0_i32_0 = arith.constant 0 : i32
    %c0_i32_1 = arith.constant 0 : i32
    return %c0_i32, %c0_i32_0 : i32, i32
  }
  func.func @transform_2(%arg0: i32) -> (i32, i32, i32) {
    %c0_i32 = arith.constant 0 : i32
    %c0_i32_0 = arith.constant 0 : i32
    %c0_i32_1 = arith.constant 0 : i32
    %c0_i32_2 = arith.constant 0 : i32
    return %c0_i32, %c0_i32_0, %c0_i32_1 : i32, i32, i32
  }
  func.func @transform_3(%arg0: i32) -> i32 {
    %c0_i32 = arith.constant 0 : i32
    %c0_i32_0 = arith.constant 0 : i32
    return %c0_i32 : i32
  }
  func.func @transform_4(%arg0: i32) -> (i32, i32) {
    %c0_i32 = arith.constant 0 : i32
    %c0_i32_0 = arith.constant 0 : i32
    return %arg0, %c0_i32 : i32, i32
  }
}

</mosaic_0001>

<llo_original>
// kernel: tpu_custom_call.1
$region0: #{tpu_custom_call.1}
  #allocation0 [shape = 'u32[]', space=smem, size = 0x4, offset = 0x4, fixed_abs, tag = 'smem constant byte address 0x4 - core index']
  #allocation1 [shape = 'u32[72,128]{1,0:T(1,128)}', space=vmem, size = 0x9000, scoped, tag = 'internal scratch']
  #allocation2 [shape = 'f32[1]{0:T(128)S(6)}', space=smem, size = 0x200, scoped, tag = 'scoped memory for tpu_custom_call.1']
  %s0 = inlined_call_operand.vmem [shape: s32[2,136,8], index: 0, kind: input, shape index: {}]
  %s1 = inlined_call_operand.vmem [shape: f32[151,8], index: 1, kind: input, shape index: {}]
  %s2 = inlined_call_operand.vmem [shape: f32[1,17,8], index: 2, kind: input, shape index: {}]
  %s3 = inlined_call_operand.<no memory space> [shape: f32[1], index: 3, kind: input, shape index: {}]
  %s4 = inlined_call_operand.vmem [shape: f32[16,1], index: 4, kind: output, shape index: {}]
  %s5 = sld [smem:[#allocation0]]
  $region49: #{tpu_custom_call.1} parent=0
    _
  %s7 = ssub.s32 1, %s5
  %s8 = scalar_select 0, %s7, %s5
  %9 = sst [smem:[#allocation2]] %s3
  loop: start=0, step=1, limit=4
  $region2: #{tpu_custom_call.1} parent=0 // loop_pre_header
    _
  $region3: #{tpu_custom_call.1} parent=0 // loop_header
    %s11 = sphi 0, %s15
    %p12 = scmp.ge.s32.totalorder %s11, 4
    %s21 = sphi 0, %s23
    %s24 = sphi 0, %s21
    %s25 = sphi 0, %s24
    %s41 = sphi 0, %s25
    %s45 = sphi 0, %s45
    %s47 = sphi 0, %s45
    %s48 = sphi 0, %s47
    %s62 = sphi 0, %s48
    %s66 = sphi 0, %s66
    %s68 = sphi 0, %s66
    %s69 = sphi 0, %s68
    %s83 = sphi 0, %s69
    %s87 = sphi 0, %s87
    %s89 = sphi 0, %s87
    %s90 = sphi 0, %s89
    %s104 = sphi 0, %s90
    %s110 = sphi 0, %s112
    %s113 = sphi 0, %s110
    %s114 = sphi 0, %s113
    %s130 = sphi 0, %s114
  $region4: #{tpu_custom_call.1} parent=0 // loop_header_branch
    %14 = sbr.rel (%p12) target = $region8
  $region5: #{tpu_custom_call.1} parent=0 // loop_body
    %s16 = ssub.s32 %s11, 1
    %s17 = ssub.s32 %s11, 2
    %s18 = sadd.s32 %s11, 1
    %s19 = ssub.s32 %s11, %s18
    %p20 = scmp.eq.s32.totalorder %s19, 0
    %s22 = sadd.s32 %s21, 1
    %s23 = scalar_select %p20, %s21, %s22
    %p26 = pneg %p20
    %p27 = scmp.eq.s32.totalorder %s11, 1
    %p28 = por %p26, %p27
    %p29 = scmp.ne.s32.totalorder %s21, %s24
    %p30 = scmp.eq.s32.totalorder %s11, 0
    %p31 = por %p29, %p30
    %p32 = scmp.ne.s32.totalorder %s21, %s24
    %p33 = scmp.eq.s32.totalorder %s16, 1
    %p34 = por %p32, %p33
    %p35 = scmp.ne.s32.totalorder %s24, %s25
    %p36 = scmp.eq.s32.totalorder %s16, 0
    %p37 = por %p35, %p36
    %p38 = scmp.ne.s32.totalorder %s24, %s25
    %p39 = scmp.eq.s32.totalorder %s17, 1
    %p40 = por %p38, %p39
    %p42 = scmp.ne.s32.totalorder %s25, %s41
    %p43 = scmp.eq.s32.totalorder %s17, 0
    %p44 = por %p42, %p43
    %s46 = sadd.s32 %s45, 1
    %p49 = scmp.eq.s32.totalorder %s11, 1
    %p50 = scmp.ne.s32.totalorder %s45, %s47
    %p51 = scmp.eq.s32.totalorder %s11, 0
    %p52 = por %p50, %p51
    %p53 = scmp.ne.s32.totalorder %s45, %s47
    %p54 = scmp.eq.s32.totalorder %s16, 1
    %p55 = por %p53, %p54
    %p56 = scmp.ne.s32.totalorder %s47, %s48
    %p57 = scmp.eq.s32.totalorder %s16, 0
    %p58 = por %p56, %p57
    %p59 = scmp.ne.s32.totalorder %s47, %s48
    %p60 = scmp.eq.s32.totalorder %s17, 1
    %p61 = por %p59, %p60
    %p63 = scmp.ne.s32.totalorder %s48, %s62
    %p64 = scmp.eq.s32.totalorder %s17, 0
    %p65 = por %p63, %p64
    %s67 = sadd.s32 %s66, 1
    %p70 = scmp.eq.s32.totalorder %s11, 1
    %p71 = scmp.ne.s32.totalorder %s66, %s68
    %p72 = scmp.eq.s32.totalorder %s11, 0
    %p73 = por %p71, %p72
    %p74 = scmp.ne.s32.totalorder %s66, %s68
    %p75 = scmp.eq.s32.totalorder %s16, 1
    %p76 = por %p74, %p75
    %p77 = scmp.ne.s32.totalorder %s68, %s69
    %p78 = scmp.eq.s32.totalorder %s16, 0
    %p79 = por %p77, %p78
    %p80 = scmp.ne.s32.totalorder %s68, %s69
    %p81 = scmp.eq.s32.totalorder %s17, 1
    %p82 = por %p80, %p81
    %p84 = scmp.ne.s32.totalorder %s69, %s83
    %p85 = scmp.eq.s32.totalorder %s17, 0
    %p86 = por %p84, %p85
    %s88 = sadd.s32 %s87, 1
    %p91 = scmp.eq.s32.totalorder %s11, 1
    %p92 = scmp.ne.s32.totalorder %s87, %s89
    %p93 = scmp.eq.s32.totalorder %s11, 0
    %p94 = por %p92, %p93
    %p95 = scmp.ne.s32.totalorder %s87, %s89
    %p96 = scmp.eq.s32.totalorder %s16, 1
    %p97 = por %p95, %p96
    %p98 = scmp.ne.s32.totalorder %s89, %s90
    %p99 = scmp.eq.s32.totalorder %s16, 0
    %p100 = por %p98, %p99
    %p101 = scmp.ne.s32.totalorder %s89, %s90
    %p102 = scmp.eq.s32.totalorder %s17, 1
    %p103 = por %p101, %p102
    %p105 = scmp.ne.s32.totalorder %s90, %s104
    %p106 = scmp.eq.s32.totalorder %s17, 0
    %p107 = por %p105, %p106
    %s108 = ssub.s32 %s11, %s18
    %p109 = scmp.eq.s32.totalorder %s108, 0
    %s111 = sadd.s32 %s110, 1
    %s112 = scalar_select %p109, %s110, %s111
    %p115 = pneg %p109
    %p116 = scmp.eq.s32.totalorder %s11, 1
    %p117 = por %p115, %p116
    %p118 = scmp.ne.s32.totalorder %s110, %s113
    %p119 = scmp.eq.s32.totalorder %s11, 0
    %p120 = por %p118, %p119
    %p121 = scmp.ne.s32.totalorder %s110, %s113
    %p122 = scmp.eq.s32.totalorder %s16, 1
    %p123 = por %p121, %p122
    %p124 = scmp.ne.s32.totalorder %s113, %s114
    %p125 = scmp.eq.s32.totalorder %s16, 0
    %p126 = por %p124, %p125
    %p127 = scmp.ne.s32.totalorder %s113, %s114
    %p128 = scmp.eq.s32.totalorder %s17, 1
    %p129 = por %p127, %p128
    %p131 = scmp.ne.s32.totalorder %s114, %s130
    %p132 = scmp.eq.s32.totalorder %s17, 0
    %p133 = por %p131, %p132
    %p134 = scmp.le.s32.totalorder 1, %s11
    %p135 = scmp.lt.s32.totalorder %s11, 3
    %p136 = pnand %p134, %p135
    %p137 = pneg %p136
    // Predicated region
    $region9: #{tpu_custom_call.1} parent=5 // pred_check
      _
    $region10: #{tpu_custom_call.1} parent=5 // pred_check_branch
      %139 = sbr.rel (%p136) target = $region12
    $region11: #{tpu_custom_call.1} parent=5 // pred_region
      %s140 = ssub.s32 %s11, 1
      // Predicated region
      $region13: #{tpu_custom_call.1} parent=11 // pred_check
        %p141 = pneg %p58
      $region14: #{tpu_custom_call.1} parent=11 // pred_check_branch
        %143 = sbr.rel (%p141) target = $region16
      $region15: #{tpu_custom_call.1} parent=11 // pred_region
        _
      $region16: #{tpu_custom_call.1} parent=11 // pred_fallthru
        _
      // Predicated region
      $region17: #{tpu_custom_call.1} parent=11 // pred_check
        %p144 = pneg %p79
      $region18: #{tpu_custom_call.1} parent=11 // pred_check_branch
        %146 = sbr.rel (%p144) target = $region20
      $region19: #{tpu_custom_call.1} parent=11 // pred_region
        _
      $region20: #{tpu_custom_call.1} parent=11 // pred_fallthru
        _
      // Predicated region
      $region21: #{tpu_custom_call.1} parent=11 // pred_check
        %p147 = pneg %p100
      $region22: #{tpu_custom_call.1} parent=11 // pred_check_branch
        %149 = sbr.rel (%p147) target = $region24
      $region23: #{tpu_custom_call.1} parent=11 // pred_region
        _
      $region24: #{tpu_custom_call.1} parent=11 // pred_fallthru
        _
    $region12: #{tpu_custom_call.1} parent=5 // pred_fallthru
      _
    %p150 = scmp.lt.s32.totalorder %s11, 2
    // Predicated region
    $region25: #{tpu_custom_call.1} parent=5 // pred_check
      %p151 = pneg %p150
    $region26: #{tpu_custom_call.1} parent=5 // pred_check_branch
      %153 = sbr.rel (%p151) target = $region28
    $region27: #{tpu_custom_call.1} parent=5 // pred_region
      // Predicated region
      $region29: #{tpu_custom_call.1} parent=27 // pred_check
        %p154 = pneg %p31
      $region30: #{tpu_custom_call.1} parent=27 // pred_check_branch
        %156 = sbr.rel (%p154) target = $region32
      $region31: #{tpu_custom_call.1} parent=27 // pred_region
        %p157 = scmp.lt.s32.totalorder %s11, 1
        %s158 = scalar_select %p157, %s11, 1
        %s159 = smul.addr %s158, 17
        %s160 = smul.addr %s159, 8
        %s161 = scalar_lea.vmem %s0, %s160
      $region32: #{tpu_custom_call.1} parent=27 // pred_fallthru
        _
    $region28: #{tpu_custom_call.1} parent=5 // pred_fallthru
      _
    %p162 = scmp.le.s32.totalorder 1, %s11
    %p163 = scmp.lt.s32.totalorder %s11, 3
    %p164 = pnand %p162, %p163
    %p165 = pneg %p164
    // Predicated region
    $region33: #{tpu_custom_call.1} parent=5 // pred_check
      _
    $region34: #{tpu_custom_call.1} parent=5 // pred_check_branch
      %167 = sbr.rel (%p164) target = $region36
    $region35: #{tpu_custom_call.1} parent=5 // pred_region
      %s168 = ssub.s32 %s11, 1
      %p169 = scmp.lt.s32.totalorder %s16, 1
      %s170 = scalar_select %p169, %s16, 1
      %s171 = smul.addr %s170, 17
      %s172 = smul.addr %s171, 8
      %s173 = scalar_lea.vmem %s0, %s172
      %p174 = pneg %p37
      %p175 = pneg %p34
      %p176 = pneg %p58
      %p177 = pneg %p55
      %p178 = pneg %p79
      %p179 = pneg %p76
      %p180 = pneg %p100
      %p181 = pneg %p97
      %p182 = pneg %p126
      %p183 = pneg %p123
      %p184 = scmp.lt.s32.totalorder %s16, 1
      %s185 = scalar_select %p184, %s16, 1
      %s186 = smul.addr %s185, 8
      %s187 = scalar_lea.vmem %s4, %s186
      %p188 = scmp.lt.s32.totalorder %s16, 1
      %s189 = scalar_select %p188, %s16, 1
      %s190 = smul.addr %s189, 17
      %s191 = smul.addr %s190, 8
      %s192 = scalar_lea.vmem %s0, %s191
      %p193 = scmp.lt.s32.totalorder %s16, 1
      %s194 = scalar_select %p193, %s16, 1
      %s195 = smul.addr %s194, 8
      %s196 = scalar_lea.vmem %s4, %s195
      %v197 = vld [vmem:[%s192] sm:$0xff]
      %v198 = vld [vmem:[%s192 + $0x8] sm:$0xff]
      %v199 = vld [vmem:[%s192 + $0x10] sm:$0xff]
      %v200 = vld [vmem:[%s192 + $0x18] sm:$0xff]
      %v201 = vld [vmem:[%s192 + $0x20] sm:$0xff]
      %v202 = vld [vmem:[%s192 + $0x28] sm:$0xff]
      %v203 = vld [vmem:[%s192 + $0x30] sm:$0xff]
      %v204 = vld [vmem:[%s192 + $0x38] sm:$0xff]
      %v205 = vld [vmem:[%s192 + $0x40] sm:$0xff]
      %v206 = vld [vmem:[%s192 + $0x48] sm:$0xff]
      %v207 = vld [vmem:[%s192 + $0x50] sm:$0xff]
      %v208 = vld [vmem:[%s192 + $0x58] sm:$0xff]
      %v209 = vld [vmem:[%s192 + $0x60] sm:$0xff]
      %v210 = vld [vmem:[%s192 + $0x68] sm:$0xff]
      %v211 = vld [vmem:[%s192 + $0x70] sm:$0xff]
      %v212 = vld [vmem:[%s192 + $0x78] sm:$0xff]
      %v213 = vld [vmem:[%s192 + $0x80] sm:$0xff]
      %v214 = vrot.slane %v197, 1
      %v215 = vrot.slane %v198, 1
      %v216 = vrot.slane %v199, 1
      %v217 = vrot.slane %v200, 1
      %v218 = vrot.slane %v201, 1
      %v219 = vrot.slane %v202, 1
      %v220 = vrot.slane %v203, 1
      %v221 = vrot.slane %v204, 1
      %v222 = vrot.slane %v205, 1
      %v223 = vrot.slane %v206, 1
      %v224 = vrot.slane %v207, 1
      %v225 = vrot.slane %v208, 1
      %v226 = vrot.slane %v209, 1
      %v227 = vrot.slane %v210, 1
      %v228 = vrot.slane %v211, 1
      %v229 = vrot.slane %v212, 1
      %v230 = vrot.slane %v213, 1
      %v231 = vlaneseq
      %v232 = vshrl.u32 %v231, 7
      %vm233 = vcmp.lt.s32.totalorder %v232, 7
      %v234 = vsel %vm233, %v229, %v230
      %v235 = vsel %vm233, %v228, %v229
      %v236 = vsel %vm233, %v227, %v228
      %v237 = vsel %vm233, %v226, %v227
      %v238 = vsel %vm233, %v225, %v226
      %v239 = vsel %vm233, %v224, %v225
      %v240 = vsel %vm233, %v223, %v224
      %v241 = vsel %vm233, %v222, %v223
      %v242 = vsel %vm233, %v221, %v222
      %v243 = vsel %vm233, %v220, %v221
      %v244 = vsel %vm233, %v219, %v220
      %v245 = vsel %vm233, %v218, %v219
      %v246 = vsel %vm233, %v217, %v218
      %v247 = vsel %vm233, %v216, %v217
      %v248 = vsel %vm233, %v215, %v216
      %v249 = vsel %vm233, %v214, %v215
      %v250 = vsel %vm233, %v230, %v214
      %v251 = vrot.slane %v197, 2
      %v252 = vrot.slane %v198, 2
      %v253 = vrot.slane %v199, 2
      %v254 = vrot.slane %v200, 2
      %v255 = vrot.slane %v201, 2
      %v256 = vrot.slane %v202, 2
      %v257 = vrot.slane %v203, 2
      %v258 = vrot.slane %v204, 2
      %v259 = vrot.slane %v205, 2
      %v260 = vrot.slane %v206, 2
      %v261 = vrot.slane %v207, 2
      %v262 = vrot.slane %v208, 2
      %v263 = vrot.slane %v209, 2
      %v264 = vrot.slane %v210, 2
      %v265 = vrot.slane %v211, 2
      %v266 = vrot.slane %v212, 2
      %v267 = vrot.slane %v213, 2
      %vm268 = vcmp.lt.s32.totalorder %v232, 6
      %v269 = vsel %vm268, %v266, %v267
      %v270 = vsel %vm268, %v265, %v266
      %v271 = vsel %vm268, %v264, %v265
      %v272 = vsel %vm268, %v263, %v264
      %v273 = vsel %vm268, %v262, %v263
      %v274 = vsel %vm268, %v261, %v262
      %v275 = vsel %vm268, %v260, %v261
      %v276 = vsel %vm268, %v259, %v260
      %v277 = vsel %vm268, %v258, %v259
      %v278 = vsel %vm268, %v257, %v258
      %v279 = vsel %vm268, %v256, %v257
      %v280 = vsel %vm268, %v255, %v256
      %v281 = vsel %vm268, %v254, %v255
      %v282 = vsel %vm268, %v253, %v254
      %v283 = vsel %vm268, %v252, %v253
      %v284 = vsel %vm268, %v251, %v252
      %v285 = vsel %vm268, %v267, %v251
      %v286 = vlaneseq
      %v287 = vand.u32 %v286, 127
      %v288 = vadd.s32 %v287, 128
      %vm289 = vcmp.eq.s32.totalorder %v287, 150
      %vm290 = vcmp.eq.s32.totalorder %v288, 150
      %291 = vset.pattern.permute.xlu0 0
      %292 = vperm.xlu0 %291, %v197
      %v293 = vpop.permute.xlu0 %292
      %294 = vset.pattern.permute.xlu0 0
      %295 = vperm.xlu0 %294, %v198
      %v296 = vpop.permute.xlu0 %295
      %297 = vset.pattern.permute.xlu0 0
      %298 = vperm.xlu0 %297, %v199
      %v299 = vpop.permute.xlu0 %298
      %300 = vset.pattern.permute.xlu0 0
      %301 = vperm.xlu0 %300, %v200
      %v302 = vpop.permute.xlu0 %301
      %303 = vset.pattern.permute.xlu0 0
      %304 = vperm.xlu0 %303, %v201
      %v305 = vpop.permute.xlu0 %304
      %306 = vset.pattern.permute.xlu0 0
      %307 = vperm.xlu0 %306, %v202
      %v308 = vpop.permute.xlu0 %307
      %309 = vset.pattern.permute.xlu0 0
      %310 = vperm.xlu0 %309, %v203
      %v311 = vpop.permute.xlu0 %310
      %312 = vset.pattern.permute.xlu0 0
      %313 = vperm.xlu0 %312, %v204
      %v314 = vpop.permute.xlu0 %313
      %315 = vset.pattern.permute.xlu0 0
      %316 = vperm.xlu0 %315, %v205
      %v317 = vpop.permute.xlu0 %316
      %318 = vset.pattern.permute.xlu0 0
      %319 = vperm.xlu0 %318, %v206
      %v320 = vpop.permute.xlu0 %319
      %321 = vset.pattern.permute.xlu0 0
      %322 = vperm.xlu0 %321, %v207
      %v323 = vpop.permute.xlu0 %322
      %324 = vset.pattern.permute.xlu0 0
      %325 = vperm.xlu0 %324, %v208
      %v326 = vpop.permute.xlu0 %325
      %327 = vset.pattern.permute.xlu0 0
      %328 = vperm.xlu0 %327, %v209
      %v329 = vpop.permute.xlu0 %328
      %330 = vset.pattern.permute.xlu0 0
      %331 = vperm.xlu0 %330, %v210
      %v332 = vpop.permute.xlu0 %331
      %333 = vset.pattern.permute.xlu0 0
      %334 = vperm.xlu0 %333, %v211
      %v335 = vpop.permute.xlu0 %334
      %336 = vset.pattern.permute.xlu0 0
      %337 = vperm.xlu0 %336, %v212
      %v338 = vpop.permute.xlu0 %337
      %339 = vset.pattern.permute.xlu0 0
      %340 = vperm.xlu0 %339, %v213
      %v341 = vpop.permute.xlu0 %340
      %vm342 = vcmp.eq.s32.totalorder %v287, %v293
      %vm343 = vcmp.eq.s32.totalorder %v288, %v293
      %vm344 = vcmp.eq.s32.totalorder %v287, %v296
      %vm345 = vcmp.eq.s32.totalorder %v288, %v296
      %vm346 = vcmp.eq.s32.totalorder %v287, %v299
      %vm347 = vcmp.eq.s32.totalorder %v288, %v299
      %vm348 = vcmp.eq.s32.totalorder %v287, %v302
      %vm349 = vcmp.eq.s32.totalorder %v288, %v302
      %vm350 = vcmp.eq.s32.totalorder %v287, %v305
      %vm351 = vcmp.eq.s32.totalorder %v288, %v305
      %vm352 = vcmp.eq.s32.totalorder %v287, %v308
      %vm353 = vcmp.eq.s32.totalorder %v288, %v308
      %vm354 = vcmp.eq.s32.totalorder %v287, %v311
      %vm355 = vcmp.eq.s32.totalorder %v288, %v311
      %vm356 = vcmp.eq.s32.totalorder %v287, %v314
      %vm357 = vcmp.eq.s32.totalorder %v288, %v314
      %vm358 = vcmp.eq.s32.totalorder %v287, %v317
      %vm359 = vcmp.eq.s32.totalorder %v288, %v317
      %vm360 = vcmp.eq.s32.totalorder %v287, %v320
      %vm361 = vcmp.eq.s32.totalorder %v288, %v320
      %vm362 = vcmp.eq.s32.totalorder %v287, %v323
      %vm363 = vcmp.eq.s32.totalorder %v288, %v323
      %vm364 = vcmp.eq.s32.totalorder %v287, %v326
      %vm365 = vcmp.eq.s32.totalorder %v288, %v326
      %vm366 = vcmp.eq.s32.totalorder %v287, %v329
      %vm367 = vcmp.eq.s32.totalorder %v288, %v329
      %vm368 = vcmp.eq.s32.totalorder %v287, %v332
      %vm369 = vcmp.eq.s32.totalorder %v288, %v332
      %vm370 = vcmp.eq.s32.totalorder %v287, %v335
      %vm371 = vcmp.eq.s32.totalorder %v288, %v335
      %vm372 = vcmp.eq.s32.totalorder %v287, %v338
      %vm373 = vcmp.eq.s32.totalorder %v288, %v338
      %vm374 = vcmp.eq.s32.totalorder %v287, %v341
      %vm375 = vcmp.eq.s32.totalorder %v288, %v341
      %vm376 = vmor %vm289, %vm342
      %vm377 = vmor %vm290, %vm343
      %vm378 = vmor %vm289, %vm344
      %vm379 = vmor %vm290, %vm345
      %vm380 = vmor %vm289, %vm346
      %vm381 = vmor %vm290, %vm347
      %vm382 = vmor %vm289, %vm348
      %vm383 = vmor %vm290, %vm349
      %vm384 = vmor %vm289, %vm350
      %vm385 = vmor %vm290, %vm351
      %vm386 = vmor %vm289, %vm352
      %vm387 = vmor %vm290, %vm353
      %vm388 = vmor %vm289, %vm354
      %vm389 = vmor %vm290, %vm355
      %vm390 = vmor %vm289, %vm356
      %vm391 = vmor %vm290, %vm357
      %vm392 = vmor %vm289, %vm358
      %vm393 = vmor %vm290, %vm359
      %vm394 = vmor %vm289, %vm360
      %vm395 = vmor %vm290, %vm361
      %vm396 = vmor %vm289, %vm362
      %vm397 = vmor %vm290, %vm363
      %vm398 = vmor %vm289, %vm364
      %vm399 = vmor %vm290, %vm365
      %vm400 = vmor %vm289, %vm366
      %vm401 = vmor %vm290, %vm367
      %vm402 = vmor %vm289, %vm368
      %vm403 = vmor %vm290, %vm369
      %vm404 = vmor %vm289, %vm370
      %vm405 = vmor %vm290, %vm371
      %vm406 = vmor %vm289, %vm372
      %vm407 = vmor %vm290, %vm373
      %vm408 = vmor %vm289, %vm374
      %vm409 = vmor %vm290, %vm375
      %v410 = vadd.s32 %v249, 50
      %v411 = vadd.s32 %v248, 50
      %v412 = vadd.s32 %v247, 50
      %v413 = vadd.s32 %v246, 50
      %v414 = vadd.s32 %v245, 50
      %v415 = vadd.s32 %v244, 50
      %v416 = vadd.s32 %v243, 50
      %v417 = vadd.s32 %v242, 50
      %v418 = vadd.s32 %v241, 50
      %v419 = vadd.s32 %v240, 50
      %v420 = vadd.s32 %v239, 50
      %v421 = vadd.s32 %v238, 50
      %v422 = vadd.s32 %v237, 50
      %v423 = vadd.s32 %v236, 50
      %v424 = vadd.s32 %v235, 50
      %v425 = vadd.s32 %v234, 50
      %v426 = vadd.s32 %v250, 50
      %427 = vset.pattern.permute.xlu0 0
      %428 = vperm.xlu0 %427, %v410
      %v429 = vpop.permute.xlu0 %428
      %430 = vset.pattern.permute.xlu0 0
      %431 = vperm.xlu0 %430, %v411
      %v432 = vpop.permute.xlu0 %431
      %433 = vset.pattern.permute.xlu0 0
      %434 = vperm.xlu0 %433, %v412
      %v435 = vpop.permute.xlu0 %434
      %436 = vset.pattern.permute.xlu0 0
      %437 = vperm.xlu0 %436, %v413
      %v438 = vpop.permute.xlu0 %437
      %439 = vset.pattern.permute.xlu0 0
      %440 = vperm.xlu0 %439, %v414
      %v441 = vpop.permute.xlu0 %440
      %442 = vset.pattern.permute.xlu0 0
      %443 = vperm.xlu0 %442, %v415
      %v444 = vpop.permute.xlu0 %443
      %445 = vset.pattern.permute.xlu0 0
      %446 = vperm.xlu0 %445, %v416
      %v447 = vpop.permute.xlu0 %446
      %448 = vset.pattern.permute.xlu0 0
      %449 = vperm.xlu0 %448, %v417
      %v450 = vpop.permute.xlu0 %449
      %451 = vset.pattern.permute.xlu0 0
      %452 = vperm.xlu0 %451, %v418
      %v453 = vpop.permute.xlu0 %452
      %454 = vset.pattern.permute.xlu0 0
      %455 = vperm.xlu0 %454, %v419
      %v456 = vpop.permute.xlu0 %455
      %457 = vset.pattern.permute.xlu0 0
      %458 = vperm.xlu0 %457, %v420
      %v459 = vpop.permute.xlu0 %458
      %460 = vset.pattern.permute.xlu0 0
      %461 = vperm.xlu0 %460, %v421
      %v462 = vpop.permute.xlu0 %461
      %463 = vset.pattern.permute.xlu0 0
      %464 = vperm.xlu0 %463, %v422
      %v465 = vpop.permute.xlu0 %464
      %466 = vset.pattern.permute.xlu0 0
      %467 = vperm.xlu0 %466, %v423
      %v468 = vpop.permute.xlu0 %467
      %469 = vset.pattern.permute.xlu0 0
      %470 = vperm.xlu0 %469, %v424
      %v471 = vpop.permute.xlu0 %470
      %472 = vset.pattern.permute.xlu0 0
      %473 = vperm.xlu0 %472, %v425
      %v474 = vpop.permute.xlu0 %473
      %475 = vset.pattern.permute.xlu0 0
      %476 = vperm.xlu0 %475, %v426
      %v477 = vpop.permute.xlu0 %476
      %vm478 = vcmp.eq.s32.totalorder %v287, %v429
      %vm479 = vcmp.eq.s32.totalorder %v288, %v429
      %vm480 = vcmp.eq.s32.totalorder %v287, %v432
      %vm481 = vcmp.eq.s32.totalorder %v288, %v432
      %vm482 = vcmp.eq.s32.totalorder %v287, %v435
      %vm483 = vcmp.eq.s32.totalorder %v288, %v435
      %vm484 = vcmp.eq.s32.totalorder %v287, %v438
      %vm485 = vcmp.eq.s32.totalorder %v288, %v438
      %vm486 = vcmp.eq.s32.totalorder %v287, %v441
      %vm487 = vcmp.eq.s32.totalorder %v288, %v441
      %vm488 = vcmp.eq.s32.totalorder %v287, %v444
      %vm489 = vcmp.eq.s32.totalorder %v288, %v444
      %vm490 = vcmp.eq.s32.totalorder %v287, %v447
      %vm491 = vcmp.eq.s32.totalorder %v288, %v447
      %vm492 = vcmp.eq.s32.totalorder %v287, %v450
      %vm493 = vcmp.eq.s32.totalorder %v288, %v450
      %vm494 = vcmp.eq.s32.totalorder %v287, %v453
      %vm495 = vcmp.eq.s32.totalorder %v288, %v453
      %vm496 = vcmp.eq.s32.totalorder %v287, %v456
      %vm497 = vcmp.eq.s32.totalorder %v288, %v456
      %vm498 = vcmp.eq.s32.totalorder %v287, %v459
      %vm499 = vcmp.eq.s32.totalorder %v288, %v459
      %vm500 = vcmp.eq.s32.totalorder %v287, %v462
      %vm501 = vcmp.eq.s32.totalorder %v288, %v462
      %vm502 = vcmp.eq.s32.totalorder %v287, %v465
      %vm503 = vcmp.eq.s32.totalorder %v288, %v465
      %vm504 = vcmp.eq.s32.totalorder %v287, %v468
      %vm505 = vcmp.eq.s32.totalorder %v288, %v468
      %vm506 = vcmp.eq.s32.totalorder %v287, %v471
      %vm507 = vcmp.eq.s32.totalorder %v288, %v471
      %vm508 = vcmp.eq.s32.totalorder %v287, %v474
      %vm509 = vcmp.eq.s32.totalorder %v288, %v474
      %vm510 = vcmp.eq.s32.totalorder %v287, %v477
      %vm511 = vcmp.eq.s32.totalorder %v288, %v477
      %vm512 = vmor %vm376, %vm478
      %vm513 = vmor %vm377, %vm479
      %vm514 = vmor %vm378, %vm480
      %vm515 = vmor %vm379, %vm481
      %vm516 = vmor %vm380, %vm482
      %vm517 = vmor %vm381, %vm483
      %vm518 = vmor %vm382, %vm484
      %vm519 = vmor %vm383, %vm485
      %vm520 = vmor %vm384, %vm486
      %vm521 = vmor %vm385, %vm487
      %vm522 = vmor %vm386, %vm488
      %vm523 = vmor %vm387, %vm489
      %vm524 = vmor %vm388, %vm490
      %vm525 = vmor %vm389, %vm491
      %vm526 = vmor %vm390, %vm492
      %vm527 = vmor %vm391, %vm493
      %vm528 = vmor %vm392, %vm494
      %vm529 = vmor %vm393, %vm495
      %vm530 = vmor %vm394, %vm496
      %vm531 = vmor %vm395, %vm497
      %vm532 = vmor %vm396, %vm498
      %vm533 = vmor %vm397, %vm499
      %vm534 = vmor %vm398, %vm500
      %vm535 = vmor %vm399, %vm501
      %vm536 = vmor %vm400, %vm502
      %vm537 = vmor %vm401, %vm503
      %vm538 = vmor %vm402, %vm504
      %vm539 = vmor %vm403, %vm505
      %vm540 = vmor %vm404, %vm506
      %vm541 = vmor %vm405, %vm507
      %vm542 = vmor %vm406, %vm508
      %vm543 = vmor %vm407, %vm509
      %vm544 = vmor %vm408, %vm510
      %vm545 = vmor %vm409, %vm511
      %v546 = vadd.s32 %v284, 100
      %v547 = vadd.s32 %v283, 100
      %v548 = vadd.s32 %v282, 100
      %v549 = vadd.s32 %v281, 100
      %v550 = vadd.s32 %v280, 100
      %v551 = vadd.s32 %v279, 100
      %v552 = vadd.s32 %v278, 100
      %v553 = vadd.s32 %v277, 100
      %v554 = vadd.s32 %v276, 100
      %v555 = vadd.s32 %v275, 100
      %v556 = vadd.s32 %v274, 100
      %v557 = vadd.s32 %v273, 100
      %v558 = vadd.s32 %v272, 100
      %v559 = vadd.s32 %v271, 100
      %v560 = vadd.s32 %v270, 100
      %v561 = vadd.s32 %v269, 100
      %v562 = vadd.s32 %v285, 100
      %563 = vset.pattern.permute.xlu0 0
      %564 = vperm.xlu0 %563, %v546
      %v565 = vpop.permute.xlu0 %564
      %566 = vset.pattern.permute.xlu0 0
      %567 = vperm.xlu0 %566, %v547
      %v568 = vpop.permute.xlu0 %567
      %569 = vset.pattern.permute.xlu0 0
      %570 = vperm.xlu0 %569, %v548
      %v571 = vpop.permute.xlu0 %570
      %572 = vset.pattern.permute.xlu0 0
      %573 = vperm.xlu0 %572, %v549
      %v574 = vpop.permute.xlu0 %573
      %575 = vset.pattern.permute.xlu0 0
      %576 = vperm.xlu0 %575, %v550
      %v577 = vpop.permute.xlu0 %576
      %578 = vset.pattern.permute.xlu0 0
      %579 = vperm.xlu0 %578, %v551
      %v580 = vpop.permute.xlu0 %579
      %581 = vset.pattern.permute.xlu0 0
      %582 = vperm.xlu0 %581, %v552
      %v583 = vpop.permute.xlu0 %582
      %584 = vset.pattern.permute.xlu0 0
      %585 = vperm.xlu0 %584, %v553
      %v586 = vpop.permute.xlu0 %585
      %587 = vset.pattern.permute.xlu0 0
      %588 = vperm.xlu0 %587, %v554
      %v589 = vpop.permute.xlu0 %588
      %590 = vset.pattern.permute.xlu0 0
      %591 = vperm.xlu0 %590, %v555
      %v592 = vpop.permute.xlu0 %591
      %593 = vset.pattern.permute.xlu0 0
      %594 = vperm.xlu0 %593, %v556
      %v595 = vpop.permute.xlu0 %594
      %596 = vset.pattern.permute.xlu0 0
      %597 = vperm.xlu0 %596, %v557
      %v598 = vpop.permute.xlu0 %597
      %599 = vset.pattern.permute.xlu0 0
      %600 = vperm.xlu0 %599, %v558
      %v601 = vpop.permute.xlu0 %600
      %602 = vset.pattern.permute.xlu0 0
      %603 = vperm.xlu0 %602, %v559
      %v604 = vpop.permute.xlu0 %603
      %605 = vset.pattern.permute.xlu0 0
      %606 = vperm.xlu0 %605, %v560
      %v607 = vpop.permute.xlu0 %606
      %608 = vset.pattern.permute.xlu0 0
      %609 = vperm.xlu0 %608, %v561
      %v610 = vpop.permute.xlu0 %609
      %611 = vset.pattern.permute.xlu0 0
      %612 = vperm.xlu0 %611, %v562
      %v613 = vpop.permute.xlu0 %612
      %vm614 = vcmp.eq.s32.totalorder %v287, %v565
      %vm615 = vcmp.eq.s32.totalorder %v288, %v565
      %vm616 = vcmp.eq.s32.totalorder %v287, %v568
      %vm617 = vcmp.eq.s32.totalorder %v288, %v568
      %vm618 = vcmp.eq.s32.totalorder %v287, %v571
      %vm619 = vcmp.eq.s32.totalorder %v288, %v571
      %vm620 = vcmp.eq.s32.totalorder %v287, %v574
      %vm621 = vcmp.eq.s32.totalorder %v288, %v574
      %vm622 = vcmp.eq.s32.totalorder %v287, %v577
      %vm623 = vcmp.eq.s32.totalorder %v288, %v577
      %vm624 = vcmp.eq.s32.totalorder %v287, %v580
      %vm625 = vcmp.eq.s32.totalorder %v288, %v580
      %vm626 = vcmp.eq.s32.totalorder %v287, %v583
      %vm627 = vcmp.eq.s32.totalorder %v288, %v583
      %vm628 = vcmp.eq.s32.totalorder %v287, %v586
      %vm629 = vcmp.eq.s32.totalorder %v288, %v586
      %vm630 = vcmp.eq.s32.totalorder %v287, %v589
      %vm631 = vcmp.eq.s32.totalorder %v288, %v589
      %vm632 = vcmp.eq.s32.totalorder %v287, %v592
      %vm633 = vcmp.eq.s32.totalorder %v288, %v592
      %vm634 = vcmp.eq.s32.totalorder %v287, %v595
      %vm635 = vcmp.eq.s32.totalorder %v288, %v595
      %vm636 = vcmp.eq.s32.totalorder %v287, %v598
      %vm637 = vcmp.eq.s32.totalorder %v288, %v598
      %vm638 = vcmp.eq.s32.totalorder %v287, %v601
      %vm639 = vcmp.eq.s32.totalorder %v288, %v601
      %vm640 = vcmp.eq.s32.totalorder %v287, %v604
      %vm641 = vcmp.eq.s32.totalorder %v288, %v604
      %vm642 = vcmp.eq.s32.totalorder %v287, %v607
      %vm643 = vcmp.eq.s32.totalorder %v288, %v607
      %vm644 = vcmp.eq.s32.totalorder %v287, %v610
      %vm645 = vcmp.eq.s32.totalorder %v288, %v610
      %vm646 = vcmp.eq.s32.totalorder %v287, %v613
      %vm647 = vcmp.eq.s32.totalorder %v288, %v613
      %vm648 = vmor %vm512, %vm614
      %vm649 = vmor %vm513, %vm615
      %vm650 = vmor %vm514, %vm616
      %vm651 = vmor %vm515, %vm617
      %vm652 = vmor %vm516, %vm618
      %vm653 = vmor %vm517, %vm619
      %vm654 = vmor %vm518, %vm620
      %vm655 = vmor %vm519, %vm621
      %vm656 = vmor %vm520, %vm622
      %vm657 = vmor %vm521, %vm623
      %vm658 = vmor %vm522, %vm624
      %vm659 = vmor %vm523, %vm625
      %vm660 = vmor %vm524, %vm626
      %vm661 = vmor %vm525, %vm627
      %vm662 = vmor %vm526, %vm628
      %vm663 = vmor %vm527, %vm629
      %vm664 = vmor %vm528, %vm630
      %vm665 = vmor %vm529, %vm631
      %vm666 = vmor %vm530, %vm632
      %vm667 = vmor %vm531, %vm633
      %vm668 = vmor %vm532, %vm634
      %vm669 = vmor %vm533, %vm635
      %vm670 = vmor %vm534, %vm636
      %vm671 = vmor %vm535, %vm637
      %vm672 = vmor %vm536, %vm638
      %vm673 = vmor %vm537, %vm639
      %vm674 = vmor %vm538, %vm640
      %vm675 = vmor %vm539, %vm641
      %vm676 = vmor %vm540, %vm642
      %vm677 = vmor %vm541, %vm643
      %vm678 = vmor %vm542, %vm644
      %vm679 = vmor %vm543, %vm645
      %vm680 = vmor %vm544, %vm646
      %vm681 = vmor %vm545, %vm647
      %v682 = vsel %vm648, 1, 0
      %v683 = vsel %vm649, 1, 0
      %v684 = vsel %vm650, 1, 0
      %v685 = vsel %vm651, 1, 0
      %v686 = vsel %vm652, 1, 0
      %v687 = vsel %vm653, 1, 0
      %v688 = vsel %vm654, 1, 0
      %v689 = vsel %vm655, 1, 0
      %v690 = vsel %vm656, 1, 0
      %v691 = vsel %vm657, 1, 0
      %v692 = vsel %vm658, 1, 0
      %v693 = vsel %vm659, 1, 0
      %v694 = vsel %vm660, 1, 0
      %v695 = vsel %vm661, 1, 0
      %v696 = vsel %vm662, 1, 0
      %v697 = vsel %vm663, 1, 0
      %v698 = vsel %vm664, 1, 0
      %v699 = vsel %vm665, 1, 0
      %v700 = vsel %vm666, 1, 0
      %v701 = vsel %vm667, 1, 0
      %v702 = vsel %vm668, 1, 0
      %v703 = vsel %vm669, 1, 0
      %v704 = vsel %vm670, 1, 0
      %v705 = vsel %vm671, 1, 0
      %v706 = vsel %vm672, 1, 0
      %v707 = vsel %vm673, 1, 0
      %v708 = vsel %vm674, 1, 0
      %v709 = vsel %vm675, 1, 0
      %v710 = vsel %vm676, 1, 0
      %v711 = vsel %vm677, 1, 0
      %v712 = vsel %vm678, 1, 0
      %v713 = vsel %vm679, 1, 0
      %v714 = vsel %vm680, 1, 0
      %v715 = vsel %vm681, 1, 0
      %v716 = vcvt.s32.f32 %v682
      %v717 = vcvt.s32.f32 %v683
      %v718 = vcvt.s32.f32 %v684
      %v719 = vcvt.s32.f32 %v685
      %v720 = vcvt.s32.f32 %v686
      %v721 = vcvt.s32.f32 %v687
      %v722 = vcvt.s32.f32 %v688
      %v723 = vcvt.s32.f32 %v689
      %v724 = vcvt.s32.f32 %v690
      %v725 = vcvt.s32.f32 %v691
      %v726 = vcvt.s32.f32 %v692
      %v727 = vcvt.s32.f32 %v693
      %v728 = vcvt.s32.f32 %v694
      %v729 = vcvt.s32.f32 %v695
      %v730 = vcvt.s32.f32 %v696
      %v731 = vcvt.s32.f32 %v697
      %v732 = vcvt.s32.f32 %v698
      %v733 = vcvt.s32.f32 %v699
      %v734 = vcvt.s32.f32 %v700
      %v735 = vcvt.s32.f32 %v701
      %v736 = vcvt.s32.f32 %v702
      %v737 = vcvt.s32.f32 %v703
      %v738 = vcvt.s32.f32 %v704
      %v739 = vcvt.s32.f32 %v705
      %v740 = vcvt.s32.f32 %v706
      %v741 = vcvt.s32.f32 %v707
      %v742 = vcvt.s32.f32 %v708
      %v743 = vcvt.s32.f32 %v709
      %v744 = vcvt.s32.f32 %v710
      %v745 = vcvt.s32.f32 %v711
      %v746 = vcvt.s32.f32 %v712
      %v747 = vcvt.s32.f32 %v713
      %v748 = vcvt.s32.f32 %v714
      %v749 = vcvt.s32.f32 %v715
      %750 = vset.pattern.permute.xlu0 1
      %751 = vperm.xlu0 %750, %v197
      %v752 = vpop.permute.xlu0 %751
      %753 = vset.pattern.permute.xlu0 1
      %754 = vperm.xlu0 %753, %v198
      %v755 = vpop.permute.xlu0 %754
      %756 = vset.pattern.permute.xlu0 1
      %757 = vperm.xlu0 %756, %v199
      %v758 = vpop.permute.xlu0 %757
      %759 = vset.pattern.permute.xlu0 1
      %760 = vperm.xlu0 %759, %v200
      %v761 = vpop.permute.xlu0 %760
      %762 = vset.pattern.permute.xlu0 1
      %763 = vperm.xlu0 %762, %v201
      %v764 = vpop.permute.xlu0 %763
      %765 = vset.pattern.permute.xlu0 1
      %766 = vperm.xlu0 %765, %v202
      %v767 = vpop.permute.xlu0 %766
      %768 = vset.pattern.permute.xlu0 1
      %769 = vperm.xlu0 %768, %v203
      %v770 = vpop.permute.xlu0 %769
      %771 = vset.pattern.permute.xlu0 1
      %772 = vperm.xlu0 %771, %v204
      %v773 = vpop.permute.xlu0 %772
      %774 = vset.pattern.permute.xlu0 1
      %775 = vperm.xlu0 %774, %v205
      %v776 = vpop.permute.xlu0 %775
      %777 = vset.pattern.permute.xlu0 1
      %778 = vperm.xlu0 %777, %v206
      %v779 = vpop.permute.xlu0 %778
      %780 = vset.pattern.permute.xlu0 1
      %781 = vperm.xlu0 %780, %v207
      %v782 = vpop.permute.xlu0 %781
      %783 = vset.pattern.permute.xlu0 1
      %784 = vperm.xlu0 %783, %v208
      %v785 = vpop.permute.xlu0 %784
      %786 = vset.pattern.permute.xlu0 1
      %787 = vperm.xlu0 %786, %v209
      %v788 = vpop.permute.xlu0 %787
      %789 = vset.pattern.permute.xlu0 1
      %790 = vperm.xlu0 %789, %v210
      %v791 = vpop.permute.xlu0 %790
      %792 = vset.pattern.permute.xlu0 1
      %793 = vperm.xlu0 %792, %v211
      %v794 = vpop.permute.xlu0 %793
      %795 = vset.pattern.permute.xlu0 1
      %796 = vperm.xlu0 %795, %v212
      %v797 = vpop.permute.xlu0 %796
      %798 = vset.pattern.permute.xlu0 1
      %799 = vperm.xlu0 %798, %v213
      %v800 = vpop.permute.xlu0 %799
      %vm801 = vcmp.eq.s32.totalorder %v287, %v752
      %vm802 = vcmp.eq.s32.totalorder %v288, %v752
      %vm803 = vcmp.eq.s32.totalorder %v287, %v755
      %vm804 = vcmp.eq.s32.totalorder %v288, %v755
      %vm805 = vcmp.eq.s32.totalorder %v287, %v758
      %vm806 = vcmp.eq.s32.totalorder %v288, %v758
      %vm807 = vcmp.eq.s32.totalorder %v287, %v761
      %vm808 = vcmp.eq.s32.totalorder %v288, %v761
      %vm809 = vcmp.eq.s32.totalorder %v287, %v764
      %vm810 = vcmp.eq.s32.totalorder %v288, %v764
      %vm811 = vcmp.eq.s32.totalorder %v287, %v767
      %vm812 = vcmp.eq.s32.totalorder %v288, %v767
      %vm813 = vcmp.eq.s32.totalorder %v287, %v770
      %vm814 = vcmp.eq.s32.totalorder %v288, %v770
      %vm815 = vcmp.eq.s32.totalorder %v287, %v773
      %vm816 = vcmp.eq.s32.totalorder %v288, %v773
      %vm817 = vcmp.eq.s32.totalorder %v287, %v776
      %vm818 = vcmp.eq.s32.totalorder %v288, %v776
      %vm819 = vcmp.eq.s32.totalorder %v287, %v779
      %vm820 = vcmp.eq.s32.totalorder %v288, %v779
      %vm821 = vcmp.eq.s32.totalorder %v287, %v782
      %vm822 = vcmp.eq.s32.totalorder %v288, %v782
      %vm823 = vcmp.eq.s32.totalorder %v287, %v785
      %vm824 = vcmp.eq.s32.totalorder %v288, %v785
      %vm825 = vcmp.eq.s32.totalorder %v287, %v788
      %vm826 = vcmp.eq.s32.totalorder %v288, %v788
      %vm827 = vcmp.eq.s32.totalorder %v287, %v791
      %vm828 = vcmp.eq.s32.totalorder %v288, %v791
      %vm829 = vcmp.eq.s32.totalorder %v287, %v794
      %vm830 = vcmp.eq.s32.totalorder %v288, %v794
      %vm831 = vcmp.eq.s32.totalorder %v287, %v797
      %vm832 = vcmp.eq.s32.totalorder %v288, %v797
      %vm833 = vcmp.eq.s32.totalorder %v287, %v800
      %vm834 = vcmp.eq.s32.totalorder %v288, %v800
      %vm835 = vmor %vm289, %vm801
      %vm836 = vmor %vm290, %vm802
      %vm837 = vmor %vm289, %vm803
      %vm838 = vmor %vm290, %vm804
      %vm839 = vmor %vm289, %vm805
      %vm840 = vmor %vm290, %vm806
      %vm841 = vmor %vm289, %vm807
      %vm842 = vmor %vm290, %vm808
      %vm843 = vmor %vm289, %vm809
      %vm844 = vmor %vm290, %vm810
      %vm845 = vmor %vm289, %vm811
      %vm846 = vmor %vm290, %vm812
      %vm847 = vmor %vm289, %vm813
      %vm848 = vmor %vm290, %vm814
      %vm849 = vmor %vm289, %vm815
      %vm850 = vmor %vm290, %vm816
      %vm851 = vmor %vm289, %vm817
      %vm852 = vmor %vm290, %vm818
      %vm853 = vmor %vm289, %vm819
      %vm854 = vmor %vm290, %vm820
      %vm855 = vmor %vm289, %vm821
      %vm856 = vmor %vm290, %vm822
      %vm857 = vmor %vm289, %vm823
      %vm858 = vmor %vm290, %vm824
      %vm859 = vmor %vm289, %vm825
      %vm860 = vmor %vm290, %vm826
      %vm861 = vmor %vm289, %vm827
      %vm862 = vmor %vm290, %vm828
      %vm863 = vmor %vm289, %vm829
      %vm864 = vmor %vm290, %vm830
      %vm865 = vmor %vm289, %vm831
      %vm866 = vmor %vm290, %vm832
      %vm867 = vmor %vm289, %vm833
      %vm868 = vmor %vm290, %vm834
      %869 = vset.pattern.permute.xlu0 1
      %870 = vperm.xlu0 %869, %v410
      %v871 = vpop.permute.xlu0 %870
      %872 = vset.pattern.permute.xlu0 1
      %873 = vperm.xlu0 %872, %v411
      %v874 = vpop.permute.xlu0 %873
      %875 = vset.pattern.permute.xlu0 1
      %876 = vperm.xlu0 %875, %v412
      %v877 = vpop.permute.xlu0 %876
      %878 = vset.pattern.permute.xlu0 1
      %879 = vperm.xlu0 %878, %v413
      %v880 = vpop.permute.xlu0 %879
      %881 = vset.pattern.permute.xlu0 1
      %882 = vperm.xlu0 %881, %v414
      %v883 = vpop.permute.xlu0 %882
      %884 = vset.pattern.permute.xlu0 1
      %885 = vperm.xlu0 %884, %v415
      %v886 = vpop.permute.xlu0 %885
      %887 = vset.pattern.permute.xlu0 1
      %888 = vperm.xlu0 %887, %v416
      %v889 = vpop.permute.xlu0 %888
      %890 = vset.pattern.permute.xlu0 1
      %891 = vperm.xlu0 %890, %v417
      %v892 = vpop.permute.xlu0 %891
      %893 = vset.pattern.permute.xlu0 1
      %894 = vperm.xlu0 %893, %v418
      %v895 = vpop.permute.xlu0 %894
      %896 = vset.pattern.permute.xlu0 1
      %897 = vperm.xlu0 %896, %v419
      %v898 = vpop.permute.xlu0 %897
      %899 = vset.pattern.permute.xlu0 1
      %900 = vperm.xlu0 %899, %v420
      %v901 = vpop.permute.xlu0 %900
      %902 = vset.pattern.permute.xlu0 1
      %903 = vperm.xlu0 %902, %v421
      %v904 = vpop.permute.xlu0 %903
      %905 = vset.pattern.permute.xlu0 1
      %906 = vperm.xlu0 %905, %v422
      %v907 = vpop.permute.xlu0 %906
      %908 = vset.pattern.permute.xlu0 1
      %909 = vperm.xlu0 %908, %v423
      %v910 = vpop.permute.xlu0 %909
      %911 = vset.pattern.permute.xlu0 1
      %912 = vperm.xlu0 %911, %v424
      %v913 = vpop.permute.xlu0 %912
      %914 = vset.pattern.permute.xlu0 1
      %915 = vperm.xlu0 %914, %v425
      %v916 = vpop.permute.xlu0 %915
      %917 = vset.pattern.permute.xlu0 1
      %918 = vperm.xlu0 %917, %v426
      %v919 = vpop.permute.xlu0 %918
      %vm920 = vcmp.eq.s32.totalorder %v287, %v871
      %vm921 = vcmp.eq.s32.totalorder %v288, %v871
      %vm922 = vcmp.eq.s32.totalorder %v287, %v874
      %vm923 = vcmp.eq.s32.totalorder %v288, %v874
      %vm924 = vcmp.eq.s32.totalorder %v287, %v877
      %vm925 = vcmp.eq.s32.totalorder %v288, %v877
      %vm926 = vcmp.eq.s32.totalorder %v287, %v880
      %vm927 = vcmp.eq.s32.totalorder %v288, %v880
      %vm928 = vcmp.eq.s32.totalorder %v287, %v883
      %vm929 = vcmp.eq.s32.totalorder %v288, %v883
      %vm930 = vcmp.eq.s32.totalorder %v287, %v886
      %vm931 = vcmp.eq.s32.totalorder %v288, %v886
      %vm932 = vcmp.eq.s32.totalorder %v287, %v889
      %vm933 = vcmp.eq.s32.totalorder %v288, %v889
      %vm934 = vcmp.eq.s32.totalorder %v287, %v892
      %vm935 = vcmp.eq.s32.totalorder %v288, %v892
      %vm936 = vcmp.eq.s32.totalorder %v287, %v895
      %vm937 = vcmp.eq.s32.totalorder %v288, %v895
      %vm938 = vcmp.eq.s32.totalorder %v287, %v898
      %vm939 = vcmp.eq.s32.totalorder %v288, %v898
      %vm940 = vcmp.eq.s32.totalorder %v287, %v901
      %vm941 = vcmp.eq.s32.totalorder %v288, %v901
      %vm942 = vcmp.eq.s32.totalorder %v287, %v904
      %vm943 = vcmp.eq.s32.totalorder %v288, %v904
      %vm944 = vcmp.eq.s32.totalorder %v287, %v907
      %vm945 = vcmp.eq.s32.totalorder %v288, %v907
      %vm946 = vcmp.eq.s32.totalorder %v287, %v910
      %vm947 = vcmp.eq.s32.totalorder %v288, %v910
      %vm948 = vcmp.eq.s32.totalorder %v287, %v913
      %vm949 = vcmp.eq.s32.totalorder %v288, %v913
      %vm950 = vcmp.eq.s32.totalorder %v287, %v916
      %vm951 = vcmp.eq.s32.totalorder %v288, %v916
      %vm952 = vcmp.eq.s32.totalorder %v287, %v919
      %vm953 = vcmp.eq.s32.totalorder %v288, %v919
      %vm954 = vmor %vm835, %vm920
      %vm955 = vmor %vm836, %vm921
      %vm956 = vmor %vm837, %vm922
      %vm957 = vmor %vm838, %vm923
      %vm958 = vmor %vm839, %vm924
      %vm959 = vmor %vm840, %vm925
      %vm960 = vmor %vm841, %vm926
      %vm961 = vmor %vm842, %vm927
      %vm962 = vmor %vm843, %vm928
      %vm963 = vmor %vm844, %vm929
      %vm964 = vmor %vm845, %vm930
      %vm965 = vmor %vm846, %vm931
      %vm966 = vmor %vm847, %vm932
      %vm967 = vmor %vm848, %vm933
      %vm968 = vmor %vm849, %vm934
      %vm969 = vmor %vm850, %vm935
      %vm970 = vmor %vm851, %vm936
      %vm971 = vmor %vm852, %vm937
      %vm972 = vmor %vm853, %vm938
      %vm973 = vmor %vm854, %vm939
      %vm974 = vmor %vm855, %vm940
      %vm975 = vmor %vm856, %vm941
      %vm976 = vmor %vm857, %vm942
      %vm977 = vmor %vm858, %vm943
      %vm978 = vmor %vm859, %vm944
      %vm979 = vmor %vm860, %vm945
      %vm980 = vmor %vm861, %vm946
      %vm981 = vmor %vm862, %vm947
      %vm982 = vmor %vm863, %vm948
      %vm983 = vmor %vm864, %vm949
      %vm984 = vmor %vm865, %vm950
      %vm985 = vmor %vm866, %vm951
      %vm986 = vmor %vm867, %vm952
      %vm987 = vmor %vm868, %vm953
      %988 = vset.pattern.permute.xlu0 1
      %989 = vperm.xlu0 %988, %v546
      %v990 = vpop.permute.xlu0 %989
      %991 = vset.pattern.permute.xlu0 1
      %992 = vperm.xlu0 %991, %v547
      %v993 = vpop.permute.xlu0 %992
      %994 = vset.pattern.permute.xlu0 1
      %995 = vperm.xlu0 %994, %v548
      %v996 = vpop.permute.xlu0 %995
      %997 = vset.pattern.permute.xlu0 1
      %998 = vperm.xlu0 %997, %v549
      %v999 = vpop.permute.xlu0 %998
      %1000 = vset.pattern.permute.xlu0 1
      %1001 = vperm.xlu0 %1000, %v550
      %v1002 = vpop.permute.xlu0 %1001
      %1003 = vset.pattern.permute.xlu0 1
      %1004 = vperm.xlu0 %1003, %v551
      %v1005 = vpop.permute.xlu0 %1004
      %1006 = vset.pattern.permute.xlu0 1
      %1007 = vperm.xlu0 %1006, %v552
      %v1008 = vpop.permute.xlu0 %1007
      %1009 = vset.pattern.permute.xlu0 1
      %1010 = vperm.xlu0 %1009, %v553
      %v1011 = vpop.permute.xlu0 %1010
      %1012 = vset.pattern.permute.xlu0 1
      %1013 = vperm.xlu0 %1012, %v554
      %v1014 = vpop.permute.xlu0 %1013
      %1015 = vset.pattern.permute.xlu0 1
      %1016 = vperm.xlu0 %1015, %v555
      %v1017 = vpop.permute.xlu0 %1016
      %1018 = vset.pattern.permute.xlu0 1
      %1019 = vperm.xlu0 %1018, %v556
      %v1020 = vpop.permute.xlu0 %1019
      %1021 = vset.pattern.permute.xlu0 1
      %1022 = vperm.xlu0 %1021, %v557
      %v1023 = vpop.permute.xlu0 %1022
      %1024 = vset.pattern.permute.xlu0 1
      %1025 = vperm.xlu0 %1024, %v558
      %v1026 = vpop.permute.xlu0 %1025
      %1027 = vset.pattern.permute.xlu0 1
      %1028 = vperm.xlu0 %1027, %v559
      %v1029 = vpop.permute.xlu0 %1028
      %1030 = vset.pattern.permute.xlu0 1
      %1031 = vperm.xlu0 %1030, %v560
      %v1032 = vpop.permute.xlu0 %1031
      %1033 = vset.pattern.permute.xlu0 1
      %1034 = vperm.xlu0 %1033, %v561
      %v1035 = vpop.permute.xlu0 %1034
      %1036 = vset.pattern.permute.xlu0 1
      %1037 = vperm.xlu0 %1036, %v562
      %v1038 = vpop.permute.xlu0 %1037
      %vm1039 = vcmp.eq.s32.totalorder %v287, %v990
      %vm1040 = vcmp.eq.s32.totalorder %v288, %v990
      %vm1041 = vcmp.eq.s32.totalorder %v287, %v993
      %vm1042 = vcmp.eq.s32.totalorder %v288, %v993
      %vm1043 = vcmp.eq.s32.totalorder %v287, %v996
      %vm1044 = vcmp.eq.s32.totalorder %v288, %v996
      %vm1045 = vcmp.eq.s32.totalorder %v287, %v999
      %vm1046 = vcmp.eq.s32.totalorder %v288, %v999
      %vm1047 = vcmp.eq.s32.totalorder %v287, %v1002
      %vm1048 = vcmp.eq.s32.totalorder %v288, %v1002
      %vm1049 = vcmp.eq.s32.totalorder %v287, %v1005
      %vm1050 = vcmp.eq.s32.totalorder %v288, %v1005
      %vm1051 = vcmp.eq.s32.totalorder %v287, %v1008
      %vm1052 = vcmp.eq.s32.totalorder %v288, %v1008
      %vm1053 = vcmp.eq.s32.totalorder %v287, %v1011
      %vm1054 = vcmp.eq.s32.totalorder %v288, %v1011
      %vm1055 = vcmp.eq.s32.totalorder %v287, %v1014
      %vm1056 = vcmp.eq.s32.totalorder %v288, %v1014
      %vm1057 = vcmp.eq.s32.totalorder %v287, %v1017
      %vm1058 = vcmp.eq.s32.totalorder %v288, %v1017
      %vm1059 = vcmp.eq.s32.totalorder %v287, %v1020
      %vm1060 = vcmp.eq.s32.totalorder %v288, %v1020
      %vm1061 = vcmp.eq.s32.totalorder %v287, %v1023
      %vm1062 = vcmp.eq.s32.totalorder %v288, %v1023
      %vm1063 = vcmp.eq.s32.totalorder %v287, %v1026
      %vm1064 = vcmp.eq.s32.totalorder %v288, %v1026
      %vm1065 = vcmp.eq.s32.totalorder %v287, %v1029
      %vm1066 = vcmp.eq.s32.totalorder %v288, %v1029
      %vm1067 = vcmp.eq.s32.totalorder %v287, %v1032
      %vm1068 = vcmp.eq.s32.totalorder %v288, %v1032
      %vm1069 = vcmp.eq.s32.totalorder %v287, %v1035
      %vm1070 = vcmp.eq.s32.totalorder %v288, %v1035
      %vm1071 = vcmp.eq.s32.totalorder %v287, %v1038
      %vm1072 = vcmp.eq.s32.totalorder %v288, %v1038
      %vm1073 = vmor %vm954, %vm1039
      %vm1074 = vmor %vm955, %vm1040
      %vm1075 = vmor %vm956, %vm1041
      %vm1076 = vmor %vm957, %vm1042
      %vm1077 = vmor %vm958, %vm1043
      %vm1078 = vmor %vm959, %vm1044
      %vm1079 = vmor %vm960, %vm1045
      %vm1080 = vmor %vm961, %vm1046
      %vm1081 = vmor %vm962, %vm1047
      %vm1082 = vmor %vm963, %vm1048
      %vm1083 = vmor %vm964, %vm1049
      %vm1084 = vmor %vm965, %vm1050
      %vm1085 = vmor %vm966, %vm1051
      %vm1086 = vmor %vm967, %vm1052
      %vm1087 = vmor %vm968, %vm1053
      %vm1088 = vmor %vm969, %vm1054
      %vm1089 = vmor %vm970, %vm1055
      %vm1090 = vmor %vm971, %vm1056
      %vm1091 = vmor %vm972, %vm1057
      %vm1092 = vmor %vm973, %vm1058
      %vm1093 = vmor %vm974, %vm1059
      %vm1094 = vmor %vm975, %vm1060
      %vm1095 = vmor %vm976, %vm1061
      %vm1096 = vmor %vm977, %vm1062
      %vm1097 = vmor %vm978, %vm1063
      %vm1098 = vmor %vm979, %vm1064
      %vm1099 = vmor %vm980, %vm1065
      %vm1100 = vmor %vm981, %vm1066
      %vm1101 = vmor %vm982, %vm1067
      %vm1102 = vmor %vm983, %vm1068
      %vm1103 = vmor %vm984, %vm1069
      %vm1104 = vmor %vm985, %vm1070
      %vm1105 = vmor %vm986, %vm1071
      %vm1106 = vmor %vm987, %vm1072
      %v1107 = vsel %vm1073, 1, 0
      %v1108 = vsel %vm1074, 1, 0
      %v1109 = vsel %vm1075, 1, 0
      %v1110 = vsel %vm1076, 1, 0
      %v1111 = vsel %vm1077, 1, 0
      %v1112 = vsel %vm1078, 1, 0
      %v1113 = vsel %vm1079, 1, 0
      %v1114 = vsel %vm1080, 1, 0
      %v1115 = vsel %vm1081, 1, 0
      %v1116 = vsel %vm1082, 1, 0
      %v1117 = vsel %vm1083, 1, 0
      %v1118 = vsel %vm1084, 1, 0
      %v1119 = vsel %vm1085, 1, 0
      %v1120 = vsel %vm1086, 1, 0
      %v1121 = vsel %vm1087, 1, 0
      %v1122 = vsel %vm1088, 1, 0
      %v1123 = vsel %vm1089, 1, 0
      %v1124 = vsel %vm1090, 1, 0
      %v1125 = vsel %vm1091, 1, 0
      %v1126 = vsel %vm1092, 1, 0
      %v1127 = vsel %vm1093, 1, 0
      %v1128 = vsel %vm1094, 1, 0
      %v1129 = vsel %vm1095, 1, 0
      %v1130 = vsel %vm1096, 1, 0
      %v1131 = vsel %vm1097, 1, 0
      %v1132 = vsel %vm1098, 1, 0
      %v1133 = vsel %vm1099, 1, 0
      %v1134 = vsel %vm1100, 1, 0
      %v1135 = vsel %vm1101, 1, 0
      %v1136 = vsel %vm1102, 1, 0
      %v1137 = vsel %vm1103, 1, 0
      %v1138 = vsel %vm1104, 1, 0
      %v1139 = vsel %vm1105, 1, 0
      %v1140 = vsel %vm1106, 1, 0
      %v1141 = vcvt.s32.f32 %v1107
      %v1142 = vcvt.s32.f32 %v1108
      %v1143 = vcvt.s32.f32 %v1109
      %v1144 = vcvt.s32.f32 %v1110
      %v1145 = vcvt.s32.f32 %v1111
      %v1146 = vcvt.s32.f32 %v1112
      %v1147 = vcvt.s32.f32 %v1113
      %v1148 = vcvt.s32.f32 %v1114
      %v1149 = vcvt.s32.f32 %v1115
      %v1150 = vcvt.s32.f32 %v1116
      %v1151 = vcvt.s32.f32 %v1117
      %v1152 = vcvt.s32.f32 %v1118
      %v1153 = vcvt.s32.f32 %v1119
      %v1154 = vcvt.s32.f32 %v1120
      %v1155 = vcvt.s32.f32 %v1121
      %v1156 = vcvt.s32.f32 %v1122
      %v1157 = vcvt.s32.f32 %v1123
      %v1158 = vcvt.s32.f32 %v1124
      %v1159 = vcvt.s32.f32 %v1125
      %v1160 = vcvt.s32.f32 %v1126
      %v1161 = vcvt.s32.f32 %v1127
      %v1162 = vcvt.s32.f32 %v1128
      %v1163 = vcvt.s32.f32 %v1129
      %v1164 = vcvt.s32.f32 %v1130
      %v1165 = vcvt.s32.f32 %v1131
      %v1166 = vcvt.s32.f32 %v1132
      %v1167 = vcvt.s32.f32 %v1133
      %v1168 = vcvt.s32.f32 %v1134
      %v1169 = vcvt.s32.f32 %v1135
      %v1170 = vcvt.s32.f32 %v1136
      %v1171 = vcvt.s32.f32 %v1137
      %v1172 = vcvt.s32.f32 %v1138
      %v1173 = vcvt.s32.f32 %v1139
      %v1174 = vcvt.s32.f32 %v1140
      %1175 = vset.pattern.permute.xlu0 2
      %1176 = vperm.xlu0 %1175, %v197
      %v1177 = vpop.permute.xlu0 %1176
      %1178 = vset.pattern.permute.xlu0 2
      %1179 = vperm.xlu0 %1178, %v198
      %v1180 = vpop.permute.xlu0 %1179
      %1181 = vset.pattern.permute.xlu0 2
      %1182 = vperm.xlu0 %1181, %v199
      %v1183 = vpop.permute.xlu0 %1182
      %1184 = vset.pattern.permute.xlu0 2
      %1185 = vperm.xlu0 %1184, %v200
      %v1186 = vpop.permute.xlu0 %1185
      %1187 = vset.pattern.permute.xlu0 2
      %1188 = vperm.xlu0 %1187, %v201
      %v1189 = vpop.permute.xlu0 %1188
      %1190 = vset.pattern.permute.xlu0 2
      %1191 = vperm.xlu0 %1190, %v202
      %v1192 = vpop.permute.xlu0 %1191
      %1193 = vset.pattern.permute.xlu0 2
      %1194 = vperm.xlu0 %1193, %v203
      %v1195 = vpop.permute.xlu0 %1194
      %1196 = vset.pattern.permute.xlu0 2
      %1197 = vperm.xlu0 %1196, %v204
      %v1198 = vpop.permute.xlu0 %1197
      %1199 = vset.pattern.permute.xlu0 2
      %1200 = vperm.xlu0 %1199, %v205
      %v1201 = vpop.permute.xlu0 %1200
      %1202 = vset.pattern.permute.xlu0 2
      %1203 = vperm.xlu0 %1202, %v206
      %v1204 = vpop.permute.xlu0 %1203
      %1205 = vset.pattern.permute.xlu0 2
      %1206 = vperm.xlu0 %1205, %v207
      %v1207 = vpop.permute.xlu0 %1206
      %1208 = vset.pattern.permute.xlu0 2
      %1209 = vperm.xlu0 %1208, %v208
      %v1210 = vpop.permute.xlu0 %1209
      %1211 = vset.pattern.permute.xlu0 2
      %1212 = vperm.xlu0 %1211, %v209
      %v1213 = vpop.permute.xlu0 %1212
      %1214 = vset.pattern.permute.xlu0 2
      %1215 = vperm.xlu0 %1214, %v210
      %v1216 = vpop.permute.xlu0 %1215
      %1217 = vset.pattern.permute.xlu0 2
      %1218 = vperm.xlu0 %1217, %v211
      %v1219 = vpop.permute.xlu0 %1218
      %1220 = vset.pattern.permute.xlu0 2
      %1221 = vperm.xlu0 %1220, %v212
      %v1222 = vpop.permute.xlu0 %1221
      %1223 = vset.pattern.permute.xlu0 2
      %1224 = vperm.xlu0 %1223, %v213
      %v1225 = vpop.permute.xlu0 %1224
      %vm1226 = vcmp.eq.s32.totalorder %v287, %v1177
      %vm1227 = vcmp.eq.s32.totalorder %v288, %v1177
      %vm1228 = vcmp.eq.s32.totalorder %v287, %v1180
      %vm1229 = vcmp.eq.s32.totalorder %v288, %v1180
      %vm1230 = vcmp.eq.s32.totalorder %v287, %v1183
      %vm1231 = vcmp.eq.s32.totalorder %v288, %v1183
      %vm1232 = vcmp.eq.s32.totalorder %v287, %v1186
      %vm1233 = vcmp.eq.s32.totalorder %v288, %v1186
      %vm1234 = vcmp.eq.s32.totalorder %v287, %v1189
      %vm1235 = vcmp.eq.s32.totalorder %v288, %v1189
      %vm1236 = vcmp.eq.s32.totalorder %v287, %v1192
      %vm1237 = vcmp.eq.s32.totalorder %v288, %v1192
      %vm1238 = vcmp.eq.s32.totalorder %v287, %v1195
      %vm1239 = vcmp.eq.s32.totalorder %v288, %v1195
      %vm1240 = vcmp.eq.s32.totalorder %v287, %v1198
      %vm1241 = vcmp.eq.s32.totalorder %v288, %v1198
      %vm1242 = vcmp.eq.s32.totalorder %v287, %v1201
      %vm1243 = vcmp.eq.s32.totalorder %v288, %v1201
      %vm1244 = vcmp.eq.s32.totalorder %v287, %v1204
      %vm1245 = vcmp.eq.s32.totalorder %v288, %v1204
      %vm1246 = vcmp.eq.s32.totalorder %v287, %v1207
      %vm1247 = vcmp.eq.s32.totalorder %v288, %v1207
      %vm1248 = vcmp.eq.s32.totalorder %v287, %v1210
      %vm1249 = vcmp.eq.s32.totalorder %v288, %v1210
      %vm1250 = vcmp.eq.s32.totalorder %v287, %v1213
      %vm1251 = vcmp.eq.s32.totalorder %v288, %v1213
      %vm1252 = vcmp.eq.s32.totalorder %v287, %v1216
      %vm1253 = vcmp.eq.s32.totalorder %v288, %v1216
      %vm1254 = vcmp.eq.s32.totalorder %v287, %v1219
      %vm1255 = vcmp.eq.s32.totalorder %v288, %v1219
      %vm1256 = vcmp.eq.s32.totalorder %v287, %v1222
      %vm1257 = vcmp.eq.s32.totalorder %v288, %v1222
      %vm1258 = vcmp.eq.s32.totalorder %v287, %v1225
      %vm1259 = vcmp.eq.s32.totalorder %v288, %v1225
      %vm1260 = vmor %vm289, %vm1226
      %vm1261 = vmor %vm290, %vm1227
      %vm1262 = vmor %vm289, %vm1228
      %vm1263 = vmor %vm290, %vm1229
      %vm1264 = vmor %vm289, %vm1230
      %vm1265 = vmor %vm290, %vm1231
      %vm1266 = vmor %vm289, %vm1232
      %vm1267 = vmor %vm290, %vm1233
      %vm1268 = vmor %vm289, %vm1234
      %vm1269 = vmor %vm290, %vm1235
      %vm1270 = vmor %vm289, %vm1236
      %vm1271 = vmor %vm290, %vm1237
      %vm1272 = vmor %vm289, %vm1238
      %vm1273 = vmor %vm290, %vm1239
      %vm1274 = vmor %vm289, %vm1240
      %vm1275 = vmor %vm290, %vm1241
      %vm1276 = vmor %vm289, %vm1242
      %vm1277 = vmor %vm290, %vm1243
      %vm1278 = vmor %vm289, %vm1244
      %vm1279 = vmor %vm290, %vm1245
      %vm1280 = vmor %vm289, %vm1246
      %vm1281 = vmor %vm290, %vm1247
      %vm1282 = vmor %vm289, %vm1248
      %vm1283 = vmor %vm290, %vm1249
      %vm1284 = vmor %vm289, %vm1250
      %vm1285 = vmor %vm290, %vm1251
      %vm1286 = vmor %vm289, %vm1252
      %vm1287 = vmor %vm290, %vm1253
      %vm1288 = vmor %vm289, %vm1254
      %vm1289 = vmor %vm290, %vm1255
      %vm1290 = vmor %vm289, %vm1256
      %vm1291 = vmor %vm290, %vm1257
      %vm1292 = vmor %vm289, %vm1258
      %vm1293 = vmor %vm290, %vm1259
      %1294 = vset.pattern.permute.xlu0 2
      %1295 = vperm.xlu0 %1294, %v410
      %v1296 = vpop.permute.xlu0 %1295
      %1297 = vset.pattern.permute.xlu0 2
      %1298 = vperm.xlu0 %1297, %v411
      %v1299 = vpop.permute.xlu0 %1298
      %1300 = vset.pattern.permute.xlu0 2
      %1301 = vperm.xlu0 %1300, %v412
      %v1302 = vpop.permute.xlu0 %1301
      %1303 = vset.pattern.permute.xlu0 2
      %1304 = vperm.xlu0 %1303, %v413
      %v1305 = vpop.permute.xlu0 %1304
      %1306 = vset.pattern.permute.xlu0 2
      %1307 = vperm.xlu0 %1306, %v414
      %v1308 = vpop.permute.xlu0 %1307
      %1309 = vset.pattern.permute.xlu0 2
      %1310 = vperm.xlu0 %1309, %v415
      %v1311 = vpop.permute.xlu0 %1310
      %1312 = vset.pattern.permute.xlu0 2
      %1313 = vperm.xlu0 %1312, %v416
      %v1314 = vpop.permute.xlu0 %1313
      %1315 = vset.pattern.permute.xlu0 2
      %1316 = vperm.xlu0 %1315, %v417
      %v1317 = vpop.permute.xlu0 %1316
      %1318 = vset.pattern.permute.xlu0 2
      %1319 = vperm.xlu0 %1318, %v418
      %v1320 = vpop.permute.xlu0 %1319
      %1321 = vset.pattern.permute.xlu0 2
      %1322 = vperm.xlu0 %1321, %v419
      %v1323 = vpop.permute.xlu0 %1322
      %1324 = vset.pattern.permute.xlu0 2
      %1325 = vperm.xlu0 %1324, %v420
      %v1326 = vpop.permute.xlu0 %1325
      %1327 = vset.pattern.permute.xlu0 2
      %1328 = vperm.xlu0 %1327, %v421
      %v1329 = vpop.permute.xlu0 %1328
      %1330 = vset.pattern.permute.xlu0 2
      %1331 = vperm.xlu0 %1330, %v422
      %v1332 = vpop.permute.xlu0 %1331
      %1333 = vset.pattern.permute.xlu0 2
      %1334 = vperm.xlu0 %1333, %v423
      %v1335 = vpop.permute.xlu0 %1334
      %1336 = vset.pattern.permute.xlu0 2
      %1337 = vperm.xlu0 %1336, %v424
      %v1338 = vpop.permute.xlu0 %1337
      %1339 = vset.pattern.permute.xlu0 2
      %1340 = vperm.xlu0 %1339, %v425
      %v1341 = vpop.permute.xlu0 %1340
      %1342 = vset.pattern.permute.xlu0 2
      %1343 = vperm.xlu0 %1342, %v426
      %v1344 = vpop.permute.xlu0 %1343
      %vm1345 = vcmp.eq.s32.totalorder %v287, %v1296
      %vm1346 = vcmp.eq.s32.totalorder %v288, %v1296
      %vm1347 = vcmp.eq.s32.totalorder %v287, %v1299
      %vm1348 = vcmp.eq.s32.totalorder %v288, %v1299
      %vm1349 = vcmp.eq.s32.totalorder %v287, %v1302
      %vm1350 = vcmp.eq.s32.totalorder %v288, %v1302
      %vm1351 = vcmp.eq.s32.totalorder %v287, %v1305
      %vm1352 = vcmp.eq.s32.totalorder %v288, %v1305
      %vm1353 = vcmp.eq.s32.totalorder %v287, %v1308
      %vm1354 = vcmp.eq.s32.totalorder %v288, %v1308
      %vm1355 = vcmp.eq.s32.totalorder %v287, %v1311
      %vm1356 = vcmp.eq.s32.totalorder %v288, %v1311
      %vm1357 = vcmp.eq.s32.totalorder %v287, %v1314
      %vm1358 = vcmp.eq.s32.totalorder %v288, %v1314
      %vm1359 = vcmp.eq.s32.totalorder %v287, %v1317
      %vm1360 = vcmp.eq.s32.totalorder %v288, %v1317
      %vm1361 = vcmp.eq.s32.totalorder %v287, %v1320
      %vm1362 = vcmp.eq.s32.totalorder %v288, %v1320
      %vm1363 = vcmp.eq.s32.totalorder %v287, %v1323
      %vm1364 = vcmp.eq.s32.totalorder %v288, %v1323
      %vm1365 = vcmp.eq.s32.totalorder %v287, %v1326
      %vm1366 = vcmp.eq.s32.totalorder %v288, %v1326
      %vm1367 = vcmp.eq.s32.totalorder %v287, %v1329
      %vm1368 = vcmp.eq.s32.totalorder %v288, %v1329
      %vm1369 = vcmp.eq.s32.totalorder %v287, %v1332
      %vm1370 = vcmp.eq.s32.totalorder %v288, %v1332
      %vm1371 = vcmp.eq.s32.totalorder %v287, %v1335
      %vm1372 = vcmp.eq.s32.totalorder %v288, %v1335
      %vm1373 = vcmp.eq.s32.totalorder %v287, %v1338
      %vm1374 = vcmp.eq.s32.totalorder %v288, %v1338
      %vm1375 = vcmp.eq.s32.totalorder %v287, %v1341
      %vm1376 = vcmp.eq.s32.totalorder %v288, %v1341
      %vm1377 = vcmp.eq.s32.totalorder %v287, %v1344
      %vm1378 = vcmp.eq.s32.totalorder %v288, %v1344
      %vm1379 = vmor %vm1260, %vm1345
      %vm1380 = vmor %vm1261, %vm1346
      %vm1381 = vmor %vm1262, %vm1347
      %vm1382 = vmor %vm1263, %vm1348
      %vm1383 = vmor %vm1264, %vm1349
      %vm1384 = vmor %vm1265, %vm1350
      %vm1385 = vmor %vm1266, %vm1351
      %vm1386 = vmor %vm1267, %vm1352
      %vm1387 = vmor %vm1268, %vm1353
      %vm1388 = vmor %vm1269, %vm1354
      %vm1389 = vmor %vm1270, %vm1355
      %vm1390 = vmor %vm1271, %vm1356
      %vm1391 = vmor %vm1272, %vm1357
      %vm1392 = vmor %vm1273, %vm1358
      %vm1393 = vmor %vm1274, %vm1359
      %vm1394 = vmor %vm1275, %vm1360
      %vm1395 = vmor %vm1276, %vm1361
      %vm1396 = vmor %vm1277, %vm1362
      %vm1397 = vmor %vm1278, %vm1363
      %vm1398 = vmor %vm1279, %vm1364
      %vm1399 = vmor %vm1280, %vm1365
      %vm1400 = vmor %vm1281, %vm1366
      %vm1401 = vmor %vm1282, %vm1367
      %vm1402 = vmor %vm1283, %vm1368
      %vm1403 = vmor %vm1284, %vm1369
      %vm1404 = vmor %vm1285, %vm1370
      %vm1405 = vmor %vm1286, %vm1371
      %vm1406 = vmor %vm1287, %vm1372
      %vm1407 = vmor %vm1288, %vm1373
      %vm1408 = vmor %vm1289, %vm1374
      %vm1409 = vmor %vm1290, %vm1375
      %vm1410 = vmor %vm1291, %vm1376
      %vm1411 = vmor %vm1292, %vm1377
      %vm1412 = vmor %vm1293, %vm1378
      %1413 = vset.pattern.permute.xlu0 2
      %1414 = vperm.xlu0 %1413, %v546
      %v1415 = vpop.permute.xlu0 %1414
      %1416 = vset.pattern.permute.xlu0 2
      %1417 = vperm.xlu0 %1416, %v547
      %v1418 = vpop.permute.xlu0 %1417
      %1419 = vset.pattern.permute.xlu0 2
      %1420 = vperm.xlu0 %1419, %v548
      %v1421 = vpop.permute.xlu0 %1420
      %1422 = vset.pattern.permute.xlu0 2
      %1423 = vperm.xlu0 %1422, %v549
      %v1424 = vpop.permute.xlu0 %1423
      %1425 = vset.pattern.permute.xlu0 2
      %1426 = vperm.xlu0 %1425, %v550
      %v1427 = vpop.permute.xlu0 %1426
      %1428 = vset.pattern.permute.xlu0 2
      %1429 = vperm.xlu0 %1428, %v551
      %v1430 = vpop.permute.xlu0 %1429
      %1431 = vset.pattern.permute.xlu0 2
      %1432 = vperm.xlu0 %1431, %v552
      %v1433 = vpop.permute.xlu0 %1432
      %1434 = vset.pattern.permute.xlu0 2
      %1435 = vperm.xlu0 %1434, %v553
      %v1436 = vpop.permute.xlu0 %1435
      %1437 = vset.pattern.permute.xlu0 2
      %1438 = vperm.xlu0 %1437, %v554
      %v1439 = vpop.permute.xlu0 %1438
      %1440 = vset.pattern.permute.xlu0 2
      %1441 = vperm.xlu0 %1440, %v555
      %v1442 = vpop.permute.xlu0 %1441
      %1443 = vset.pattern.permute.xlu0 2
      %1444 = vperm.xlu0 %1443, %v556
      %v1445 = vpop.permute.xlu0 %1444
      %1446 = vset.pattern.permute.xlu0 2
      %1447 = vperm.xlu0 %1446, %v557
      %v1448 = vpop.permute.xlu0 %1447
      %1449 = vset.pattern.permute.xlu0 2
      %1450 = vperm.xlu0 %1449, %v558
      %v1451 = vpop.permute.xlu0 %1450
      %1452 = vset.pattern.permute.xlu0 2
      %1453 = vperm.xlu0 %1452, %v559
      %v1454 = vpop.permute.xlu0 %1453
      %1455 = vset.pattern.permute.xlu0 2
      %1456 = vperm.xlu0 %1455, %v560
      %v1457 = vpop.permute.xlu0 %1456
      %1458 = vset.pattern.permute.xlu0 2
      %1459 = vperm.xlu0 %1458, %v561
      %v1460 = vpop.permute.xlu0 %1459
      %1461 = vset.pattern.permute.xlu0 2
      %1462 = vperm.xlu0 %1461, %v562
      %v1463 = vpop.permute.xlu0 %1462
      %vm1464 = vcmp.eq.s32.totalorder %v287, %v1415
      %vm1465 = vcmp.eq.s32.totalorder %v288, %v1415
      %vm1466 = vcmp.eq.s32.totalorder %v287, %v1418
      %vm1467 = vcmp.eq.s32.totalorder %v288, %v1418
      %vm1468 = vcmp.eq.s32.totalorder %v287, %v1421
      %vm1469 = vcmp.eq.s32.totalorder %v288, %v1421
      %vm1470 = vcmp.eq.s32.totalorder %v287, %v1424
      %vm1471 = vcmp.eq.s32.totalorder %v288, %v1424
      %vm1472 = vcmp.eq.s32.totalorder %v287, %v1427
      %vm1473 = vcmp.eq.s32.totalorder %v288, %v1427
      %vm1474 = vcmp.eq.s32.totalorder %v287, %v1430
      %vm1475 = vcmp.eq.s32.totalorder %v288, %v1430
      %vm1476 = vcmp.eq.s32.totalorder %v287, %v1433
      %vm1477 = vcmp.eq.s32.totalorder %v288, %v1433
      %vm1478 = vcmp.eq.s32.totalorder %v287, %v1436
      %vm1479 = vcmp.eq.s32.totalorder %v288, %v1436
      %vm1480 = vcmp.eq.s32.totalorder %v287, %v1439
      %vm1481 = vcmp.eq.s32.totalorder %v288, %v1439
      %vm1482 = vcmp.eq.s32.totalorder %v287, %v1442
      %vm1483 = vcmp.eq.s32.totalorder %v288, %v1442
      %vm1484 = vcmp.eq.s32.totalorder %v287, %v1445
      %vm1485 = vcmp.eq.s32.totalorder %v288, %v1445
      %vm1486 = vcmp.eq.s32.totalorder %v287, %v1448
      %vm1487 = vcmp.eq.s32.totalorder %v288, %v1448
      %vm1488 = vcmp.eq.s32.totalorder %v287, %v1451
      %vm1489 = vcmp.eq.s32.totalorder %v288, %v1451
      %vm1490 = vcmp.eq.s32.totalorder %v287, %v1454
      %vm1491 = vcmp.eq.s32.totalorder %v288, %v1454
      %vm1492 = vcmp.eq.s32.totalorder %v287, %v1457
      %vm1493 = vcmp.eq.s32.totalorder %v288, %v1457
      %vm1494 = vcmp.eq.s32.totalorder %v287, %v1460
      %vm1495 = vcmp.eq.s32.totalorder %v288, %v1460
      %vm1496 = vcmp.eq.s32.totalorder %v287, %v1463
      %vm1497 = vcmp.eq.s32.totalorder %v288, %v1463
      %vm1498 = vmor %vm1379, %vm1464
      %vm1499 = vmor %vm1380, %vm1465
      %vm1500 = vmor %vm1381, %vm1466
      %vm1501 = vmor %vm1382, %vm1467
      %vm1502 = vmor %vm1383, %vm1468
      %vm1503 = vmor %vm1384, %vm1469
      %vm1504 = vmor %vm1385, %vm1470
      %vm1505 = vmor %vm1386, %vm1471
      %vm1506 = vmor %vm1387, %vm1472
      %vm1507 = vmor %vm1388, %vm1473
      %vm1508 = vmor %vm1389, %vm1474
      %vm1509 = vmor %vm1390, %vm1475
      %vm1510 = vmor %vm1391, %vm1476
      %vm1511 = vmor %vm1392, %vm1477
      %vm1512 = vmor %vm1393, %vm1478
      %vm1513 = vmor %vm1394, %vm1479
      %vm1514 = vmor %vm1395, %vm1480
      %vm1515 = vmor %vm1396, %vm1481
      %vm1516 = vmor %vm1397, %vm1482
      %vm1517 = vmor %vm1398, %vm1483
      %vm1518 = vmor %vm1399, %vm1484
      %vm1519 = vmor %vm1400, %vm1485
      %vm1520 = vmor %vm1401, %vm1486
      %vm1521 = vmor %vm1402, %vm1487
      %vm1522 = vmor %vm1403, %vm1488
      %vm1523 = vmor %vm1404, %vm1489
      %vm1524 = vmor %vm1405, %vm1490
      %vm1525 = vmor %vm1406, %vm1491
      %vm1526 = vmor %vm1407, %vm1492
      %vm1527 = vmor %vm1408, %vm1493
      %vm1528 = vmor %vm1409, %vm1494
      %vm1529 = vmor %vm1410, %vm1495
      %vm1530 = vmor %vm1411, %vm1496
      %vm1531 = vmor %vm1412, %vm1497
      %v1532 = vsel %vm1498, 1, 0
      %v1533 = vsel %vm1499, 1, 0
      %v1534 = vsel %vm1500, 1, 0
      %v1535 = vsel %vm1501, 1, 0
      %v1536 = vsel %vm1502, 1, 0
      %v1537 = vsel %vm1503, 1, 0
      %v1538 = vsel %vm1504, 1, 0
      %v1539 = vsel %vm1505, 1, 0
      %v1540 = vsel %vm1506, 1, 0
      %v1541 = vsel %vm1507, 1, 0
      %v1542 = vsel %vm1508, 1, 0
      %v1543 = vsel %vm1509, 1, 0
      %v1544 = vsel %vm1510, 1, 0
      %v1545 = vsel %vm1511, 1, 0
      %v1546 = vsel %vm1512, 1, 0
      %v1547 = vsel %vm1513, 1, 0
      %v1548 = vsel %vm1514, 1, 0
      %v1549 = vsel %vm1515, 1, 0
      %v1550 = vsel %vm1516, 1, 0
      %v1551 = vsel %vm1517, 1, 0
      %v1552 = vsel %vm1518, 1, 0
      %v1553 = vsel %vm1519, 1, 0
      %v1554 = vsel %vm1520, 1, 0
      %v1555 = vsel %vm1521, 1, 0
      %v1556 = vsel %vm1522, 1, 0
      %v1557 = vsel %vm1523, 1, 0
      %v1558 = vsel %vm1524, 1, 0
      %v1559 = vsel %vm1525, 1, 0
      %v1560 = vsel %vm1526, 1, 0
      %v1561 = vsel %vm1527, 1, 0
      %v1562 = vsel %vm1528, 1, 0
      %v1563 = vsel %vm1529, 1, 0
      %v1564 = vsel %vm1530, 1, 0
      %v1565 = vsel %vm1531, 1, 0
      %v1566 = vcvt.s32.f32 %v1532
      %v1567 = vcvt.s32.f32 %v1533
      %v1568 = vcvt.s32.f32 %v1534
      %v1569 = vcvt.s32.f32 %v1535
      %v1570 = vcvt.s32.f32 %v1536
      %v1571 = vcvt.s32.f32 %v1537
      %v1572 = vcvt.s32.f32 %v1538
      %v1573 = vcvt.s32.f32 %v1539
      %v1574 = vcvt.s32.f32 %v1540
      %v1575 = vcvt.s32.f32 %v1541
      %v1576 = vcvt.s32.f32 %v1542
      %v1577 = vcvt.s32.f32 %v1543
      %v1578 = vcvt.s32.f32 %v1544
      %v1579 = vcvt.s32.f32 %v1545
      %v1580 = vcvt.s32.f32 %v1546
      %v1581 = vcvt.s32.f32 %v1547
      %v1582 = vcvt.s32.f32 %v1548
      %v1583 = vcvt.s32.f32 %v1549
      %v1584 = vcvt.s32.f32 %v1550
      %v1585 = vcvt.s32.f32 %v1551
      %v1586 = vcvt.s32.f32 %v1552
      %v1587 = vcvt.s32.f32 %v1553
      %v1588 = vcvt.s32.f32 %v1554
      %v1589 = vcvt.s32.f32 %v1555
      %v1590 = vcvt.s32.f32 %v1556
      %v1591 = vcvt.s32.f32 %v1557
      %v1592 = vcvt.s32.f32 %v1558
      %v1593 = vcvt.s32.f32 %v1559
      %v1594 = vcvt.s32.f32 %v1560
      %v1595 = vcvt.s32.f32 %v1561
      %v1596 = vcvt.s32.f32 %v1562
      %v1597 = vcvt.s32.f32 %v1563
      %v1598 = vcvt.s32.f32 %v1564
      %v1599 = vcvt.s32.f32 %v1565
      %1600 = vset.pattern.permute.xlu0 3
      %1601 = vperm.xlu0 %1600, %v197
      %v1602 = vpop.permute.xlu0 %1601
      %1603 = vset.pattern.permute.xlu0 3
      %1604 = vperm.xlu0 %1603, %v198
      %v1605 = vpop.permute.xlu0 %1604
      %1606 = vset.pattern.permute.xlu0 3
      %1607 = vperm.xlu0 %1606, %v199
      %v1608 = vpop.permute.xlu0 %1607
      %1609 = vset.pattern.permute.xlu0 3
      %1610 = vperm.xlu0 %1609, %v200
      %v1611 = vpop.permute.xlu0 %1610
      %1612 = vset.pattern.permute.xlu0 3
      %1613 = vperm.xlu0 %1612, %v201
      %v1614 = vpop.permute.xlu0 %1613
      %1615 = vset.pattern.permute.xlu0 3
      %1616 = vperm.xlu0 %1615, %v202
      %v1617 = vpop.permute.xlu0 %1616
      %1618 = vset.pattern.permute.xlu0 3
      %1619 = vperm.xlu0 %1618, %v203
      %v1620 = vpop.permute.xlu0 %1619
      %1621 = vset.pattern.permute.xlu0 3
      %1622 = vperm.xlu0 %1621, %v204
      %v1623 = vpop.permute.xlu0 %1622
      %1624 = vset.pattern.permute.xlu0 3
      %1625 = vperm.xlu0 %1624, %v205
      %v1626 = vpop.permute.xlu0 %1625
      %1627 = vset.pattern.permute.xlu0 3
      %1628 = vperm.xlu0 %1627, %v206
      %v1629 = vpop.permute.xlu0 %1628
      %1630 = vset.pattern.permute.xlu0 3
      %1631 = vperm.xlu0 %1630, %v207
      %v1632 = vpop.permute.xlu0 %1631
      %1633 = vset.pattern.permute.xlu0 3
      %1634 = vperm.xlu0 %1633, %v208
      %v1635 = vpop.permute.xlu0 %1634
      %1636 = vset.pattern.permute.xlu0 3
      %1637 = vperm.xlu0 %1636, %v209
      %v1638 = vpop.permute.xlu0 %1637
      %1639 = vset.pattern.permute.xlu0 3
      %1640 = vperm.xlu0 %1639, %v210
      %v1641 = vpop.permute.xlu0 %1640
      %1642 = vset.pattern.permute.xlu0 3
      %1643 = vperm.xlu0 %1642, %v211
      %v1644 = vpop.permute.xlu0 %1643
      %1645 = vset.pattern.permute.xlu0 3
      %1646 = vperm.xlu0 %1645, %v212
      %v1647 = vpop.permute.xlu0 %1646
      %1648 = vset.pattern.permute.xlu0 3
      %1649 = vperm.xlu0 %1648, %v213
      %v1650 = vpop.permute.xlu0 %1649
      %vm1651 = vcmp.eq.s32.totalorder %v287, %v1602
      %vm1652 = vcmp.eq.s32.totalorder %v288, %v1602
      %vm1653 = vcmp.eq.s32.totalorder %v287, %v1605
      %vm1654 = vcmp.eq.s32.totalorder %v288, %v1605
      %vm1655 = vcmp.eq.s32.totalorder %v287, %v1608
      %vm1656 = vcmp.eq.s32.totalorder %v288, %v1608
      %vm1657 = vcmp.eq.s32.totalorder %v287, %v1611
      %vm1658 = vcmp.eq.s32.totalorder %v288, %v1611
      %vm1659 = vcmp.eq.s32.totalorder %v287, %v1614
      %vm1660 = vcmp.eq.s32.totalorder %v288, %v1614
      %vm1661 = vcmp.eq.s32.totalorder %v287, %v1617
      %vm1662 = vcmp.eq.s32.totalorder %v288, %v1617
      %vm1663 = vcmp.eq.s32.totalorder %v287, %v1620
      %vm1664 = vcmp.eq.s32.totalorder %v288, %v1620
      %vm1665 = vcmp.eq.s32.totalorder %v287, %v1623
      %vm1666 = vcmp.eq.s32.totalorder %v288, %v1623
      %vm1667 = vcmp.eq.s32.totalorder %v287, %v1626
      %vm1668 = vcmp.eq.s32.totalorder %v288, %v1626
      %vm1669 = vcmp.eq.s32.totalorder %v287, %v1629
      %vm1670 = vcmp.eq.s32.totalorder %v288, %v1629
      %vm1671 = vcmp.eq.s32.totalorder %v287, %v1632
      %vm1672 = vcmp.eq.s32.totalorder %v288, %v1632
      %vm1673 = vcmp.eq.s32.totalorder %v287, %v1635
      %vm1674 = vcmp.eq.s32.totalorder %v288, %v1635
      %vm1675 = vcmp.eq.s32.totalorder %v287, %v1638
      %vm1676 = vcmp.eq.s32.totalorder %v288, %v1638
      %vm1677 = vcmp.eq.s32.totalorder %v287, %v1641
      %vm1678 = vcmp.eq.s32.totalorder %v288, %v1641
      %vm1679 = vcmp.eq.s32.totalorder %v287, %v1644
      %vm1680 = vcmp.eq.s32.totalorder %v288, %v1644
      %vm1681 = vcmp.eq.s32.totalorder %v287, %v1647
      %vm1682 = vcmp.eq.s32.totalorder %v288, %v1647
      %vm1683 = vcmp.eq.s32.totalorder %v287, %v1650
      %vm1684 = vcmp.eq.s32.totalorder %v288, %v1650
      %vm1685 = vmor %vm289, %vm1651
      %vm1686 = vmor %vm290, %vm1652
      %vm1687 = vmor %vm289, %vm1653
      %vm1688 = vmor %vm290, %vm1654
      %vm1689 = vmor %vm289, %vm1655
      %vm1690 = vmor %vm290, %vm1656
      %vm1691 = vmor %vm289, %vm1657
      %vm1692 = vmor %vm290, %vm1658
      %vm1693 = vmor %vm289, %vm1659
      %vm1694 = vmor %vm290, %vm1660
      %vm1695 = vmor %vm289, %vm1661
      %vm1696 = vmor %vm290, %vm1662
      %vm1697 = vmor %vm289, %vm1663
      %vm1698 = vmor %vm290, %vm1664
      %vm1699 = vmor %vm289, %vm1665
      %vm1700 = vmor %vm290, %vm1666
      %vm1701 = vmor %vm289, %vm1667
      %vm1702 = vmor %vm290, %vm1668
      %vm1703 = vmor %vm289, %vm1669
      %vm1704 = vmor %vm290, %vm1670
      %vm1705 = vmor %vm289, %vm1671
      %vm1706 = vmor %vm290, %vm1672
      %vm1707 = vmor %vm289, %vm1673
      %vm1708 = vmor %vm290, %vm1674
      %vm1709 = vmor %vm289, %vm1675
      %vm1710 = vmor %vm290, %vm1676
      %vm1711 = vmor %vm289, %vm1677
      %vm1712 = vmor %vm290, %vm1678
      %vm1713 = vmor %vm289, %vm1679
      %vm1714 = vmor %vm290, %vm1680
      %vm1715 = vmor %vm289, %vm1681
      %vm1716 = vmor %vm290, %vm1682
      %vm1717 = vmor %vm289, %vm1683
      %vm1718 = vmor %vm290, %vm1684
      %1719 = vset.pattern.permute.xlu0 3
      %1720 = vperm.xlu0 %1719, %v410
      %v1721 = vpop.permute.xlu0 %1720
      %1722 = vset.pattern.permute.xlu0 3
      %1723 = vperm.xlu0 %1722, %v411
      %v1724 = vpop.permute.xlu0 %1723
      %1725 = vset.pattern.permute.xlu0 3
      %1726 = vperm.xlu0 %1725, %v412
      %v1727 = vpop.permute.xlu0 %1726
      %1728 = vset.pattern.permute.xlu0 3
      %1729 = vperm.xlu0 %1728, %v413
      %v1730 = vpop.permute.xlu0 %1729
      %1731 = vset.pattern.permute.xlu0 3
      %1732 = vperm.xlu0 %1731, %v414
      %v1733 = vpop.permute.xlu0 %1732
      %1734 = vset.pattern.permute.xlu0 3
      %1735 = vperm.xlu0 %1734, %v415
      %v1736 = vpop.permute.xlu0 %1735
      %1737 = vset.pattern.permute.xlu0 3
      %1738 = vperm.xlu0 %1737, %v416
      %v1739 = vpop.permute.xlu0 %1738
      %1740 = vset.pattern.permute.xlu0 3
      %1741 = vperm.xlu0 %1740, %v417
      %v1742 = vpop.permute.xlu0 %1741
      %1743 = vset.pattern.permute.xlu0 3
      %1744 = vperm.xlu0 %1743, %v418
      %v1745 = vpop.permute.xlu0 %1744
      %1746 = vset.pattern.permute.xlu0 3
      %1747 = vperm.xlu0 %1746, %v419
      %v1748 = vpop.permute.xlu0 %1747
      %1749 = vset.pattern.permute.xlu0 3
      %1750 = vperm.xlu0 %1749, %v420
      %v1751 = vpop.permute.xlu0 %1750
      %1752 = vset.pattern.permute.xlu0 3
      %1753 = vperm.xlu0 %1752, %v421
      %v1754 = vpop.permute.xlu0 %1753
      %1755 = vset.pattern.permute.xlu0 3
      %1756 = vperm.xlu0 %1755, %v422
      %v1757 = vpop.permute.xlu0 %1756
      %1758 = vset.pattern.permute.xlu0 3
      %1759 = vperm.xlu0 %1758, %v423
      %v1760 = vpop.permute.xlu0 %1759
      %1761 = vset.pattern.permute.xlu0 3
      %1762 = vperm.xlu0 %1761, %v424
      %v1763 = vpop.permute.xlu0 %1762
      %1764 = vset.pattern.permute.xlu0 3
      %1765 = vperm.xlu0 %1764, %v425
      %v1766 = vpop.permute.xlu0 %1765
      %1767 = vset.pattern.permute.xlu0 3
      %1768 = vperm.xlu0 %1767, %v426
      %v1769 = vpop.permute.xlu0 %1768
      %vm1770 = vcmp.eq.s32.totalorder %v287, %v1721
      %vm1771 = vcmp.eq.s32.totalorder %v288, %v1721
      %vm1772 = vcmp.eq.s32.totalorder %v287, %v1724
      %vm1773 = vcmp.eq.s32.totalorder %v288, %v1724
      %vm1774 = vcmp.eq.s32.totalorder %v287, %v1727
      %vm1775 = vcmp.eq.s32.totalorder %v288, %v1727
      %vm1776 = vcmp.eq.s32.totalorder %v287, %v1730
      %vm1777 = vcmp.eq.s32.totalorder %v288, %v1730
      %vm1778 = vcmp.eq.s32.totalorder %v287, %v1733
      %vm1779 = vcmp.eq.s32.totalorder %v288, %v1733
      %vm1780 = vcmp.eq.s32.totalorder %v287, %v1736
      %vm1781 = vcmp.eq.s32.totalorder %v288, %v1736
      %vm1782 = vcmp.eq.s32.totalorder %v287, %v1739
      %vm1783 = vcmp.eq.s32.totalorder %v288, %v1739
      %vm1784 = vcmp.eq.s32.totalorder %v287, %v1742
      %vm1785 = vcmp.eq.s32.totalorder %v288, %v1742
      %vm1786 = vcmp.eq.s32.totalorder %v287, %v1745
      %vm1787 = vcmp.eq.s32.totalorder %v288, %v1745
      %vm1788 = vcmp.eq.s32.totalorder %v287, %v1748
      %vm1789 = vcmp.eq.s32.totalorder %v288, %v1748
      %vm1790 = vcmp.eq.s32.totalorder %v287, %v1751
      %vm1791 = vcmp.eq.s32.totalorder %v288, %v1751
      %vm1792 = vcmp.eq.s32.totalorder %v287, %v1754
      %vm1793 = vcmp.eq.s32.totalorder %v288, %v1754
      %vm1794 = vcmp.eq.s32.totalorder %v287, %v1757
      %vm1795 = vcmp.eq.s32.totalorder %v288, %v1757
      %vm1796 = vcmp.eq.s32.totalorder %v287, %v1760
      %vm1797 = vcmp.eq.s32.totalorder %v288, %v1760
      %vm1798 = vcmp.eq.s32.totalorder %v287, %v1763
      %vm1799 = vcmp.eq.s32.totalorder %v288, %v1763
      %vm1800 = vcmp.eq.s32.totalorder %v287, %v1766
      %vm1801 = vcmp.eq.s32.totalorder %v288, %v1766
      %vm1802 = vcmp.eq.s32.totalorder %v287, %v1769
      %vm1803 = vcmp.eq.s32.totalorder %v288, %v1769
      %vm1804 = vmor %vm1685, %vm1770
      %vm1805 = vmor %vm1686, %vm1771
      %vm1806 = vmor %vm1687, %vm1772
      %vm1807 = vmor %vm1688, %vm1773
      %vm1808 = vmor %vm1689, %vm1774
      %vm1809 = vmor %vm1690, %vm1775
      %vm1810 = vmor %vm1691, %vm1776
      %vm1811 = vmor %vm1692, %vm1777
      %vm1812 = vmor %vm1693, %vm1778
      %vm1813 = vmor %vm1694, %vm1779
      %vm1814 = vmor %vm1695, %vm1780
      %vm1815 = vmor %vm1696, %vm1781
      %vm1816 = vmor %vm1697, %vm1782
      %vm1817 = vmor %vm1698, %vm1783
      %vm1818 = vmor %vm1699, %vm1784
      %vm1819 = vmor %vm1700, %vm1785
      %vm1820 = vmor %vm1701, %vm1786
      %vm1821 = vmor %vm1702, %vm1787
      %vm1822 = vmor %vm1703, %vm1788
      %vm1823 = vmor %vm1704, %vm1789
      %vm1824 = vmor %vm1705, %vm1790
      %vm1825 = vmor %vm1706, %vm1791
      %vm1826 = vmor %vm1707, %vm1792
      %vm1827 = vmor %vm1708, %vm1793
      %vm1828 = vmor %vm1709, %vm1794
      %vm1829 = vmor %vm1710, %vm1795
      %vm1830 = vmor %vm1711, %vm1796
      %vm1831 = vmor %vm1712, %vm1797
      %vm1832 = vmor %vm1713, %vm1798
      %vm1833 = vmor %vm1714, %vm1799
      %vm1834 = vmor %vm1715, %vm1800
      %vm1835 = vmor %vm1716, %vm1801
      %vm1836 = vmor %vm1717, %vm1802
      %vm1837 = vmor %vm1718, %vm1803
      %1838 = vset.pattern.permute.xlu0 3
      %1839 = vperm.xlu0 %1838, %v546
      %v1840 = vpop.permute.xlu0 %1839
      %1841 = vset.pattern.permute.xlu0 3
      %1842 = vperm.xlu0 %1841, %v547
      %v1843 = vpop.permute.xlu0 %1842
      %1844 = vset.pattern.permute.xlu0 3
      %1845 = vperm.xlu0 %1844, %v548
      %v1846 = vpop.permute.xlu0 %1845
      %1847 = vset.pattern.permute.xlu0 3
      %1848 = vperm.xlu0 %1847, %v549
      %v1849 = vpop.permute.xlu0 %1848
      %1850 = vset.pattern.permute.xlu0 3
      %1851 = vperm.xlu0 %1850, %v550
      %v1852 = vpop.permute.xlu0 %1851
      %1853 = vset.pattern.permute.xlu0 3
      %1854 = vperm.xlu0 %1853, %v551
      %v1855 = vpop.permute.xlu0 %1854
      %1856 = vset.pattern.permute.xlu0 3
      %1857 = vperm.xlu0 %1856, %v552
      %v1858 = vpop.permute.xlu0 %1857
      %1859 = vset.pattern.permute.xlu0 3
      %1860 = vperm.xlu0 %1859, %v553
      %v1861 = vpop.permute.xlu0 %1860
      %1862 = vset.pattern.permute.xlu0 3
      %1863 = vperm.xlu0 %1862, %v554
      %v1864 = vpop.permute.xlu0 %1863
      %1865 = vset.pattern.permute.xlu0 3
      %1866 = vperm.xlu0 %1865, %v555
      %v1867 = vpop.permute.xlu0 %1866
      %1868 = vset.pattern.permute.xlu0 3
      %1869 = vperm.xlu0 %1868, %v556
      %v1870 = vpop.permute.xlu0 %1869
      %1871 = vset.pattern.permute.xlu0 3
      %1872 = vperm.xlu0 %1871, %v557
      %v1873 = vpop.permute.xlu0 %1872
      %1874 = vset.pattern.permute.xlu0 3
      %1875 = vperm.xlu0 %1874, %v558
      %v1876 = vpop.permute.xlu0 %1875
      %1877 = vset.pattern.permute.xlu0 3
      %1878 = vperm.xlu0 %1877, %v559
      %v1879 = vpop.permute.xlu0 %1878
      %1880 = vset.pattern.permute.xlu0 3
      %1881 = vperm.xlu0 %1880, %v560
      %v1882 = vpop.permute.xlu0 %1881
      %1883 = vset.pattern.permute.xlu0 3
      %1884 = vperm.xlu0 %1883, %v561
      %v1885 = vpop.permute.xlu0 %1884
      %1886 = vset.pattern.permute.xlu0 3
      %1887 = vperm.xlu0 %1886, %v562
      %v1888 = vpop.permute.xlu0 %1887
      %vm1889 = vcmp.eq.s32.totalorder %v287, %v1840
      %vm1890 = vcmp.eq.s32.totalorder %v288, %v1840
      %vm1891 = vcmp.eq.s32.totalorder %v287, %v1843
      %vm1892 = vcmp.eq.s32.totalorder %v288, %v1843
      %vm1893 = vcmp.eq.s32.totalorder %v287, %v1846
      %vm1894 = vcmp.eq.s32.totalorder %v288, %v1846
      %vm1895 = vcmp.eq.s32.totalorder %v287, %v1849
      %vm1896 = vcmp.eq.s32.totalorder %v288, %v1849
      %vm1897 = vcmp.eq.s32.totalorder %v287, %v1852
      %vm1898 = vcmp.eq.s32.totalorder %v288, %v1852
      %vm1899 = vcmp.eq.s32.totalorder %v287, %v1855
      %vm1900 = vcmp.eq.s32.totalorder %v288, %v1855
      %vm1901 = vcmp.eq.s32.totalorder %v287, %v1858
      %vm1902 = vcmp.eq.s32.totalorder %v288, %v1858
      %vm1903 = vcmp.eq.s32.totalorder %v287, %v1861
      %vm1904 = vcmp.eq.s32.totalorder %v288, %v1861
      %vm1905 = vcmp.eq.s32.totalorder %v287, %v1864
      %vm1906 = vcmp.eq.s32.totalorder %v288, %v1864
      %vm1907 = vcmp.eq.s32.totalorder %v287, %v1867
      %vm1908 = vcmp.eq.s32.totalorder %v288, %v1867
      %vm1909 = vcmp.eq.s32.totalorder %v287, %v1870
      %vm1910 = vcmp.eq.s32.totalorder %v288, %v1870
      %vm1911 = vcmp.eq.s32.totalorder %v287, %v1873
      %vm1912 = vcmp.eq.s32.totalorder %v288, %v1873
      %vm1913 = vcmp.eq.s32.totalorder %v287, %v1876
      %vm1914 = vcmp.eq.s32.totalorder %v288, %v1876
      %vm1915 = vcmp.eq.s32.totalorder %v287, %v1879
      %vm1916 = vcmp.eq.s32.totalorder %v288, %v1879
      %vm1917 = vcmp.eq.s32.totalorder %v287, %v1882
      %vm1918 = vcmp.eq.s32.totalorder %v288, %v1882
      %vm1919 = vcmp.eq.s32.totalorder %v287, %v1885
      %vm1920 = vcmp.eq.s32.totalorder %v288, %v1885
      %vm1921 = vcmp.eq.s32.totalorder %v287, %v1888
      %vm1922 = vcmp.eq.s32.totalorder %v288, %v1888
      %vm1923 = vmor %vm1804, %vm1889
      %vm1924 = vmor %vm1805, %vm1890
      %vm1925 = vmor %vm1806, %vm1891
      %vm1926 = vmor %vm1807, %vm1892
      %vm1927 = vmor %vm1808, %vm1893
      %vm1928 = vmor %vm1809, %vm1894
      %vm1929 = vmor %vm1810, %vm1895
      %vm1930 = vmor %vm1811, %vm1896
      %vm1931 = vmor %vm1812, %vm1897
      %vm1932 = vmor %vm1813, %vm1898
      %vm1933 = vmor %vm1814, %vm1899
      %vm1934 = vmor %vm1815, %vm1900
      %vm1935 = vmor %vm1816, %vm1901
      %vm1936 = vmor %vm1817, %vm1902
      %vm1937 = vmor %vm1818, %vm1903
      %vm1938 = vmor %vm1819, %vm1904
      %vm1939 = vmor %vm1820, %vm1905
      %vm1940 = vmor %vm1821, %vm1906
      %vm1941 = vmor %vm1822, %vm1907
      %vm1942 = vmor %vm1823, %vm1908
      %vm1943 = vmor %vm1824, %vm1909
      %vm1944 = vmor %vm1825, %vm1910
      %vm1945 = vmor %vm1826, %vm1911
      %vm1946 = vmor %vm1827, %vm1912
      %vm1947 = vmor %vm1828, %vm1913
      %vm1948 = vmor %vm1829, %vm1914
      %vm1949 = vmor %vm1830, %vm1915
      %vm1950 = vmor %vm1831, %vm1916
      %vm1951 = vmor %vm1832, %vm1917
      %vm1952 = vmor %vm1833, %vm1918
      %vm1953 = vmor %vm1834, %vm1919
      %vm1954 = vmor %vm1835, %vm1920
      %vm1955 = vmor %vm1836, %vm1921
      %vm1956 = vmor %vm1837, %vm1922
      %v1957 = vsel %vm1923, 1, 0
      %v1958 = vsel %vm1924, 1, 0
      %v1959 = vsel %vm1925, 1, 0
      %v1960 = vsel %vm1926, 1, 0
      %v1961 = vsel %vm1927, 1, 0
      %v1962 = vsel %vm1928, 1, 0
      %v1963 = vsel %vm1929, 1, 0
      %v1964 = vsel %vm1930, 1, 0
      %v1965 = vsel %vm1931, 1, 0
      %v1966 = vsel %vm1932, 1, 0
      %v1967 = vsel %vm1933, 1, 0
      %v1968 = vsel %vm1934, 1, 0
      %v1969 = vsel %vm1935, 1, 0
      %v1970 = vsel %vm1936, 1, 0
      %v1971 = vsel %vm1937, 1, 0
      %v1972 = vsel %vm1938, 1, 0
      %v1973 = vsel %vm1939, 1, 0
      %v1974 = vsel %vm1940, 1, 0
      %v1975 = vsel %vm1941, 1, 0
      %v1976 = vsel %vm1942, 1, 0
      %v1977 = vsel %vm1943, 1, 0
      %v1978 = vsel %vm1944, 1, 0
      %v1979 = vsel %vm1945, 1, 0
      %v1980 = vsel %vm1946, 1, 0
      %v1981 = vsel %vm1947, 1, 0
      %v1982 = vsel %vm1948, 1, 0
      %v1983 = vsel %vm1949, 1, 0
      %v1984 = vsel %vm1950, 1, 0
      %v1985 = vsel %vm1951, 1, 0
      %v1986 = vsel %vm1952, 1, 0
      %v1987 = vsel %vm1953, 1, 0
      %v1988 = vsel %vm1954, 1, 0
      %v1989 = vsel %vm1955, 1, 0
      %v1990 = vsel %vm1956, 1, 0
      %v1991 = vcvt.s32.f32 %v1957
      %v1992 = vcvt.s32.f32 %v1958
      %v1993 = vcvt.s32.f32 %v1959
      %v1994 = vcvt.s32.f32 %v1960
      %v1995 = vcvt.s32.f32 %v1961
      %v1996 = vcvt.s32.f32 %v1962
      %v1997 = vcvt.s32.f32 %v1963
      %v1998 = vcvt.s32.f32 %v1964
      %v1999 = vcvt.s32.f32 %v1965
      %v2000 = vcvt.s32.f32 %v1966
      %v2001 = vcvt.s32.f32 %v1967
      %v2002 = vcvt.s32.f32 %v1968
      %v2003 = vcvt.s32.f32 %v1969
      %v2004 = vcvt.s32.f32 %v1970
      %v2005 = vcvt.s32.f32 %v1971
      %v2006 = vcvt.s32.f32 %v1972
      %v2007 = vcvt.s32.f32 %v1973
      %v2008 = vcvt.s32.f32 %v1974
      %v2009 = vcvt.s32.f32 %v1975
      %v2010 = vcvt.s32.f32 %v1976
      %v2011 = vcvt.s32.f32 %v1977
      %v2012 = vcvt.s32.f32 %v1978
      %v2013 = vcvt.s32.f32 %v1979
      %v2014 = vcvt.s32.f32 %v1980
      %v2015 = vcvt.s32.f32 %v1981
      %v2016 = vcvt.s32.f32 %v1982
      %v2017 = vcvt.s32.f32 %v1983
      %v2018 = vcvt.s32.f32 %v1984
      %v2019 = vcvt.s32.f32 %v1985
      %v2020 = vcvt.s32.f32 %v1986
      %v2021 = vcvt.s32.f32 %v1987
      %v2022 = vcvt.s32.f32 %v1988
      %v2023 = vcvt.s32.f32 %v1989
      %v2024 = vcvt.s32.f32 %v1990
      %2025 = vset.pattern.permute.xlu0 4
      %2026 = vperm.xlu0 %2025, %v197
      %v2027 = vpop.permute.xlu0 %2026
      %2028 = vset.pattern.permute.xlu0 4
      %2029 = vperm.xlu0 %2028, %v198
      %v2030 = vpop.permute.xlu0 %2029
      %2031 = vset.pattern.permute.xlu0 4
      %2032 = vperm.xlu0 %2031, %v199
      %v2033 = vpop.permute.xlu0 %2032
      %2034 = vset.pattern.permute.xlu0 4
      %2035 = vperm.xlu0 %2034, %v200
      %v2036 = vpop.permute.xlu0 %2035
      %2037 = vset.pattern.permute.xlu0 4
      %2038 = vperm.xlu0 %2037, %v201
      %v2039 = vpop.permute.xlu0 %2038
      %2040 = vset.pattern.permute.xlu0 4
      %2041 = vperm.xlu0 %2040, %v202
      %v2042 = vpop.permute.xlu0 %2041
      %2043 = vset.pattern.permute.xlu0 4
      %2044 = vperm.xlu0 %2043, %v203
      %v2045 = vpop.permute.xlu0 %2044
      %2046 = vset.pattern.permute.xlu0 4
      %2047 = vperm.xlu0 %2046, %v204
      %v2048 = vpop.permute.xlu0 %2047
      %2049 = vset.pattern.permute.xlu0 4
      %2050 = vperm.xlu0 %2049, %v205
      %v2051 = vpop.permute.xlu0 %2050
      %2052 = vset.pattern.permute.xlu0 4
      %2053 = vperm.xlu0 %2052, %v206
      %v2054 = vpop.permute.xlu0 %2053
      %2055 = vset.pattern.permute.xlu0 4
      %2056 = vperm.xlu0 %2055, %v207
      %v2057 = vpop.permute.xlu0 %2056
      %2058 = vset.pattern.permute.xlu0 4
      %2059 = vperm.xlu0 %2058, %v208
      %v2060 = vpop.permute.xlu0 %2059
      %2061 = vset.pattern.permute.xlu0 4
      %2062 = vperm.xlu0 %2061, %v209
      %v2063 = vpop.permute.xlu0 %2062
      %2064 = vset.pattern.permute.xlu0 4
      %2065 = vperm.xlu0 %2064, %v210
      %v2066 = vpop.permute.xlu0 %2065
      %2067 = vset.pattern.permute.xlu0 4
      %2068 = vperm.xlu0 %2067, %v211
      %v2069 = vpop.permute.xlu0 %2068
      %2070 = vset.pattern.permute.xlu0 4
      %2071 = vperm.xlu0 %2070, %v212
      %v2072 = vpop.permute.xlu0 %2071
      %2073 = vset.pattern.permute.xlu0 4
      %2074 = vperm.xlu0 %2073, %v213
      %v2075 = vpop.permute.xlu0 %2074
      %vm2076 = vcmp.eq.s32.totalorder %v287, %v2027
      %vm2077 = vcmp.eq.s32.totalorder %v288, %v2027
      %vm2078 = vcmp.eq.s32.totalorder %v287, %v2030
      %vm2079 = vcmp.eq.s32.totalorder %v288, %v2030
      %vm2080 = vcmp.eq.s32.totalorder %v287, %v2033
      %vm2081 = vcmp.eq.s32.totalorder %v288, %v2033
      %vm2082 = vcmp.eq.s32.totalorder %v287, %v2036
      %vm2083 = vcmp.eq.s32.totalorder %v288, %v2036
      %vm2084 = vcmp.eq.s32.totalorder %v287, %v2039
      %vm2085 = vcmp.eq.s32.totalorder %v288, %v2039
      %vm2086 = vcmp.eq.s32.totalorder %v287, %v2042
      %vm2087 = vcmp.eq.s32.totalorder %v288, %v2042
      %vm2088 = vcmp.eq.s32.totalorder %v287, %v2045
      %vm2089 = vcmp.eq.s32.totalorder %v288, %v2045
      %vm2090 = vcmp.eq.s32.totalorder %v287, %v2048
      %vm2091 = vcmp.eq.s32.totalorder %v288, %v2048
      %vm2092 = vcmp.eq.s32.totalorder %v287, %v2051
      %vm2093 = vcmp.eq.s32.totalorder %v288, %v2051
      %vm2094 = vcmp.eq.s32.totalorder %v287, %v2054
      %vm2095 = vcmp.eq.s32.totalorder %v288, %v2054
      %vm2096 = vcmp.eq.s32.totalorder %v287, %v2057
      %vm2097 = vcmp.eq.s32.totalorder %v288, %v2057
      %vm2098 = vcmp.eq.s32.totalorder %v287, %v2060
      %vm2099 = vcmp.eq.s32.totalorder %v288, %v2060
      %vm2100 = vcmp.eq.s32.totalorder %v287, %v2063
      %vm2101 = vcmp.eq.s32.totalorder %v288, %v2063
      %vm2102 = vcmp.eq.s32.totalorder %v287, %v2066
      %vm2103 = vcmp.eq.s32.totalorder %v288, %v2066
      %vm2104 = vcmp.eq.s32.totalorder %v287, %v2069
      %vm2105 = vcmp.eq.s32.totalorder %v288, %v2069
      %vm2106 = vcmp.eq.s32.totalorder %v287, %v2072
      %vm2107 = vcmp.eq.s32.totalorder %v288, %v2072
      %vm2108 = vcmp.eq.s32.totalorder %v287, %v2075
      %vm2109 = vcmp.eq.s32.totalorder %v288, %v2075
      %vm2110 = vmor %vm289, %vm2076
      %vm2111 = vmor %vm290, %vm2077
      %vm2112 = vmor %vm289, %vm2078
      %vm2113 = vmor %vm290, %vm2079
      %vm2114 = vmor %vm289, %vm2080
      %vm2115 = vmor %vm290, %vm2081
      %vm2116 = vmor %vm289, %vm2082
      %vm2117 = vmor %vm290, %vm2083
      %vm2118 = vmor %vm289, %vm2084
      %vm2119 = vmor %vm290, %vm2085
      %vm2120 = vmor %vm289, %vm2086
      %vm2121 = vmor %vm290, %vm2087
      %vm2122 = vmor %vm289, %vm2088
      %vm2123 = vmor %vm290, %vm2089
      %vm2124 = vmor %vm289, %vm2090
      %vm2125 = vmor %vm290, %vm2091
      %vm2126 = vmor %vm289, %vm2092
      %vm2127 = vmor %vm290, %vm2093
      %vm2128 = vmor %vm289, %vm2094
      %vm2129 = vmor %vm290, %vm2095
      %vm2130 = vmor %vm289, %vm2096
      %vm2131 = vmor %vm290, %vm2097
      %vm2132 = vmor %vm289, %vm2098
      %vm2133 = vmor %vm290, %vm2099
      %vm2134 = vmor %vm289, %vm2100
      %vm2135 = vmor %vm290, %vm2101
      %vm2136 = vmor %vm289, %vm2102
      %vm2137 = vmor %vm290, %vm2103
      %vm2138 = vmor %vm289, %vm2104
      %vm2139 = vmor %vm290, %vm2105
      %vm2140 = vmor %vm289, %vm2106
      %vm2141 = vmor %vm290, %vm2107
      %vm2142 = vmor %vm289, %vm2108
      %vm2143 = vmor %vm290, %vm2109
      %2144 = vset.pattern.permute.xlu0 4
      %2145 = vperm.xlu0 %2144, %v410
      %v2146 = vpop.permute.xlu0 %2145
      %2147 = vset.pattern.permute.xlu0 4
      %2148 = vperm.xlu0 %2147, %v411
      %v2149 = vpop.permute.xlu0 %2148
      %2150 = vset.pattern.permute.xlu0 4
      %2151 = vperm.xlu0 %2150, %v412
      %v2152 = vpop.permute.xlu0 %2151
      %2153 = vset.pattern.permute.xlu0 4
      %2154 = vperm.xlu0 %2153, %v413
      %v2155 = vpop.permute.xlu0 %2154
      %2156 = vset.pattern.permute.xlu0 4
      %2157 = vperm.xlu0 %2156, %v414
      %v2158 = vpop.permute.xlu0 %2157
      %2159 = vset.pattern.permute.xlu0 4
      %2160 = vperm.xlu0 %2159, %v415
      %v2161 = vpop.permute.xlu0 %2160
      %2162 = vset.pattern.permute.xlu0 4
      %2163 = vperm.xlu0 %2162, %v416
      %v2164 = vpop.permute.xlu0 %2163
      %2165 = vset.pattern.permute.xlu0 4
      %2166 = vperm.xlu0 %2165, %v417
      %v2167 = vpop.permute.xlu0 %2166
      %2168 = vset.pattern.permute.xlu0 4
      %2169 = vperm.xlu0 %2168, %v418
      %v2170 = vpop.permute.xlu0 %2169
      %2171 = vset.pattern.permute.xlu0 4
      %2172 = vperm.xlu0 %2171, %v419
      %v2173 = vpop.permute.xlu0 %2172
      %2174 = vset.pattern.permute.xlu0 4
      %2175 = vperm.xlu0 %2174, %v420
      %v2176 = vpop.permute.xlu0 %2175
      %2177 = vset.pattern.permute.xlu0 4
      %2178 = vperm.xlu0 %2177, %v421
      %v2179 = vpop.permute.xlu0 %2178
      %2180 = vset.pattern.permute.xlu0 4
      %2181 = vperm.xlu0 %2180, %v422
      %v2182 = vpop.permute.xlu0 %2181
      %2183 = vset.pattern.permute.xlu0 4
      %2184 = vperm.xlu0 %2183, %v423
      %v2185 = vpop.permute.xlu0 %2184
      %2186 = vset.pattern.permute.xlu0 4
      %2187 = vperm.xlu0 %2186, %v424
      %v2188 = vpop.permute.xlu0 %2187
      %2189 = vset.pattern.permute.xlu0 4
      %2190 = vperm.xlu0 %2189, %v425
      %v2191 = vpop.permute.xlu0 %2190
      %2192 = vset.pattern.permute.xlu0 4
      %2193 = vperm.xlu0 %2192, %v426
      %v2194 = vpop.permute.xlu0 %2193
      %vm2195 = vcmp.eq.s32.totalorder %v287, %v2146
      %vm2196 = vcmp.eq.s32.totalorder %v288, %v2146
      %vm2197 = vcmp.eq.s32.totalorder %v287, %v2149
      %vm2198 = vcmp.eq.s32.totalorder %v288, %v2149
      %vm2199 = vcmp.eq.s32.totalorder %v287, %v2152
      %vm2200 = vcmp.eq.s32.totalorder %v288, %v2152
      %vm2201 = vcmp.eq.s32.totalorder %v287, %v2155
      %vm2202 = vcmp.eq.s32.totalorder %v288, %v2155
      %vm2203 = vcmp.eq.s32.totalorder %v287, %v2158
      %vm2204 = vcmp.eq.s32.totalorder %v288, %v2158
      %vm2205 = vcmp.eq.s32.totalorder %v287, %v2161
      %vm2206 = vcmp.eq.s32.totalorder %v288, %v2161
      %vm2207 = vcmp.eq.s32.totalorder %v287, %v2164
      %vm2208 = vcmp.eq.s32.totalorder %v288, %v2164
      %vm2209 = vcmp.eq.s32.totalorder %v287, %v2167
      %vm2210 = vcmp.eq.s32.totalorder %v288, %v2167
      %vm2211 = vcmp.eq.s32.totalorder %v287, %v2170
      %vm2212 = vcmp.eq.s32.totalorder %v288, %v2170
      %vm2213 = vcmp.eq.s32.totalorder %v287, %v2173
      %vm2214 = vcmp.eq.s32.totalorder %v288, %v2173
      %vm2215 = vcmp.eq.s32.totalorder %v287, %v2176
      %vm2216 = vcmp.eq.s32.totalorder %v288, %v2176
      %vm2217 = vcmp.eq.s32.totalorder %v287, %v2179
      %vm2218 = vcmp.eq.s32.totalorder %v288, %v2179
      %vm2219 = vcmp.eq.s32.totalorder %v287, %v2182
      %vm2220 = vcmp.eq.s32.totalorder %v288, %v2182
      %vm2221 = vcmp.eq.s32.totalorder %v287, %v2185
      %vm2222 = vcmp.eq.s32.totalorder %v288, %v2185
      %vm2223 = vcmp.eq.s32.totalorder %v287, %v2188
      %vm2224 = vcmp.eq.s32.totalorder %v288, %v2188
      %vm2225 = vcmp.eq.s32.totalorder %v287, %v2191
      %vm2226 = vcmp.eq.s32.totalorder %v288, %v2191
      %vm2227 = vcmp.eq.s32.totalorder %v287, %v2194
      %vm2228 = vcmp.eq.s32.totalorder %v288, %v2194
      %vm2229 = vmor %vm2110, %vm2195
      %vm2230 = vmor %vm2111, %vm2196
      %vm2231 = vmor %vm2112, %vm2197
      %vm2232 = vmor %vm2113, %vm2198
      %vm2233 = vmor %vm2114, %vm2199
      %vm2234 = vmor %vm2115, %vm2200
      %vm2235 = vmor %vm2116, %vm2201
      %vm2236 = vmor %vm2117, %vm2202
      %vm2237 = vmor %vm2118, %vm2203
      %vm2238 = vmor %vm2119, %vm2204
      %vm2239 = vmor %vm2120, %vm2205
      %vm2240 = vmor %vm2121, %vm2206
      %vm2241 = vmor %vm2122, %vm2207
      %vm2242 = vmor %vm2123, %vm2208
      %vm2243 = vmor %vm2124, %vm2209
      %vm2244 = vmor %vm2125, %vm2210
      %vm2245 = vmor %vm2126, %vm2211
      %vm2246 = vmor %vm2127, %vm2212
      %vm2247 = vmor %vm2128, %vm2213
      %vm2248 = vmor %vm2129, %vm2214
      %vm2249 = vmor %vm2130, %vm2215
      %vm2250 = vmor %vm2131, %vm2216
      %vm2251 = vmor %vm2132, %vm2217
      %vm2252 = vmor %vm2133, %vm2218
      %vm2253 = vmor %vm2134, %vm2219
      %vm2254 = vmor %vm2135, %vm2220
      %vm2255 = vmor %vm2136, %vm2221
      %vm2256 = vmor %vm2137, %vm2222
      %vm2257 = vmor %vm2138, %vm2223
      %vm2258 = vmor %vm2139, %vm2224
      %vm2259 = vmor %vm2140, %vm2225
      %vm2260 = vmor %vm2141, %vm2226
      %vm2261 = vmor %vm2142, %vm2227
      %vm2262 = vmor %vm2143, %vm2228
      %2263 = vset.pattern.permute.xlu0 4
      %2264 = vperm.xlu0 %2263, %v546
      %v2265 = vpop.permute.xlu0 %2264
      %2266 = vset.pattern.permute.xlu0 4
      %2267 = vperm.xlu0 %2266, %v547
      %v2268 = vpop.permute.xlu0 %2267
      %2269 = vset.pattern.permute.xlu0 4
      %2270 = vperm.xlu0 %2269, %v548
      %v2271 = vpop.permute.xlu0 %2270
      %2272 = vset.pattern.permute.xlu0 4
      %2273 = vperm.xlu0 %2272, %v549
      %v2274 = vpop.permute.xlu0 %2273
      %2275 = vset.pattern.permute.xlu0 4
      %2276 = vperm.xlu0 %2275, %v550
      %v2277 = vpop.permute.xlu0 %2276
      %2278 = vset.pattern.permute.xlu0 4
      %2279 = vperm.xlu0 %2278, %v551
      %v2280 = vpop.permute.xlu0 %2279
      %2281 = vset.pattern.permute.xlu0 4
      %2282 = vperm.xlu0 %2281, %v552
      %v2283 = vpop.permute.xlu0 %2282
      %2284 = vset.pattern.permute.xlu0 4
      %2285 = vperm.xlu0 %2284, %v553
      %v2286 = vpop.permute.xlu0 %2285
      %2287 = vset.pattern.permute.xlu0 4
      %2288 = vperm.xlu0 %2287, %v554
      %v2289 = vpop.permute.xlu0 %2288
      %2290 = vset.pattern.permute.xlu0 4
      %2291 = vperm.xlu0 %2290, %v555
      %v2292 = vpop.permute.xlu0 %2291
      %2293 = vset.pattern.permute.xlu0 4
      %2294 = vperm.xlu0 %2293, %v556
      %v2295 = vpop.permute.xlu0 %2294
      %2296 = vset.pattern.permute.xlu0 4
      %2297 = vperm.xlu0 %2296, %v557
      %v2298 = vpop.permute.xlu0 %2297
      %2299 = vset.pattern.permute.xlu0 4
      %2300 = vperm.xlu0 %2299, %v558
      %v2301 = vpop.permute.xlu0 %2300
      %2302 = vset.pattern.permute.xlu0 4
      %2303 = vperm.xlu0 %2302, %v559
      %v2304 = vpop.permute.xlu0 %2303
      %2305 = vset.pattern.permute.xlu0 4
      %2306 = vperm.xlu0 %2305, %v560
      %v2307 = vpop.permute.xlu0 %2306
      %2308 = vset.pattern.permute.xlu0 4
      %2309 = vperm.xlu0 %2308, %v561
      %v2310 = vpop.permute.xlu0 %2309
      %2311 = vset.pattern.permute.xlu0 4
      %2312 = vperm.xlu0 %2311, %v562
      %v2313 = vpop.permute.xlu0 %2312
      %vm2314 = vcmp.eq.s32.totalorder %v287, %v2265
      %vm2315 = vcmp.eq.s32.totalorder %v288, %v2265
      %vm2316 = vcmp.eq.s32.totalorder %v287, %v2268
      %vm2317 = vcmp.eq.s32.totalorder %v288, %v2268
      %vm2318 = vcmp.eq.s32.totalorder %v287, %v2271
      %vm2319 = vcmp.eq.s32.totalorder %v288, %v2271
      %vm2320 = vcmp.eq.s32.totalorder %v287, %v2274
      %vm2321 = vcmp.eq.s32.totalorder %v288, %v2274
      %vm2322 = vcmp.eq.s32.totalorder %v287, %v2277
      %vm2323 = vcmp.eq.s32.totalorder %v288, %v2277
      %vm2324 = vcmp.eq.s32.totalorder %v287, %v2280
      %vm2325 = vcmp.eq.s32.totalorder %v288, %v2280
      %vm2326 = vcmp.eq.s32.totalorder %v287, %v2283
      %vm2327 = vcmp.eq.s32.totalorder %v288, %v2283
      %vm2328 = vcmp.eq.s32.totalorder %v287, %v2286
      %vm2329 = vcmp.eq.s32.totalorder %v288, %v2286
      %vm2330 = vcmp.eq.s32.totalorder %v287, %v2289
      %vm2331 = vcmp.eq.s32.totalorder %v288, %v2289
      %vm2332 = vcmp.eq.s32.totalorder %v287, %v2292
      %vm2333 = vcmp.eq.s32.totalorder %v288, %v2292
      %vm2334 = vcmp.eq.s32.totalorder %v287, %v2295
      %vm2335 = vcmp.eq.s32.totalorder %v288, %v2295
      %vm2336 = vcmp.eq.s32.totalorder %v287, %v2298
      %vm2337 = vcmp.eq.s32.totalorder %v288, %v2298
      %vm2338 = vcmp.eq.s32.totalorder %v287, %v2301
      %vm2339 = vcmp.eq.s32.totalorder %v288, %v2301
      %vm2340 = vcmp.eq.s32.totalorder %v287, %v2304
      %vm2341 = vcmp.eq.s32.totalorder %v288, %v2304
      %vm2342 = vcmp.eq.s32.totalorder %v287, %v2307
      %vm2343 = vcmp.eq.s32.totalorder %v288, %v2307
      %vm2344 = vcmp.eq.s32.totalorder %v287, %v2310
      %vm2345 = vcmp.eq.s32.totalorder %v288, %v2310
      %vm2346 = vcmp.eq.s32.totalorder %v287, %v2313
      %vm2347 = vcmp.eq.s32.totalorder %v288, %v2313
      %vm2348 = vmor %vm2229, %vm2314
      %vm2349 = vmor %vm2230, %vm2315
      %vm2350 = vmor %vm2231, %vm2316
      %vm2351 = vmor %vm2232, %vm2317
      %vm2352 = vmor %vm2233, %vm2318
      %vm2353 = vmor %vm2234, %vm2319
      %vm2354 = vmor %vm2235, %vm2320
      %vm2355 = vmor %vm2236, %vm2321
      %vm2356 = vmor %vm2237, %vm2322
      %vm2357 = vmor %vm2238, %vm2323
      %vm2358 = vmor %vm2239, %vm2324
      %vm2359 = vmor %vm2240, %vm2325
      %vm2360 = vmor %vm2241, %vm2326
      %vm2361 = vmor %vm2242, %vm2327
      %vm2362 = vmor %vm2243, %vm2328
      %vm2363 = vmor %vm2244, %vm2329
      %vm2364 = vmor %vm2245, %vm2330
      %vm2365 = vmor %vm2246, %vm2331
      %vm2366 = vmor %vm2247, %vm2332
      %vm2367 = vmor %vm2248, %vm2333
      %vm2368 = vmor %vm2249, %vm2334
      %vm2369 = vmor %vm2250, %vm2335
      %vm2370 = vmor %vm2251, %vm2336
      %vm2371 = vmor %vm2252, %vm2337
      %vm2372 = vmor %vm2253, %vm2338
      %vm2373 = vmor %vm2254, %vm2339
      %vm2374 = vmor %vm2255, %vm2340
      %vm2375 = vmor %vm2256, %vm2341
      %vm2376 = vmor %vm2257, %vm2342
      %vm2377 = vmor %vm2258, %vm2343
      %vm2378 = vmor %vm2259, %vm2344
      %vm2379 = vmor %vm2260, %vm2345
      %vm2380 = vmor %vm2261, %vm2346
      %vm2381 = vmor %vm2262, %vm2347
      %v2382 = vsel %vm2348, 1, 0
      %v2383 = vsel %vm2349, 1, 0
      %v2384 = vsel %vm2350, 1, 0
      %v2385 = vsel %vm2351, 1, 0
      %v2386 = vsel %vm2352, 1, 0
      %v2387 = vsel %vm2353, 1, 0
      %v2388 = vsel %vm2354, 1, 0
      %v2389 = vsel %vm2355, 1, 0
      %v2390 = vsel %vm2356, 1, 0
      %v2391 = vsel %vm2357, 1, 0
      %v2392 = vsel %vm2358, 1, 0
      %v2393 = vsel %vm2359, 1, 0
      %v2394 = vsel %vm2360, 1, 0
      %v2395 = vsel %vm2361, 1, 0
      %v2396 = vsel %vm2362, 1, 0
      %v2397 = vsel %vm2363, 1, 0
      %v2398 = vsel %vm2364, 1, 0
      %v2399 = vsel %vm2365, 1, 0
      %v2400 = vsel %vm2366, 1, 0
      %v2401 = vsel %vm2367, 1, 0
      %v2402 = vsel %vm2368, 1, 0
      %v2403 = vsel %vm2369, 1, 0
      %v2404 = vsel %vm2370, 1, 0
      %v2405 = vsel %vm2371, 1, 0
      %v2406 = vsel %vm2372, 1, 0
      %v2407 = vsel %vm2373, 1, 0
      %v2408 = vsel %vm2374, 1, 0
      %v2409 = vsel %vm2375, 1, 0
      %v2410 = vsel %vm2376, 1, 0
      %v2411 = vsel %vm2377, 1, 0
      %v2412 = vsel %vm2378, 1, 0
      %v2413 = vsel %vm2379, 1, 0
      %v2414 = vsel %vm2380, 1, 0
      %v2415 = vsel %vm2381, 1, 0
      %v2416 = vcvt.s32.f32 %v2382
      %v2417 = vcvt.s32.f32 %v2383
      %v2418 = vcvt.s32.f32 %v2384
      %v2419 = vcvt.s32.f32 %v2385
      %v2420 = vcvt.s32.f32 %v2386
      %v2421 = vcvt.s32.f32 %v2387
      %v2422 = vcvt.s32.f32 %v2388
      %v2423 = vcvt.s32.f32 %v2389
      %v2424 = vcvt.s32.f32 %v2390
      %v2425 = vcvt.s32.f32 %v2391
      %v2426 = vcvt.s32.f32 %v2392
      %v2427 = vcvt.s32.f32 %v2393
      %v2428 = vcvt.s32.f32 %v2394
      %v2429 = vcvt.s32.f32 %v2395
      %v2430 = vcvt.s32.f32 %v2396
      %v2431 = vcvt.s32.f32 %v2397
      %v2432 = vcvt.s32.f32 %v2398
      %v2433 = vcvt.s32.f32 %v2399
      %v2434 = vcvt.s32.f32 %v2400
      %v2435 = vcvt.s32.f32 %v2401
      %v2436 = vcvt.s32.f32 %v2402
      %v2437 = vcvt.s32.f32 %v2403
      %v2438 = vcvt.s32.f32 %v2404
      %v2439 = vcvt.s32.f32 %v2405
      %v2440 = vcvt.s32.f32 %v2406
      %v2441 = vcvt.s32.f32 %v2407
      %v2442 = vcvt.s32.f32 %v2408
      %v2443 = vcvt.s32.f32 %v2409
      %v2444 = vcvt.s32.f32 %v2410
      %v2445 = vcvt.s32.f32 %v2411
      %v2446 = vcvt.s32.f32 %v2412
      %v2447 = vcvt.s32.f32 %v2413
      %v2448 = vcvt.s32.f32 %v2414
      %v2449 = vcvt.s32.f32 %v2415
      %2450 = vset.pattern.permute.xlu0 5
      %2451 = vperm.xlu0 %2450, %v197
      %v2452 = vpop.permute.xlu0 %2451
      %2453 = vset.pattern.permute.xlu0 5
      %2454 = vperm.xlu0 %2453, %v198
      %v2455 = vpop.permute.xlu0 %2454
      %2456 = vset.pattern.permute.xlu0 5
      %2457 = vperm.xlu0 %2456, %v199
      %v2458 = vpop.permute.xlu0 %2457
      %2459 = vset.pattern.permute.xlu0 5
      %2460 = vperm.xlu0 %2459, %v200
      %v2461 = vpop.permute.xlu0 %2460
      %2462 = vset.pattern.permute.xlu0 5
      %2463 = vperm.xlu0 %2462, %v201
      %v2464 = vpop.permute.xlu0 %2463
      %2465 = vset.pattern.permute.xlu0 5
      %2466 = vperm.xlu0 %2465, %v202
      %v2467 = vpop.permute.xlu0 %2466
      %2468 = vset.pattern.permute.xlu0 5
      %2469 = vperm.xlu0 %2468, %v203
      %v2470 = vpop.permute.xlu0 %2469
      %2471 = vset.pattern.permute.xlu0 5
      %2472 = vperm.xlu0 %2471, %v204
      %v2473 = vpop.permute.xlu0 %2472
      %2474 = vset.pattern.permute.xlu0 5
      %2475 = vperm.xlu0 %2474, %v205
      %v2476 = vpop.permute.xlu0 %2475
      %2477 = vset.pattern.permute.xlu0 5
      %2478 = vperm.xlu0 %2477, %v206
      %v2479 = vpop.permute.xlu0 %2478
      %2480 = vset.pattern.permute.xlu0 5
      %2481 = vperm.xlu0 %2480, %v207
      %v2482 = vpop.permute.xlu0 %2481
      %2483 = vset.pattern.permute.xlu0 5
      %2484 = vperm.xlu0 %2483, %v208
      %v2485 = vpop.permute.xlu0 %2484
      %2486 = vset.pattern.permute.xlu0 5
      %2487 = vperm.xlu0 %2486, %v209
      %v2488 = vpop.permute.xlu0 %2487
      %2489 = vset.pattern.permute.xlu0 5
      %2490 = vperm.xlu0 %2489, %v210
      %v2491 = vpop.permute.xlu0 %2490
      %2492 = vset.pattern.permute.xlu0 5
      %2493 = vperm.xlu0 %2492, %v211
      %v2494 = vpop.permute.xlu0 %2493
      %2495 = vset.pattern.permute.xlu0 5
      %2496 = vperm.xlu0 %2495, %v212
      %v2497 = vpop.permute.xlu0 %2496
      %2498 = vset.pattern.permute.xlu0 5
      %2499 = vperm.xlu0 %2498, %v213
      %v2500 = vpop.permute.xlu0 %2499
      %vm2501 = vcmp.eq.s32.totalorder %v287, %v2452
      %vm2502 = vcmp.eq.s32.totalorder %v288, %v2452
      %vm2503 = vcmp.eq.s32.totalorder %v287, %v2455
      %vm2504 = vcmp.eq.s32.totalorder %v288, %v2455
      %vm2505 = vcmp.eq.s32.totalorder %v287, %v2458
      %vm2506 = vcmp.eq.s32.totalorder %v288, %v2458
      %vm2507 = vcmp.eq.s32.totalorder %v287, %v2461
      %vm2508 = vcmp.eq.s32.totalorder %v288, %v2461
      %vm2509 = vcmp.eq.s32.totalorder %v287, %v2464
      %vm2510 = vcmp.eq.s32.totalorder %v288, %v2464
      %vm2511 = vcmp.eq.s32.totalorder %v287, %v2467
      %vm2512 = vcmp.eq.s32.totalorder %v288, %v2467
      %vm2513 = vcmp.eq.s32.totalorder %v287, %v2470
      %vm2514 = vcmp.eq.s32.totalorder %v288, %v2470
      %vm2515 = vcmp.eq.s32.totalorder %v287, %v2473
      %vm2516 = vcmp.eq.s32.totalorder %v288, %v2473
      %vm2517 = vcmp.eq.s32.totalorder %v287, %v2476
      %vm2518 = vcmp.eq.s32.totalorder %v288, %v2476
      %vm2519 = vcmp.eq.s32.totalorder %v287, %v2479
      %vm2520 = vcmp.eq.s32.totalorder %v288, %v2479
      %vm2521 = vcmp.eq.s32.totalorder %v287, %v2482
      %vm2522 = vcmp.eq.s32.totalorder %v288, %v2482
      %vm2523 = vcmp.eq.s32.totalorder %v287, %v2485
      %vm2524 = vcmp.eq.s32.totalorder %v288, %v2485
      %vm2525 = vcmp.eq.s32.totalorder %v287, %v2488
      %vm2526 = vcmp.eq.s32.totalorder %v288, %v2488
      %vm2527 = vcmp.eq.s32.totalorder %v287, %v2491
      %vm2528 = vcmp.eq.s32.totalorder %v288, %v2491
      %vm2529 = vcmp.eq.s32.totalorder %v287, %v2494
      %vm2530 = vcmp.eq.s32.totalorder %v288, %v2494
      %vm2531 = vcmp.eq.s32.totalorder %v287, %v2497
      %vm2532 = vcmp.eq.s32.totalorder %v288, %v2497
      %vm2533 = vcmp.eq.s32.totalorder %v287, %v2500
      %vm2534 = vcmp.eq.s32.totalorder %v288, %v2500
      %vm2535 = vmor %vm289, %vm2501
      %vm2536 = vmor %vm290, %vm2502
      %vm2537 = vmor %vm289, %vm2503
      %vm2538 = vmor %vm290, %vm2504
      %vm2539 = vmor %vm289, %vm2505
      %vm2540 = vmor %vm290, %vm2506
      %vm2541 = vmor %vm289, %vm2507
      %vm2542 = vmor %vm290, %vm2508
      %vm2543 = vmor %vm289, %vm2509
      %vm2544 = vmor %vm290, %vm2510
      %vm2545 = vmor %vm289, %vm2511
      %vm2546 = vmor %vm290, %vm2512
      %vm2547 = vmor %vm289, %vm2513
      %vm2548 = vmor %vm290, %vm2514
      %vm2549 = vmor %vm289, %vm2515
      %vm2550 = vmor %vm290, %vm2516
      %vm2551 = vmor %vm289, %vm2517
      %vm2552 = vmor %vm290, %vm2518
      %vm2553 = vmor %vm289, %vm2519
      %vm2554 = vmor %vm290, %vm2520
      %vm2555 = vmor %vm289, %vm2521
      %vm2556 = vmor %vm290, %vm2522
      %vm2557 = vmor %vm289, %vm2523
      %vm2558 = vmor %vm290, %vm2524
      %vm2559 = vmor %vm289, %vm2525
      %vm2560 = vmor %vm290, %vm2526
      %vm2561 = vmor %vm289, %vm2527
      %vm2562 = vmor %vm290, %vm2528
      %vm2563 = vmor %vm289, %vm2529
      %vm2564 = vmor %vm290, %vm2530
      %vm2565 = vmor %vm289, %vm2531
      %vm2566 = vmor %vm290, %vm2532
      %vm2567 = vmor %vm289, %vm2533
      %vm2568 = vmor %vm290, %vm2534
      %2569 = vset.pattern.permute.xlu0 5
      %2570 = vperm.xlu0 %2569, %v410
      %v2571 = vpop.permute.xlu0 %2570
      %2572 = vset.pattern.permute.xlu0 5
      %2573 = vperm.xlu0 %2572, %v411
      %v2574 = vpop.permute.xlu0 %2573
      %2575 = vset.pattern.permute.xlu0 5
      %2576 = vperm.xlu0 %2575, %v412
      %v2577 = vpop.permute.xlu0 %2576
      %2578 = vset.pattern.permute.xlu0 5
      %2579 = vperm.xlu0 %2578, %v413
      %v2580 = vpop.permute.xlu0 %2579
      %2581 = vset.pattern.permute.xlu0 5
      %2582 = vperm.xlu0 %2581, %v414
      %v2583 = vpop.permute.xlu0 %2582
      %2584 = vset.pattern.permute.xlu0 5
      %2585 = vperm.xlu0 %2584, %v415
      %v2586 = vpop.permute.xlu0 %2585
      %2587 = vset.pattern.permute.xlu0 5
      %2588 = vperm.xlu0 %2587, %v416
      %v2589 = vpop.permute.xlu0 %2588
      %2590 = vset.pattern.permute.xlu0 5
      %2591 = vperm.xlu0 %2590, %v417
      %v2592 = vpop.permute.xlu0 %2591
      %2593 = vset.pattern.permute.xlu0 5
      %2594 = vperm.xlu0 %2593, %v418
      %v2595 = vpop.permute.xlu0 %2594
      %2596 = vset.pattern.permute.xlu0 5
      %2597 = vperm.xlu0 %2596, %v419
      %v2598 = vpop.permute.xlu0 %2597
      %2599 = vset.pattern.permute.xlu0 5
      %2600 = vperm.xlu0 %2599, %v420
      %v2601 = vpop.permute.xlu0 %2600
      %2602 = vset.pattern.permute.xlu0 5
      %2603 = vperm.xlu0 %2602, %v421
      %v2604 = vpop.permute.xlu0 %2603
      %2605 = vset.pattern.permute.xlu0 5
      %2606 = vperm.xlu0 %2605, %v422
      %v2607 = vpop.permute.xlu0 %2606
      %2608 = vset.pattern.permute.xlu0 5
      %2609 = vperm.xlu0 %2608, %v423
      %v2610 = vpop.permute.xlu0 %2609
      %2611 = vset.pattern.permute.xlu0 5
      %2612 = vperm.xlu0 %2611, %v424
      %v2613 = vpop.permute.xlu0 %2612
      %2614 = vset.pattern.permute.xlu0 5
      %2615 = vperm.xlu0 %2614, %v425
      %v2616 = vpop.permute.xlu0 %2615
      %2617 = vset.pattern.permute.xlu0 5
      %2618 = vperm.xlu0 %2617, %v426
      %v2619 = vpop.permute.xlu0 %2618
      %vm2620 = vcmp.eq.s32.totalorder %v287, %v2571
      %vm2621 = vcmp.eq.s32.totalorder %v288, %v2571
      %vm2622 = vcmp.eq.s32.totalorder %v287, %v2574
      %vm2623 = vcmp.eq.s32.totalorder %v288, %v2574
      %vm2624 = vcmp.eq.s32.totalorder %v287, %v2577
      %vm2625 = vcmp.eq.s32.totalorder %v288, %v2577
      %vm2626 = vcmp.eq.s32.totalorder %v287, %v2580
      %vm2627 = vcmp.eq.s32.totalorder %v288, %v2580
      %vm2628 = vcmp.eq.s32.totalorder %v287, %v2583
      %vm2629 = vcmp.eq.s32.totalorder %v288, %v2583
      %vm2630 = vcmp.eq.s32.totalorder %v287, %v2586
      %vm2631 = vcmp.eq.s32.totalorder %v288, %v2586
      %vm2632 = vcmp.eq.s32.totalorder %v287, %v2589
      %vm2633 = vcmp.eq.s32.totalorder %v288, %v2589
      %vm2634 = vcmp.eq.s32.totalorder %v287, %v2592
      %vm2635 = vcmp.eq.s32.totalorder %v288, %v2592
      %vm2636 = vcmp.eq.s32.totalorder %v287, %v2595
      %vm2637 = vcmp.eq.s32.totalorder %v288, %v2595
      %vm2638 = vcmp.eq.s32.totalorder %v287, %v2598
      %vm2639 = vcmp.eq.s32.totalorder %v288, %v2598
      %vm2640 = vcmp.eq.s32.totalorder %v287, %v2601
      %vm2641 = vcmp.eq.s32.totalorder %v288, %v2601
      %vm2642 = vcmp.eq.s32.totalorder %v287, %v2604
      %vm2643 = vcmp.eq.s32.totalorder %v288, %v2604
      %vm2644 = vcmp.eq.s32.totalorder %v287, %v2607
      %vm2645 = vcmp.eq.s32.totalorder %v288, %v2607
      %vm2646 = vcmp.eq.s32.totalorder %v287, %v2610
      %vm2647 = vcmp.eq.s32.totalorder %v288, %v2610
      %vm2648 = vcmp.eq.s32.totalorder %v287, %v2613
      %vm2649 = vcmp.eq.s32.totalorder %v288, %v2613
      %vm2650 = vcmp.eq.s32.totalorder %v287, %v2616
      %vm2651 = vcmp.eq.s32.totalorder %v288, %v2616
      %vm2652 = vcmp.eq.s32.totalorder %v287, %v2619
      %vm2653 = vcmp.eq.s32.totalorder %v288, %v2619
      %vm2654 = vmor %vm2535, %vm2620
      %vm2655 = vmor %vm2536, %vm2621
      %vm2656 = vmor %vm2537, %vm2622
      %vm2657 = vmor %vm2538, %vm2623
      %vm2658 = vmor %vm2539, %vm2624
      %vm2659 = vmor %vm2540, %vm2625
      %vm2660 = vmor %vm2541, %vm2626
      %vm2661 = vmor %vm2542, %vm2627
      %vm2662 = vmor %vm2543, %vm2628
      %vm2663 = vmor %vm2544, %vm2629
      %vm2664 = vmor %vm2545, %vm2630
      %vm2665 = vmor %vm2546, %vm2631
      %vm2666 = vmor %vm2547, %vm2632
      %vm2667 = vmor %vm2548, %vm2633
      %vm2668 = vmor %vm2549, %vm2634
      %vm2669 = vmor %vm2550, %vm2635
      %vm2670 = vmor %vm2551, %vm2636
      %vm2671 = vmor %vm2552, %vm2637
      %vm2672 = vmor %vm2553, %vm2638
      %vm2673 = vmor %vm2554, %vm2639
      %vm2674 = vmor %vm2555, %vm2640
      %vm2675 = vmor %vm2556, %vm2641
      %vm2676 = vmor %vm2557, %vm2642
      %vm2677 = vmor %vm2558, %vm2643
      %vm2678 = vmor %vm2559, %vm2644
      %vm2679 = vmor %vm2560, %vm2645
      %vm2680 = vmor %vm2561, %vm2646
      %vm2681 = vmor %vm2562, %vm2647
      %vm2682 = vmor %vm2563, %vm2648
      %vm2683 = vmor %vm2564, %vm2649
      %vm2684 = vmor %vm2565, %vm2650
      %vm2685 = vmor %vm2566, %vm2651
      %vm2686 = vmor %vm2567, %vm2652
      %vm2687 = vmor %vm2568, %vm2653
      %2688 = vset.pattern.permute.xlu0 5
      %2689 = vperm.xlu0 %2688, %v546
      %v2690 = vpop.permute.xlu0 %2689
      %2691 = vset.pattern.permute.xlu0 5
      %2692 = vperm.xlu0 %2691, %v547
      %v2693 = vpop.permute.xlu0 %2692
      %2694 = vset.pattern.permute.xlu0 5
      %2695 = vperm.xlu0 %2694, %v548
      %v2696 = vpop.permute.xlu0 %2695
      %2697 = vset.pattern.permute.xlu0 5
      %2698 = vperm.xlu0 %2697, %v549
      %v2699 = vpop.permute.xlu0 %2698
      %2700 = vset.pattern.permute.xlu0 5
      %2701 = vperm.xlu0 %2700, %v550
      %v2702 = vpop.permute.xlu0 %2701
      %2703 = vset.pattern.permute.xlu0 5
      %2704 = vperm.xlu0 %2703, %v551
      %v2705 = vpop.permute.xlu0 %2704
      %2706 = vset.pattern.permute.xlu0 5
      %2707 = vperm.xlu0 %2706, %v552
      %v2708 = vpop.permute.xlu0 %2707
      %2709 = vset.pattern.permute.xlu0 5
      %2710 = vperm.xlu0 %2709, %v553
      %v2711 = vpop.permute.xlu0 %2710
      %2712 = vset.pattern.permute.xlu0 5
      %2713 = vperm.xlu0 %2712, %v554
      %v2714 = vpop.permute.xlu0 %2713
      %2715 = vset.pattern.permute.xlu0 5
      %2716 = vperm.xlu0 %2715, %v555
      %v2717 = vpop.permute.xlu0 %2716
      %2718 = vset.pattern.permute.xlu0 5
      %2719 = vperm.xlu0 %2718, %v556
      %v2720 = vpop.permute.xlu0 %2719
      %2721 = vset.pattern.permute.xlu0 5
      %2722 = vperm.xlu0 %2721, %v557
      %v2723 = vpop.permute.xlu0 %2722
      %2724 = vset.pattern.permute.xlu0 5
      %2725 = vperm.xlu0 %2724, %v558
      %v2726 = vpop.permute.xlu0 %2725
      %2727 = vset.pattern.permute.xlu0 5
      %2728 = vperm.xlu0 %2727, %v559
      %v2729 = vpop.permute.xlu0 %2728
      %2730 = vset.pattern.permute.xlu0 5
      %2731 = vperm.xlu0 %2730, %v560
      %v2732 = vpop.permute.xlu0 %2731
      %2733 = vset.pattern.permute.xlu0 5
      %2734 = vperm.xlu0 %2733, %v561
      %v2735 = vpop.permute.xlu0 %2734
      %2736 = vset.pattern.permute.xlu0 5
      %2737 = vperm.xlu0 %2736, %v562
      %v2738 = vpop.permute.xlu0 %2737
      %vm2739 = vcmp.eq.s32.totalorder %v287, %v2690
      %vm2740 = vcmp.eq.s32.totalorder %v288, %v2690
      %vm2741 = vcmp.eq.s32.totalorder %v287, %v2693
      %vm2742 = vcmp.eq.s32.totalorder %v288, %v2693
      %vm2743 = vcmp.eq.s32.totalorder %v287, %v2696
      %vm2744 = vcmp.eq.s32.totalorder %v288, %v2696
      %vm2745 = vcmp.eq.s32.totalorder %v287, %v2699
      %vm2746 = vcmp.eq.s32.totalorder %v288, %v2699
      %vm2747 = vcmp.eq.s32.totalorder %v287, %v2702
      %vm2748 = vcmp.eq.s32.totalorder %v288, %v2702
      %vm2749 = vcmp.eq.s32.totalorder %v287, %v2705
      %vm2750 = vcmp.eq.s32.totalorder %v288, %v2705
      %vm2751 = vcmp.eq.s32.totalorder %v287, %v2708
      %vm2752 = vcmp.eq.s32.totalorder %v288, %v2708
      %vm2753 = vcmp.eq.s32.totalorder %v287, %v2711
      %vm2754 = vcmp.eq.s32.totalorder %v288, %v2711
      %vm2755 = vcmp.eq.s32.totalorder %v287, %v2714
      %vm2756 = vcmp.eq.s32.totalorder %v288, %v2714
      %vm2757 = vcmp.eq.s32.totalorder %v287, %v2717
      %vm2758 = vcmp.eq.s32.totalorder %v288, %v2717
      %vm2759 = vcmp.eq.s32.totalorder %v287, %v2720
      %vm2760 = vcmp.eq.s32.totalorder %v288, %v2720
      %vm2761 = vcmp.eq.s32.totalorder %v287, %v2723
      %vm2762 = vcmp.eq.s32.totalorder %v288, %v2723
      %vm2763 = vcmp.eq.s32.totalorder %v287, %v2726
      %vm2764 = vcmp.eq.s32.totalorder %v288, %v2726
      %vm2765 = vcmp.eq.s32.totalorder %v287, %v2729
      %vm2766 = vcmp.eq.s32.totalorder %v288, %v2729
      %vm2767 = vcmp.eq.s32.totalorder %v287, %v2732
      %vm2768 = vcmp.eq.s32.totalorder %v288, %v2732
      %vm2769 = vcmp.eq.s32.totalorder %v287, %v2735
      %vm2770 = vcmp.eq.s32.totalorder %v288, %v2735
      %vm2771 = vcmp.eq.s32.totalorder %v287, %v2738
      %vm2772 = vcmp.eq.s32.totalorder %v288, %v2738
      %vm2773 = vmor %vm2654, %vm2739
      %vm2774 = vmor %vm2655, %vm2740
      %vm2775 = vmor %vm2656, %vm2741
      %vm2776 = vmor %vm2657, %vm2742
      %vm2777 = vmor %vm2658, %vm2743
      %vm2778 = vmor %vm2659, %vm2744
      %vm2779 = vmor %vm2660, %vm2745
      %vm2780 = vmor %vm2661, %vm2746
      %vm2781 = vmor %vm2662, %vm2747
      %vm2782 = vmor %vm2663, %vm2748
      %vm2783 = vmor %vm2664, %vm2749
      %vm2784 = vmor %vm2665, %vm2750
      %vm2785 = vmor %vm2666, %vm2751
      %vm2786 = vmor %vm2667, %vm2752
      %vm2787 = vmor %vm2668, %vm2753
      %vm2788 = vmor %vm2669, %vm2754
      %vm2789 = vmor %vm2670, %vm2755
      %vm2790 = vmor %vm2671, %vm2756
      %vm2791 = vmor %vm2672, %vm2757
      %vm2792 = vmor %vm2673, %vm2758
      %vm2793 = vmor %vm2674, %vm2759
      %vm2794 = vmor %vm2675, %vm2760
      %vm2795 = vmor %vm2676, %vm2761
      %vm2796 = vmor %vm2677, %vm2762
      %vm2797 = vmor %vm2678, %vm2763
      %vm2798 = vmor %vm2679, %vm2764
      %vm2799 = vmor %vm2680, %vm2765
      %vm2800 = vmor %vm2681, %vm2766
      %vm2801 = vmor %vm2682, %vm2767
      %vm2802 = vmor %vm2683, %vm2768
      %vm2803 = vmor %vm2684, %vm2769
      %vm2804 = vmor %vm2685, %vm2770
      %vm2805 = vmor %vm2686, %vm2771
      %vm2806 = vmor %vm2687, %vm2772
      %v2807 = vsel %vm2773, 1, 0
      %v2808 = vsel %vm2774, 1, 0
      %v2809 = vsel %vm2775, 1, 0
      %v2810 = vsel %vm2776, 1, 0
      %v2811 = vsel %vm2777, 1, 0
      %v2812 = vsel %vm2778, 1, 0
      %v2813 = vsel %vm2779, 1, 0
      %v2814 = vsel %vm2780, 1, 0
      %v2815 = vsel %vm2781, 1, 0
      %v2816 = vsel %vm2782, 1, 0
      %v2817 = vsel %vm2783, 1, 0
      %v2818 = vsel %vm2784, 1, 0
      %v2819 = vsel %vm2785, 1, 0
      %v2820 = vsel %vm2786, 1, 0
      %v2821 = vsel %vm2787, 1, 0
      %v2822 = vsel %vm2788, 1, 0
      %v2823 = vsel %vm2789, 1, 0
      %v2824 = vsel %vm2790, 1, 0
      %v2825 = vsel %vm2791, 1, 0
      %v2826 = vsel %vm2792, 1, 0
      %v2827 = vsel %vm2793, 1, 0
      %v2828 = vsel %vm2794, 1, 0
      %v2829 = vsel %vm2795, 1, 0
      %v2830 = vsel %vm2796, 1, 0
      %v2831 = vsel %vm2797, 1, 0
      %v2832 = vsel %vm2798, 1, 0
      %v2833 = vsel %vm2799, 1, 0
      %v2834 = vsel %vm2800, 1, 0
      %v2835 = vsel %vm2801, 1, 0
      %v2836 = vsel %vm2802, 1, 0
      %v2837 = vsel %vm2803, 1, 0
      %v2838 = vsel %vm2804, 1, 0
      %v2839 = vsel %vm2805, 1, 0
      %v2840 = vsel %vm2806, 1, 0
      %v2841 = vcvt.s32.f32 %v2807
      %v2842 = vcvt.s32.f32 %v2808
      %v2843 = vcvt.s32.f32 %v2809
      %v2844 = vcvt.s32.f32 %v2810
      %v2845 = vcvt.s32.f32 %v2811
      %v2846 = vcvt.s32.f32 %v2812
      %v2847 = vcvt.s32.f32 %v2813
      %v2848 = vcvt.s32.f32 %v2814
      %v2849 = vcvt.s32.f32 %v2815
      %v2850 = vcvt.s32.f32 %v2816
      %v2851 = vcvt.s32.f32 %v2817
      %v2852 = vcvt.s32.f32 %v2818
      %v2853 = vcvt.s32.f32 %v2819
      %v2854 = vcvt.s32.f32 %v2820
      %v2855 = vcvt.s32.f32 %v2821
      %v2856 = vcvt.s32.f32 %v2822
      %v2857 = vcvt.s32.f32 %v2823
      %v2858 = vcvt.s32.f32 %v2824
      %v2859 = vcvt.s32.f32 %v2825
      %v2860 = vcvt.s32.f32 %v2826
      %v2861 = vcvt.s32.f32 %v2827
      %v2862 = vcvt.s32.f32 %v2828
      %v2863 = vcvt.s32.f32 %v2829
      %v2864 = vcvt.s32.f32 %v2830
      %v2865 = vcvt.s32.f32 %v2831
      %v2866 = vcvt.s32.f32 %v2832
      %v2867 = vcvt.s32.f32 %v2833
      %v2868 = vcvt.s32.f32 %v2834
      %v2869 = vcvt.s32.f32 %v2835
      %v2870 = vcvt.s32.f32 %v2836
      %v2871 = vcvt.s32.f32 %v2837
      %v2872 = vcvt.s32.f32 %v2838
      %v2873 = vcvt.s32.f32 %v2839
      %v2874 = vcvt.s32.f32 %v2840
      %2875 = vset.pattern.permute.xlu0 6
      %2876 = vperm.xlu0 %2875, %v197
      %v2877 = vpop.permute.xlu0 %2876
      %2878 = vset.pattern.permute.xlu0 6
      %2879 = vperm.xlu0 %2878, %v198
      %v2880 = vpop.permute.xlu0 %2879
      %2881 = vset.pattern.permute.xlu0 6
      %2882 = vperm.xlu0 %2881, %v199
      %v2883 = vpop.permute.xlu0 %2882
      %2884 = vset.pattern.permute.xlu0 6
      %2885 = vperm.xlu0 %2884, %v200
      %v2886 = vpop.permute.xlu0 %2885
      %2887 = vset.pattern.permute.xlu0 6
      %2888 = vperm.xlu0 %2887, %v201
      %v2889 = vpop.permute.xlu0 %2888
      %2890 = vset.pattern.permute.xlu0 6
      %2891 = vperm.xlu0 %2890, %v202
      %v2892 = vpop.permute.xlu0 %2891
      %2893 = vset.pattern.permute.xlu0 6
      %2894 = vperm.xlu0 %2893, %v203
      %v2895 = vpop.permute.xlu0 %2894
      %2896 = vset.pattern.permute.xlu0 6
      %2897 = vperm.xlu0 %2896, %v204
      %v2898 = vpop.permute.xlu0 %2897
      %2899 = vset.pattern.permute.xlu0 6
      %2900 = vperm.xlu0 %2899, %v205
      %v2901 = vpop.permute.xlu0 %2900
      %2902 = vset.pattern.permute.xlu0 6
      %2903 = vperm.xlu0 %2902, %v206
      %v2904 = vpop.permute.xlu0 %2903
      %2905 = vset.pattern.permute.xlu0 6
      %2906 = vperm.xlu0 %2905, %v207
      %v2907 = vpop.permute.xlu0 %2906
      %2908 = vset.pattern.permute.xlu0 6
      %2909 = vperm.xlu0 %2908, %v208
      %v2910 = vpop.permute.xlu0 %2909
      %2911 = vset.pattern.permute.xlu0 6
      %2912 = vperm.xlu0 %2911, %v209
      %v2913 = vpop.permute.xlu0 %2912
      %2914 = vset.pattern.permute.xlu0 6
      %2915 = vperm.xlu0 %2914, %v210
      %v2916 = vpop.permute.xlu0 %2915
      %2917 = vset.pattern.permute.xlu0 6
      %2918 = vperm.xlu0 %2917, %v211
      %v2919 = vpop.permute.xlu0 %2918
      %2920 = vset.pattern.permute.xlu0 6
      %2921 = vperm.xlu0 %2920, %v212
      %v2922 = vpop.permute.xlu0 %2921
      %2923 = vset.pattern.permute.xlu0 6
      %2924 = vperm.xlu0 %2923, %v213
      %v2925 = vpop.permute.xlu0 %2924
      %vm2926 = vcmp.eq.s32.totalorder %v287, %v2877
      %vm2927 = vcmp.eq.s32.totalorder %v288, %v2877
      %vm2928 = vcmp.eq.s32.totalorder %v287, %v2880
      %vm2929 = vcmp.eq.s32.totalorder %v288, %v2880
      %vm2930 = vcmp.eq.s32.totalorder %v287, %v2883
      %vm2931 = vcmp.eq.s32.totalorder %v288, %v2883
      %vm2932 = vcmp.eq.s32.totalorder %v287, %v2886
      %vm2933 = vcmp.eq.s32.totalorder %v288, %v2886
      %vm2934 = vcmp.eq.s32.totalorder %v287, %v2889
      %vm2935 = vcmp.eq.s32.totalorder %v288, %v2889
      %vm2936 = vcmp.eq.s32.totalorder %v287, %v2892
      %vm2937 = vcmp.eq.s32.totalorder %v288, %v2892
      %vm2938 = vcmp.eq.s32.totalorder %v287, %v2895
      %vm2939 = vcmp.eq.s32.totalorder %v288, %v2895
      %vm2940 = vcmp.eq.s32.totalorder %v287, %v2898
      %vm2941 = vcmp.eq.s32.totalorder %v288, %v2898
      %vm2942 = vcmp.eq.s32.totalorder %v287, %v2901
      %vm2943 = vcmp.eq.s32.totalorder %v288, %v2901
      %vm2944 = vcmp.eq.s32.totalorder %v287, %v2904
      %vm2945 = vcmp.eq.s32.totalorder %v288, %v2904
      %vm2946 = vcmp.eq.s32.totalorder %v287, %v2907
      %vm2947 = vcmp.eq.s32.totalorder %v288, %v2907
      %vm2948 = vcmp.eq.s32.totalorder %v287, %v2910
      %vm2949 = vcmp.eq.s32.totalorder %v288, %v2910
      %vm2950 = vcmp.eq.s32.totalorder %v287, %v2913
      %vm2951 = vcmp.eq.s32.totalorder %v288, %v2913
      %vm2952 = vcmp.eq.s32.totalorder %v287, %v2916
      %vm2953 = vcmp.eq.s32.totalorder %v288, %v2916
      %vm2954 = vcmp.eq.s32.totalorder %v287, %v2919
      %vm2955 = vcmp.eq.s32.totalorder %v288, %v2919
      %vm2956 = vcmp.eq.s32.totalorder %v287, %v2922
      %vm2957 = vcmp.eq.s32.totalorder %v288, %v2922
      %vm2958 = vcmp.eq.s32.totalorder %v287, %v2925
      %vm2959 = vcmp.eq.s32.totalorder %v288, %v2925
      %vm2960 = vmor %vm289, %vm2926
      %vm2961 = vmor %vm290, %vm2927
      %vm2962 = vmor %vm289, %vm2928
      %vm2963 = vmor %vm290, %vm2929
      %vm2964 = vmor %vm289, %vm2930
      %vm2965 = vmor %vm290, %vm2931
      %vm2966 = vmor %vm289, %vm2932
      %vm2967 = vmor %vm290, %vm2933
      %vm2968 = vmor %vm289, %vm2934
      %vm2969 = vmor %vm290, %vm2935
      %vm2970 = vmor %vm289, %vm2936
      %vm2971 = vmor %vm290, %vm2937
      %vm2972 = vmor %vm289, %vm2938
      %vm2973 = vmor %vm290, %vm2939
      %vm2974 = vmor %vm289, %vm2940
      %vm2975 = vmor %vm290, %vm2941
      %vm2976 = vmor %vm289, %vm2942
      %vm2977 = vmor %vm290, %vm2943
      %vm2978 = vmor %vm289, %vm2944
      %vm2979 = vmor %vm290, %vm2945
      %vm2980 = vmor %vm289, %vm2946
      %vm2981 = vmor %vm290, %vm2947
      %vm2982 = vmor %vm289, %vm2948
      %vm2983 = vmor %vm290, %vm2949
      %vm2984 = vmor %vm289, %vm2950
      %vm2985 = vmor %vm290, %vm2951
      %vm2986 = vmor %vm289, %vm2952
      %vm2987 = vmor %vm290, %vm2953
      %vm2988 = vmor %vm289, %vm2954
      %vm2989 = vmor %vm290, %vm2955
      %vm2990 = vmor %vm289, %vm2956
      %vm2991 = vmor %vm290, %vm2957
      %vm2992 = vmor %vm289, %vm2958
      %vm2993 = vmor %vm290, %vm2959
      %2994 = vset.pattern.permute.xlu0 6
      %2995 = vperm.xlu0 %2994, %v410
      %v2996 = vpop.permute.xlu0 %2995
      %2997 = vset.pattern.permute.xlu0 6
      %2998 = vperm.xlu0 %2997, %v411
      %v2999 = vpop.permute.xlu0 %2998
      %3000 = vset.pattern.permute.xlu0 6
      %3001 = vperm.xlu0 %3000, %v412
      %v3002 = vpop.permute.xlu0 %3001
      %3003 = vset.pattern.permute.xlu0 6
      %3004 = vperm.xlu0 %3003, %v413
      %v3005 = vpop.permute.xlu0 %3004
      %3006 = vset.pattern.permute.xlu0 6
      %3007 = vperm.xlu0 %3006, %v414
      %v3008 = vpop.permute.xlu0 %3007
      %3009 = vset.pattern.permute.xlu0 6
      %3010 = vperm.xlu0 %3009, %v415
      %v3011 = vpop.permute.xlu0 %3010
      %3012 = vset.pattern.permute.xlu0 6
      %3013 = vperm.xlu0 %3012, %v416
      %v3014 = vpop.permute.xlu0 %3013
      %3015 = vset.pattern.permute.xlu0 6
      %3016 = vperm.xlu0 %3015, %v417
      %v3017 = vpop.permute.xlu0 %3016
      %3018 = vset.pattern.permute.xlu0 6
      %3019 = vperm.xlu0 %3018, %v418
      %v3020 = vpop.permute.xlu0 %3019
      %3021 = vset.pattern.permute.xlu0 6
      %3022 = vperm.xlu0 %3021, %v419
      %v3023 = vpop.permute.xlu0 %3022
      %3024 = vset.pattern.permute.xlu0 6
      %3025 = vperm.xlu0 %3024, %v420
      %v3026 = vpop.permute.xlu0 %3025
      %3027 = vset.pattern.permute.xlu0 6
      %3028 = vperm.xlu0 %3027, %v421
      %v3029 = vpop.permute.xlu0 %3028
      %3030 = vset.pattern.permute.xlu0 6
      %3031 = vperm.xlu0 %3030, %v422
      %v3032 = vpop.permute.xlu0 %3031
      %3033 = vset.pattern.permute.xlu0 6
      %3034 = vperm.xlu0 %3033, %v423
      %v3035 = vpop.permute.xlu0 %3034
      %3036 = vset.pattern.permute.xlu0 6
      %3037 = vperm.xlu0 %3036, %v424
      %v3038 = vpop.permute.xlu0 %3037
      %3039 = vset.pattern.permute.xlu0 6
      %3040 = vperm.xlu0 %3039, %v425
      %v3041 = vpop.permute.xlu0 %3040
      %3042 = vset.pattern.permute.xlu0 6
      %3043 = vperm.xlu0 %3042, %v426
      %v3044 = vpop.permute.xlu0 %3043
      %vm3045 = vcmp.eq.s32.totalorder %v287, %v2996
      %vm3046 = vcmp.eq.s32.totalorder %v288, %v2996
      %vm3047 = vcmp.eq.s32.totalorder %v287, %v2999
      %vm3048 = vcmp.eq.s32.totalorder %v288, %v2999
      %vm3049 = vcmp.eq.s32.totalorder %v287, %v3002
      %vm3050 = vcmp.eq.s32.totalorder %v288, %v3002
      %vm3051 = vcmp.eq.s32.totalorder %v287, %v3005
      %vm3052 = vcmp.eq.s32.totalorder %v288, %v3005
      %vm3053 = vcmp.eq.s32.totalorder %v287, %v3008
      %vm3054 = vcmp.eq.s32.totalorder %v288, %v3008
      %vm3055 = vcmp.eq.s32.totalorder %v287, %v3011
      %vm3056 = vcmp.eq.s32.totalorder %v288, %v3011
      %vm3057 = vcmp.eq.s32.totalorder %v287, %v3014
      %vm3058 = vcmp.eq.s32.totalorder %v288, %v3014
      %vm3059 = vcmp.eq.s32.totalorder %v287, %v3017
      %vm3060 = vcmp.eq.s32.totalorder %v288, %v3017
      %vm3061 = vcmp.eq.s32.totalorder %v287, %v3020
      %vm3062 = vcmp.eq.s32.totalorder %v288, %v3020
      %vm3063 = vcmp.eq.s32.totalorder %v287, %v3023
      %vm3064 = vcmp.eq.s32.totalorder %v288, %v3023
      %vm3065 = vcmp.eq.s32.totalorder %v287, %v3026
      %vm3066 = vcmp.eq.s32.totalorder %v288, %v3026
      %vm3067 = vcmp.eq.s32.totalorder %v287, %v3029
      %vm3068 = vcmp.eq.s32.totalorder %v288, %v3029
      %vm3069 = vcmp.eq.s32.totalorder %v287, %v3032
      %vm3070 = vcmp.eq.s32.totalorder %v288, %v3032
      %vm3071 = vcmp.eq.s32.totalorder %v287, %v3035
      %vm3072 = vcmp.eq.s32.totalorder %v288, %v3035
      %vm3073 = vcmp.eq.s32.totalorder %v287, %v3038
      %vm3074 = vcmp.eq.s32.totalorder %v288, %v3038
      %vm3075 = vcmp.eq.s32.totalorder %v287, %v3041
      %vm3076 = vcmp.eq.s32.totalorder %v288, %v3041
      %vm3077 = vcmp.eq.s32.totalorder %v287, %v3044
      %vm3078 = vcmp.eq.s32.totalorder %v288, %v3044
      %vm3079 = vmor %vm2960, %vm3045
      %vm3080 = vmor %vm2961, %vm3046
      %vm3081 = vmor %vm2962, %vm3047
      %vm3082 = vmor %vm2963, %vm3048
      %vm3083 = vmor %vm2964, %vm3049
      %vm3084 = vmor %vm2965, %vm3050
      %vm3085 = vmor %vm2966, %vm3051
      %vm3086 = vmor %vm2967, %vm3052
      %vm3087 = vmor %vm2968, %vm3053
      %vm3088 = vmor %vm2969, %vm3054
      %vm3089 = vmor %vm2970, %vm3055
      %vm3090 = vmor %vm2971, %vm3056
      %vm3091 = vmor %vm2972, %vm3057
      %vm3092 = vmor %vm2973, %vm3058
      %vm3093 = vmor %vm2974, %vm3059
      %vm3094 = vmor %vm2975, %vm3060
      %vm3095 = vmor %vm2976, %vm3061
      %vm3096 = vmor %vm2977, %vm3062
      %vm3097 = vmor %vm2978, %vm3063
      %vm3098 = vmor %vm2979, %vm3064
      %vm3099 = vmor %vm2980, %vm3065
      %vm3100 = vmor %vm2981, %vm3066
      %vm3101 = vmor %vm2982, %vm3067
      %vm3102 = vmor %vm2983, %vm3068
      %vm3103 = vmor %vm2984, %vm3069
      %vm3104 = vmor %vm2985, %vm3070
      %vm3105 = vmor %vm2986, %vm3071
      %vm3106 = vmor %vm2987, %vm3072
      %vm3107 = vmor %vm2988, %vm3073
      %vm3108 = vmor %vm2989, %vm3074
      %vm3109 = vmor %vm2990, %vm3075
      %vm3110 = vmor %vm2991, %vm3076
      %vm3111 = vmor %vm2992, %vm3077
      %vm3112 = vmor %vm2993, %vm3078
      %3113 = vset.pattern.permute.xlu0 6
      %3114 = vperm.xlu0 %3113, %v546
      %v3115 = vpop.permute.xlu0 %3114
      %3116 = vset.pattern.permute.xlu0 6
      %3117 = vperm.xlu0 %3116, %v547
      %v3118 = vpop.permute.xlu0 %3117
      %3119 = vset.pattern.permute.xlu0 6
      %3120 = vperm.xlu0 %3119, %v548
      %v3121 = vpop.permute.xlu0 %3120
      %3122 = vset.pattern.permute.xlu0 6
      %3123 = vperm.xlu0 %3122, %v549
      %v3124 = vpop.permute.xlu0 %3123
      %3125 = vset.pattern.permute.xlu0 6
      %3126 = vperm.xlu0 %3125, %v550
      %v3127 = vpop.permute.xlu0 %3126
      %3128 = vset.pattern.permute.xlu0 6
      %3129 = vperm.xlu0 %3128, %v551
      %v3130 = vpop.permute.xlu0 %3129
      %3131 = vset.pattern.permute.xlu0 6
      %3132 = vperm.xlu0 %3131, %v552
      %v3133 = vpop.permute.xlu0 %3132
      %3134 = vset.pattern.permute.xlu0 6
      %3135 = vperm.xlu0 %3134, %v553
      %v3136 = vpop.permute.xlu0 %3135
      %3137 = vset.pattern.permute.xlu0 6
      %3138 = vperm.xlu0 %3137, %v554
      %v3139 = vpop.permute.xlu0 %3138
      %3140 = vset.pattern.permute.xlu0 6
      %3141 = vperm.xlu0 %3140, %v555
      %v3142 = vpop.permute.xlu0 %3141
      %3143 = vset.pattern.permute.xlu0 6
      %3144 = vperm.xlu0 %3143, %v556
      %v3145 = vpop.permute.xlu0 %3144
      %3146 = vset.pattern.permute.xlu0 6
      %3147 = vperm.xlu0 %3146, %v557
      %v3148 = vpop.permute.xlu0 %3147
      %3149 = vset.pattern.permute.xlu0 6
      %3150 = vperm.xlu0 %3149, %v558
      %v3151 = vpop.permute.xlu0 %3150
      %3152 = vset.pattern.permute.xlu0 6
      %3153 = vperm.xlu0 %3152, %v559
      %v3154 = vpop.permute.xlu0 %3153
      %3155 = vset.pattern.permute.xlu0 6
      %3156 = vperm.xlu0 %3155, %v560
      %v3157 = vpop.permute.xlu0 %3156
      %3158 = vset.pattern.permute.xlu0 6
      %3159 = vperm.xlu0 %3158, %v561
      %v3160 = vpop.permute.xlu0 %3159
      %3161 = vset.pattern.permute.xlu0 6
      %3162 = vperm.xlu0 %3161, %v562
      %v3163 = vpop.permute.xlu0 %3162
      %vm3164 = vcmp.eq.s32.totalorder %v287, %v3115
      %vm3165 = vcmp.eq.s32.totalorder %v288, %v3115
      %vm3166 = vcmp.eq.s32.totalorder %v287, %v3118
      %vm3167 = vcmp.eq.s32.totalorder %v288, %v3118
      %vm3168 = vcmp.eq.s32.totalorder %v287, %v3121
      %vm3169 = vcmp.eq.s32.totalorder %v288, %v3121
      %vm3170 = vcmp.eq.s32.totalorder %v287, %v3124
      %vm3171 = vcmp.eq.s32.totalorder %v288, %v3124
      %vm3172 = vcmp.eq.s32.totalorder %v287, %v3127
      %vm3173 = vcmp.eq.s32.totalorder %v288, %v3127
      %vm3174 = vcmp.eq.s32.totalorder %v287, %v3130
      %vm3175 = vcmp.eq.s32.totalorder %v288, %v3130
      %vm3176 = vcmp.eq.s32.totalorder %v287, %v3133
      %vm3177 = vcmp.eq.s32.totalorder %v288, %v3133
      %vm3178 = vcmp.eq.s32.totalorder %v287, %v3136
      %vm3179 = vcmp.eq.s32.totalorder %v288, %v3136
      %vm3180 = vcmp.eq.s32.totalorder %v287, %v3139
      %vm3181 = vcmp.eq.s32.totalorder %v288, %v3139
      %vm3182 = vcmp.eq.s32.totalorder %v287, %v3142
      %vm3183 = vcmp.eq.s32.totalorder %v288, %v3142
      %vm3184 = vcmp.eq.s32.totalorder %v287, %v3145
      %vm3185 = vcmp.eq.s32.totalorder %v288, %v3145
      %vm3186 = vcmp.eq.s32.totalorder %v287, %v3148
      %vm3187 = vcmp.eq.s32.totalorder %v288, %v3148
      %vm3188 = vcmp.eq.s32.totalorder %v287, %v3151
      %vm3189 = vcmp.eq.s32.totalorder %v288, %v3151
      %vm3190 = vcmp.eq.s32.totalorder %v287, %v3154
      %vm3191 = vcmp.eq.s32.totalorder %v288, %v3154
      %vm3192 = vcmp.eq.s32.totalorder %v287, %v3157
      %vm3193 = vcmp.eq.s32.totalorder %v288, %v3157
      %vm3194 = vcmp.eq.s32.totalorder %v287, %v3160
      %vm3195 = vcmp.eq.s32.totalorder %v288, %v3160
      %vm3196 = vcmp.eq.s32.totalorder %v287, %v3163
      %vm3197 = vcmp.eq.s32.totalorder %v288, %v3163
      %vm3198 = vmor %vm3079, %vm3164
      %vm3199 = vmor %vm3080, %vm3165
      %vm3200 = vmor %vm3081, %vm3166
      %vm3201 = vmor %vm3082, %vm3167
      %vm3202 = vmor %vm3083, %vm3168
      %vm3203 = vmor %vm3084, %vm3169
      %vm3204 = vmor %vm3085, %vm3170
      %vm3205 = vmor %vm3086, %vm3171
      %vm3206 = vmor %vm3087, %vm3172
      %vm3207 = vmor %vm3088, %vm3173
      %vm3208 = vmor %vm3089, %vm3174
      %vm3209 = vmor %vm3090, %vm3175
      %vm3210 = vmor %vm3091, %vm3176
      %vm3211 = vmor %vm3092, %vm3177
      %vm3212 = vmor %vm3093, %vm3178
      %vm3213 = vmor %vm3094, %vm3179
      %vm3214 = vmor %vm3095, %vm3180
      %vm3215 = vmor %vm3096, %vm3181
      %vm3216 = vmor %vm3097, %vm3182
      %vm3217 = vmor %vm3098, %vm3183
      %vm3218 = vmor %vm3099, %vm3184
      %vm3219 = vmor %vm3100, %vm3185
      %vm3220 = vmor %vm3101, %vm3186
      %vm3221 = vmor %vm3102, %vm3187
      %vm3222 = vmor %vm3103, %vm3188
      %vm3223 = vmor %vm3104, %vm3189
      %vm3224 = vmor %vm3105, %vm3190
      %vm3225 = vmor %vm3106, %vm3191
      %vm3226 = vmor %vm3107, %vm3192
      %vm3227 = vmor %vm3108, %vm3193
      %vm3228 = vmor %vm3109, %vm3194
      %vm3229 = vmor %vm3110, %vm3195
      %vm3230 = vmor %vm3111, %vm3196
      %vm3231 = vmor %vm3112, %vm3197
      %v3232 = vsel %vm3198, 1, 0
      %v3233 = vsel %vm3199, 1, 0
      %v3234 = vsel %vm3200, 1, 0
      %v3235 = vsel %vm3201, 1, 0
      %v3236 = vsel %vm3202, 1, 0
      %v3237 = vsel %vm3203, 1, 0
      %v3238 = vsel %vm3204, 1, 0
      %v3239 = vsel %vm3205, 1, 0
      %v3240 = vsel %vm3206, 1, 0
      %v3241 = vsel %vm3207, 1, 0
      %v3242 = vsel %vm3208, 1, 0
      %v3243 = vsel %vm3209, 1, 0
      %v3244 = vsel %vm3210, 1, 0
      %v3245 = vsel %vm3211, 1, 0
      %v3246 = vsel %vm3212, 1, 0
      %v3247 = vsel %vm3213, 1, 0
      %v3248 = vsel %vm3214, 1, 0
      %v3249 = vsel %vm3215, 1, 0
      %v3250 = vsel %vm3216, 1, 0
      %v3251 = vsel %vm3217, 1, 0
      %v3252 = vsel %vm3218, 1, 0
      %v3253 = vsel %vm3219, 1, 0
      %v3254 = vsel %vm3220, 1, 0
      %v3255 = vsel %vm3221, 1, 0
      %v3256 = vsel %vm3222, 1, 0
      %v3257 = vsel %vm3223, 1, 0
      %v3258 = vsel %vm3224, 1, 0
      %v3259 = vsel %vm3225, 1, 0
      %v3260 = vsel %vm3226, 1, 0
      %v3261 = vsel %vm3227, 1, 0
      %v3262 = vsel %vm3228, 1, 0
      %v3263 = vsel %vm3229, 1, 0
      %v3264 = vsel %vm3230, 1, 0
      %v3265 = vsel %vm3231, 1, 0
      %v3266 = vcvt.s32.f32 %v3232
      %v3267 = vcvt.s32.f32 %v3233
      %v3268 = vcvt.s32.f32 %v3234
      %v3269 = vcvt.s32.f32 %v3235
      %v3270 = vcvt.s32.f32 %v3236
      %v3271 = vcvt.s32.f32 %v3237
      %v3272 = vcvt.s32.f32 %v3238
      %v3273 = vcvt.s32.f32 %v3239
      %v3274 = vcvt.s32.f32 %v3240
      %v3275 = vcvt.s32.f32 %v3241
      %v3276 = vcvt.s32.f32 %v3242
      %v3277 = vcvt.s32.f32 %v3243
      %v3278 = vcvt.s32.f32 %v3244
      %v3279 = vcvt.s32.f32 %v3245
      %v3280 = vcvt.s32.f32 %v3246
      %v3281 = vcvt.s32.f32 %v3247
      %v3282 = vcvt.s32.f32 %v3248
      %v3283 = vcvt.s32.f32 %v3249
      %v3284 = vcvt.s32.f32 %v3250
      %v3285 = vcvt.s32.f32 %v3251
      %v3286 = vcvt.s32.f32 %v3252
      %v3287 = vcvt.s32.f32 %v3253
      %v3288 = vcvt.s32.f32 %v3254
      %v3289 = vcvt.s32.f32 %v3255
      %v3290 = vcvt.s32.f32 %v3256
      %v3291 = vcvt.s32.f32 %v3257
      %v3292 = vcvt.s32.f32 %v3258
      %v3293 = vcvt.s32.f32 %v3259
      %v3294 = vcvt.s32.f32 %v3260
      %v3295 = vcvt.s32.f32 %v3261
      %v3296 = vcvt.s32.f32 %v3262
      %v3297 = vcvt.s32.f32 %v3263
      %v3298 = vcvt.s32.f32 %v3264
      %v3299 = vcvt.s32.f32 %v3265
      %3300 = vset.pattern.permute.xlu0 7
      %3301 = vperm.xlu0 %3300, %v197
      %v3302 = vpop.permute.xlu0 %3301
      %3303 = vset.pattern.permute.xlu0 7
      %3304 = vperm.xlu0 %3303, %v198
      %v3305 = vpop.permute.xlu0 %3304
      %3306 = vset.pattern.permute.xlu0 7
      %3307 = vperm.xlu0 %3306, %v199
      %v3308 = vpop.permute.xlu0 %3307
      %3309 = vset.pattern.permute.xlu0 7
      %3310 = vperm.xlu0 %3309, %v200
      %v3311 = vpop.permute.xlu0 %3310
      %3312 = vset.pattern.permute.xlu0 7
      %3313 = vperm.xlu0 %3312, %v201
      %v3314 = vpop.permute.xlu0 %3313
      %3315 = vset.pattern.permute.xlu0 7
      %3316 = vperm.xlu0 %3315, %v202
      %v3317 = vpop.permute.xlu0 %3316
      %3318 = vset.pattern.permute.xlu0 7
      %3319 = vperm.xlu0 %3318, %v203
      %v3320 = vpop.permute.xlu0 %3319
      %3321 = vset.pattern.permute.xlu0 7
      %3322 = vperm.xlu0 %3321, %v204
      %v3323 = vpop.permute.xlu0 %3322
      %3324 = vset.pattern.permute.xlu0 7
      %3325 = vperm.xlu0 %3324, %v205
      %v3326 = vpop.permute.xlu0 %3325
      %3327 = vset.pattern.permute.xlu0 7
      %3328 = vperm.xlu0 %3327, %v206
      %v3329 = vpop.permute.xlu0 %3328
      %3330 = vset.pattern.permute.xlu0 7
      %3331 = vperm.xlu0 %3330, %v207
      %v3332 = vpop.permute.xlu0 %3331
      %3333 = vset.pattern.permute.xlu0 7
      %3334 = vperm.xlu0 %3333, %v208
      %v3335 = vpop.permute.xlu0 %3334
      %3336 = vset.pattern.permute.xlu0 7
      %3337 = vperm.xlu0 %3336, %v209
      %v3338 = vpop.permute.xlu0 %3337
      %3339 = vset.pattern.permute.xlu0 7
      %3340 = vperm.xlu0 %3339, %v210
      %v3341 = vpop.permute.xlu0 %3340
      %3342 = vset.pattern.permute.xlu0 7
      %3343 = vperm.xlu0 %3342, %v211
      %v3344 = vpop.permute.xlu0 %3343
      %3345 = vset.pattern.permute.xlu0 7
      %3346 = vperm.xlu0 %3345, %v212
      %v3347 = vpop.permute.xlu0 %3346
      %3348 = vset.pattern.permute.xlu0 7
      %3349 = vperm.xlu0 %3348, %v213
      %v3350 = vpop.permute.xlu0 %3349
      %vm3351 = vcmp.eq.s32.totalorder %v287, %v3302
      %vm3352 = vcmp.eq.s32.totalorder %v288, %v3302
      %vm3353 = vcmp.eq.s32.totalorder %v287, %v3305
      %vm3354 = vcmp.eq.s32.totalorder %v288, %v3305
      %vm3355 = vcmp.eq.s32.totalorder %v287, %v3308
      %vm3356 = vcmp.eq.s32.totalorder %v288, %v3308
      %vm3357 = vcmp.eq.s32.totalorder %v287, %v3311
      %vm3358 = vcmp.eq.s32.totalorder %v288, %v3311
      %vm3359 = vcmp.eq.s32.totalorder %v287, %v3314
      %vm3360 = vcmp.eq.s32.totalorder %v288, %v3314
      %vm3361 = vcmp.eq.s32.totalorder %v287, %v3317
      %vm3362 = vcmp.eq.s32.totalorder %v288, %v3317
      %vm3363 = vcmp.eq.s32.totalorder %v287, %v3320
      %vm3364 = vcmp.eq.s32.totalorder %v288, %v3320
      %vm3365 = vcmp.eq.s32.totalorder %v287, %v3323
      %vm3366 = vcmp.eq.s32.totalorder %v288, %v3323
      %vm3367 = vcmp.eq.s32.totalorder %v287, %v3326
      %vm3368 = vcmp.eq.s32.totalorder %v288, %v3326
      %vm3369 = vcmp.eq.s32.totalorder %v287, %v3329
      %vm3370 = vcmp.eq.s32.totalorder %v288, %v3329
      %vm3371 = vcmp.eq.s32.totalorder %v287, %v3332
      %vm3372 = vcmp.eq.s32.totalorder %v288, %v3332
      %vm3373 = vcmp.eq.s32.totalorder %v287, %v3335
      %vm3374 = vcmp.eq.s32.totalorder %v288, %v3335
      %vm3375 = vcmp.eq.s32.totalorder %v287, %v3338
      %vm3376 = vcmp.eq.s32.totalorder %v288, %v3338
      %vm3377 = vcmp.eq.s32.totalorder %v287, %v3341
      %vm3378 = vcmp.eq.s32.totalorder %v288, %v3341
      %vm3379 = vcmp.eq.s32.totalorder %v287, %v3344
      %vm3380 = vcmp.eq.s32.totalorder %v288, %v3344
      %vm3381 = vcmp.eq.s32.totalorder %v287, %v3347
      %vm3382 = vcmp.eq.s32.totalorder %v288, %v3347
      %vm3383 = vcmp.eq.s32.totalorder %v287, %v3350
      %vm3384 = vcmp.eq.s32.totalorder %v288, %v3350
      %vm3385 = vmor %vm289, %vm3351
      %vm3386 = vmor %vm290, %vm3352
      %vm3387 = vmor %vm289, %vm3353
      %vm3388 = vmor %vm290, %vm3354
      %vm3389 = vmor %vm289, %vm3355
      %vm3390 = vmor %vm290, %vm3356
      %vm3391 = vmor %vm289, %vm3357
      %vm3392 = vmor %vm290, %vm3358
      %vm3393 = vmor %vm289, %vm3359
      %vm3394 = vmor %vm290, %vm3360
      %vm3395 = vmor %vm289, %vm3361
      %vm3396 = vmor %vm290, %vm3362
      %vm3397 = vmor %vm289, %vm3363
      %vm3398 = vmor %vm290, %vm3364
      %vm3399 = vmor %vm289, %vm3365
      %vm3400 = vmor %vm290, %vm3366
      %vm3401 = vmor %vm289, %vm3367
      %vm3402 = vmor %vm290, %vm3368
      %vm3403 = vmor %vm289, %vm3369
      %vm3404 = vmor %vm290, %vm3370
      %vm3405 = vmor %vm289, %vm3371
      %vm3406 = vmor %vm290, %vm3372
      %vm3407 = vmor %vm289, %vm3373
      %vm3408 = vmor %vm290, %vm3374
      %vm3409 = vmor %vm289, %vm3375
      %vm3410 = vmor %vm290, %vm3376
      %vm3411 = vmor %vm289, %vm3377
      %vm3412 = vmor %vm290, %vm3378
      %vm3413 = vmor %vm289, %vm3379
      %vm3414 = vmor %vm290, %vm3380
      %vm3415 = vmor %vm289, %vm3381
      %vm3416 = vmor %vm290, %vm3382
      %vm3417 = vmor %vm289, %vm3383
      %vm3418 = vmor %vm290, %vm3384
      %3419 = vset.pattern.permute.xlu0 7
      %3420 = vperm.xlu0 %3419, %v410
      %v3421 = vpop.permute.xlu0 %3420
      %3422 = vset.pattern.permute.xlu0 7
      %3423 = vperm.xlu0 %3422, %v411
      %v3424 = vpop.permute.xlu0 %3423
      %3425 = vset.pattern.permute.xlu0 7
      %3426 = vperm.xlu0 %3425, %v412
      %v3427 = vpop.permute.xlu0 %3426
      %3428 = vset.pattern.permute.xlu0 7
      %3429 = vperm.xlu0 %3428, %v413
      %v3430 = vpop.permute.xlu0 %3429
      %3431 = vset.pattern.permute.xlu0 7
      %3432 = vperm.xlu0 %3431, %v414
      %v3433 = vpop.permute.xlu0 %3432
      %3434 = vset.pattern.permute.xlu0 7
      %3435 = vperm.xlu0 %3434, %v415
      %v3436 = vpop.permute.xlu0 %3435
      %3437 = vset.pattern.permute.xlu0 7
      %3438 = vperm.xlu0 %3437, %v416
      %v3439 = vpop.permute.xlu0 %3438
      %3440 = vset.pattern.permute.xlu0 7
      %3441 = vperm.xlu0 %3440, %v417
      %v3442 = vpop.permute.xlu0 %3441
      %3443 = vset.pattern.permute.xlu0 7
      %3444 = vperm.xlu0 %3443, %v418
      %v3445 = vpop.permute.xlu0 %3444
      %3446 = vset.pattern.permute.xlu0 7
      %3447 = vperm.xlu0 %3446, %v419
      %v3448 = vpop.permute.xlu0 %3447
      %3449 = vset.pattern.permute.xlu0 7
      %3450 = vperm.xlu0 %3449, %v420
      %v3451 = vpop.permute.xlu0 %3450
      %3452 = vset.pattern.permute.xlu0 7
      %3453 = vperm.xlu0 %3452, %v421
      %v3454 = vpop.permute.xlu0 %3453
      %3455 = vset.pattern.permute.xlu0 7
      %3456 = vperm.xlu0 %3455, %v422
      %v3457 = vpop.permute.xlu0 %3456
      %3458 = vset.pattern.permute.xlu0 7
      %3459 = vperm.xlu0 %3458, %v423
      %v3460 = vpop.permute.xlu0 %3459
      %3461 = vset.pattern.permute.xlu0 7
      %3462 = vperm.xlu0 %3461, %v424
      %v3463 = vpop.permute.xlu0 %3462
      %3464 = vset.pattern.permute.xlu0 7
      %3465 = vperm.xlu0 %3464, %v425
      %v3466 = vpop.permute.xlu0 %3465
      %3467 = vset.pattern.permute.xlu0 7
      %3468 = vperm.xlu0 %3467, %v426
      %v3469 = vpop.permute.xlu0 %3468
      %vm3470 = vcmp.eq.s32.totalorder %v287, %v3421
      %vm3471 = vcmp.eq.s32.totalorder %v288, %v3421
      %vm3472 = vcmp.eq.s32.totalorder %v287, %v3424
      %vm3473 = vcmp.eq.s32.totalorder %v288, %v3424
      %vm3474 = vcmp.eq.s32.totalorder %v287, %v3427
      %vm3475 = vcmp.eq.s32.totalorder %v288, %v3427
      %vm3476 = vcmp.eq.s32.totalorder %v287, %v3430
      %vm3477 = vcmp.eq.s32.totalorder %v288, %v3430
      %vm3478 = vcmp.eq.s32.totalorder %v287, %v3433
      %vm3479 = vcmp.eq.s32.totalorder %v288, %v3433
      %vm3480 = vcmp.eq.s32.totalorder %v287, %v3436
      %vm3481 = vcmp.eq.s32.totalorder %v288, %v3436
      %vm3482 = vcmp.eq.s32.totalorder %v287, %v3439
      %vm3483 = vcmp.eq.s32.totalorder %v288, %v3439
      %vm3484 = vcmp.eq.s32.totalorder %v287, %v3442
      %vm3485 = vcmp.eq.s32.totalorder %v288, %v3442
      %vm3486 = vcmp.eq.s32.totalorder %v287, %v3445
      %vm3487 = vcmp.eq.s32.totalorder %v288, %v3445
      %vm3488 = vcmp.eq.s32.totalorder %v287, %v3448
      %vm3489 = vcmp.eq.s32.totalorder %v288, %v3448
      %vm3490 = vcmp.eq.s32.totalorder %v287, %v3451
      %vm3491 = vcmp.eq.s32.totalorder %v288, %v3451
      %vm3492 = vcmp.eq.s32.totalorder %v287, %v3454
      %vm3493 = vcmp.eq.s32.totalorder %v288, %v3454
      %vm3494 = vcmp.eq.s32.totalorder %v287, %v3457
      %vm3495 = vcmp.eq.s32.totalorder %v288, %v3457
      %vm3496 = vcmp.eq.s32.totalorder %v287, %v3460
      %vm3497 = vcmp.eq.s32.totalorder %v288, %v3460
      %vm3498 = vcmp.eq.s32.totalorder %v287, %v3463
      %vm3499 = vcmp.eq.s32.totalorder %v288, %v3463
      %vm3500 = vcmp.eq.s32.totalorder %v287, %v3466
      %vm3501 = vcmp.eq.s32.totalorder %v288, %v3466
      %vm3502 = vcmp.eq.s32.totalorder %v287, %v3469
      %vm3503 = vcmp.eq.s32.totalorder %v288, %v3469
      %vm3504 = vmor %vm3385, %vm3470
      %vm3505 = vmor %vm3386, %vm3471
      %vm3506 = vmor %vm3387, %vm3472
      %vm3507 = vmor %vm3388, %vm3473
      %vm3508 = vmor %vm3389, %vm3474
      %vm3509 = vmor %vm3390, %vm3475
      %vm3510 = vmor %vm3391, %vm3476
      %vm3511 = vmor %vm3392, %vm3477
      %vm3512 = vmor %vm3393, %vm3478
      %vm3513 = vmor %vm3394, %vm3479
      %vm3514 = vmor %vm3395, %vm3480
      %vm3515 = vmor %vm3396, %vm3481
      %vm3516 = vmor %vm3397, %vm3482
      %vm3517 = vmor %vm3398, %vm3483
      %vm3518 = vmor %vm3399, %vm3484
      %vm3519 = vmor %vm3400, %vm3485
      %vm3520 = vmor %vm3401, %vm3486
      %vm3521 = vmor %vm3402, %vm3487
      %vm3522 = vmor %vm3403, %vm3488
      %vm3523 = vmor %vm3404, %vm3489
      %vm3524 = vmor %vm3405, %vm3490
      %vm3525 = vmor %vm3406, %vm3491
      %vm3526 = vmor %vm3407, %vm3492
      %vm3527 = vmor %vm3408, %vm3493
      %vm3528 = vmor %vm3409, %vm3494
      %vm3529 = vmor %vm3410, %vm3495
      %vm3530 = vmor %vm3411, %vm3496
      %vm3531 = vmor %vm3412, %vm3497
      %vm3532 = vmor %vm3413, %vm3498
      %vm3533 = vmor %vm3414, %vm3499
      %vm3534 = vmor %vm3415, %vm3500
      %vm3535 = vmor %vm3416, %vm3501
      %vm3536 = vmor %vm3417, %vm3502
      %vm3537 = vmor %vm3418, %vm3503
      %3538 = vset.pattern.permute.xlu0 7
      %3539 = vperm.xlu0 %3538, %v546
      %v3540 = vpop.permute.xlu0 %3539
      %3541 = vset.pattern.permute.xlu0 7
      %3542 = vperm.xlu0 %3541, %v547
      %v3543 = vpop.permute.xlu0 %3542
      %3544 = vset.pattern.permute.xlu0 7
      %3545 = vperm.xlu0 %3544, %v548
      %v3546 = vpop.permute.xlu0 %3545
      %3547 = vset.pattern.permute.xlu0 7
      %3548 = vperm.xlu0 %3547, %v549
      %v3549 = vpop.permute.xlu0 %3548
      %3550 = vset.pattern.permute.xlu0 7
      %3551 = vperm.xlu0 %3550, %v550
      %v3552 = vpop.permute.xlu0 %3551
      %3553 = vset.pattern.permute.xlu0 7
      %3554 = vperm.xlu0 %3553, %v551
      %v3555 = vpop.permute.xlu0 %3554
      %3556 = vset.pattern.permute.xlu0 7
      %3557 = vperm.xlu0 %3556, %v552
      %v3558 = vpop.permute.xlu0 %3557
      %3559 = vset.pattern.permute.xlu0 7
      %3560 = vperm.xlu0 %3559, %v553
      %v3561 = vpop.permute.xlu0 %3560
      %3562 = vset.pattern.permute.xlu0 7
      %3563 = vperm.xlu0 %3562, %v554
      %v3564 = vpop.permute.xlu0 %3563
      %3565 = vset.pattern.permute.xlu0 7
      %3566 = vperm.xlu0 %3565, %v555
      %v3567 = vpop.permute.xlu0 %3566
      %3568 = vset.pattern.permute.xlu0 7
      %3569 = vperm.xlu0 %3568, %v556
      %v3570 = vpop.permute.xlu0 %3569
      %3571 = vset.pattern.permute.xlu0 7
      %3572 = vperm.xlu0 %3571, %v557
      %v3573 = vpop.permute.xlu0 %3572
      %3574 = vset.pattern.permute.xlu0 7
      %3575 = vperm.xlu0 %3574, %v558
      %v3576 = vpop.permute.xlu0 %3575
      %3577 = vset.pattern.permute.xlu0 7
      %3578 = vperm.xlu0 %3577, %v559
      %v3579 = vpop.permute.xlu0 %3578
      %3580 = vset.pattern.permute.xlu0 7
      %3581 = vperm.xlu0 %3580, %v560
      %v3582 = vpop.permute.xlu0 %3581
      %3583 = vset.pattern.permute.xlu0 7
      %3584 = vperm.xlu0 %3583, %v561
      %v3585 = vpop.permute.xlu0 %3584
      %3586 = vset.pattern.permute.xlu0 7
      %3587 = vperm.xlu0 %3586, %v562
      %v3588 = vpop.permute.xlu0 %3587
      %vm3589 = vcmp.eq.s32.totalorder %v287, %v3540
      %vm3590 = vcmp.eq.s32.totalorder %v288, %v3540
      %vm3591 = vcmp.eq.s32.totalorder %v287, %v3543
      %vm3592 = vcmp.eq.s32.totalorder %v288, %v3543
      %vm3593 = vcmp.eq.s32.totalorder %v287, %v3546
      %vm3594 = vcmp.eq.s32.totalorder %v288, %v3546
      %vm3595 = vcmp.eq.s32.totalorder %v287, %v3549
      %vm3596 = vcmp.eq.s32.totalorder %v288, %v3549
      %vm3597 = vcmp.eq.s32.totalorder %v287, %v3552
      %vm3598 = vcmp.eq.s32.totalorder %v288, %v3552
      %vm3599 = vcmp.eq.s32.totalorder %v287, %v3555
      %vm3600 = vcmp.eq.s32.totalorder %v288, %v3555
      %vm3601 = vcmp.eq.s32.totalorder %v287, %v3558
      %vm3602 = vcmp.eq.s32.totalorder %v288, %v3558
      %vm3603 = vcmp.eq.s32.totalorder %v287, %v3561
      %vm3604 = vcmp.eq.s32.totalorder %v288, %v3561
      %vm3605 = vcmp.eq.s32.totalorder %v287, %v3564
      %vm3606 = vcmp.eq.s32.totalorder %v288, %v3564
      %vm3607 = vcmp.eq.s32.totalorder %v287, %v3567
      %vm3608 = vcmp.eq.s32.totalorder %v288, %v3567
      %vm3609 = vcmp.eq.s32.totalorder %v287, %v3570
      %vm3610 = vcmp.eq.s32.totalorder %v288, %v3570
      %vm3611 = vcmp.eq.s32.totalorder %v287, %v3573
      %vm3612 = vcmp.eq.s32.totalorder %v288, %v3573
      %vm3613 = vcmp.eq.s32.totalorder %v287, %v3576
      %vm3614 = vcmp.eq.s32.totalorder %v288, %v3576
      %vm3615 = vcmp.eq.s32.totalorder %v287, %v3579
      %vm3616 = vcmp.eq.s32.totalorder %v288, %v3579
      %vm3617 = vcmp.eq.s32.totalorder %v287, %v3582
      %vm3618 = vcmp.eq.s32.totalorder %v288, %v3582
      %vm3619 = vcmp.eq.s32.totalorder %v287, %v3585
      %vm3620 = vcmp.eq.s32.totalorder %v288, %v3585
      %vm3621 = vcmp.eq.s32.totalorder %v287, %v3588
      %vm3622 = vcmp.eq.s32.totalorder %v288, %v3588
      %vm3623 = vmor %vm3504, %vm3589
      %vm3624 = vmor %vm3505, %vm3590
      %vm3625 = vmor %vm3506, %vm3591
      %vm3626 = vmor %vm3507, %vm3592
      %vm3627 = vmor %vm3508, %vm3593
      %vm3628 = vmor %vm3509, %vm3594
      %vm3629 = vmor %vm3510, %vm3595
      %vm3630 = vmor %vm3511, %vm3596
      %vm3631 = vmor %vm3512, %vm3597
      %vm3632 = vmor %vm3513, %vm3598
      %vm3633 = vmor %vm3514, %vm3599
      %vm3634 = vmor %vm3515, %vm3600
      %vm3635 = vmor %vm3516, %vm3601
      %vm3636 = vmor %vm3517, %vm3602
      %vm3637 = vmor %vm3518, %vm3603
      %vm3638 = vmor %vm3519, %vm3604
      %vm3639 = vmor %vm3520, %vm3605
      %vm3640 = vmor %vm3521, %vm3606
      %vm3641 = vmor %vm3522, %vm3607
      %vm3642 = vmor %vm3523, %vm3608
      %vm3643 = vmor %vm3524, %vm3609
      %vm3644 = vmor %vm3525, %vm3610
      %vm3645 = vmor %vm3526, %vm3611
      %vm3646 = vmor %vm3527, %vm3612
      %vm3647 = vmor %vm3528, %vm3613
      %vm3648 = vmor %vm3529, %vm3614
      %vm3649 = vmor %vm3530, %vm3615
      %vm3650 = vmor %vm3531, %vm3616
      %vm3651 = vmor %vm3532, %vm3617
      %vm3652 = vmor %vm3533, %vm3618
      %vm3653 = vmor %vm3534, %vm3619
      %vm3654 = vmor %vm3535, %vm3620
      %vm3655 = vmor %vm3536, %vm3621
      %vm3656 = vmor %vm3537, %vm3622
      %v3657 = vsel %vm3623, 1, 0
      %v3658 = vsel %vm3624, 1, 0
      %v3659 = vsel %vm3625, 1, 0
      %v3660 = vsel %vm3626, 1, 0
      %v3661 = vsel %vm3627, 1, 0
      %v3662 = vsel %vm3628, 1, 0
      %v3663 = vsel %vm3629, 1, 0
      %v3664 = vsel %vm3630, 1, 0
      %v3665 = vsel %vm3631, 1, 0
      %v3666 = vsel %vm3632, 1, 0
      %v3667 = vsel %vm3633, 1, 0
      %v3668 = vsel %vm3634, 1, 0
      %v3669 = vsel %vm3635, 1, 0
      %v3670 = vsel %vm3636, 1, 0
      %v3671 = vsel %vm3637, 1, 0
      %v3672 = vsel %vm3638, 1, 0
      %v3673 = vsel %vm3639, 1, 0
      %v3674 = vsel %vm3640, 1, 0
      %v3675 = vsel %vm3641, 1, 0
      %v3676 = vsel %vm3642, 1, 0
      %v3677 = vsel %vm3643, 1, 0
      %v3678 = vsel %vm3644, 1, 0
      %v3679 = vsel %vm3645, 1, 0
      %v3680 = vsel %vm3646, 1, 0
      %v3681 = vsel %vm3647, 1, 0
      %v3682 = vsel %vm3648, 1, 0
      %v3683 = vsel %vm3649, 1, 0
      %v3684 = vsel %vm3650, 1, 0
      %v3685 = vsel %vm3651, 1, 0
      %v3686 = vsel %vm3652, 1, 0
      %v3687 = vsel %vm3653, 1, 0
      %v3688 = vsel %vm3654, 1, 0
      %v3689 = vsel %vm3655, 1, 0
      %v3690 = vsel %vm3656, 1, 0
      %v3691 = vcvt.s32.f32 %v3657
      %v3692 = vcvt.s32.f32 %v3658
      %v3693 = vcvt.s32.f32 %v3659
      %v3694 = vcvt.s32.f32 %v3660
      %v3695 = vcvt.s32.f32 %v3661
      %v3696 = vcvt.s32.f32 %v3662
      %v3697 = vcvt.s32.f32 %v3663
      %v3698 = vcvt.s32.f32 %v3664
      %v3699 = vcvt.s32.f32 %v3665
      %v3700 = vcvt.s32.f32 %v3666
      %v3701 = vcvt.s32.f32 %v3667
      %v3702 = vcvt.s32.f32 %v3668
      %v3703 = vcvt.s32.f32 %v3669
      %v3704 = vcvt.s32.f32 %v3670
      %v3705 = vcvt.s32.f32 %v3671
      %v3706 = vcvt.s32.f32 %v3672
      %v3707 = vcvt.s32.f32 %v3673
      %v3708 = vcvt.s32.f32 %v3674
      %v3709 = vcvt.s32.f32 %v3675
      %v3710 = vcvt.s32.f32 %v3676
      %v3711 = vcvt.s32.f32 %v3677
      %v3712 = vcvt.s32.f32 %v3678
      %v3713 = vcvt.s32.f32 %v3679
      %v3714 = vcvt.s32.f32 %v3680
      %v3715 = vcvt.s32.f32 %v3681
      %v3716 = vcvt.s32.f32 %v3682
      %v3717 = vcvt.s32.f32 %v3683
      %v3718 = vcvt.s32.f32 %v3684
      %v3719 = vcvt.s32.f32 %v3685
      %v3720 = vcvt.s32.f32 %v3686
      %v3721 = vcvt.s32.f32 %v3687
      %v3722 = vcvt.s32.f32 %v3688
      %v3723 = vcvt.s32.f32 %v3689
      %v3724 = vcvt.s32.f32 %v3690
      %v3725 = vld [vmem:[%s1] sm:$0xff]
      %v3726 = vld [vmem:[%s1 + $0x8] sm:$0xff]
      %v3727 = vld [vmem:[%s1 + $0x10] sm:$0xff]
      %v3728 = vld [vmem:[%s1 + $0x18] sm:$0xff]
      %v3729 = vld [vmem:[%s1 + $0x20] sm:$0xff]
      %v3730 = vld [vmem:[%s1 + $0x28] sm:$0xff]
      %v3731 = vld [vmem:[%s1 + $0x30] sm:$0xff]
      %v3732 = vld [vmem:[%s1 + $0x38] sm:$0xff]
      %v3733 = vld [vmem:[%s1 + $0x40] sm:$0xff]
      %v3734 = vld [vmem:[%s1 + $0x48] sm:$0xff]
      %v3735 = vld [vmem:[%s1 + $0x50] sm:$0xff]
      %v3736 = vld [vmem:[%s1 + $0x58] sm:$0xff]
      %v3737 = vld [vmem:[%s1 + $0x60] sm:$0xff]
      %v3738 = vld [vmem:[%s1 + $0x68] sm:$0xff]
      %v3739 = vld [vmem:[%s1 + $0x70] sm:$0xff]
      %v3740 = vld [vmem:[%s1 + $0x78] sm:$0xff]
      %v3741 = vld [vmem:[%s1 + $0x80] sm:$0xff]
      %v3742 = vld [vmem:[%s1 + $0x88] sm:$0xff]
      %v3743 = vld [vmem:[%s1 + $0x90] sm:$0x7f]
      %vm3744 = vcmask 187392
      %v3746 = vsel %vm3744, %v717, 0
      %v3749 = vsel %vm3744, %v719, 0
      %v3752 = vsel %vm3744, %v721, 0
      %v3755 = vsel %vm3744, %v723, 0
      %v3758 = vsel %vm3744, %v725, 0
      %v3761 = vsel %vm3744, %v727, 0
      %v3764 = vsel %vm3744, %v729, 0
      %v3767 = vsel %vm3744, %v731, 0
      %v3770 = vsel %vm3744, %v733, 0
      %v3773 = vsel %vm3744, %v735, 0
      %v3776 = vsel %vm3744, %v737, 0
      %v3779 = vsel %vm3744, %v739, 0
      %v3782 = vsel %vm3744, %v741, 0
      %v3785 = vsel %vm3744, %v743, 0
      %v3788 = vsel %vm3744, %v745, 0
      %v3791 = vsel %vm3744, %v747, 0
      %v3794 = vsel %vm3744, %v749, 0
      %v3797 = vsel %vm3744, %v1142, 0
      %v3800 = vsel %vm3744, %v1144, 0
      %v3803 = vsel %vm3744, %v1146, 0
      %v3806 = vsel %vm3744, %v1148, 0
      %v3809 = vsel %vm3744, %v1150, 0
      %v3812 = vsel %vm3744, %v1152, 0
      %v3815 = vsel %vm3744, %v1154, 0
      %v3818 = vsel %vm3744, %v1156, 0
      %v3821 = vsel %vm3744, %v1158, 0
      %v3824 = vsel %vm3744, %v1160, 0
      %v3827 = vsel %vm3744, %v1162, 0
      %v3830 = vsel %vm3744, %v1164, 0
      %v3833 = vsel %vm3744, %v1166, 0
      %v3836 = vsel %vm3744, %v1168, 0
      %v3839 = vsel %vm3744, %v1170, 0
      %v3842 = vsel %vm3744, %v1172, 0
      %v3845 = vsel %vm3744, %v1174, 0
      %v3848 = vsel %vm3744, %v1567, 0
      %v3851 = vsel %vm3744, %v1569, 0
      %v3854 = vsel %vm3744, %v1571, 0
      %v3857 = vsel %vm3744, %v1573, 0
      %v3860 = vsel %vm3744, %v1575, 0
      %v3863 = vsel %vm3744, %v1577, 0
      %v3866 = vsel %vm3744, %v1579, 0
      %v3869 = vsel %vm3744, %v1581, 0
      %v3872 = vsel %vm3744, %v1583, 0
      %v3875 = vsel %vm3744, %v1585, 0
      %v3878 = vsel %vm3744, %v1587, 0
      %v3881 = vsel %vm3744, %v1589, 0
      %v3884 = vsel %vm3744, %v1591, 0
      %v3887 = vsel %vm3744, %v1593, 0
      %v3890 = vsel %vm3744, %v1595, 0
      %v3893 = vsel %vm3744, %v1597, 0
      %v3896 = vsel %vm3744, %v1599, 0
      %v3899 = vsel %vm3744, %v1992, 0
      %v3902 = vsel %vm3744, %v1994, 0
      %v3905 = vsel %vm3744, %v1996, 0
      %v3908 = vsel %vm3744, %v1998, 0
      %v3911 = vsel %vm3744, %v2000, 0
      %v3914 = vsel %vm3744, %v2002, 0
      %v3917 = vsel %vm3744, %v2004, 0
      %v3920 = vsel %vm3744, %v2006, 0
      %v3923 = vsel %vm3744, %v2008, 0
      %v3926 = vsel %vm3744, %v2010, 0
      %v3929 = vsel %vm3744, %v2012, 0
      %v3932 = vsel %vm3744, %v2014, 0
      %v3935 = vsel %vm3744, %v2016, 0
      %v3938 = vsel %vm3744, %v2018, 0
      %v3941 = vsel %vm3744, %v2020, 0
      %v3944 = vsel %vm3744, %v2022, 0
      %v3947 = vsel %vm3744, %v2024, 0
      %v3950 = vsel %vm3744, %v2417, 0
      %v3953 = vsel %vm3744, %v2419, 0
      %v3956 = vsel %vm3744, %v2421, 0
      %v3959 = vsel %vm3744, %v2423, 0
      %v3962 = vsel %vm3744, %v2425, 0
      %v3965 = vsel %vm3744, %v2427, 0
      %v3968 = vsel %vm3744, %v2429, 0
      %v3971 = vsel %vm3744, %v2431, 0
      %v3974 = vsel %vm3744, %v2433, 0
      %v3977 = vsel %vm3744, %v2435, 0
      %v3980 = vsel %vm3744, %v2437, 0
      %v3983 = vsel %vm3744, %v2439, 0
      %v3986 = vsel %vm3744, %v2441, 0
      %v3989 = vsel %vm3744, %v2443, 0
      %v3992 = vsel %vm3744, %v2445, 0
      %v3995 = vsel %vm3744, %v2447, 0
      %v3998 = vsel %vm3744, %v2449, 0
      %v4001 = vsel %vm3744, %v2842, 0
      %v4004 = vsel %vm3744, %v2844, 0
      %v4007 = vsel %vm3744, %v2846, 0
      %v4010 = vsel %vm3744, %v2848, 0
      %v4013 = vsel %vm3744, %v2850, 0
      %v4016 = vsel %vm3744, %v2852, 0
      %v4019 = vsel %vm3744, %v2854, 0
      %v4022 = vsel %vm3744, %v2856, 0
      %v4025 = vsel %vm3744, %v2858, 0
      %v4028 = vsel %vm3744, %v2860, 0
      %v4031 = vsel %vm3744, %v2862, 0
      %v4034 = vsel %vm3744, %v2864, 0
      %v4037 = vsel %vm3744, %v2866, 0
      %v4040 = vsel %vm3744, %v2868, 0
      %v4043 = vsel %vm3744, %v2870, 0
      %v4046 = vsel %vm3744, %v2872, 0
      %v4049 = vsel %vm3744, %v2874, 0
      %v4052 = vsel %vm3744, %v3267, 0
      %v4055 = vsel %vm3744, %v3269, 0
      %v4058 = vsel %vm3744, %v3271, 0
      %v4061 = vsel %vm3744, %v3273, 0
      %v4064 = vsel %vm3744, %v3275, 0
      %v4067 = vsel %vm3744, %v3277, 0
      %v4070 = vsel %vm3744, %v3279, 0
      %v4073 = vsel %vm3744, %v3281, 0
      %v4076 = vsel %vm3744, %v3283, 0
      %v4079 = vsel %vm3744, %v3285, 0
      %v4082 = vsel %vm3744, %v3287, 0
      %v4085 = vsel %vm3744, %v3289, 0
      %v4088 = vsel %vm3744, %v3291, 0
      %v4091 = vsel %vm3744, %v3293, 0
      %v4094 = vsel %vm3744, %v3295, 0
      %v4097 = vsel %vm3744, %v3297, 0
      %v4100 = vsel %vm3744, %v3299, 0
      %v4103 = vsel %vm3744, %v3692, 0
      %v4106 = vsel %vm3744, %v3694, 0
      %v4109 = vsel %vm3744, %v3696, 0
      %v4112 = vsel %vm3744, %v3698, 0
      %v4115 = vsel %vm3744, %v3700, 0
      %v4118 = vsel %vm3744, %v3702, 0
      %v4121 = vsel %vm3744, %v3704, 0
      %v4124 = vsel %vm3744, %v3706, 0
      %v4127 = vsel %vm3744, %v3708, 0
      %v4130 = vsel %vm3744, %v3710, 0
      %v4133 = vsel %vm3744, %v3712, 0
      %v4136 = vsel %vm3744, %v3714, 0
      %v4139 = vsel %vm3744, %v3716, 0
      %v4142 = vsel %vm3744, %v3718, 0
      %v4145 = vsel %vm3744, %v3720, 0
      %v4148 = vsel %vm3744, %v3722, 0
      %v4151 = vsel %vm3744, %v3724, 0
      %vm4153 = vcmask 1046528
      %v4155 = vsel %vm4153, %v3743, 0
      %4157 = vmatpush.msra.mxu0 %v3740
      %4158 = vmatpush.msra.mxu0 %v3739
      %4159 = vmatpush.msra.mxu0 %v3738
      %4160 = vmatpush.msra.mxu0 %v3737
      %4161 = vmatpush.msra.mxu0 %v3736
      %4162 = vmatpush.msra.mxu0 %v3735
      %4163 = vmatpush.msra.mxu0 %v3734
      %4164 = vmatpush.msra.mxu0 %v3733
      %4165 = vmatpush.msra.mxu0 %v3732
      %4166 = vmatpush.msra.mxu0 %v3731
      %4167 = vmatpush.msra.mxu0 %v3730
      %4168 = vmatpush.msra.mxu0 %v3729
      %4169 = vmatpush.msra.mxu0 %v3728
      %4170 = vmatpush.msra.mxu0 %v3727
      %4171 = vmatpush.msra.mxu0 %v3726
      %4172 = vmatpush.msra.mxu0 %v3725
      %4173 = vmatmul.f32.gmra.mxu0 %v716
      %v4174 = vpop.f32.mrf.mxu0
      %v4175 = vadd.f32 0.0, %v4174
      %4176 = vmatmul.f32.gmra.mxu0 %v718
      %v4177 = vpop.f32.mrf.mxu0
      %v4178 = vadd.f32 0.0, %v4177
      %4179 = vmatmul.f32.gmra.mxu0 %v720
      %v4180 = vpop.f32.mrf.mxu0
      %v4181 = vadd.f32 0.0, %v4180
      %4182 = vmatmul.f32.gmra.mxu0 %v722
      %v4183 = vpop.f32.mrf.mxu0
      %v4184 = vadd.f32 0.0, %v4183
      %4185 = vmatmul.f32.gmra.mxu0 %v724
      %v4186 = vpop.f32.mrf.mxu0
      %v4187 = vadd.f32 0.0, %v4186
      %4188 = vmatmul.f32.gmra.mxu0 %v726
      %v4189 = vpop.f32.mrf.mxu0
      %v4190 = vadd.f32 0.0, %v4189
      %4191 = vmatmul.f32.gmra.mxu0 %v728
      %v4192 = vpop.f32.mrf.mxu0
      %v4193 = vadd.f32 0.0, %v4192
      %4194 = vmatmul.f32.gmra.mxu0 %v730
      %v4195 = vpop.f32.mrf.mxu0
      %v4196 = vadd.f32 0.0, %v4195
      %4197 = vmatmul.f32.gmra.mxu0 %v732
      %v4198 = vpop.f32.mrf.mxu0
      %v4199 = vadd.f32 0.0, %v4198
      %4200 = vmatmul.f32.gmra.mxu0 %v734
      %v4201 = vpop.f32.mrf.mxu0
      %v4202 = vadd.f32 0.0, %v4201
      %4203 = vmatmul.f32.gmra.mxu0 %v736
      %v4204 = vpop.f32.mrf.mxu0
      %v4205 = vadd.f32 0.0, %v4204
      %4206 = vmatmul.f32.gmra.mxu0 %v738
      %v4207 = vpop.f32.mrf.mxu0
      %v4208 = vadd.f32 0.0, %v4207
      %4209 = vmatmul.f32.gmra.mxu0 %v740
      %v4210 = vpop.f32.mrf.mxu0
      %v4211 = vadd.f32 0.0, %v4210
      %4212 = vmatmul.f32.gmra.mxu0 %v742
      %v4213 = vpop.f32.mrf.mxu0
      %v4214 = vadd.f32 0.0, %v4213
      %4215 = vmatmul.f32.gmra.mxu0 %v744
      %v4216 = vpop.f32.mrf.mxu0
      %v4217 = vadd.f32 0.0, %v4216
      %4218 = vmatmul.f32.gmra.mxu0 %v746
      %v4219 = vpop.f32.mrf.mxu0
      %v4220 = vadd.f32 0.0, %v4219
      %4221 = vmatmul.f32.gmra.mxu0 %v748
      %v4222 = vpop.f32.mrf.mxu0
      %v4223 = vadd.f32 0.0, %v4222
      %4224 = vmatmul.f32.gmra.mxu0 %v1141
      %v4225 = vpop.f32.mrf.mxu0
      %v4226 = vadd.f32 0.0, %v4225
      %4227 = vmatmul.f32.gmra.mxu0 %v1143
      %v4228 = vpop.f32.mrf.mxu0
      %v4229 = vadd.f32 0.0, %v4228
      %4230 = vmatmul.f32.gmra.mxu0 %v1145
      %v4231 = vpop.f32.mrf.mxu0
      %v4232 = vadd.f32 0.0, %v4231
      %4233 = vmatmul.f32.gmra.mxu0 %v1147
      %v4234 = vpop.f32.mrf.mxu0
      %v4235 = vadd.f32 0.0, %v4234
      %4236 = vmatmul.f32.gmra.mxu0 %v1149
      %v4237 = vpop.f32.mrf.mxu0
      %v4238 = vadd.f32 0.0, %v4237
      %4239 = vmatmul.f32.gmra.mxu0 %v1151
      %v4240 = vpop.f32.mrf.mxu0
      %v4241 = vadd.f32 0.0, %v4240
      %4242 = vmatmul.f32.gmra.mxu0 %v1153
      %v4243 = vpop.f32.mrf.mxu0
      %v4244 = vadd.f32 0.0, %v4243
      %4245 = vmatmul.f32.gmra.mxu0 %v1155
      %v4246 = vpop.f32.mrf.mxu0
      %v4247 = vadd.f32 0.0, %v4246
      %4248 = vmatmul.f32.gmra.mxu0 %v1157
      %v4249 = vpop.f32.mrf.mxu0
      %v4250 = vadd.f32 0.0, %v4249
      %4251 = vmatmul.f32.gmra.mxu0 %v1159
      %v4252 = vpop.f32.mrf.mxu0
      %v4253 = vadd.f32 0.0, %v4252
      %4254 = vmatmul.f32.gmra.mxu0 %v1161
      %v4255 = vpop.f32.mrf.mxu0
      %v4256 = vadd.f32 0.0, %v4255
      %4257 = vmatmul.f32.gmra.mxu0 %v1163
      %v4258 = vpop.f32.mrf.mxu0
      %v4259 = vadd.f32 0.0, %v4258
      %4260 = vmatmul.f32.gmra.mxu0 %v1165
      %v4261 = vpop.f32.mrf.mxu0
      %v4262 = vadd.f32 0.0, %v4261
      %4263 = vmatmul.f32.gmra.mxu0 %v1167
      %v4264 = vpop.f32.mrf.mxu0
      %v4265 = vadd.f32 0.0, %v4264
      %4266 = vmatmul.f32.gmra.mxu0 %v1169
      %v4267 = vpop.f32.mrf.mxu0
      %v4268 = vadd.f32 0.0, %v4267
      %4269 = vmatmul.f32.gmra.mxu0 %v1171
      %v4270 = vpop.f32.mrf.mxu0
      %v4271 = vadd.f32 0.0, %v4270
      %4272 = vmatmul.f32.gmra.mxu0 %v1173
      %v4273 = vpop.f32.mrf.mxu0
      %v4274 = vadd.f32 0.0, %v4273
      %4275 = vmatmul.f32.gmra.mxu0 %v1566
      %v4276 = vpop.f32.mrf.mxu0
      %v4277 = vadd.f32 0.0, %v4276
      %4278 = vmatmul.f32.gmra.mxu0 %v1568
      %v4279 = vpop.f32.mrf.mxu0
      %v4280 = vadd.f32 0.0, %v4279
      %4281 = vmatmul.f32.gmra.mxu0 %v1570
      %v4282 = vpop.f32.mrf.mxu0
      %v4283 = vadd.f32 0.0, %v4282
      %4284 = vmatmul.f32.gmra.mxu0 %v1572
      %v4285 = vpop.f32.mrf.mxu0
      %v4286 = vadd.f32 0.0, %v4285
      %4287 = vmatmul.f32.gmra.mxu0 %v1574
      %v4288 = vpop.f32.mrf.mxu0
      %v4289 = vadd.f32 0.0, %v4288
      %4290 = vmatmul.f32.gmra.mxu0 %v1576
      %v4291 = vpop.f32.mrf.mxu0
      %v4292 = vadd.f32 0.0, %v4291
      %4293 = vmatmul.f32.gmra.mxu0 %v1578
      %v4294 = vpop.f32.mrf.mxu0
      %v4295 = vadd.f32 0.0, %v4294
      %4296 = vmatmul.f32.gmra.mxu0 %v1580
      %v4297 = vpop.f32.mrf.mxu0
      %v4298 = vadd.f32 0.0, %v4297
      %4299 = vmatmul.f32.gmra.mxu0 %v1582
      %v4300 = vpop.f32.mrf.mxu0
      %v4301 = vadd.f32 0.0, %v4300
      %4302 = vmatmul.f32.gmra.mxu0 %v1584
      %v4303 = vpop.f32.mrf.mxu0
      %v4304 = vadd.f32 0.0, %v4303
      %4305 = vmatmul.f32.gmra.mxu0 %v1586
      %v4306 = vpop.f32.mrf.mxu0
      %v4307 = vadd.f32 0.0, %v4306
      %4308 = vmatmul.f32.gmra.mxu0 %v1588
      %v4309 = vpop.f32.mrf.mxu0
      %v4310 = vadd.f32 0.0, %v4309
      %4311 = vmatmul.f32.gmra.mxu0 %v1590
      %v4312 = vpop.f32.mrf.mxu0
      %v4313 = vadd.f32 0.0, %v4312
      %4314 = vmatmul.f32.gmra.mxu0 %v1592
      %v4315 = vpop.f32.mrf.mxu0
      %v4316 = vadd.f32 0.0, %v4315
      %4317 = vmatmul.f32.gmra.mxu0 %v1594
      %v4318 = vpop.f32.mrf.mxu0
      %v4319 = vadd.f32 0.0, %v4318
      %4320 = vmatmul.f32.gmra.mxu0 %v1596
      %v4321 = vpop.f32.mrf.mxu0
      %v4322 = vadd.f32 0.0, %v4321
      %4323 = vmatmul.f32.gmra.mxu0 %v1598
      %v4324 = vpop.f32.mrf.mxu0
      %v4325 = vadd.f32 0.0, %v4324
      %4326 = vmatmul.f32.gmra.mxu0 %v1991
      %v4327 = vpop.f32.mrf.mxu0
      %v4328 = vadd.f32 0.0, %v4327
      %4329 = vmatmul.f32.gmra.mxu0 %v1993
      %v4330 = vpop.f32.mrf.mxu0
      %v4331 = vadd.f32 0.0, %v4330
      %4332 = vmatmul.f32.gmra.mxu0 %v1995
      %v4333 = vpop.f32.mrf.mxu0
      %v4334 = vadd.f32 0.0, %v4333
      %4335 = vmatmul.f32.gmra.mxu0 %v1997
      %v4336 = vpop.f32.mrf.mxu0
      %v4337 = vadd.f32 0.0, %v4336
      %4338 = vmatmul.f32.gmra.mxu0 %v1999
      %v4339 = vpop.f32.mrf.mxu0
      %v4340 = vadd.f32 0.0, %v4339
      %4341 = vmatmul.f32.gmra.mxu0 %v2001
      %v4342 = vpop.f32.mrf.mxu0
      %v4343 = vadd.f32 0.0, %v4342
      %4344 = vmatmul.f32.gmra.mxu0 %v2003
      %v4345 = vpop.f32.mrf.mxu0
      %v4346 = vadd.f32 0.0, %v4345
      %4347 = vmatmul.f32.gmra.mxu0 %v2005
      %v4348 = vpop.f32.mrf.mxu0
      %v4349 = vadd.f32 0.0, %v4348
      %4350 = vmatmul.f32.gmra.mxu0 %v2007
      %v4351 = vpop.f32.mrf.mxu0
      %v4352 = vadd.f32 0.0, %v4351
      %4353 = vmatmul.f32.gmra.mxu0 %v2009
      %v4354 = vpop.f32.mrf.mxu0
      %v4355 = vadd.f32 0.0, %v4354
      %4356 = vmatmul.f32.gmra.mxu0 %v2011
      %v4357 = vpop.f32.mrf.mxu0
      %v4358 = vadd.f32 0.0, %v4357
      %4359 = vmatmul.f32.gmra.mxu0 %v2013
      %v4360 = vpop.f32.mrf.mxu0
      %v4361 = vadd.f32 0.0, %v4360
      %4362 = vmatmul.f32.gmra.mxu0 %v2015
      %v4363 = vpop.f32.mrf.mxu0
      %v4364 = vadd.f32 0.0, %v4363
      %4365 = vmatmul.f32.gmra.mxu0 %v2017
      %v4366 = vpop.f32.mrf.mxu0
      %v4367 = vadd.f32 0.0, %v4366
      %4368 = vmatmul.f32.gmra.mxu0 %v2019
      %v4369 = vpop.f32.mrf.mxu0
      %v4370 = vadd.f32 0.0, %v4369
      %4371 = vmatmul.f32.gmra.mxu0 %v2021
      %v4372 = vpop.f32.mrf.mxu0
      %v4373 = vadd.f32 0.0, %v4372
      %4374 = vmatmul.f32.gmra.mxu0 %v2023
      %v4375 = vpop.f32.mrf.mxu0
      %v4376 = vadd.f32 0.0, %v4375
      %4377 = vmatmul.f32.gmra.mxu0 %v2416
      %v4378 = vpop.f32.mrf.mxu0
      %v4379 = vadd.f32 0.0, %v4378
      %4380 = vmatmul.f32.gmra.mxu0 %v2418
      %v4381 = vpop.f32.mrf.mxu0
      %v4382 = vadd.f32 0.0, %v4381
      %4383 = vmatmul.f32.gmra.mxu0 %v2420
      %v4384 = vpop.f32.mrf.mxu0
      %v4385 = vadd.f32 0.0, %v4384
      %4386 = vmatmul.f32.gmra.mxu0 %v2422
      %v4387 = vpop.f32.mrf.mxu0
      %v4388 = vadd.f32 0.0, %v4387
      %4389 = vmatmul.f32.gmra.mxu0 %v2424
      %v4390 = vpop.f32.mrf.mxu0
      %v4391 = vadd.f32 0.0, %v4390
      %4392 = vmatmul.f32.gmra.mxu0 %v2426
      %v4393 = vpop.f32.mrf.mxu0
      %v4394 = vadd.f32 0.0, %v4393
      %4395 = vmatmul.f32.gmra.mxu0 %v2428
      %v4396 = vpop.f32.mrf.mxu0
      %v4397 = vadd.f32 0.0, %v4396
      %4398 = vmatmul.f32.gmra.mxu0 %v2430
      %v4399 = vpop.f32.mrf.mxu0
      %v4400 = vadd.f32 0.0, %v4399
      %4401 = vmatmul.f32.gmra.mxu0 %v2432
      %v4402 = vpop.f32.mrf.mxu0
      %v4403 = vadd.f32 0.0, %v4402
      %4404 = vmatmul.f32.gmra.mxu0 %v2434
      %v4405 = vpop.f32.mrf.mxu0
      %v4406 = vadd.f32 0.0, %v4405
      %4407 = vmatmul.f32.gmra.mxu0 %v2436
      %v4408 = vpop.f32.mrf.mxu0
      %v4409 = vadd.f32 0.0, %v4408
      %4410 = vmatmul.f32.gmra.mxu0 %v2438
      %v4411 = vpop.f32.mrf.mxu0
      %v4412 = vadd.f32 0.0, %v4411
      %4413 = vmatmul.f32.gmra.mxu0 %v2440
      %v4414 = vpop.f32.mrf.mxu0
      %v4415 = vadd.f32 0.0, %v4414
      %4416 = vmatmul.f32.gmra.mxu0 %v2442
      %v4417 = vpop.f32.mrf.mxu0
      %v4418 = vadd.f32 0.0, %v4417
      %4419 = vmatmul.f32.gmra.mxu0 %v2444
      %v4420 = vpop.f32.mrf.mxu0
      %v4421 = vadd.f32 0.0, %v4420
      %4422 = vmatmul.f32.gmra.mxu0 %v2446
      %v4423 = vpop.f32.mrf.mxu0
      %v4424 = vadd.f32 0.0, %v4423
      %4425 = vmatmul.f32.gmra.mxu0 %v2448
      %v4426 = vpop.f32.mrf.mxu0
      %v4427 = vadd.f32 0.0, %v4426
      %4428 = vmatmul.f32.gmra.mxu0 %v2841
      %v4429 = vpop.f32.mrf.mxu0
      %v4430 = vadd.f32 0.0, %v4429
      %4431 = vmatmul.f32.gmra.mxu0 %v2843
      %v4432 = vpop.f32.mrf.mxu0
      %v4433 = vadd.f32 0.0, %v4432
      %4434 = vmatmul.f32.gmra.mxu0 %v2845
      %v4435 = vpop.f32.mrf.mxu0
      %v4436 = vadd.f32 0.0, %v4435
      %4437 = vmatmul.f32.gmra.mxu0 %v2847
      %v4438 = vpop.f32.mrf.mxu0
      %v4439 = vadd.f32 0.0, %v4438
      %4440 = vmatmul.f32.gmra.mxu0 %v2849
      %v4441 = vpop.f32.mrf.mxu0
      %v4442 = vadd.f32 0.0, %v4441
      %4443 = vmatmul.f32.gmra.mxu0 %v2851
      %v4444 = vpop.f32.mrf.mxu0
      %v4445 = vadd.f32 0.0, %v4444
      %4446 = vmatmul.f32.gmra.mxu0 %v2853
      %v4447 = vpop.f32.mrf.mxu0
      %v4448 = vadd.f32 0.0, %v4447
      %4449 = vmatmul.f32.gmra.mxu0 %v2855
      %v4450 = vpop.f32.mrf.mxu0
      %v4451 = vadd.f32 0.0, %v4450
      %4452 = vmatmul.f32.gmra.mxu0 %v2857
      %v4453 = vpop.f32.mrf.mxu0
      %v4454 = vadd.f32 0.0, %v4453
      %4455 = vmatmul.f32.gmra.mxu0 %v2859
      %v4456 = vpop.f32.mrf.mxu0
      %v4457 = vadd.f32 0.0, %v4456
      %4458 = vmatmul.f32.gmra.mxu0 %v2861
      %v4459 = vpop.f32.mrf.mxu0
      %v4460 = vadd.f32 0.0, %v4459
      %4461 = vmatmul.f32.gmra.mxu0 %v2863
      %v4462 = vpop.f32.mrf.mxu0
      %v4463 = vadd.f32 0.0, %v4462
      %4464 = vmatmul.f32.gmra.mxu0 %v2865
      %v4465 = vpop.f32.mrf.mxu0
      %v4466 = vadd.f32 0.0, %v4465
      %4467 = vmatmul.f32.gmra.mxu0 %v2867
      %v4468 = vpop.f32.mrf.mxu0
      %v4469 = vadd.f32 0.0, %v4468
      %4470 = vmatmul.f32.gmra.mxu0 %v2869
      %v4471 = vpop.f32.mrf.mxu0
      %v4472 = vadd.f32 0.0, %v4471
      %4473 = vmatmul.f32.gmra.mxu0 %v2871
      %v4474 = vpop.f32.mrf.mxu0
      %v4475 = vadd.f32 0.0, %v4474
      %4476 = vmatmul.f32.gmra.mxu0 %v2873
      %v4477 = vpop.f32.mrf.mxu0
      %v4478 = vadd.f32 0.0, %v4477
      %4479 = vmatmul.f32.gmra.mxu0 %v3266
      %v4480 = vpop.f32.mrf.mxu0
      %v4481 = vadd.f32 0.0, %v4480
      %4482 = vmatmul.f32.gmra.mxu0 %v3268
      %v4483 = vpop.f32.mrf.mxu0
      %v4484 = vadd.f32 0.0, %v4483
      %4485 = vmatmul.f32.gmra.mxu0 %v3270
      %v4486 = vpop.f32.mrf.mxu0
      %v4487 = vadd.f32 0.0, %v4486
      %4488 = vmatmul.f32.gmra.mxu0 %v3272
      %v4489 = vpop.f32.mrf.mxu0
      %v4490 = vadd.f32 0.0, %v4489
      %4491 = vmatmul.f32.gmra.mxu0 %v3274
      %v4492 = vpop.f32.mrf.mxu0
      %v4493 = vadd.f32 0.0, %v4492
      %4494 = vmatmul.f32.gmra.mxu0 %v3276
      %v4495 = vpop.f32.mrf.mxu0
      %v4496 = vadd.f32 0.0, %v4495
      %4497 = vmatmul.f32.gmra.mxu0 %v3278
      %v4498 = vpop.f32.mrf.mxu0
      %v4499 = vadd.f32 0.0, %v4498
      %4500 = vmatmul.f32.gmra.mxu0 %v3280
      %v4501 = vpop.f32.mrf.mxu0
      %v4502 = vadd.f32 0.0, %v4501
      %4503 = vmatmul.f32.gmra.mxu0 %v3282
      %v4504 = vpop.f32.mrf.mxu0
      %v4505 = vadd.f32 0.0, %v4504
      %4506 = vmatmul.f32.gmra.mxu0 %v3284
      %v4507 = vpop.f32.mrf.mxu0
      %v4508 = vadd.f32 0.0, %v4507
      %4509 = vmatmul.f32.gmra.mxu0 %v3286
      %v4510 = vpop.f32.mrf.mxu0
      %v4511 = vadd.f32 0.0, %v4510
      %4512 = vmatmul.f32.gmra.mxu0 %v3288
      %v4513 = vpop.f32.mrf.mxu0
      %v4514 = vadd.f32 0.0, %v4513
      %4515 = vmatmul.f32.gmra.mxu0 %v3290
      %v4516 = vpop.f32.mrf.mxu0
      %v4517 = vadd.f32 0.0, %v4516
      %4518 = vmatmul.f32.gmra.mxu0 %v3292
      %v4519 = vpop.f32.mrf.mxu0
      %v4520 = vadd.f32 0.0, %v4519
      %4521 = vmatmul.f32.gmra.mxu0 %v3294
      %v4522 = vpop.f32.mrf.mxu0
      %v4523 = vadd.f32 0.0, %v4522
      %4524 = vmatmul.f32.gmra.mxu0 %v3296
      %v4525 = vpop.f32.mrf.mxu0
      %v4526 = vadd.f32 0.0, %v4525
      %4527 = vmatmul.f32.gmra.mxu0 %v3298
      %v4528 = vpop.f32.mrf.mxu0
      %v4529 = vadd.f32 0.0, %v4528
      %4530 = vmatmul.f32.gmra.mxu0 %v3691
      %v4531 = vpop.f32.mrf.mxu0
      %v4532 = vadd.f32 0.0, %v4531
      %4533 = vmatmul.f32.gmra.mxu0 %v3693
      %v4534 = vpop.f32.mrf.mxu0
      %v4535 = vadd.f32 0.0, %v4534
      %4536 = vmatmul.f32.gmra.mxu0 %v3695
      %v4537 = vpop.f32.mrf.mxu0
      %v4538 = vadd.f32 0.0, %v4537
      %4539 = vmatmul.f32.gmra.mxu0 %v3697
      %v4540 = vpop.f32.mrf.mxu0
      %v4541 = vadd.f32 0.0, %v4540
      %4542 = vmatmul.f32.gmra.mxu0 %v3699
      %v4543 = vpop.f32.mrf.mxu0
      %v4544 = vadd.f32 0.0, %v4543
      %4545 = vmatmul.f32.gmra.mxu0 %v3701
      %v4546 = vpop.f32.mrf.mxu0
      %v4547 = vadd.f32 0.0, %v4546
      %4548 = vmatmul.f32.gmra.mxu0 %v3703
      %v4549 = vpop.f32.mrf.mxu0
      %v4550 = vadd.f32 0.0, %v4549
      %4551 = vmatmul.f32.gmra.mxu0 %v3705
      %v4552 = vpop.f32.mrf.mxu0
      %v4553 = vadd.f32 0.0, %v4552
      %4554 = vmatmul.f32.gmra.mxu0 %v3707
      %v4555 = vpop.f32.mrf.mxu0
      %v4556 = vadd.f32 0.0, %v4555
      %4557 = vmatmul.f32.gmra.mxu0 %v3709
      %v4558 = vpop.f32.mrf.mxu0
      %v4559 = vadd.f32 0.0, %v4558
      %4560 = vmatmul.f32.gmra.mxu0 %v3711
      %v4561 = vpop.f32.mrf.mxu0
      %v4562 = vadd.f32 0.0, %v4561
      %4563 = vmatmul.f32.gmra.mxu0 %v3713
      %v4564 = vpop.f32.mrf.mxu0
      %v4565 = vadd.f32 0.0, %v4564
      %4566 = vmatmul.f32.gmra.mxu0 %v3715
      %v4567 = vpop.f32.mrf.mxu0
      %v4568 = vadd.f32 0.0, %v4567
      %4569 = vmatmul.f32.gmra.mxu0 %v3717
      %v4570 = vpop.f32.mrf.mxu0
      %v4571 = vadd.f32 0.0, %v4570
      %4572 = vmatmul.f32.gmra.mxu0 %v3719
      %v4573 = vpop.f32.mrf.mxu0
      %v4574 = vadd.f32 0.0, %v4573
      %4575 = vmatmul.f32.gmra.mxu0 %v3721
      %v4576 = vpop.f32.mrf.mxu0
      %v4577 = vadd.f32 0.0, %v4576
      %4578 = vmatmul.f32.gmra.mxu0 %v3723
      %v4579 = vpop.f32.mrf.mxu0
      %v4580 = vadd.f32 0.0, %v4579
      %4581 = vdwg.mxu0
      %4582 = vmatpush.msra.mxu0 0.0
      %4583 = vmatpush.msra.mxu0 0.0
      %4584 = vmatpush.msra.mxu0 0.0
      %4585 = vmatpush.msra.mxu0 0.0
      %4586 = vmatpush.msra.mxu0 0.0
      %4587 = vmatpush.msra.mxu0 0.0
      %4588 = vmatpush.msra.mxu0 0.0
      %4589 = vmatpush.msra.mxu0 0.0
      %4590 = vmatpush.msra.mxu0 0.0
      %4591 = vmatpush.msra.mxu0 0.0
      %4592 = vmatpush.msra.mxu0 0.0
      %4593 = vmatpush.msra.mxu0 0.0
      %4594 = vmatpush.msra.mxu0 0.0
      %4595 = vmatpush.msra.mxu0 %v4155
      %4596 = vmatpush.msra.mxu0 %v3742
      %4597 = vmatpush.msra.mxu0 %v3741
      %4598 = vmatmul.f32.gmra.mxu0 %v3746
      %v4599 = vpop.f32.mrf.mxu0
      %v4600 = vadd.f32 %v4175, %v4599
      %4601 = vmatmul.f32.gmra.mxu0 %v3749
      %v4602 = vpop.f32.mrf.mxu0
      %v4603 = vadd.f32 %v4178, %v4602
      %4604 = vmatmul.f32.gmra.mxu0 %v3752
      %v4605 = vpop.f32.mrf.mxu0
      %v4606 = vadd.f32 %v4181, %v4605
      %4607 = vmatmul.f32.gmra.mxu0 %v3755
      %v4608 = vpop.f32.mrf.mxu0
      %v4609 = vadd.f32 %v4184, %v4608
      %4610 = vmatmul.f32.gmra.mxu0 %v3758
      %v4611 = vpop.f32.mrf.mxu0
      %v4612 = vadd.f32 %v4187, %v4611
      %4613 = vmatmul.f32.gmra.mxu0 %v3761
      %v4614 = vpop.f32.mrf.mxu0
      %v4615 = vadd.f32 %v4190, %v4614
      %4616 = vmatmul.f32.gmra.mxu0 %v3764
      %v4617 = vpop.f32.mrf.mxu0
      %v4618 = vadd.f32 %v4193, %v4617
      %4619 = vmatmul.f32.gmra.mxu0 %v3767
      %v4620 = vpop.f32.mrf.mxu0
      %v4621 = vadd.f32 %v4196, %v4620
      %4622 = vmatmul.f32.gmra.mxu0 %v3770
      %v4623 = vpop.f32.mrf.mxu0
      %v4624 = vadd.f32 %v4199, %v4623
      %4625 = vmatmul.f32.gmra.mxu0 %v3773
      %v4626 = vpop.f32.mrf.mxu0
      %v4627 = vadd.f32 %v4202, %v4626
      %4628 = vmatmul.f32.gmra.mxu0 %v3776
      %v4629 = vpop.f32.mrf.mxu0
      %v4630 = vadd.f32 %v4205, %v4629
      %4631 = vmatmul.f32.gmra.mxu0 %v3779
      %v4632 = vpop.f32.mrf.mxu0
      %v4633 = vadd.f32 %v4208, %v4632
      %4634 = vmatmul.f32.gmra.mxu0 %v3782
      %v4635 = vpop.f32.mrf.mxu0
      %v4636 = vadd.f32 %v4211, %v4635
      %4637 = vmatmul.f32.gmra.mxu0 %v3785
      %v4638 = vpop.f32.mrf.mxu0
      %v4639 = vadd.f32 %v4214, %v4638
      %4640 = vmatmul.f32.gmra.mxu0 %v3788
      %v4641 = vpop.f32.mrf.mxu0
      %v4642 = vadd.f32 %v4217, %v4641
      %4643 = vmatmul.f32.gmra.mxu0 %v3791
      %v4644 = vpop.f32.mrf.mxu0
      %v4645 = vadd.f32 %v4220, %v4644
      %4646 = vmatmul.f32.gmra.mxu0 %v3794
      %v4647 = vpop.f32.mrf.mxu0
      %v4648 = vadd.f32 %v4223, %v4647
      %4649 = vmatmul.f32.gmra.mxu0 %v3797
      %v4650 = vpop.f32.mrf.mxu0
      %v4651 = vadd.f32 %v4226, %v4650
      %4652 = vmatmul.f32.gmra.mxu0 %v3800
      %v4653 = vpop.f32.mrf.mxu0
      %v4654 = vadd.f32 %v4229, %v4653
      %4655 = vmatmul.f32.gmra.mxu0 %v3803
      %v4656 = vpop.f32.mrf.mxu0
      %v4657 = vadd.f32 %v4232, %v4656
      %4658 = vmatmul.f32.gmra.mxu0 %v3806
      %v4659 = vpop.f32.mrf.mxu0
      %v4660 = vadd.f32 %v4235, %v4659
      %4661 = vmatmul.f32.gmra.mxu0 %v3809
      %v4662 = vpop.f32.mrf.mxu0
      %v4663 = vadd.f32 %v4238, %v4662
      %4664 = vmatmul.f32.gmra.mxu0 %v3812
      %v4665 = vpop.f32.mrf.mxu0
      %v4666 = vadd.f32 %v4241, %v4665
      %4667 = vmatmul.f32.gmra.mxu0 %v3815
      %v4668 = vpop.f32.mrf.mxu0
      %v4669 = vadd.f32 %v4244, %v4668
      %4670 = vmatmul.f32.gmra.mxu0 %v3818
      %v4671 = vpop.f32.mrf.mxu0
      %v4672 = vadd.f32 %v4247, %v4671
      %4673 = vmatmul.f32.gmra.mxu0 %v3821
      %v4674 = vpop.f32.mrf.mxu0
      %v4675 = vadd.f32 %v4250, %v4674
      %4676 = vmatmul.f32.gmra.mxu0 %v3824
      %v4677 = vpop.f32.mrf.mxu0
      %v4678 = vadd.f32 %v4253, %v4677
      %4679 = vmatmul.f32.gmra.mxu0 %v3827
      %v4680 = vpop.f32.mrf.mxu0
      %v4681 = vadd.f32 %v4256, %v4680
      %4682 = vmatmul.f32.gmra.mxu0 %v3830
      %v4683 = vpop.f32.mrf.mxu0
      %v4684 = vadd.f32 %v4259, %v4683
      %4685 = vmatmul.f32.gmra.mxu0 %v3833
      %v4686 = vpop.f32.mrf.mxu0
      %v4687 = vadd.f32 %v4262, %v4686
      %4688 = vmatmul.f32.gmra.mxu0 %v3836
      %v4689 = vpop.f32.mrf.mxu0
      %v4690 = vadd.f32 %v4265, %v4689
      %4691 = vmatmul.f32.gmra.mxu0 %v3839
      %v4692 = vpop.f32.mrf.mxu0
      %v4693 = vadd.f32 %v4268, %v4692
      %4694 = vmatmul.f32.gmra.mxu0 %v3842
      %v4695 = vpop.f32.mrf.mxu0
      %v4696 = vadd.f32 %v4271, %v4695
      %4697 = vmatmul.f32.gmra.mxu0 %v3845
      %v4698 = vpop.f32.mrf.mxu0
      %v4699 = vadd.f32 %v4274, %v4698
      %4700 = vmatmul.f32.gmra.mxu0 %v3848
      %v4701 = vpop.f32.mrf.mxu0
      %v4702 = vadd.f32 %v4277, %v4701
      %4703 = vmatmul.f32.gmra.mxu0 %v3851
      %v4704 = vpop.f32.mrf.mxu0
      %v4705 = vadd.f32 %v4280, %v4704
      %4706 = vmatmul.f32.gmra.mxu0 %v3854
      %v4707 = vpop.f32.mrf.mxu0
      %v4708 = vadd.f32 %v4283, %v4707
      %4709 = vmatmul.f32.gmra.mxu0 %v3857
      %v4710 = vpop.f32.mrf.mxu0
      %v4711 = vadd.f32 %v4286, %v4710
      %4712 = vmatmul.f32.gmra.mxu0 %v3860
      %v4713 = vpop.f32.mrf.mxu0
      %v4714 = vadd.f32 %v4289, %v4713
      %4715 = vmatmul.f32.gmra.mxu0 %v3863
      %v4716 = vpop.f32.mrf.mxu0
      %v4717 = vadd.f32 %v4292, %v4716
      %4718 = vmatmul.f32.gmra.mxu0 %v3866
      %v4719 = vpop.f32.mrf.mxu0
      %v4720 = vadd.f32 %v4295, %v4719
      %4721 = vmatmul.f32.gmra.mxu0 %v3869
      %v4722 = vpop.f32.mrf.mxu0
      %v4723 = vadd.f32 %v4298, %v4722
      %4724 = vmatmul.f32.gmra.mxu0 %v3872
      %v4725 = vpop.f32.mrf.mxu0
      %v4726 = vadd.f32 %v4301, %v4725
      %4727 = vmatmul.f32.gmra.mxu0 %v3875
      %v4728 = vpop.f32.mrf.mxu0
      %v4729 = vadd.f32 %v4304, %v4728
      %4730 = vmatmul.f32.gmra.mxu0 %v3878
      %v4731 = vpop.f32.mrf.mxu0
      %v4732 = vadd.f32 %v4307, %v4731
      %4733 = vmatmul.f32.gmra.mxu0 %v3881
      %v4734 = vpop.f32.mrf.mxu0
      %v4735 = vadd.f32 %v4310, %v4734
      %4736 = vmatmul.f32.gmra.mxu0 %v3884
      %v4737 = vpop.f32.mrf.mxu0
      %v4738 = vadd.f32 %v4313, %v4737
      %4739 = vmatmul.f32.gmra.mxu0 %v3887
      %v4740 = vpop.f32.mrf.mxu0
      %v4741 = vadd.f32 %v4316, %v4740
      %4742 = vmatmul.f32.gmra.mxu0 %v3890
      %v4743 = vpop.f32.mrf.mxu0
      %v4744 = vadd.f32 %v4319, %v4743
      %4745 = vmatmul.f32.gmra.mxu0 %v3893
      %v4746 = vpop.f32.mrf.mxu0
      %v4747 = vadd.f32 %v4322, %v4746
      %4748 = vmatmul.f32.gmra.mxu0 %v3896
      %v4749 = vpop.f32.mrf.mxu0
      %v4750 = vadd.f32 %v4325, %v4749
      %4751 = vmatmul.f32.gmra.mxu0 %v3899
      %v4752 = vpop.f32.mrf.mxu0
      %v4753 = vadd.f32 %v4328, %v4752
      %4754 = vmatmul.f32.gmra.mxu0 %v3902
      %v4755 = vpop.f32.mrf.mxu0
      %v4756 = vadd.f32 %v4331, %v4755
      %4757 = vmatmul.f32.gmra.mxu0 %v3905
      %v4758 = vpop.f32.mrf.mxu0
      %v4759 = vadd.f32 %v4334, %v4758
      %4760 = vmatmul.f32.gmra.mxu0 %v3908
      %v4761 = vpop.f32.mrf.mxu0
      %v4762 = vadd.f32 %v4337, %v4761
      %4763 = vmatmul.f32.gmra.mxu0 %v3911
      %v4764 = vpop.f32.mrf.mxu0
      %v4765 = vadd.f32 %v4340, %v4764
      %4766 = vmatmul.f32.gmra.mxu0 %v3914
      %v4767 = vpop.f32.mrf.mxu0
      %v4768 = vadd.f32 %v4343, %v4767
      %4769 = vmatmul.f32.gmra.mxu0 %v3917
      %v4770 = vpop.f32.mrf.mxu0
      %v4771 = vadd.f32 %v4346, %v4770
      %4772 = vmatmul.f32.gmra.mxu0 %v3920
      %v4773 = vpop.f32.mrf.mxu0
      %v4774 = vadd.f32 %v4349, %v4773
      %4775 = vmatmul.f32.gmra.mxu0 %v3923
      %v4776 = vpop.f32.mrf.mxu0
      %v4777 = vadd.f32 %v4352, %v4776
      %4778 = vmatmul.f32.gmra.mxu0 %v3926
      %v4779 = vpop.f32.mrf.mxu0
      %v4780 = vadd.f32 %v4355, %v4779
      %4781 = vmatmul.f32.gmra.mxu0 %v3929
      %v4782 = vpop.f32.mrf.mxu0
      %v4783 = vadd.f32 %v4358, %v4782
      %4784 = vmatmul.f32.gmra.mxu0 %v3932
      %v4785 = vpop.f32.mrf.mxu0
      %v4786 = vadd.f32 %v4361, %v4785
      %4787 = vmatmul.f32.gmra.mxu0 %v3935
      %v4788 = vpop.f32.mrf.mxu0
      %v4789 = vadd.f32 %v4364, %v4788
      %4790 = vmatmul.f32.gmra.mxu0 %v3938
      %v4791 = vpop.f32.mrf.mxu0
      %v4792 = vadd.f32 %v4367, %v4791
      %4793 = vmatmul.f32.gmra.mxu0 %v3941
      %v4794 = vpop.f32.mrf.mxu0
      %v4795 = vadd.f32 %v4370, %v4794
      %4796 = vmatmul.f32.gmra.mxu0 %v3944
      %v4797 = vpop.f32.mrf.mxu0
      %v4798 = vadd.f32 %v4373, %v4797
      %4799 = vmatmul.f32.gmra.mxu0 %v3947
      %v4800 = vpop.f32.mrf.mxu0
      %v4801 = vadd.f32 %v4376, %v4800
      %4802 = vmatmul.f32.gmra.mxu0 %v3950
      %v4803 = vpop.f32.mrf.mxu0
      %v4804 = vadd.f32 %v4379, %v4803
      %4805 = vmatmul.f32.gmra.mxu0 %v3953
      %v4806 = vpop.f32.mrf.mxu0
      %v4807 = vadd.f32 %v4382, %v4806
      %4808 = vmatmul.f32.gmra.mxu0 %v3956
      %v4809 = vpop.f32.mrf.mxu0
      %v4810 = vadd.f32 %v4385, %v4809
      %4811 = vmatmul.f32.gmra.mxu0 %v3959
      %v4812 = vpop.f32.mrf.mxu0
      %v4813 = vadd.f32 %v4388, %v4812
      %4814 = vmatmul.f32.gmra.mxu0 %v3962
      %v4815 = vpop.f32.mrf.mxu0
      %v4816 = vadd.f32 %v4391, %v4815
      %4817 = vmatmul.f32.gmra.mxu0 %v3965
      %v4818 = vpop.f32.mrf.mxu0
      %v4819 = vadd.f32 %v4394, %v4818
      %4820 = vmatmul.f32.gmra.mxu0 %v3968
      %v4821 = vpop.f32.mrf.mxu0
      %v4822 = vadd.f32 %v4397, %v4821
      %4823 = vmatmul.f32.gmra.mxu0 %v3971
      %v4824 = vpop.f32.mrf.mxu0
      %v4825 = vadd.f32 %v4400, %v4824
      %4826 = vmatmul.f32.gmra.mxu0 %v3974
      %v4827 = vpop.f32.mrf.mxu0
      %v4828 = vadd.f32 %v4403, %v4827
      %4829 = vmatmul.f32.gmra.mxu0 %v3977
      %v4830 = vpop.f32.mrf.mxu0
      %v4831 = vadd.f32 %v4406, %v4830
      %4832 = vmatmul.f32.gmra.mxu0 %v3980
      %v4833 = vpop.f32.mrf.mxu0
      %v4834 = vadd.f32 %v4409, %v4833
      %4835 = vmatmul.f32.gmra.mxu0 %v3983
      %v4836 = vpop.f32.mrf.mxu0
      %v4837 = vadd.f32 %v4412, %v4836
      %4838 = vmatmul.f32.gmra.mxu0 %v3986
      %v4839 = vpop.f32.mrf.mxu0
      %v4840 = vadd.f32 %v4415, %v4839
      %4841 = vmatmul.f32.gmra.mxu0 %v3989
      %v4842 = vpop.f32.mrf.mxu0
      %v4843 = vadd.f32 %v4418, %v4842
      %4844 = vmatmul.f32.gmra.mxu0 %v3992
      %v4845 = vpop.f32.mrf.mxu0
      %v4846 = vadd.f32 %v4421, %v4845
      %4847 = vmatmul.f32.gmra.mxu0 %v3995
      %v4848 = vpop.f32.mrf.mxu0
      %v4849 = vadd.f32 %v4424, %v4848
      %4850 = vmatmul.f32.gmra.mxu0 %v3998
      %v4851 = vpop.f32.mrf.mxu0
      %v4852 = vadd.f32 %v4427, %v4851
      %4853 = vmatmul.f32.gmra.mxu0 %v4001
      %v4854 = vpop.f32.mrf.mxu0
      %v4855 = vadd.f32 %v4430, %v4854
      %4856 = vmatmul.f32.gmra.mxu0 %v4004
      %v4857 = vpop.f32.mrf.mxu0
      %v4858 = vadd.f32 %v4433, %v4857
      %4859 = vmatmul.f32.gmra.mxu0 %v4007
      %v4860 = vpop.f32.mrf.mxu0
      %v4861 = vadd.f32 %v4436, %v4860
      %4862 = vmatmul.f32.gmra.mxu0 %v4010
      %v4863 = vpop.f32.mrf.mxu0
      %v4864 = vadd.f32 %v4439, %v4863
      %4865 = vmatmul.f32.gmra.mxu0 %v4013
      %v4866 = vpop.f32.mrf.mxu0
      %v4867 = vadd.f32 %v4442, %v4866
      %4868 = vmatmul.f32.gmra.mxu0 %v4016
      %v4869 = vpop.f32.mrf.mxu0
      %v4870 = vadd.f32 %v4445, %v4869
      %4871 = vmatmul.f32.gmra.mxu0 %v4019
      %v4872 = vpop.f32.mrf.mxu0
      %v4873 = vadd.f32 %v4448, %v4872
      %4874 = vmatmul.f32.gmra.mxu0 %v4022
      %v4875 = vpop.f32.mrf.mxu0
      %v4876 = vadd.f32 %v4451, %v4875
      %4877 = vmatmul.f32.gmra.mxu0 %v4025
      %v4878 = vpop.f32.mrf.mxu0
      %v4879 = vadd.f32 %v4454, %v4878
      %4880 = vmatmul.f32.gmra.mxu0 %v4028
      %v4881 = vpop.f32.mrf.mxu0
      %v4882 = vadd.f32 %v4457, %v4881
      %4883 = vmatmul.f32.gmra.mxu0 %v4031
      %v4884 = vpop.f32.mrf.mxu0
      %v4885 = vadd.f32 %v4460, %v4884
      %4886 = vmatmul.f32.gmra.mxu0 %v4034
      %v4887 = vpop.f32.mrf.mxu0
      %v4888 = vadd.f32 %v4463, %v4887
      %4889 = vmatmul.f32.gmra.mxu0 %v4037
      %v4890 = vpop.f32.mrf.mxu0
      %v4891 = vadd.f32 %v4466, %v4890
      %4892 = vmatmul.f32.gmra.mxu0 %v4040
      %v4893 = vpop.f32.mrf.mxu0
      %v4894 = vadd.f32 %v4469, %v4893
      %4895 = vmatmul.f32.gmra.mxu0 %v4043
      %v4896 = vpop.f32.mrf.mxu0
      %v4897 = vadd.f32 %v4472, %v4896
      %4898 = vmatmul.f32.gmra.mxu0 %v4046
      %v4899 = vpop.f32.mrf.mxu0
      %v4900 = vadd.f32 %v4475, %v4899
      %4901 = vmatmul.f32.gmra.mxu0 %v4049
      %v4902 = vpop.f32.mrf.mxu0
      %v4903 = vadd.f32 %v4478, %v4902
      %4904 = vmatmul.f32.gmra.mxu0 %v4052
      %v4905 = vpop.f32.mrf.mxu0
      %v4906 = vadd.f32 %v4481, %v4905
      %4907 = vmatmul.f32.gmra.mxu0 %v4055
      %v4908 = vpop.f32.mrf.mxu0
      %v4909 = vadd.f32 %v4484, %v4908
      %4910 = vmatmul.f32.gmra.mxu0 %v4058
      %v4911 = vpop.f32.mrf.mxu0
      %v4912 = vadd.f32 %v4487, %v4911
      %4913 = vmatmul.f32.gmra.mxu0 %v4061
      %v4914 = vpop.f32.mrf.mxu0
      %v4915 = vadd.f32 %v4490, %v4914
      %4916 = vmatmul.f32.gmra.mxu0 %v4064
      %v4917 = vpop.f32.mrf.mxu0
      %v4918 = vadd.f32 %v4493, %v4917
      %4919 = vmatmul.f32.gmra.mxu0 %v4067
      %v4920 = vpop.f32.mrf.mxu0
      %v4921 = vadd.f32 %v4496, %v4920
      %4922 = vmatmul.f32.gmra.mxu0 %v4070
      %v4923 = vpop.f32.mrf.mxu0
      %v4924 = vadd.f32 %v4499, %v4923
      %4925 = vmatmul.f32.gmra.mxu0 %v4073
      %v4926 = vpop.f32.mrf.mxu0
      %v4927 = vadd.f32 %v4502, %v4926
      %4928 = vmatmul.f32.gmra.mxu0 %v4076
      %v4929 = vpop.f32.mrf.mxu0
      %v4930 = vadd.f32 %v4505, %v4929
      %4931 = vmatmul.f32.gmra.mxu0 %v4079
      %v4932 = vpop.f32.mrf.mxu0
      %v4933 = vadd.f32 %v4508, %v4932
      %4934 = vmatmul.f32.gmra.mxu0 %v4082
      %v4935 = vpop.f32.mrf.mxu0
      %v4936 = vadd.f32 %v4511, %v4935
      %4937 = vmatmul.f32.gmra.mxu0 %v4085
      %v4938 = vpop.f32.mrf.mxu0
      %v4939 = vadd.f32 %v4514, %v4938
      %4940 = vmatmul.f32.gmra.mxu0 %v4088
      %v4941 = vpop.f32.mrf.mxu0
      %v4942 = vadd.f32 %v4517, %v4941
      %4943 = vmatmul.f32.gmra.mxu0 %v4091
      %v4944 = vpop.f32.mrf.mxu0
      %v4945 = vadd.f32 %v4520, %v4944
      %4946 = vmatmul.f32.gmra.mxu0 %v4094
      %v4947 = vpop.f32.mrf.mxu0
      %v4948 = vadd.f32 %v4523, %v4947
      %4949 = vmatmul.f32.gmra.mxu0 %v4097
      %v4950 = vpop.f32.mrf.mxu0
      %v4951 = vadd.f32 %v4526, %v4950
      %4952 = vmatmul.f32.gmra.mxu0 %v4100
      %v4953 = vpop.f32.mrf.mxu0
      %v4954 = vadd.f32 %v4529, %v4953
      %4955 = vmatmul.f32.gmra.mxu0 %v4103
      %v4956 = vpop.f32.mrf.mxu0
      %v4957 = vadd.f32 %v4532, %v4956
      %4958 = vmatmul.f32.gmra.mxu0 %v4106
      %v4959 = vpop.f32.mrf.mxu0
      %v4960 = vadd.f32 %v4535, %v4959
      %4961 = vmatmul.f32.gmra.mxu0 %v4109
      %v4962 = vpop.f32.mrf.mxu0
      %v4963 = vadd.f32 %v4538, %v4962
      %4964 = vmatmul.f32.gmra.mxu0 %v4112
      %v4965 = vpop.f32.mrf.mxu0
      %v4966 = vadd.f32 %v4541, %v4965
      %4967 = vmatmul.f32.gmra.mxu0 %v4115
      %v4968 = vpop.f32.mrf.mxu0
      %v4969 = vadd.f32 %v4544, %v4968
      %4970 = vmatmul.f32.gmra.mxu0 %v4118
      %v4971 = vpop.f32.mrf.mxu0
      %v4972 = vadd.f32 %v4547, %v4971
      %4973 = vmatmul.f32.gmra.mxu0 %v4121
      %v4974 = vpop.f32.mrf.mxu0
      %v4975 = vadd.f32 %v4550, %v4974
      %4976 = vmatmul.f32.gmra.mxu0 %v4124
      %v4977 = vpop.f32.mrf.mxu0
      %v4978 = vadd.f32 %v4553, %v4977
      %4979 = vmatmul.f32.gmra.mxu0 %v4127
      %v4980 = vpop.f32.mrf.mxu0
      %v4981 = vadd.f32 %v4556, %v4980
      %4982 = vmatmul.f32.gmra.mxu0 %v4130
      %v4983 = vpop.f32.mrf.mxu0
      %v4984 = vadd.f32 %v4559, %v4983
      %4985 = vmatmul.f32.gmra.mxu0 %v4133
      %v4986 = vpop.f32.mrf.mxu0
      %v4987 = vadd.f32 %v4562, %v4986
      %4988 = vmatmul.f32.gmra.mxu0 %v4136
      %v4989 = vpop.f32.mrf.mxu0
      %v4990 = vadd.f32 %v4565, %v4989
      %4991 = vmatmul.f32.gmra.mxu0 %v4139
      %v4992 = vpop.f32.mrf.mxu0
      %v4993 = vadd.f32 %v4568, %v4992
      %4994 = vmatmul.f32.gmra.mxu0 %v4142
      %v4995 = vpop.f32.mrf.mxu0
      %v4996 = vadd.f32 %v4571, %v4995
      %4997 = vmatmul.f32.gmra.mxu0 %v4145
      %v4998 = vpop.f32.mrf.mxu0
      %v4999 = vadd.f32 %v4574, %v4998
      %5000 = vmatmul.f32.gmra.mxu0 %v4148
      %v5001 = vpop.f32.mrf.mxu0
      %v5002 = vadd.f32 %v4577, %v5001
      %5003 = vmatmul.f32.gmra.mxu0 %v4151
      %v5004 = vpop.f32.mrf.mxu0
      %v5005 = vadd.f32 %v4580, %v5004
      %5006 = vdwg.mxu0
      %v5007 = vmax.f32 %v4600, 0.0
      %v5008 = vmax.f32 %v4603, 0.0
      %v5009 = vmax.f32 %v4606, 0.0
      %v5010 = vmax.f32 %v4609, 0.0
      %v5011 = vmax.f32 %v4612, 0.0
      %v5012 = vmax.f32 %v4615, 0.0
      %v5013 = vmax.f32 %v4618, 0.0
      %v5014 = vmax.f32 %v4621, 0.0
      %v5015 = vmax.f32 %v4624, 0.0
      %v5016 = vmax.f32 %v4627, 0.0
      %v5017 = vmax.f32 %v4630, 0.0
      %v5018 = vmax.f32 %v4633, 0.0
      %v5019 = vmax.f32 %v4636, 0.0
      %v5020 = vmax.f32 %v4639, 0.0
      %v5021 = vmax.f32 %v4642, 0.0
      %v5022 = vmax.f32 %v4645, 0.0
      %v5023 = vmax.f32 %v4648, 0.0
      %v5024 = vmax.f32 %v4651, 0.0
      %v5025 = vmax.f32 %v4654, 0.0
      %v5026 = vmax.f32 %v4657, 0.0
      %v5027 = vmax.f32 %v4660, 0.0
      %v5028 = vmax.f32 %v4663, 0.0
      %v5029 = vmax.f32 %v4666, 0.0
      %v5030 = vmax.f32 %v4669, 0.0
      %v5031 = vmax.f32 %v4672, 0.0
      %v5032 = vmax.f32 %v4675, 0.0
      %v5033 = vmax.f32 %v4678, 0.0
      %v5034 = vmax.f32 %v4681, 0.0
      %v5035 = vmax.f32 %v4684, 0.0
      %v5036 = vmax.f32 %v4687, 0.0
      %v5037 = vmax.f32 %v4690, 0.0
      %v5038 = vmax.f32 %v4693, 0.0
      %v5039 = vmax.f32 %v4696, 0.0
      %v5040 = vmax.f32 %v4699, 0.0
      %v5041 = vmax.f32 %v4702, 0.0
      %v5042 = vmax.f32 %v4705, 0.0
      %v5043 = vmax.f32 %v4708, 0.0
      %v5044 = vmax.f32 %v4711, 0.0
      %v5045 = vmax.f32 %v4714, 0.0
      %v5046 = vmax.f32 %v4717, 0.0
      %v5047 = vmax.f32 %v4720, 0.0
      %v5048 = vmax.f32 %v4723, 0.0
      %v5049 = vmax.f32 %v4726, 0.0
      %v5050 = vmax.f32 %v4729, 0.0
      %v5051 = vmax.f32 %v4732, 0.0
      %v5052 = vmax.f32 %v4735, 0.0
      %v5053 = vmax.f32 %v4738, 0.0
      %v5054 = vmax.f32 %v4741, 0.0
      %v5055 = vmax.f32 %v4744, 0.0
      %v5056 = vmax.f32 %v4747, 0.0
      %v5057 = vmax.f32 %v4750, 0.0
      %v5058 = vmax.f32 %v4753, 0.0
      %v5059 = vmax.f32 %v4756, 0.0
      %v5060 = vmax.f32 %v4759, 0.0
      %v5061 = vmax.f32 %v4762, 0.0
      %v5062 = vmax.f32 %v4765, 0.0
      %v5063 = vmax.f32 %v4768, 0.0
      %v5064 = vmax.f32 %v4771, 0.0
      %v5065 = vmax.f32 %v4774, 0.0
      %v5066 = vmax.f32 %v4777, 0.0
      %v5067 = vmax.f32 %v4780, 0.0
      %v5068 = vmax.f32 %v4783, 0.0
      %v5069 = vmax.f32 %v4786, 0.0
      %v5070 = vmax.f32 %v4789, 0.0
      %v5071 = vmax.f32 %v4792, 0.0
      %v5072 = vmax.f32 %v4795, 0.0
      %v5073 = vmax.f32 %v4798, 0.0
      %v5074 = vmax.f32 %v4801, 0.0
      %v5075 = vmax.f32 %v4804, 0.0
      %v5076 = vmax.f32 %v4807, 0.0
      %v5077 = vmax.f32 %v4810, 0.0
      %v5078 = vmax.f32 %v4813, 0.0
      %v5079 = vmax.f32 %v4816, 0.0
      %v5080 = vmax.f32 %v4819, 0.0
      %v5081 = vmax.f32 %v4822, 0.0
      %v5082 = vmax.f32 %v4825, 0.0
      %v5083 = vmax.f32 %v4828, 0.0
      %v5084 = vmax.f32 %v4831, 0.0
      %v5085 = vmax.f32 %v4834, 0.0
      %v5086 = vmax.f32 %v4837, 0.0
      %v5087 = vmax.f32 %v4840, 0.0
      %v5088 = vmax.f32 %v4843, 0.0
      %v5089 = vmax.f32 %v4846, 0.0
      %v5090 = vmax.f32 %v4849, 0.0
      %v5091 = vmax.f32 %v4852, 0.0
      %v5092 = vmax.f32 %v4855, 0.0
      %v5093 = vmax.f32 %v4858, 0.0
      %v5094 = vmax.f32 %v4861, 0.0
      %v5095 = vmax.f32 %v4864, 0.0
      %v5096 = vmax.f32 %v4867, 0.0
      %v5097 = vmax.f32 %v4870, 0.0
      %v5098 = vmax.f32 %v4873, 0.0
      %v5099 = vmax.f32 %v4876, 0.0
      %v5100 = vmax.f32 %v4879, 0.0
      %v5101 = vmax.f32 %v4882, 0.0
      %v5102 = vmax.f32 %v4885, 0.0
      %v5103 = vmax.f32 %v4888, 0.0
      %v5104 = vmax.f32 %v4891, 0.0
      %v5105 = vmax.f32 %v4894, 0.0
      %v5106 = vmax.f32 %v4897, 0.0
      %v5107 = vmax.f32 %v4900, 0.0
      %v5108 = vmax.f32 %v4903, 0.0
      %v5109 = vmax.f32 %v4906, 0.0
      %v5110 = vmax.f32 %v4909, 0.0
      %v5111 = vmax.f32 %v4912, 0.0
      %v5112 = vmax.f32 %v4915, 0.0
      %v5113 = vmax.f32 %v4918, 0.0
      %v5114 = vmax.f32 %v4921, 0.0
      %v5115 = vmax.f32 %v4924, 0.0
      %v5116 = vmax.f32 %v4927, 0.0
      %v5117 = vmax.f32 %v4930, 0.0
      %v5118 = vmax.f32 %v4933, 0.0
      %v5119 = vmax.f32 %v4936, 0.0
      %v5120 = vmax.f32 %v4939, 0.0
      %v5121 = vmax.f32 %v4942, 0.0
      %v5122 = vmax.f32 %v4945, 0.0
      %v5123 = vmax.f32 %v4948, 0.0
      %v5124 = vmax.f32 %v4951, 0.0
      %v5125 = vmax.f32 %v4954, 0.0
      %v5126 = vmax.f32 %v4957, 0.0
      %v5127 = vmax.f32 %v4960, 0.0
      %v5128 = vmax.f32 %v4963, 0.0
      %v5129 = vmax.f32 %v4966, 0.0
      %v5130 = vmax.f32 %v4969, 0.0
      %v5131 = vmax.f32 %v4972, 0.0
      %v5132 = vmax.f32 %v4975, 0.0
      %v5133 = vmax.f32 %v4978, 0.0
      %v5134 = vmax.f32 %v4981, 0.0
      %v5135 = vmax.f32 %v4984, 0.0
      %v5136 = vmax.f32 %v4987, 0.0
      %v5137 = vmax.f32 %v4990, 0.0
      %v5138 = vmax.f32 %v4993, 0.0
      %v5139 = vmax.f32 %v4996, 0.0
      %v5140 = vmax.f32 %v4999, 0.0
      %v5141 = vmax.f32 %v5002, 0.0
      %v5142 = vmax.f32 %v5005, 0.0
      %vm5143 = vcmask 64512
      %v5144 = vsel %vm5143, %v5007, -inf
      %v5145 = vrot.slane %v5144, 4
      %v5146 = vmax.f32 %v5144, %v5145
      %v5147 = vrot.slane %v5146, 2
      %v5148 = vmax.f32 %v5146, %v5147
      %v5149 = vrot.slane %v5148, 1
      %v5150 = vmax.f32 %v5148, %v5149
      %v5151 = vsel %vm5143, %v5008, -inf
      %v5152 = vrot.slane %v5151, 4
      %v5153 = vmax.f32 %v5151, %v5152
      %v5154 = vrot.slane %v5153, 2
      %v5155 = vmax.f32 %v5153, %v5154
      %v5156 = vrot.slane %v5155, 1
      %v5157 = vmax.f32 %v5155, %v5156
      %v5158 = vsel %vm5143, %v5009, -inf
      %v5159 = vrot.slane %v5158, 4
      %v5160 = vmax.f32 %v5158, %v5159
      %v5161 = vrot.slane %v5160, 2
      %v5162 = vmax.f32 %v5160, %v5161
      %v5163 = vrot.slane %v5162, 1
      %v5164 = vmax.f32 %v5162, %v5163
      %v5165 = vsel %vm5143, %v5010, -inf
      %v5166 = vrot.slane %v5165, 4
      %v5167 = vmax.f32 %v5165, %v5166
      %v5168 = vrot.slane %v5167, 2
      %v5169 = vmax.f32 %v5167, %v5168
      %v5170 = vrot.slane %v5169, 1
      %v5171 = vmax.f32 %v5169, %v5170
      %v5172 = vsel %vm5143, %v5011, -inf
      %v5173 = vrot.slane %v5172, 4
      %v5174 = vmax.f32 %v5172, %v5173
      %v5175 = vrot.slane %v5174, 2
      %v5176 = vmax.f32 %v5174, %v5175
      %v5177 = vrot.slane %v5176, 1
      %v5178 = vmax.f32 %v5176, %v5177
      %v5179 = vsel %vm5143, %v5012, -inf
      %v5180 = vrot.slane %v5179, 4
      %v5181 = vmax.f32 %v5179, %v5180
      %v5182 = vrot.slane %v5181, 2
      %v5183 = vmax.f32 %v5181, %v5182
      %v5184 = vrot.slane %v5183, 1
      %v5185 = vmax.f32 %v5183, %v5184
      %v5186 = vsel %vm5143, %v5013, -inf
      %v5187 = vrot.slane %v5186, 4
      %v5188 = vmax.f32 %v5186, %v5187
      %v5189 = vrot.slane %v5188, 2
      %v5190 = vmax.f32 %v5188, %v5189
      %v5191 = vrot.slane %v5190, 1
      %v5192 = vmax.f32 %v5190, %v5191
      %v5193 = vsel %vm5143, %v5014, -inf
      %v5194 = vrot.slane %v5193, 4
      %v5195 = vmax.f32 %v5193, %v5194
      %v5196 = vrot.slane %v5195, 2
      %v5197 = vmax.f32 %v5195, %v5196
      %v5198 = vrot.slane %v5197, 1
      %v5199 = vmax.f32 %v5197, %v5198
      %v5200 = vsel %vm5143, %v5015, -inf
      %v5201 = vrot.slane %v5200, 4
      %v5202 = vmax.f32 %v5200, %v5201
      %v5203 = vrot.slane %v5202, 2
      %v5204 = vmax.f32 %v5202, %v5203
      %v5205 = vrot.slane %v5204, 1
      %v5206 = vmax.f32 %v5204, %v5205
      %v5207 = vsel %vm5143, %v5016, -inf
      %v5208 = vrot.slane %v5207, 4
      %v5209 = vmax.f32 %v5207, %v5208
      %v5210 = vrot.slane %v5209, 2
      %v5211 = vmax.f32 %v5209, %v5210
      %v5212 = vrot.slane %v5211, 1
      %v5213 = vmax.f32 %v5211, %v5212
      %v5214 = vsel %vm5143, %v5017, -inf
      %v5215 = vrot.slane %v5214, 4
      %v5216 = vmax.f32 %v5214, %v5215
      %v5217 = vrot.slane %v5216, 2
      %v5218 = vmax.f32 %v5216, %v5217
      %v5219 = vrot.slane %v5218, 1
      %v5220 = vmax.f32 %v5218, %v5219
      %v5221 = vsel %vm5143, %v5018, -inf
      %v5222 = vrot.slane %v5221, 4
      %v5223 = vmax.f32 %v5221, %v5222
      %v5224 = vrot.slane %v5223, 2
      %v5225 = vmax.f32 %v5223, %v5224
      %v5226 = vrot.slane %v5225, 1
      %v5227 = vmax.f32 %v5225, %v5226
      %v5228 = vsel %vm5143, %v5019, -inf
      %v5229 = vrot.slane %v5228, 4
      %v5230 = vmax.f32 %v5228, %v5229
      %v5231 = vrot.slane %v5230, 2
      %v5232 = vmax.f32 %v5230, %v5231
      %v5233 = vrot.slane %v5232, 1
      %v5234 = vmax.f32 %v5232, %v5233
      %v5235 = vsel %vm5143, %v5020, -inf
      %v5236 = vrot.slane %v5235, 4
      %v5237 = vmax.f32 %v5235, %v5236
      %v5238 = vrot.slane %v5237, 2
      %v5239 = vmax.f32 %v5237, %v5238
      %v5240 = vrot.slane %v5239, 1
      %v5241 = vmax.f32 %v5239, %v5240
      %v5242 = vsel %vm5143, %v5021, -inf
      %v5243 = vrot.slane %v5242, 4
      %v5244 = vmax.f32 %v5242, %v5243
      %v5245 = vrot.slane %v5244, 2
      %v5246 = vmax.f32 %v5244, %v5245
      %v5247 = vrot.slane %v5246, 1
      %v5248 = vmax.f32 %v5246, %v5247
      %v5249 = vsel %vm5143, %v5022, -inf
      %v5250 = vrot.slane %v5249, 4
      %v5251 = vmax.f32 %v5249, %v5250
      %v5252 = vrot.slane %v5251, 2
      %v5253 = vmax.f32 %v5251, %v5252
      %v5254 = vrot.slane %v5253, 1
      %v5255 = vmax.f32 %v5253, %v5254
      %v5256 = vsel %vm5143, %v5023, -inf
      %v5257 = vrot.slane %v5256, 4
      %v5258 = vmax.f32 %v5256, %v5257
      %v5259 = vrot.slane %v5258, 2
      %v5260 = vmax.f32 %v5258, %v5259
      %v5261 = vrot.slane %v5260, 1
      %v5262 = vmax.f32 %v5260, %v5261
      %v5263 = vsel %vm5143, %v5024, -inf
      %v5264 = vrot.slane %v5263, 4
      %v5265 = vmax.f32 %v5263, %v5264
      %v5266 = vrot.slane %v5265, 2
      %v5267 = vmax.f32 %v5265, %v5266
      %v5268 = vrot.slane %v5267, 1
      %v5269 = vmax.f32 %v5267, %v5268
      %v5270 = vsel %vm5143, %v5025, -inf
      %v5271 = vrot.slane %v5270, 4
      %v5272 = vmax.f32 %v5270, %v5271
      %v5273 = vrot.slane %v5272, 2
      %v5274 = vmax.f32 %v5272, %v5273
      %v5275 = vrot.slane %v5274, 1
      %v5276 = vmax.f32 %v5274, %v5275
      %v5277 = vsel %vm5143, %v5026, -inf
      %v5278 = vrot.slane %v5277, 4
      %v5279 = vmax.f32 %v5277, %v5278
      %v5280 = vrot.slane %v5279, 2
      %v5281 = vmax.f32 %v5279, %v5280
      %v5282 = vrot.slane %v5281, 1
      %v5283 = vmax.f32 %v5281, %v5282
      %v5284 = vsel %vm5143, %v5027, -inf
      %v5285 = vrot.slane %v5284, 4
      %v5286 = vmax.f32 %v5284, %v5285
      %v5287 = vrot.slane %v5286, 2
      %v5288 = vmax.f32 %v5286, %v5287
      %v5289 = vrot.slane %v5288, 1
      %v5290 = vmax.f32 %v5288, %v5289
      %v5291 = vsel %vm5143, %v5028, -inf
      %v5292 = vrot.slane %v5291, 4
      %v5293 = vmax.f32 %v5291, %v5292
      %v5294 = vrot.slane %v5293, 2
      %v5295 = vmax.f32 %v5293, %v5294
      %v5296 = vrot.slane %v5295, 1
      %v5297 = vmax.f32 %v5295, %v5296
      %v5298 = vsel %vm5143, %v5029, -inf
      %v5299 = vrot.slane %v5298, 4
      %v5300 = vmax.f32 %v5298, %v5299
      %v5301 = vrot.slane %v5300, 2
      %v5302 = vmax.f32 %v5300, %v5301
      %v5303 = vrot.slane %v5302, 1
      %v5304 = vmax.f32 %v5302, %v5303
      %v5305 = vsel %vm5143, %v5030, -inf
      %v5306 = vrot.slane %v5305, 4
      %v5307 = vmax.f32 %v5305, %v5306
      %v5308 = vrot.slane %v5307, 2
      %v5309 = vmax.f32 %v5307, %v5308
      %v5310 = vrot.slane %v5309, 1
      %v5311 = vmax.f32 %v5309, %v5310
      %v5312 = vsel %vm5143, %v5031, -inf
      %v5313 = vrot.slane %v5312, 4
      %v5314 = vmax.f32 %v5312, %v5313
      %v5315 = vrot.slane %v5314, 2
      %v5316 = vmax.f32 %v5314, %v5315
      %v5317 = vrot.slane %v5316, 1
      %v5318 = vmax.f32 %v5316, %v5317
      %v5319 = vsel %vm5143, %v5032, -inf
      %v5320 = vrot.slane %v5319, 4
      %v5321 = vmax.f32 %v5319, %v5320
      %v5322 = vrot.slane %v5321, 2
      %v5323 = vmax.f32 %v5321, %v5322
      %v5324 = vrot.slane %v5323, 1
      %v5325 = vmax.f32 %v5323, %v5324
      %v5326 = vsel %vm5143, %v5033, -inf
      %v5327 = vrot.slane %v5326, 4
      %v5328 = vmax.f32 %v5326, %v5327
      %v5329 = vrot.slane %v5328, 2
      %v5330 = vmax.f32 %v5328, %v5329
      %v5331 = vrot.slane %v5330, 1
      %v5332 = vmax.f32 %v5330, %v5331
      %v5333 = vsel %vm5143, %v5034, -inf
      %v5334 = vrot.slane %v5333, 4
      %v5335 = vmax.f32 %v5333, %v5334
      %v5336 = vrot.slane %v5335, 2
      %v5337 = vmax.f32 %v5335, %v5336
      %v5338 = vrot.slane %v5337, 1
      %v5339 = vmax.f32 %v5337, %v5338
      %v5340 = vsel %vm5143, %v5035, -inf
      %v5341 = vrot.slane %v5340, 4
      %v5342 = vmax.f32 %v5340, %v5341
      %v5343 = vrot.slane %v5342, 2
      %v5344 = vmax.f32 %v5342, %v5343
      %v5345 = vrot.slane %v5344, 1
      %v5346 = vmax.f32 %v5344, %v5345
      %v5347 = vsel %vm5143, %v5036, -inf
      %v5348 = vrot.slane %v5347, 4
      %v5349 = vmax.f32 %v5347, %v5348
      %v5350 = vrot.slane %v5349, 2
      %v5351 = vmax.f32 %v5349, %v5350
      %v5352 = vrot.slane %v5351, 1
      %v5353 = vmax.f32 %v5351, %v5352
      %v5354 = vsel %vm5143, %v5037, -inf
      %v5355 = vrot.slane %v5354, 4
      %v5356 = vmax.f32 %v5354, %v5355
      %v5357 = vrot.slane %v5356, 2
      %v5358 = vmax.f32 %v5356, %v5357
      %v5359 = vrot.slane %v5358, 1
      %v5360 = vmax.f32 %v5358, %v5359
      %v5361 = vsel %vm5143, %v5038, -inf
      %v5362 = vrot.slane %v5361, 4
      %v5363 = vmax.f32 %v5361, %v5362
      %v5364 = vrot.slane %v5363, 2
      %v5365 = vmax.f32 %v5363, %v5364
      %v5366 = vrot.slane %v5365, 1
      %v5367 = vmax.f32 %v5365, %v5366
      %v5368 = vsel %vm5143, %v5039, -inf
      %v5369 = vrot.slane %v5368, 4
      %v5370 = vmax.f32 %v5368, %v5369
      %v5371 = vrot.slane %v5370, 2
      %v5372 = vmax.f32 %v5370, %v5371
      %v5373 = vrot.slane %v5372, 1
      %v5374 = vmax.f32 %v5372, %v5373
      %v5375 = vsel %vm5143, %v5040, -inf
      %v5376 = vrot.slane %v5375, 4
      %v5377 = vmax.f32 %v5375, %v5376
      %v5378 = vrot.slane %v5377, 2
      %v5379 = vmax.f32 %v5377, %v5378
      %v5380 = vrot.slane %v5379, 1
      %v5381 = vmax.f32 %v5379, %v5380
      %v5382 = vsel %vm5143, %v5041, -inf
      %v5383 = vrot.slane %v5382, 4
      %v5384 = vmax.f32 %v5382, %v5383
      %v5385 = vrot.slane %v5384, 2
      %v5386 = vmax.f32 %v5384, %v5385
      %v5387 = vrot.slane %v5386, 1
      %v5388 = vmax.f32 %v5386, %v5387
      %v5389 = vsel %vm5143, %v5042, -inf
      %v5390 = vrot.slane %v5389, 4
      %v5391 = vmax.f32 %v5389, %v5390
      %v5392 = vrot.slane %v5391, 2
      %v5393 = vmax.f32 %v5391, %v5392
      %v5394 = vrot.slane %v5393, 1
      %v5395 = vmax.f32 %v5393, %v5394
      %v5396 = vsel %vm5143, %v5043, -inf
      %v5397 = vrot.slane %v5396, 4
      %v5398 = vmax.f32 %v5396, %v5397
      %v5399 = vrot.slane %v5398, 2
      %v5400 = vmax.f32 %v5398, %v5399
      %v5401 = vrot.slane %v5400, 1
      %v5402 = vmax.f32 %v5400, %v5401
      %v5403 = vsel %vm5143, %v5044, -inf
      %v5404 = vrot.slane %v5403, 4
      %v5405 = vmax.f32 %v5403, %v5404
      %v5406 = vrot.slane %v5405, 2
      %v5407 = vmax.f32 %v5405, %v5406
      %v5408 = vrot.slane %v5407, 1
      %v5409 = vmax.f32 %v5407, %v5408
      %v5410 = vsel %vm5143, %v5045, -inf
      %v5411 = vrot.slane %v5410, 4
      %v5412 = vmax.f32 %v5410, %v5411
      %v5413 = vrot.slane %v5412, 2
      %v5414 = vmax.f32 %v5412, %v5413
      %v5415 = vrot.slane %v5414, 1
      %v5416 = vmax.f32 %v5414, %v5415
      %v5417 = vsel %vm5143, %v5046, -inf
      %v5418 = vrot.slane %v5417, 4
      %v5419 = vmax.f32 %v5417, %v5418
      %v5420 = vrot.slane %v5419, 2
      %v5421 = vmax.f32 %v5419, %v5420
      %v5422 = vrot.slane %v5421, 1
      %v5423 = vmax.f32 %v5421, %v5422
      %v5424 = vsel %vm5143, %v5047, -inf
      %v5425 = vrot.slane %v5424, 4
      %v5426 = vmax.f32 %v5424, %v5425
      %v5427 = vrot.slane %v5426, 2
      %v5428 = vmax.f32 %v5426, %v5427
      %v5429 = vrot.slane %v5428, 1
      %v5430 = vmax.f32 %v5428, %v5429
      %v5431 = vsel %vm5143, %v5048, -inf
      %v5432 = vrot.slane %v5431, 4
      %v5433 = vmax.f32 %v5431, %v5432
      %v5434 = vrot.slane %v5433, 2
      %v5435 = vmax.f32 %v5433, %v5434
      %v5436 = vrot.slane %v5435, 1
      %v5437 = vmax.f32 %v5435, %v5436
      %v5438 = vsel %vm5143, %v5049, -inf
      %v5439 = vrot.slane %v5438, 4
      %v5440 = vmax.f32 %v5438, %v5439
      %v5441 = vrot.slane %v5440, 2
      %v5442 = vmax.f32 %v5440, %v5441
      %v5443 = vrot.slane %v5442, 1
      %v5444 = vmax.f32 %v5442, %v5443
      %v5445 = vsel %vm5143, %v5050, -inf
      %v5446 = vrot.slane %v5445, 4
      %v5447 = vmax.f32 %v5445, %v5446
      %v5448 = vrot.slane %v5447, 2
      %v5449 = vmax.f32 %v5447, %v5448
      %v5450 = vrot.slane %v5449, 1
      %v5451 = vmax.f32 %v5449, %v5450
      %v5452 = vsel %vm5143, %v5051, -inf
      %v5453 = vrot.slane %v5452, 4
      %v5454 = vmax.f32 %v5452, %v5453
      %v5455 = vrot.slane %v5454, 2
      %v5456 = vmax.f32 %v5454, %v5455
      %v5457 = vrot.slane %v5456, 1
      %v5458 = vmax.f32 %v5456, %v5457
      %v5459 = vsel %vm5143, %v5052, -inf
      %v5460 = vrot.slane %v5459, 4
      %v5461 = vmax.f32 %v5459, %v5460
      %v5462 = vrot.slane %v5461, 2
      %v5463 = vmax.f32 %v5461, %v5462
      %v5464 = vrot.slane %v5463, 1
      %v5465 = vmax.f32 %v5463, %v5464
      %v5466 = vsel %vm5143, %v5053, -inf
      %v5467 = vrot.slane %v5466, 4
      %v5468 = vmax.f32 %v5466, %v5467
      %v5469 = vrot.slane %v5468, 2
      %v5470 = vmax.f32 %v5468, %v5469
      %v5471 = vrot.slane %v5470, 1
      %v5472 = vmax.f32 %v5470, %v5471
      %v5473 = vsel %vm5143, %v5054, -inf
      %v5474 = vrot.slane %v5473, 4
      %v5475 = vmax.f32 %v5473, %v5474
      %v5476 = vrot.slane %v5475, 2
      %v5477 = vmax.f32 %v5475, %v5476
      %v5478 = vrot.slane %v5477, 1
      %v5479 = vmax.f32 %v5477, %v5478
      %v5480 = vsel %vm5143, %v5055, -inf
      %v5481 = vrot.slane %v5480, 4
      %v5482 = vmax.f32 %v5480, %v5481
      %v5483 = vrot.slane %v5482, 2
      %v5484 = vmax.f32 %v5482, %v5483
      %v5485 = vrot.slane %v5484, 1
      %v5486 = vmax.f32 %v5484, %v5485
      %v5487 = vsel %vm5143, %v5056, -inf
      %v5488 = vrot.slane %v5487, 4
      %v5489 = vmax.f32 %v5487, %v5488
      %v5490 = vrot.slane %v5489, 2
      %v5491 = vmax.f32 %v5489, %v5490
      %v5492 = vrot.slane %v5491, 1
      %v5493 = vmax.f32 %v5491, %v5492
      %v5494 = vsel %vm5143, %v5057, -inf
      %v5495 = vrot.slane %v5494, 4
      %v5496 = vmax.f32 %v5494, %v5495
      %v5497 = vrot.slane %v5496, 2
      %v5498 = vmax.f32 %v5496, %v5497
      %v5499 = vrot.slane %v5498, 1
      %v5500 = vmax.f32 %v5498, %v5499
      %v5501 = vsel %vm5143, %v5058, -inf
      %v5502 = vrot.slane %v5501, 4
      %v5503 = vmax.f32 %v5501, %v5502
      %v5504 = vrot.slane %v5503, 2
      %v5505 = vmax.f32 %v5503, %v5504
      %v5506 = vrot.slane %v5505, 1
      %v5507 = vmax.f32 %v5505, %v5506
      %v5508 = vsel %vm5143, %v5059, -inf
      %v5509 = vrot.slane %v5508, 4
      %v5510 = vmax.f32 %v5508, %v5509
      %v5511 = vrot.slane %v5510, 2
      %v5512 = vmax.f32 %v5510, %v5511
      %v5513 = vrot.slane %v5512, 1
      %v5514 = vmax.f32 %v5512, %v5513
      %v5515 = vsel %vm5143, %v5060, -inf
      %v5516 = vrot.slane %v5515, 4
      %v5517 = vmax.f32 %v5515, %v5516
      %v5518 = vrot.slane %v5517, 2
      %v5519 = vmax.f32 %v5517, %v5518
      %v5520 = vrot.slane %v5519, 1
      %v5521 = vmax.f32 %v5519, %v5520
      %v5522 = vsel %vm5143, %v5061, -inf
      %v5523 = vrot.slane %v5522, 4
      %v5524 = vmax.f32 %v5522, %v5523
      %v5525 = vrot.slane %v5524, 2
      %v5526 = vmax.f32 %v5524, %v5525
      %v5527 = vrot.slane %v5526, 1
      %v5528 = vmax.f32 %v5526, %v5527
      %v5529 = vsel %vm5143, %v5062, -inf
      %v5530 = vrot.slane %v5529, 4
      %v5531 = vmax.f32 %v5529, %v5530
      %v5532 = vrot.slane %v5531, 2
      %v5533 = vmax.f32 %v5531, %v5532
      %v5534 = vrot.slane %v5533, 1
      %v5535 = vmax.f32 %v5533, %v5534
      %v5536 = vsel %vm5143, %v5063, -inf
      %v5537 = vrot.slane %v5536, 4
      %v5538 = vmax.f32 %v5536, %v5537
      %v5539 = vrot.slane %v5538, 2
      %v5540 = vmax.f32 %v5538, %v5539
      %v5541 = vrot.slane %v5540, 1
      %v5542 = vmax.f32 %v5540, %v5541
      %v5543 = vsel %vm5143, %v5064, -inf
      %v5544 = vrot.slane %v5543, 4
      %v5545 = vmax.f32 %v5543, %v5544
      %v5546 = vrot.slane %v5545, 2
      %v5547 = vmax.f32 %v5545, %v5546
      %v5548 = vrot.slane %v5547, 1
      %v5549 = vmax.f32 %v5547, %v5548
      %v5550 = vsel %vm5143, %v5065, -inf
      %v5551 = vrot.slane %v5550, 4
      %v5552 = vmax.f32 %v5550, %v5551
      %v5553 = vrot.slane %v5552, 2
      %v5554 = vmax.f32 %v5552, %v5553
      %v5555 = vrot.slane %v5554, 1
      %v5556 = vmax.f32 %v5554, %v5555
      %v5557 = vsel %vm5143, %v5066, -inf
      %v5558 = vrot.slane %v5557, 4
      %v5559 = vmax.f32 %v5557, %v5558
      %v5560 = vrot.slane %v5559, 2
      %v5561 = vmax.f32 %v5559, %v5560
      %v5562 = vrot.slane %v5561, 1
      %v5563 = vmax.f32 %v5561, %v5562
      %v5564 = vsel %vm5143, %v5067, -inf
      %v5565 = vrot.slane %v5564, 4
      %v5566 = vmax.f32 %v5564, %v5565
      %v5567 = vrot.slane %v5566, 2
      %v5568 = vmax.f32 %v5566, %v5567
      %v5569 = vrot.slane %v5568, 1
      %v5570 = vmax.f32 %v5568, %v5569
      %v5571 = vsel %vm5143, %v5068, -inf
      %v5572 = vrot.slane %v5571, 4
      %v5573 = vmax.f32 %v5571, %v5572
      %v5574 = vrot.slane %v5573, 2
      %v5575 = vmax.f32 %v5573, %v5574
      %v5576 = vrot.slane %v5575, 1
      %v5577 = vmax.f32 %v5575, %v5576
      %v5578 = vsel %vm5143, %v5069, -inf
      %v5579 = vrot.slane %v5578, 4
      %v5580 = vmax.f32 %v5578, %v5579
      %v5581 = vrot.slane %v5580, 2
      %v5582 = vmax.f32 %v5580, %v5581
      %v5583 = vrot.slane %v5582, 1
      %v5584 = vmax.f32 %v5582, %v5583
      %v5585 = vsel %vm5143, %v5070, -inf
      %v5586 = vrot.slane %v5585, 4
      %v5587 = vmax.f32 %v5585, %v5586
      %v5588 = vrot.slane %v5587, 2
      %v5589 = vmax.f32 %v5587, %v5588
      %v5590 = vrot.slane %v5589, 1
      %v5591 = vmax.f32 %v5589, %v5590
      %v5592 = vsel %vm5143, %v5071, -inf
      %v5593 = vrot.slane %v5592, 4
      %v5594 = vmax.f32 %v5592, %v5593
      %v5595 = vrot.slane %v5594, 2
      %v5596 = vmax.f32 %v5594, %v5595
      %v5597 = vrot.slane %v5596, 1
      %v5598 = vmax.f32 %v5596, %v5597
      %v5599 = vsel %vm5143, %v5072, -inf
      %v5600 = vrot.slane %v5599, 4
      %v5601 = vmax.f32 %v5599, %v5600
      %v5602 = vrot.slane %v5601, 2
      %v5603 = vmax.f32 %v5601, %v5602
      %v5604 = vrot.slane %v5603, 1
      %v5605 = vmax.f32 %v5603, %v5604
      %v5606 = vsel %vm5143, %v5073, -inf
      %v5607 = vrot.slane %v5606, 4
      %v5608 = vmax.f32 %v5606, %v5607
      %v5609 = vrot.slane %v5608, 2
      %v5610 = vmax.f32 %v5608, %v5609
      %v5611 = vrot.slane %v5610, 1
      %v5612 = vmax.f32 %v5610, %v5611
      %v5613 = vsel %vm5143, %v5074, -inf
      %v5614 = vrot.slane %v5613, 4
      %v5615 = vmax.f32 %v5613, %v5614
      %v5616 = vrot.slane %v5615, 2
      %v5617 = vmax.f32 %v5615, %v5616
      %v5618 = vrot.slane %v5617, 1
      %v5619 = vmax.f32 %v5617, %v5618
      %v5620 = vsel %vm5143, %v5075, -inf
      %v5621 = vrot.slane %v5620, 4
      %v5622 = vmax.f32 %v5620, %v5621
      %v5623 = vrot.slane %v5622, 2
      %v5624 = vmax.f32 %v5622, %v5623
      %v5625 = vrot.slane %v5624, 1
      %v5626 = vmax.f32 %v5624, %v5625
      %v5627 = vsel %vm5143, %v5076, -inf
      %v5628 = vrot.slane %v5627, 4
      %v5629 = vmax.f32 %v5627, %v5628
      %v5630 = vrot.slane %v5629, 2
      %v5631 = vmax.f32 %v5629, %v5630
      %v5632 = vrot.slane %v5631, 1
      %v5633 = vmax.f32 %v5631, %v5632
      %v5634 = vsel %vm5143, %v5077, -inf
      %v5635 = vrot.slane %v5634, 4
      %v5636 = vmax.f32 %v5634, %v5635
      %v5637 = vrot.slane %v5636, 2
      %v5638 = vmax.f32 %v5636, %v5637
      %v5639 = vrot.slane %v5638, 1
      %v5640 = vmax.f32 %v5638, %v5639
      %v5641 = vsel %vm5143, %v5078, -inf
      %v5642 = vrot.slane %v5641, 4
      %v5643 = vmax.f32 %v5641, %v5642
      %v5644 = vrot.slane %v5643, 2
      %v5645 = vmax.f32 %v5643, %v5644
      %v5646 = vrot.slane %v5645, 1
      %v5647 = vmax.f32 %v5645, %v5646
      %v5648 = vsel %vm5143, %v5079, -inf
      %v5649 = vrot.slane %v5648, 4
      %v5650 = vmax.f32 %v5648, %v5649
      %v5651 = vrot.slane %v5650, 2
      %v5652 = vmax.f32 %v5650, %v5651
      %v5653 = vrot.slane %v5652, 1
      %v5654 = vmax.f32 %v5652, %v5653
      %v5655 = vsel %vm5143, %v5080, -inf
      %v5656 = vrot.slane %v5655, 4
      %v5657 = vmax.f32 %v5655, %v5656
      %v5658 = vrot.slane %v5657, 2
      %v5659 = vmax.f32 %v5657, %v5658
      %v5660 = vrot.slane %v5659, 1
      %v5661 = vmax.f32 %v5659, %v5660
      %v5662 = vsel %vm5143, %v5081, -inf
      %v5663 = vrot.slane %v5662, 4
      %v5664 = vmax.f32 %v5662, %v5663
      %v5665 = vrot.slane %v5664, 2
      %v5666 = vmax.f32 %v5664, %v5665
      %v5667 = vrot.slane %v5666, 1
      %v5668 = vmax.f32 %v5666, %v5667
      %v5669 = vsel %vm5143, %v5082, -inf
      %v5670 = vrot.slane %v5669, 4
      %v5671 = vmax.f32 %v5669, %v5670
      %v5672 = vrot.slane %v5671, 2
      %v5673 = vmax.f32 %v5671, %v5672
      %v5674 = vrot.slane %v5673, 1
      %v5675 = vmax.f32 %v5673, %v5674
      %v5676 = vsel %vm5143, %v5083, -inf
      %v5677 = vrot.slane %v5676, 4
      %v5678 = vmax.f32 %v5676, %v5677
      %v5679 = vrot.slane %v5678, 2
      %v5680 = vmax.f32 %v5678, %v5679
      %v5681 = vrot.slane %v5680, 1
      %v5682 = vmax.f32 %v5680, %v5681
      %v5683 = vsel %vm5143, %v5084, -inf
      %v5684 = vrot.slane %v5683, 4
      %v5685 = vmax.f32 %v5683, %v5684
      %v5686 = vrot.slane %v5685, 2
      %v5687 = vmax.f32 %v5685, %v5686
      %v5688 = vrot.slane %v5687, 1
      %v5689 = vmax.f32 %v5687, %v5688
      %v5690 = vsel %vm5143, %v5085, -inf
      %v5691 = vrot.slane %v5690, 4
      %v5692 = vmax.f32 %v5690, %v5691
      %v5693 = vrot.slane %v5692, 2
      %v5694 = vmax.f32 %v5692, %v5693
      %v5695 = vrot.slane %v5694, 1
      %v5696 = vmax.f32 %v5694, %v5695
      %v5697 = vsel %vm5143, %v5086, -inf
      %v5698 = vrot.slane %v5697, 4
      %v5699 = vmax.f32 %v5697, %v5698
      %v5700 = vrot.slane %v5699, 2
      %v5701 = vmax.f32 %v5699, %v5700
      %v5702 = vrot.slane %v5701, 1
      %v5703 = vmax.f32 %v5701, %v5702
      %v5704 = vsel %vm5143, %v5087, -inf
      %v5705 = vrot.slane %v5704, 4
      %v5706 = vmax.f32 %v5704, %v5705
      %v5707 = vrot.slane %v5706, 2
      %v5708 = vmax.f32 %v5706, %v5707
      %v5709 = vrot.slane %v5708, 1
      %v5710 = vmax.f32 %v5708, %v5709
      %v5711 = vsel %vm5143, %v5088, -inf
      %v5712 = vrot.slane %v5711, 4
      %v5713 = vmax.f32 %v5711, %v5712
      %v5714 = vrot.slane %v5713, 2
      %v5715 = vmax.f32 %v5713, %v5714
      %v5716 = vrot.slane %v5715, 1
      %v5717 = vmax.f32 %v5715, %v5716
      %v5718 = vsel %vm5143, %v5089, -inf
      %v5719 = vrot.slane %v5718, 4
      %v5720 = vmax.f32 %v5718, %v5719
      %v5721 = vrot.slane %v5720, 2
      %v5722 = vmax.f32 %v5720, %v5721
      %v5723 = vrot.slane %v5722, 1
      %v5724 = vmax.f32 %v5722, %v5723
      %v5725 = vsel %vm5143, %v5090, -inf
      %v5726 = vrot.slane %v5725, 4
      %v5727 = vmax.f32 %v5725, %v5726
      %v5728 = vrot.slane %v5727, 2
      %v5729 = vmax.f32 %v5727, %v5728
      %v5730 = vrot.slane %v5729, 1
      %v5731 = vmax.f32 %v5729, %v5730
      %v5732 = vsel %vm5143, %v5091, -inf
      %v5733 = vrot.slane %v5732, 4
      %v5734 = vmax.f32 %v5732, %v5733
      %v5735 = vrot.slane %v5734, 2
      %v5736 = vmax.f32 %v5734, %v5735
      %v5737 = vrot.slane %v5736, 1
      %v5738 = vmax.f32 %v5736, %v5737
      %v5739 = vsel %vm5143, %v5092, -inf
      %v5740 = vrot.slane %v5739, 4
      %v5741 = vmax.f32 %v5739, %v5740
      %v5742 = vrot.slane %v5741, 2
      %v5743 = vmax.f32 %v5741, %v5742
      %v5744 = vrot.slane %v5743, 1
      %v5745 = vmax.f32 %v5743, %v5744
      %v5746 = vsel %vm5143, %v5093, -inf
      %v5747 = vrot.slane %v5746, 4
      %v5748 = vmax.f32 %v5746, %v5747
      %v5749 = vrot.slane %v5748, 2
      %v5750 = vmax.f32 %v5748, %v5749
      %v5751 = vrot.slane %v5750, 1
      %v5752 = vmax.f32 %v5750, %v5751
      %v5753 = vsel %vm5143, %v5094, -inf
      %v5754 = vrot.slane %v5753, 4
      %v5755 = vmax.f32 %v5753, %v5754
      %v5756 = vrot.slane %v5755, 2
      %v5757 = vmax.f32 %v5755, %v5756
      %v5758 = vrot.slane %v5757, 1
      %v5759 = vmax.f32 %v5757, %v5758
      %v5760 = vsel %vm5143, %v5095, -inf
      %v5761 = vrot.slane %v5760, 4
      %v5762 = vmax.f32 %v5760, %v5761
      %v5763 = vrot.slane %v5762, 2
      %v5764 = vmax.f32 %v5762, %v5763
      %v5765 = vrot.slane %v5764, 1
      %v5766 = vmax.f32 %v5764, %v5765
      %v5767 = vsel %vm5143, %v5096, -inf
      %v5768 = vrot.slane %v5767, 4
      %v5769 = vmax.f32 %v5767, %v5768
      %v5770 = vrot.slane %v5769, 2
      %v5771 = vmax.f32 %v5769, %v5770
      %v5772 = vrot.slane %v5771, 1
      %v5773 = vmax.f32 %v5771, %v5772
      %v5774 = vsel %vm5143, %v5097, -inf
      %v5775 = vrot.slane %v5774, 4
      %v5776 = vmax.f32 %v5774, %v5775
      %v5777 = vrot.slane %v5776, 2
      %v5778 = vmax.f32 %v5776, %v5777
      %v5779 = vrot.slane %v5778, 1
      %v5780 = vmax.f32 %v5778, %v5779
      %v5781 = vsel %vm5143, %v5098, -inf
      %v5782 = vrot.slane %v5781, 4
      %v5783 = vmax.f32 %v5781, %v5782
      %v5784 = vrot.slane %v5783, 2
      %v5785 = vmax.f32 %v5783, %v5784
      %v5786 = vrot.slane %v5785, 1
      %v5787 = vmax.f32 %v5785, %v5786
      %v5788 = vsel %vm5143, %v5099, -inf
      %v5789 = vrot.slane %v5788, 4
      %v5790 = vmax.f32 %v5788, %v5789
      %v5791 = vrot.slane %v5790, 2
      %v5792 = vmax.f32 %v5790, %v5791
      %v5793 = vrot.slane %v5792, 1
      %v5794 = vmax.f32 %v5792, %v5793
      %v5795 = vsel %vm5143, %v5100, -inf
      %v5796 = vrot.slane %v5795, 4
      %v5797 = vmax.f32 %v5795, %v5796
      %v5798 = vrot.slane %v5797, 2
      %v5799 = vmax.f32 %v5797, %v5798
      %v5800 = vrot.slane %v5799, 1
      %v5801 = vmax.f32 %v5799, %v5800
      %v5802 = vsel %vm5143, %v5101, -inf
      %v5803 = vrot.slane %v5802, 4
      %v5804 = vmax.f32 %v5802, %v5803
      %v5805 = vrot.slane %v5804, 2
      %v5806 = vmax.f32 %v5804, %v5805
      %v5807 = vrot.slane %v5806, 1
      %v5808 = vmax.f32 %v5806, %v5807
      %v5809 = vsel %vm5143, %v5102, -inf
      %v5810 = vrot.slane %v5809, 4
      %v5811 = vmax.f32 %v5809, %v5810
      %v5812 = vrot.slane %v5811, 2
      %v5813 = vmax.f32 %v5811, %v5812
      %v5814 = vrot.slane %v5813, 1
      %v5815 = vmax.f32 %v5813, %v5814
      %v5816 = vsel %vm5143, %v5103, -inf
      %v5817 = vrot.slane %v5816, 4
      %v5818 = vmax.f32 %v5816, %v5817
      %v5819 = vrot.slane %v5818, 2
      %v5820 = vmax.f32 %v5818, %v5819
      %v5821 = vrot.slane %v5820, 1
      %v5822 = vmax.f32 %v5820, %v5821
      %v5823 = vsel %vm5143, %v5104, -inf
      %v5824 = vrot.slane %v5823, 4
      %v5825 = vmax.f32 %v5823, %v5824
      %v5826 = vrot.slane %v5825, 2
      %v5827 = vmax.f32 %v5825, %v5826
      %v5828 = vrot.slane %v5827, 1
      %v5829 = vmax.f32 %v5827, %v5828
      %v5830 = vsel %vm5143, %v5105, -inf
      %v5831 = vrot.slane %v5830, 4
      %v5832 = vmax.f32 %v5830, %v5831
      %v5833 = vrot.slane %v5832, 2
      %v5834 = vmax.f32 %v5832, %v5833
      %v5835 = vrot.slane %v5834, 1
      %v5836 = vmax.f32 %v5834, %v5835
      %v5837 = vsel %vm5143, %v5106, -inf
      %v5838 = vrot.slane %v5837, 4
      %v5839 = vmax.f32 %v5837, %v5838
      %v5840 = vrot.slane %v5839, 2
      %v5841 = vmax.f32 %v5839, %v5840
      %v5842 = vrot.slane %v5841, 1
      %v5843 = vmax.f32 %v5841, %v5842
      %v5844 = vsel %vm5143, %v5107, -inf
      %v5845 = vrot.slane %v5844, 4
      %v5846 = vmax.f32 %v5844, %v5845
      %v5847 = vrot.slane %v5846, 2
      %v5848 = vmax.f32 %v5846, %v5847
      %v5849 = vrot.slane %v5848, 1
      %v5850 = vmax.f32 %v5848, %v5849
      %v5851 = vsel %vm5143, %v5108, -inf
      %v5852 = vrot.slane %v5851, 4
      %v5853 = vmax.f32 %v5851, %v5852
      %v5854 = vrot.slane %v5853, 2
      %v5855 = vmax.f32 %v5853, %v5854
      %v5856 = vrot.slane %v5855, 1
      %v5857 = vmax.f32 %v5855, %v5856
      %v5858 = vsel %vm5143, %v5109, -inf
      %v5859 = vrot.slane %v5858, 4
      %v5860 = vmax.f32 %v5858, %v5859
      %v5861 = vrot.slane %v5860, 2
      %v5862 = vmax.f32 %v5860, %v5861
      %v5863 = vrot.slane %v5862, 1
      %v5864 = vmax.f32 %v5862, %v5863
      %v5865 = vsel %vm5143, %v5110, -inf
      %v5866 = vrot.slane %v5865, 4
      %v5867 = vmax.f32 %v5865, %v5866
      %v5868 = vrot.slane %v5867, 2
      %v5869 = vmax.f32 %v5867, %v5868
      %v5870 = vrot.slane %v5869, 1
      %v5871 = vmax.f32 %v5869, %v5870
      %v5872 = vsel %vm5143, %v5111, -inf
      %v5873 = vrot.slane %v5872, 4
      %v5874 = vmax.f32 %v5872, %v5873
      %v5875 = vrot.slane %v5874, 2
      %v5876 = vmax.f32 %v5874, %v5875
      %v5877 = vrot.slane %v5876, 1
      %v5878 = vmax.f32 %v5876, %v5877
      %v5879 = vsel %vm5143, %v5112, -inf
      %v5880 = vrot.slane %v5879, 4
      %v5881 = vmax.f32 %v5879, %v5880
      %v5882 = vrot.slane %v5881, 2
      %v5883 = vmax.f32 %v5881, %v5882
      %v5884 = vrot.slane %v5883, 1
      %v5885 = vmax.f32 %v5883, %v5884
      %v5886 = vsel %vm5143, %v5113, -inf
      %v5887 = vrot.slane %v5886, 4
      %v5888 = vmax.f32 %v5886, %v5887
      %v5889 = vrot.slane %v5888, 2
      %v5890 = vmax.f32 %v5888, %v5889
      %v5891 = vrot.slane %v5890, 1
      %v5892 = vmax.f32 %v5890, %v5891
      %v5893 = vsel %vm5143, %v5114, -inf
      %v5894 = vrot.slane %v5893, 4
      %v5895 = vmax.f32 %v5893, %v5894
      %v5896 = vrot.slane %v5895, 2
      %v5897 = vmax.f32 %v5895, %v5896
      %v5898 = vrot.slane %v5897, 1
      %v5899 = vmax.f32 %v5897, %v5898
      %v5900 = vsel %vm5143, %v5115, -inf
      %v5901 = vrot.slane %v5900, 4
      %v5902 = vmax.f32 %v5900, %v5901
      %v5903 = vrot.slane %v5902, 2
      %v5904 = vmax.f32 %v5902, %v5903
      %v5905 = vrot.slane %v5904, 1
      %v5906 = vmax.f32 %v5904, %v5905
      %v5907 = vsel %vm5143, %v5116, -inf
      %v5908 = vrot.slane %v5907, 4
      %v5909 = vmax.f32 %v5907, %v5908
      %v5910 = vrot.slane %v5909, 2
      %v5911 = vmax.f32 %v5909, %v5910
      %v5912 = vrot.slane %v5911, 1
      %v5913 = vmax.f32 %v5911, %v5912
      %v5914 = vsel %vm5143, %v5117, -inf
      %v5915 = vrot.slane %v5914, 4
      %v5916 = vmax.f32 %v5914, %v5915
      %v5917 = vrot.slane %v5916, 2
      %v5918 = vmax.f32 %v5916, %v5917
      %v5919 = vrot.slane %v5918, 1
      %v5920 = vmax.f32 %v5918, %v5919
      %v5921 = vsel %vm5143, %v5118, -inf
      %v5922 = vrot.slane %v5921, 4
      %v5923 = vmax.f32 %v5921, %v5922
      %v5924 = vrot.slane %v5923, 2
      %v5925 = vmax.f32 %v5923, %v5924
      %v5926 = vrot.slane %v5925, 1
      %v5927 = vmax.f32 %v5925, %v5926
      %v5928 = vsel %vm5143, %v5119, -inf
      %v5929 = vrot.slane %v5928, 4
      %v5930 = vmax.f32 %v5928, %v5929
      %v5931 = vrot.slane %v5930, 2
      %v5932 = vmax.f32 %v5930, %v5931
      %v5933 = vrot.slane %v5932, 1
      %v5934 = vmax.f32 %v5932, %v5933
      %v5935 = vsel %vm5143, %v5120, -inf
      %v5936 = vrot.slane %v5935, 4
      %v5937 = vmax.f32 %v5935, %v5936
      %v5938 = vrot.slane %v5937, 2
      %v5939 = vmax.f32 %v5937, %v5938
      %v5940 = vrot.slane %v5939, 1
      %v5941 = vmax.f32 %v5939, %v5940
      %v5942 = vsel %vm5143, %v5121, -inf
      %v5943 = vrot.slane %v5942, 4
      %v5944 = vmax.f32 %v5942, %v5943
      %v5945 = vrot.slane %v5944, 2
      %v5946 = vmax.f32 %v5944, %v5945
      %v5947 = vrot.slane %v5946, 1
      %v5948 = vmax.f32 %v5946, %v5947
      %v5949 = vsel %vm5143, %v5122, -inf
      %v5950 = vrot.slane %v5949, 4
      %v5951 = vmax.f32 %v5949, %v5950
      %v5952 = vrot.slane %v5951, 2
      %v5953 = vmax.f32 %v5951, %v5952
      %v5954 = vrot.slane %v5953, 1
      %v5955 = vmax.f32 %v5953, %v5954
      %v5956 = vsel %vm5143, %v5123, -inf
      %v5957 = vrot.slane %v5956, 4
      %v5958 = vmax.f32 %v5956, %v5957
      %v5959 = vrot.slane %v5958, 2
      %v5960 = vmax.f32 %v5958, %v5959
      %v5961 = vrot.slane %v5960, 1
      %v5962 = vmax.f32 %v5960, %v5961
      %v5963 = vsel %vm5143, %v5124, -inf
      %v5964 = vrot.slane %v5963, 4
      %v5965 = vmax.f32 %v5963, %v5964
      %v5966 = vrot.slane %v5965, 2
      %v5967 = vmax.f32 %v5965, %v5966
      %v5968 = vrot.slane %v5967, 1
      %v5969 = vmax.f32 %v5967, %v5968
      %v5970 = vsel %vm5143, %v5125, -inf
      %v5971 = vrot.slane %v5970, 4
      %v5972 = vmax.f32 %v5970, %v5971
      %v5973 = vrot.slane %v5972, 2
      %v5974 = vmax.f32 %v5972, %v5973
      %v5975 = vrot.slane %v5974, 1
      %v5976 = vmax.f32 %v5974, %v5975
      %v5977 = vsel %vm5143, %v5126, -inf
      %v5978 = vrot.slane %v5977, 4
      %v5979 = vmax.f32 %v5977, %v5978
      %v5980 = vrot.slane %v5979, 2
      %v5981 = vmax.f32 %v5979, %v5980
      %v5982 = vrot.slane %v5981, 1
      %v5983 = vmax.f32 %v5981, %v5982
      %v5984 = vsel %vm5143, %v5127, -inf
      %v5985 = vrot.slane %v5984, 4
      %v5986 = vmax.f32 %v5984, %v5985
      %v5987 = vrot.slane %v5986, 2
      %v5988 = vmax.f32 %v5986, %v5987
      %v5989 = vrot.slane %v5988, 1
      %v5990 = vmax.f32 %v5988, %v5989
      %v5991 = vsel %vm5143, %v5128, -inf
      %v5992 = vrot.slane %v5991, 4
      %v5993 = vmax.f32 %v5991, %v5992
      %v5994 = vrot.slane %v5993, 2
      %v5995 = vmax.f32 %v5993, %v5994
      %v5996 = vrot.slane %v5995, 1
      %v5997 = vmax.f32 %v5995, %v5996
      %v5998 = vsel %vm5143, %v5129, -inf
      %v5999 = vrot.slane %v5998, 4
      %v6000 = vmax.f32 %v5998, %v5999
      %v6001 = vrot.slane %v6000, 2
      %v6002 = vmax.f32 %v6000, %v6001
      %v6003 = vrot.slane %v6002, 1
      %v6004 = vmax.f32 %v6002, %v6003
      %v6005 = vsel %vm5143, %v5130, -inf
      %v6006 = vrot.slane %v6005, 4
      %v6007 = vmax.f32 %v6005, %v6006
      %v6008 = vrot.slane %v6007, 2
      %v6009 = vmax.f32 %v6007, %v6008
      %v6010 = vrot.slane %v6009, 1
      %v6011 = vmax.f32 %v6009, %v6010
      %v6012 = vsel %vm5143, %v5131, -inf
      %v6013 = vrot.slane %v6012, 4
      %v6014 = vmax.f32 %v6012, %v6013
      %v6015 = vrot.slane %v6014, 2
      %v6016 = vmax.f32 %v6014, %v6015
      %v6017 = vrot.slane %v6016, 1
      %v6018 = vmax.f32 %v6016, %v6017
      %v6019 = vsel %vm5143, %v5132, -inf
      %v6020 = vrot.slane %v6019, 4
      %v6021 = vmax.f32 %v6019, %v6020
      %v6022 = vrot.slane %v6021, 2
      %v6023 = vmax.f32 %v6021, %v6022
      %v6024 = vrot.slane %v6023, 1
      %v6025 = vmax.f32 %v6023, %v6024
      %v6026 = vsel %vm5143, %v5133, -inf
      %v6027 = vrot.slane %v6026, 4
      %v6028 = vmax.f32 %v6026, %v6027
      %v6029 = vrot.slane %v6028, 2
      %v6030 = vmax.f32 %v6028, %v6029
      %v6031 = vrot.slane %v6030, 1
      %v6032 = vmax.f32 %v6030, %v6031
      %v6033 = vsel %vm5143, %v5134, -inf
      %v6034 = vrot.slane %v6033, 4
      %v6035 = vmax.f32 %v6033, %v6034
      %v6036 = vrot.slane %v6035, 2
      %v6037 = vmax.f32 %v6035, %v6036
      %v6038 = vrot.slane %v6037, 1
      %v6039 = vmax.f32 %v6037, %v6038
      %v6040 = vsel %vm5143, %v5135, -inf
      %v6041 = vrot.slane %v6040, 4
      %v6042 = vmax.f32 %v6040, %v6041
      %v6043 = vrot.slane %v6042, 2
      %v6044 = vmax.f32 %v6042, %v6043
      %v6045 = vrot.slane %v6044, 1
      %v6046 = vmax.f32 %v6044, %v6045
      %v6047 = vsel %vm5143, %v5136, -inf
      %v6048 = vrot.slane %v6047, 4
      %v6049 = vmax.f32 %v6047, %v6048
      %v6050 = vrot.slane %v6049, 2
      %v6051 = vmax.f32 %v6049, %v6050
      %v6052 = vrot.slane %v6051, 1
      %v6053 = vmax.f32 %v6051, %v6052
      %v6054 = vsel %vm5143, %v5137, -inf
      %v6055 = vrot.slane %v6054, 4
      %v6056 = vmax.f32 %v6054, %v6055
      %v6057 = vrot.slane %v6056, 2
      %v6058 = vmax.f32 %v6056, %v6057
      %v6059 = vrot.slane %v6058, 1
      %v6060 = vmax.f32 %v6058, %v6059
      %v6061 = vsel %vm5143, %v5138, -inf
      %v6062 = vrot.slane %v6061, 4
      %v6063 = vmax.f32 %v6061, %v6062
      %v6064 = vrot.slane %v6063, 2
      %v6065 = vmax.f32 %v6063, %v6064
      %v6066 = vrot.slane %v6065, 1
      %v6067 = vmax.f32 %v6065, %v6066
      %v6068 = vsel %vm5143, %v5139, -inf
      %v6069 = vrot.slane %v6068, 4
      %v6070 = vmax.f32 %v6068, %v6069
      %v6071 = vrot.slane %v6070, 2
      %v6072 = vmax.f32 %v6070, %v6071
      %v6073 = vrot.slane %v6072, 1
      %v6074 = vmax.f32 %v6072, %v6073
      %v6075 = vsel %vm5143, %v5140, -inf
      %v6076 = vrot.slane %v6075, 4
      %v6077 = vmax.f32 %v6075, %v6076
      %v6078 = vrot.slane %v6077, 2
      %v6079 = vmax.f32 %v6077, %v6078
      %v6080 = vrot.slane %v6079, 1
      %v6081 = vmax.f32 %v6079, %v6080
      %v6082 = vsel %vm5143, %v5141, -inf
      %v6083 = vrot.slane %v6082, 4
      %v6084 = vmax.f32 %v6082, %v6083
      %v6085 = vrot.slane %v6084, 2
      %v6086 = vmax.f32 %v6084, %v6085
      %v6087 = vrot.slane %v6086, 1
      %v6088 = vmax.f32 %v6086, %v6087
      %v6089 = vsel %vm5143, %v5142, -inf
      %v6090 = vrot.slane %v6089, 4
      %v6091 = vmax.f32 %v6089, %v6090
      %v6092 = vrot.slane %v6091, 2
      %v6093 = vmax.f32 %v6091, %v6092
      %v6094 = vrot.slane %v6093, 1
      %v6095 = vmax.f32 %v6093, %v6094
      %v6096 = vld [vmem:[%s2] sm:$0xff]
      %v6097 = vld [vmem:[%s2 + $0x8] sm:$0xff]
      %v6098 = vld [vmem:[%s2 + $0x10] sm:$0x1]
      %v6102 = vrot.slane %v6096, 1
      %v6103 = vrot.slane %v6096, 2
      %v6104 = vrot.slane %v6096, 3
      %v6105 = vrot.slane %v6096, 4
      %v6106 = vrot.slane %v6096, 5
      %v6107 = vrot.slane %v6096, 6
      %v6108 = vrot.slane %v6096, 7
      %v6109 = vrot.slane %v6097, 1
      %v6110 = vrot.slane %v6097, 2
      %v6111 = vrot.slane %v6097, 3
      %v6112 = vrot.slane %v6097, 4
      %v6113 = vrot.slane %v6097, 5
      %v6114 = vrot.slane %v6097, 6
      %v6115 = vrot.slane %v6097, 7
      %v6133 = vmul.f32 %v5150, %v6096
      %v6134 = vmul.f32 %v5157, %v6102
      %v6135 = vmul.f32 %v5164, %v6103
      %v6136 = vmul.f32 %v5171, %v6104
      %v6137 = vmul.f32 %v5178, %v6105
      %v6138 = vmul.f32 %v5185, %v6106
      %v6139 = vmul.f32 %v5192, %v6107
      %v6140 = vmul.f32 %v5199, %v6108
      %v6141 = vmul.f32 %v5206, %v6097
      %v6142 = vmul.f32 %v5213, %v6109
      %v6143 = vmul.f32 %v5220, %v6110
      %v6144 = vmul.f32 %v5227, %v6111
      %v6145 = vmul.f32 %v5234, %v6112
      %v6146 = vmul.f32 %v5241, %v6113
      %v6147 = vmul.f32 %v5248, %v6114
      %v6148 = vmul.f32 %v5255, %v6115
      %v6149 = vmul.f32 %v5262, %v6098
      %v6150 = vmul.f32 %v5269, %v6096
      %v6151 = vmul.f32 %v5276, %v6102
      %v6152 = vmul.f32 %v5283, %v6103
      %v6153 = vmul.f32 %v5290, %v6104
      %v6154 = vmul.f32 %v5297, %v6105
      %v6155 = vmul.f32 %v5304, %v6106
      %v6156 = vmul.f32 %v5311, %v6107
      %v6157 = vmul.f32 %v5318, %v6108
      %v6158 = vmul.f32 %v5325, %v6097
      %v6159 = vmul.f32 %v5332, %v6109
      %v6160 = vmul.f32 %v5339, %v6110
      %v6161 = vmul.f32 %v5346, %v6111
      %v6162 = vmul.f32 %v5353, %v6112
      %v6163 = vmul.f32 %v5360, %v6113
      %v6164 = vmul.f32 %v5367, %v6114
      %v6165 = vmul.f32 %v5374, %v6115
      %v6166 = vmul.f32 %v5381, %v6098
      %v6167 = vmul.f32 %v5388, %v6096
      %v6168 = vmul.f32 %v5395, %v6102
      %v6169 = vmul.f32 %v5402, %v6103
      %v6170 = vmul.f32 %v5409, %v6104
      %v6171 = vmul.f32 %v5416, %v6105
      %v6172 = vmul.f32 %v5423, %v6106
      %v6173 = vmul.f32 %v5430, %v6107
      %v6174 = vmul.f32 %v5437, %v6108
      %v6175 = vmul.f32 %v5444, %v6097
      %v6176 = vmul.f32 %v5451, %v6109
      %v6177 = vmul.f32 %v5458, %v6110
      %v6178 = vmul.f32 %v5465, %v6111
      %v6179 = vmul.f32 %v5472, %v6112
      %v6180 = vmul.f32 %v5479, %v6113
      %v6181 = vmul.f32 %v5486, %v6114
      %v6182 = vmul.f32 %v5493, %v6115
      %v6183 = vmul.f32 %v5500, %v6098
      %v6184 = vmul.f32 %v5507, %v6096
      %v6185 = vmul.f32 %v5514, %v6102
      %v6186 = vmul.f32 %v5521, %v6103
      %v6187 = vmul.f32 %v5528, %v6104
      %v6188 = vmul.f32 %v5535, %v6105
      %v6189 = vmul.f32 %v5542, %v6106
      %v6190 = vmul.f32 %v5549, %v6107
      %v6191 = vmul.f32 %v5556, %v6108
      %v6192 = vmul.f32 %v5563, %v6097
      %v6193 = vmul.f32 %v5570, %v6109
      %v6194 = vmul.f32 %v5577, %v6110
      %v6195 = vmul.f32 %v5584, %v6111
      %v6196 = vmul.f32 %v5591, %v6112
      %v6197 = vmul.f32 %v5598, %v6113
      %v6198 = vmul.f32 %v5605, %v6114
      %v6199 = vmul.f32 %v5612, %v6115
      %v6200 = vmul.f32 %v5619, %v6098
      %v6201 = vmul.f32 %v5626, %v6096
      %v6202 = vmul.f32 %v5633, %v6102
      %v6203 = vmul.f32 %v5640, %v6103
      %v6204 = vmul.f32 %v5647, %v6104
      %v6205 = vmul.f32 %v5654, %v6105
      %v6206 = vmul.f32 %v5661, %v6106
      %v6207 = vmul.f32 %v5668, %v6107
      %v6208 = vmul.f32 %v5675, %v6108
      %v6209 = vmul.f32 %v5682, %v6097
      %v6210 = vmul.f32 %v5689, %v6109
      %v6211 = vmul.f32 %v5696, %v6110
      %v6212 = vmul.f32 %v5703, %v6111
      %v6213 = vmul.f32 %v5710, %v6112
      %v6214 = vmul.f32 %v5717, %v6113
      %v6215 = vmul.f32 %v5724, %v6114
      %v6216 = vmul.f32 %v5731, %v6115
      %v6217 = vmul.f32 %v5738, %v6098
      %v6218 = vmul.f32 %v5745, %v6096
      %v6219 = vmul.f32 %v5752, %v6102
      %v6220 = vmul.f32 %v5759, %v6103
      %v6221 = vmul.f32 %v5766, %v6104
      %v6222 = vmul.f32 %v5773, %v6105
      %v6223 = vmul.f32 %v5780, %v6106
      %v6224 = vmul.f32 %v5787, %v6107
      %v6225 = vmul.f32 %v5794, %v6108
      %v6226 = vmul.f32 %v5801, %v6097
      %v6227 = vmul.f32 %v5808, %v6109
      %v6228 = vmul.f32 %v5815, %v6110
      %v6229 = vmul.f32 %v5822, %v6111
      %v6230 = vmul.f32 %v5829, %v6112
      %v6231 = vmul.f32 %v5836, %v6113
      %v6232 = vmul.f32 %v5843, %v6114
      %v6233 = vmul.f32 %v5850, %v6115
      %v6234 = vmul.f32 %v5857, %v6098
      %v6235 = vmul.f32 %v5864, %v6096
      %v6236 = vmul.f32 %v5871, %v6102
      %v6237 = vmul.f32 %v5878, %v6103
      %v6238 = vmul.f32 %v5885, %v6104
      %v6239 = vmul.f32 %v5892, %v6105
      %v6240 = vmul.f32 %v5899, %v6106
      %v6241 = vmul.f32 %v5906, %v6107
      %v6242 = vmul.f32 %v5913, %v6108
      %v6243 = vmul.f32 %v5920, %v6097
      %v6244 = vmul.f32 %v5927, %v6109
      %v6245 = vmul.f32 %v5934, %v6110
      %v6246 = vmul.f32 %v5941, %v6111
      %v6247 = vmul.f32 %v5948, %v6112
      %v6248 = vmul.f32 %v5955, %v6113
      %v6249 = vmul.f32 %v5962, %v6114
      %v6250 = vmul.f32 %v5969, %v6115
      %v6251 = vmul.f32 %v5976, %v6098
      %v6252 = vmul.f32 %v5983, %v6096
      %v6253 = vmul.f32 %v5990, %v6102
      %v6254 = vmul.f32 %v5997, %v6103
      %v6255 = vmul.f32 %v6004, %v6104
      %v6256 = vmul.f32 %v6011, %v6105
      %v6257 = vmul.f32 %v6018, %v6106
      %v6258 = vmul.f32 %v6025, %v6107
      %v6259 = vmul.f32 %v6032, %v6108
      %v6260 = vmul.f32 %v6039, %v6097
      %v6261 = vmul.f32 %v6046, %v6109
      %v6262 = vmul.f32 %v6053, %v6110
      %v6263 = vmul.f32 %v6060, %v6111
      %v6264 = vmul.f32 %v6067, %v6112
      %v6265 = vmul.f32 %v6074, %v6113
      %v6266 = vmul.f32 %v6081, %v6114
      %v6267 = vmul.f32 %v6088, %v6115
      %v6268 = vmul.f32 %v6095, %v6098
      %v6405 = vrot.slane %v6134, 7
      %vm6406 = vcmask 1041409
      %v6407 = vsel %vm6406, %v6405, %v6133
      %v6408 = vrot.slane %v6135, 6
      %vm6409 = vcmask 1042434
      %v6410 = vsel %vm6409, %v6408, %v6407
      %v6411 = vrot.slane %v6136, 5
      %vm6412 = vcmask 1043459
      %v6413 = vsel %vm6412, %v6411, %v6410
      %v6414 = vrot.slane %v6137, 4
      %vm6415 = vcmask 1044484
      %v6416 = vsel %vm6415, %v6414, %v6413
      %v6417 = vrot.slane %v6138, 3
      %vm6418 = vcmask 1045509
      %v6419 = vsel %vm6418, %v6417, %v6416
      %v6420 = vrot.slane %v6139, 2
      %vm6421 = vcmask 1046534
      %v6422 = vsel %vm6421, %v6420, %v6419
      %v6423 = vrot.slane %v6140, 1
      %vm6424 = vcmask 1047559
      %v6425 = vsel %vm6424, %v6423, %v6422
      %v6426 = vrot.slane %v6142, 7
      %v6427 = vsel %vm6406, %v6426, %v6141
      %v6428 = vrot.slane %v6143, 6
      %v6429 = vsel %vm6409, %v6428, %v6427
      %v6430 = vrot.slane %v6144, 5
      %v6431 = vsel %vm6412, %v6430, %v6429
      %v6432 = vrot.slane %v6145, 4
      %v6433 = vsel %vm6415, %v6432, %v6431
      %v6434 = vrot.slane %v6146, 3
      %v6435 = vsel %vm6418, %v6434, %v6433
      %v6436 = vrot.slane %v6147, 2
      %v6437 = vsel %vm6421, %v6436, %v6435
      %v6438 = vrot.slane %v6148, 1
      %v6439 = vsel %vm6424, %v6438, %v6437
      %v6440 = vrot.slane %v6151, 7
      %v6441 = vsel %vm6406, %v6440, %v6150
      %v6442 = vrot.slane %v6152, 6
      %v6443 = vsel %vm6409, %v6442, %v6441
      %v6444 = vrot.slane %v6153, 5
      %v6445 = vsel %vm6412, %v6444, %v6443
      %v6446 = vrot.slane %v6154, 4
      %v6447 = vsel %vm6415, %v6446, %v6445
      %v6448 = vrot.slane %v6155, 3
      %v6449 = vsel %vm6418, %v6448, %v6447
      %v6450 = vrot.slane %v6156, 2
      %v6451 = vsel %vm6421, %v6450, %v6449
      %v6452 = vrot.slane %v6157, 1
      %v6453 = vsel %vm6424, %v6452, %v6451
      %v6454 = vrot.slane %v6159, 7
      %v6455 = vsel %vm6406, %v6454, %v6158
      %v6456 = vrot.slane %v6160, 6
      %v6457 = vsel %vm6409, %v6456, %v6455
      %v6458 = vrot.slane %v6161, 5
      %v6459 = vsel %vm6412, %v6458, %v6457
      %v6460 = vrot.slane %v6162, 4
      %v6461 = vsel %vm6415, %v6460, %v6459
      %v6462 = vrot.slane %v6163, 3
      %v6463 = vsel %vm6418, %v6462, %v6461
      %v6464 = vrot.slane %v6164, 2
      %v6465 = vsel %vm6421, %v6464, %v6463
      %v6466 = vrot.slane %v6165, 1
      %v6467 = vsel %vm6424, %v6466, %v6465
      %v6468 = vrot.slane %v6168, 7
      %v6469 = vsel %vm6406, %v6468, %v6167
      %v6470 = vrot.slane %v6169, 6
      %v6471 = vsel %vm6409, %v6470, %v6469
      %v6472 = vrot.slane %v6170, 5
      %v6473 = vsel %vm6412, %v6472, %v6471
      %v6474 = vrot.slane %v6171, 4
      %v6475 = vsel %vm6415, %v6474, %v6473
      %v6476 = vrot.slane %v6172, 3
      %v6477 = vsel %vm6418, %v6476, %v6475
      %v6478 = vrot.slane %v6173, 2
      %v6479 = vsel %vm6421, %v6478, %v6477
      %v6480 = vrot.slane %v6174, 1
      %v6481 = vsel %vm6424, %v6480, %v6479
      %v6482 = vrot.slane %v6176, 7
      %v6483 = vsel %vm6406, %v6482, %v6175
      %v6484 = vrot.slane %v6177, 6
      %v6485 = vsel %vm6409, %v6484, %v6483
      %v6486 = vrot.slane %v6178, 5
      %v6487 = vsel %vm6412, %v6486, %v6485
      %v6488 = vrot.slane %v6179, 4
      %v6489 = vsel %vm6415, %v6488, %v6487
      %v6490 = vrot.slane %v6180, 3
      %v6491 = vsel %vm6418, %v6490, %v6489
      %v6492 = vrot.slane %v6181, 2
      %v6493 = vsel %vm6421, %v6492, %v6491
      %v6494 = vrot.slane %v6182, 1
      %v6495 = vsel %vm6424, %v6494, %v6493
      %v6496 = vrot.slane %v6185, 7
      %v6497 = vsel %vm6406, %v6496, %v6184
      %v6498 = vrot.slane %v6186, 6
      %v6499 = vsel %vm6409, %v6498, %v6497
      %v6500 = vrot.slane %v6187, 5
      %v6501 = vsel %vm6412, %v6500, %v6499
      %v6502 = vrot.slane %v6188, 4
      %v6503 = vsel %vm6415, %v6502, %v6501
      %v6504 = vrot.slane %v6189, 3
      %v6505 = vsel %vm6418, %v6504, %v6503
      %v6506 = vrot.slane %v6190, 2
      %v6507 = vsel %vm6421, %v6506, %v6505
      %v6508 = vrot.slane %v6191, 1
      %v6509 = vsel %vm6424, %v6508, %v6507
      %v6510 = vrot.slane %v6193, 7
      %v6511 = vsel %vm6406, %v6510, %v6192
      %v6512 = vrot.slane %v6194, 6
      %v6513 = vsel %vm6409, %v6512, %v6511
      %v6514 = vrot.slane %v6195, 5
      %v6515 = vsel %vm6412, %v6514, %v6513
      %v6516 = vrot.slane %v6196, 4
      %v6517 = vsel %vm6415, %v6516, %v6515
      %v6518 = vrot.slane %v6197, 3
      %v6519 = vsel %vm6418, %v6518, %v6517
      %v6520 = vrot.slane %v6198, 2
      %v6521 = vsel %vm6421, %v6520, %v6519
      %v6522 = vrot.slane %v6199, 1
      %v6523 = vsel %vm6424, %v6522, %v6521
      %v6524 = vrot.slane %v6202, 7
      %v6525 = vsel %vm6406, %v6524, %v6201
      %v6526 = vrot.slane %v6203, 6
      %v6527 = vsel %vm6409, %v6526, %v6525
      %v6528 = vrot.slane %v6204, 5
      %v6529 = vsel %vm6412, %v6528, %v6527
      %v6530 = vrot.slane %v6205, 4
      %v6531 = vsel %vm6415, %v6530, %v6529
      %v6532 = vrot.slane %v6206, 3
      %v6533 = vsel %vm6418, %v6532, %v6531
      %v6534 = vrot.slane %v6207, 2
      %v6535 = vsel %vm6421, %v6534, %v6533
      %v6536 = vrot.slane %v6208, 1
      %v6537 = vsel %vm6424, %v6536, %v6535
      %v6538 = vrot.slane %v6210, 7
      %v6539 = vsel %vm6406, %v6538, %v6209
      %v6540 = vrot.slane %v6211, 6
      %v6541 = vsel %vm6409, %v6540, %v6539
      %v6542 = vrot.slane %v6212, 5
      %v6543 = vsel %vm6412, %v6542, %v6541
      %v6544 = vrot.slane %v6213, 4
      %v6545 = vsel %vm6415, %v6544, %v6543
      %v6546 = vrot.slane %v6214, 3
      %v6547 = vsel %vm6418, %v6546, %v6545
      %v6548 = vrot.slane %v6215, 2
      %v6549 = vsel %vm6421, %v6548, %v6547
      %v6550 = vrot.slane %v6216, 1
      %v6551 = vsel %vm6424, %v6550, %v6549
      %v6552 = vrot.slane %v6219, 7
      %v6553 = vsel %vm6406, %v6552, %v6218
      %v6554 = vrot.slane %v6220, 6
      %v6555 = vsel %vm6409, %v6554, %v6553
      %v6556 = vrot.slane %v6221, 5
      %v6557 = vsel %vm6412, %v6556, %v6555
      %v6558 = vrot.slane %v6222, 4
      %v6559 = vsel %vm6415, %v6558, %v6557
      %v6560 = vrot.slane %v6223, 3
      %v6561 = vsel %vm6418, %v6560, %v6559
      %v6562 = vrot.slane %v6224, 2
      %v6563 = vsel %vm6421, %v6562, %v6561
      %v6564 = vrot.slane %v6225, 1
      %v6565 = vsel %vm6424, %v6564, %v6563
      %v6566 = vrot.slane %v6227, 7
      %v6567 = vsel %vm6406, %v6566, %v6226
      %v6568 = vrot.slane %v6228, 6
      %v6569 = vsel %vm6409, %v6568, %v6567
      %v6570 = vrot.slane %v6229, 5
      %v6571 = vsel %vm6412, %v6570, %v6569
      %v6572 = vrot.slane %v6230, 4
      %v6573 = vsel %vm6415, %v6572, %v6571
      %v6574 = vrot.slane %v6231, 3
      %v6575 = vsel %vm6418, %v6574, %v6573
      %v6576 = vrot.slane %v6232, 2
      %v6577 = vsel %vm6421, %v6576, %v6575
      %v6578 = vrot.slane %v6233, 1
      %v6579 = vsel %vm6424, %v6578, %v6577
      %v6580 = vrot.slane %v6236, 7
      %v6581 = vsel %vm6406, %v6580, %v6235
      %v6582 = vrot.slane %v6237, 6
      %v6583 = vsel %vm6409, %v6582, %v6581
      %v6584 = vrot.slane %v6238, 5
      %v6585 = vsel %vm6412, %v6584, %v6583
      %v6586 = vrot.slane %v6239, 4
      %v6587 = vsel %vm6415, %v6586, %v6585
      %v6588 = vrot.slane %v6240, 3
      %v6589 = vsel %vm6418, %v6588, %v6587
      %v6590 = vrot.slane %v6241, 2
      %v6591 = vsel %vm6421, %v6590, %v6589
      %v6592 = vrot.slane %v6242, 1
      %v6593 = vsel %vm6424, %v6592, %v6591
      %v6594 = vrot.slane %v6244, 7
      %v6595 = vsel %vm6406, %v6594, %v6243
      %v6596 = vrot.slane %v6245, 6
      %v6597 = vsel %vm6409, %v6596, %v6595
      %v6598 = vrot.slane %v6246, 5
      %v6599 = vsel %vm6412, %v6598, %v6597
      %v6600 = vrot.slane %v6247, 4
      %v6601 = vsel %vm6415, %v6600, %v6599
      %v6602 = vrot.slane %v6248, 3
      %v6603 = vsel %vm6418, %v6602, %v6601
      %v6604 = vrot.slane %v6249, 2
      %v6605 = vsel %vm6421, %v6604, %v6603
      %v6606 = vrot.slane %v6250, 1
      %v6607 = vsel %vm6424, %v6606, %v6605
      %v6608 = vrot.slane %v6253, 7
      %v6609 = vsel %vm6406, %v6608, %v6252
      %v6610 = vrot.slane %v6254, 6
      %v6611 = vsel %vm6409, %v6610, %v6609
      %v6612 = vrot.slane %v6255, 5
      %v6613 = vsel %vm6412, %v6612, %v6611
      %v6614 = vrot.slane %v6256, 4
      %v6615 = vsel %vm6415, %v6614, %v6613
      %v6616 = vrot.slane %v6257, 3
      %v6617 = vsel %vm6418, %v6616, %v6615
      %v6618 = vrot.slane %v6258, 2
      %v6619 = vsel %vm6421, %v6618, %v6617
      %v6620 = vrot.slane %v6259, 1
      %v6621 = vsel %vm6424, %v6620, %v6619
      %v6622 = vrot.slane %v6261, 7
      %v6623 = vsel %vm6406, %v6622, %v6260
      %v6624 = vrot.slane %v6262, 6
      %v6625 = vsel %vm6409, %v6624, %v6623
      %v6626 = vrot.slane %v6263, 5
      %v6627 = vsel %vm6412, %v6626, %v6625
      %v6628 = vrot.slane %v6264, 4
      %v6629 = vsel %vm6415, %v6628, %v6627
      %v6630 = vrot.slane %v6265, 3
      %v6631 = vsel %vm6418, %v6630, %v6629
      %v6632 = vrot.slane %v6266, 2
      %v6633 = vsel %vm6421, %v6632, %v6631
      %v6634 = vrot.slane %v6267, 1
      %v6635 = vsel %vm6424, %v6634, %v6633
      %v6660 = vsel %vm5143, %v6425, 0.0
      %v6661 = vsel %vm5143, %v6439, 0.0
      %v6662 = vadd.f32 %v6660, %v6661
      %vm6663 = vcmask 57344
      %v6664 = vsel %vm6663, %v6149, 0.0
      %v6665 = vadd.f32 %v6662, %v6664
      %v6666 = vrot.slane %v6665, 4
      %v6667 = vadd.f32 %v6665, %v6666
      %v6668 = vrot.slane %v6667, 2
      %v6669 = vadd.f32 %v6667, %v6668
      %v6670 = vrot.slane %v6669, 1
      %v6671 = vadd.f32 %v6669, %v6670
      %v6672 = vsel %vm5143, %v6453, 0.0
      %v6673 = vsel %vm5143, %v6467, 0.0
      %v6674 = vadd.f32 %v6672, %v6673
      %v6675 = vsel %vm6663, %v6166, 0.0
      %v6676 = vadd.f32 %v6674, %v6675
      %v6677 = vrot.slane %v6676, 4
      %v6678 = vadd.f32 %v6676, %v6677
      %v6679 = vrot.slane %v6678, 2
      %v6680 = vadd.f32 %v6678, %v6679
      %v6681 = vrot.slane %v6680, 1
      %v6682 = vadd.f32 %v6680, %v6681
      %v6683 = vsel %vm5143, %v6481, 0.0
      %v6684 = vsel %vm5143, %v6495, 0.0
      %v6685 = vadd.f32 %v6683, %v6684
      %v6686 = vsel %vm6663, %v6183, 0.0
      %v6687 = vadd.f32 %v6685, %v6686
      %v6688 = vrot.slane %v6687, 4
      %v6689 = vadd.f32 %v6687, %v6688
      %v6690 = vrot.slane %v6689, 2
      %v6691 = vadd.f32 %v6689, %v6690
      %v6692 = vrot.slane %v6691, 1
      %v6693 = vadd.f32 %v6691, %v6692
      %v6694 = vsel %vm5143, %v6509, 0.0
      %v6695 = vsel %vm5143, %v6523, 0.0
      %v6696 = vadd.f32 %v6694, %v6695
      %v6697 = vsel %vm6663, %v6200, 0.0
      %v6698 = vadd.f32 %v6696, %v6697
      %v6699 = vrot.slane %v6698, 4
      %v6700 = vadd.f32 %v6698, %v6699
      %v6701 = vrot.slane %v6700, 2
      %v6702 = vadd.f32 %v6700, %v6701
      %v6703 = vrot.slane %v6702, 1
      %v6704 = vadd.f32 %v6702, %v6703
      %v6705 = vsel %vm5143, %v6537, 0.0
      %v6706 = vsel %vm5143, %v6551, 0.0
      %v6707 = vadd.f32 %v6705, %v6706
      %v6708 = vsel %vm6663, %v6217, 0.0
      %v6709 = vadd.f32 %v6707, %v6708
      %v6710 = vrot.slane %v6709, 4
      %v6711 = vadd.f32 %v6709, %v6710
      %v6712 = vrot.slane %v6711, 2
      %v6713 = vadd.f32 %v6711, %v6712
      %v6714 = vrot.slane %v6713, 1
      %v6715 = vadd.f32 %v6713, %v6714
      %v6716 = vsel %vm5143, %v6565, 0.0
      %v6717 = vsel %vm5143, %v6579, 0.0
      %v6718 = vadd.f32 %v6716, %v6717
      %v6719 = vsel %vm6663, %v6234, 0.0
      %v6720 = vadd.f32 %v6718, %v6719
      %v6721 = vrot.slane %v6720, 4
      %v6722 = vadd.f32 %v6720, %v6721
      %v6723 = vrot.slane %v6722, 2
      %v6724 = vadd.f32 %v6722, %v6723
      %v6725 = vrot.slane %v6724, 1
      %v6726 = vadd.f32 %v6724, %v6725
      %v6727 = vsel %vm5143, %v6593, 0.0
      %v6728 = vsel %vm5143, %v6607, 0.0
      %v6729 = vadd.f32 %v6727, %v6728
      %v6730 = vsel %vm6663, %v6251, 0.0
      %v6731 = vadd.f32 %v6729, %v6730
      %v6732 = vrot.slane %v6731, 4
      %v6733 = vadd.f32 %v6731, %v6732
      %v6734 = vrot.slane %v6733, 2
      %v6735 = vadd.f32 %v6733, %v6734
      %v6736 = vrot.slane %v6735, 1
      %v6737 = vadd.f32 %v6735, %v6736
      %v6738 = vsel %vm5143, %v6621, 0.0
      %v6739 = vsel %vm5143, %v6635, 0.0
      %v6740 = vadd.f32 %v6738, %v6739
      %v6741 = vsel %vm6663, %v6268, 0.0
      %v6742 = vadd.f32 %v6740, %v6741
      %v6743 = vrot.slane %v6742, 4
      %v6744 = vadd.f32 %v6742, %v6743
      %v6745 = vrot.slane %v6744, 2
      %v6746 = vadd.f32 %v6744, %v6745
      %v6747 = vrot.slane %v6746, 1
      %v6748 = vadd.f32 %v6746, %v6747
      %v6757 = vrot.slane %v6682, 7
      %v6758 = vsel %vm6406, %v6757, %v6671
      %v6759 = vrot.slane %v6693, 6
      %v6760 = vsel %vm6409, %v6759, %v6758
      %v6761 = vrot.slane %v6704, 5
      %v6762 = vsel %vm6412, %v6761, %v6760
      %v6763 = vrot.slane %v6715, 4
      %v6764 = vsel %vm6415, %v6763, %v6762
      %v6765 = vrot.slane %v6726, 3
      %v6766 = vsel %vm6418, %v6765, %v6764
      %v6767 = vrot.slane %v6737, 2
      %v6768 = vsel %vm6421, %v6767, %v6766
      %v6769 = vrot.slane %v6748, 1
      %v6770 = vsel %vm6424, %v6769, %v6768
      %v6772 = vsel %vm5143, %v6770, 0.0
      %6773 = vadd.xlane.f32.xlu0 %v6772
      %v6774 = vpop.xlane.xlu0 %6773
      %s6775 = sld [smem:[#allocation2]]
      %v6776 = vstv %s6775
      %v6777 = vadd.f32 %v6774, %v6776
      %v6778 = vxor.u32 %v6777, 2147483648
      %v6779 = vmul.f32 %v6778, 1.442695
      %v6780 = vpow.pop %v6779
      %v6781 = vadd.f32 %v6780, 1.0
      %v6782 = vrcp.pop %v6781
      %v6783 = vmul.f32 %v6781, %v6782
      %v6784 = vsub.f32 1.0, %v6783
      %v6785 = vmul.f32 %v6782, %v6784
      %v6786 = vadd.f32 %v6782, %v6785
      %vm6787 = vweird.f32 %v6781
      %vm6788 = vweird.f32 %v6782
      %vm6789 = vmor %vm6787, %vm6788
      %v6790 = vsel %vm6789, %v6782, %v6786
      %v6791 = vand.u32 2147483647, %v6781
      %vm6792 = vcmp.eq.f32.partialorder %v6791, 8.507059e+37
      %v6793 = vand.u32 %v6781, 2147483648
      %v6794 = vor.u32 1.1754944e-38, %v6793
      %v6795 = vsel %vm6792, %v6794, %v6790
      %v6796 = vmul.f32 1.0, %v6795
      %vm6797 = vcmask 7168
      %6798 = vst.msk [vmem:[%s196] sm:$0xff] %vm6797, %v6796
      %p6799 = scmp.lt.s32.totalorder %s16, 1
      %s6800 = scalar_select %p6799, %s16, 1
      %s6801 = smul.addr %s6800, 8
      %s6802 = scalar_lea.vmem %s4, %s6801
      // Predicated region
      $region37: #{tpu_custom_call.1} parent=35 // pred_check
        %p6803 = pneg %p123
      $region38: #{tpu_custom_call.1} parent=35 // pred_check_branch
        %6805 = sbr.rel (%p6803) target = $region40
      $region39: #{tpu_custom_call.1} parent=35 // pred_region
        _
      $region40: #{tpu_custom_call.1} parent=35 // pred_fallthru
        _
    $region36: #{tpu_custom_call.1} parent=5 // pred_fallthru
      _
    %p6806 = scmp.le.s32.totalorder 2, %s11
    // Predicated region
    $region41: #{tpu_custom_call.1} parent=5 // pred_check
      %p6807 = pneg %p6806
    $region42: #{tpu_custom_call.1} parent=5 // pred_check_branch
      %6809 = sbr.rel (%p6807) target = $region44
    $region43: #{tpu_custom_call.1} parent=5 // pred_region
      %s6810 = ssub.s32 %s11, 2
      // Predicated region
      $region45: #{tpu_custom_call.1} parent=43 // pred_check
        %p6811 = pneg %p129
      $region46: #{tpu_custom_call.1} parent=43 // pred_check_branch
        %6813 = sbr.rel (%p6811) target = $region48
      $region47: #{tpu_custom_call.1} parent=43 // pred_region
        %p6814 = scmp.lt.s32.totalorder %s17, 1
        %s6815 = scalar_select %p6814, %s17, 1
        %s6816 = smul.addr %s6815, 8
        %s6817 = scalar_lea.vmem %s4, %s6816
      $region48: #{tpu_custom_call.1} parent=43 // pred_fallthru
        _
    $region44: #{tpu_custom_call.1} parent=5 // pred_fallthru
      _
  $region6: #{tpu_custom_call.1} parent=0 // loop_footer
    %s15 = sadd.s32 1, %s11
  $region7: #{tpu_custom_call.1} parent=0 // loop_footer_branch
    %10 = sbr.rel target = $region3
  $region8: #{tpu_custom_call.1} parent=0 // loop_exit
    _

</llo_original>
